<compile_context>
chip_gen: v7x
topology: tpu7x:2x2x1
jax: 0.10.0
libtpu: 0.0.40
codegen_flags: <defaults>
</compile_context>

<pallas_src>
import functools

import numpy as np
import jax
import jax.numpy as jnp
from jax.experimental import pallas as pl
from jax.experimental.pallas import tpu as pltpu  # noqa: F401  (TPU backend)

# ----------------------------- hyper-parameters -----------------------------
B       = 2        # batch
T_OBS   = 8        # observed steps
T_PRED  = 8        # predicted steps
IN_SIZE = 2        # (x, y)
HID     = 32       # encoder LSTM hidden size
EMB     = 32       # encoder.emb_out output size
VSN     = 32       # vision feature size
RED     = 4        # decoder.dim_red output per row
DEC_HID = (HID + 1) * RED            # 132
C_IN, HS, WS = 4, 16, 16             # visual input NCHW
KH, KW  = 3, 3
F_CONV  = 8                          # conv output channels
N_HEADS = 4                          # attention heads (attn, attn2, attn4, attn6)
P_SPAT  = (HS - KH + 1) * (WS - KW + 1)   # 196 spatial positions
K_PATCH = C_IN * KH * KW                  # 36
P_PAD   = 256                        # spatial positions padded to lanes

# lane-aligned padded hidden widths (per-gate slices land on 128-lane bounds)
HPE  = 128                           # encoder hidden, padded (real = 32)
DPAD = 256                           # decoder hidden, padded (real = 132)
OUT_W = 256                          # decoder output head, padded (real = 4)

# --------------------------- slab layout constants ---------------------------
# xdata (B, 128): per-batch scalars packed on lanes
XDATA_W = 128
X_ENC = 0                            # x_enc flattened t-major  [0:16)
X_SP  = T_OBS * IN_SIZE              # start point              [16:18)
X_DX0 = X_SP + IN_SIZE               # first decoder input      [18:20)

# slab A: encoder LSTM, lane dim 4*HPE = 512
A_WIH = 0                            # 2 rows
A_B   = 8                            # 1 row
A_WHH = 16                           # HPE rows
A_ROWS = A_WHH + HPE                 # 144

# slab B: decoder LSTM (feedback-fused), lane dim 4*DPAD = 1024
B_WIH  = 0                           # 2 rows
B_BF   = 8                           # 1 row (fused bias)
B_WHHF = 16                          # DPAD rows (fused recurrent weight)
B_ROWS = B_WHHF + DPAD               # 272

# slab C: dim_red expansion, output head, conv weight, lane dim 256
C_E    = 0                           # HPE rows
C_E0   = 128                         # 1 row
C_TILE = 136                         # EMB rows (only first RED real)
C_REDB = 168                         # 1 row
C_BOUT = 176                         # 1 row
C_BC   = 184                         # F_CONV rows (bias in lane 0)
C_WCT  = 192                         # F_CONV rows (wc^T, first K_PATCH lanes)
C_WOUT = 200                         # DPAD rows
C_ROWS = C_WOUT + DPAD               # 456

# slab D: emb_out blocks + vision small weights, lane dim EMB = 32
D_EMB   = 0                          # T_OBS * HPE rows
D_EMBB  = D_EMB + T_OBS * HPE        # 1024
D_WQ    = 1032                       # EMB rows
D_WQSP  = D_WQ + EMB                 # 1064 (2 rows)
D_WV2   = 1072                       # EMB rows
D_WV2SP = D_WV2 + EMB                # 1104 (2 rows)
D_WV1   = 1112                       # F_CONV rows
D_BV    = D_WV1 + F_CONV             # 1120
D_RW1   = 1128                       # VSN rows (only first RED lanes real)
D_RW0   = D_RW1 + VSN                # 1160
D_ROWS  = 1168

# misc output slab (B, MISC_W)
OFF_EH   = 0                         # encoder h (padded to HPE)
OFF_EC   = HPE                       # encoder c
OFF_VSN  = 2 * HPE                   # vsn
OFF_AREP = OFF_VSN + VSN             # attn_rep
OFF_DH   = 384                       # decoder h (padded to DPAD)
OFF_DC   = OFF_DH + DPAD             # decoder c
MISC_W   = OFF_DC + DPAD             # 896


# ============================ the fused kernel ===============================

def seq2seq_kernel(xdata_ref, patches_ref, wA_ref, wB_ref, wC_ref, wD_ref,
                   misc_ref, attn_ref, traj_ref):
    f32 = jnp.float32

    # deterministic pad lanes in the state slab
    misc_ref[...] = jnp.zeros((B, MISC_W), f32)

    xdata = xdata_ref[...]                                   # (B, 128)

    # ----------------------- encoder LSTM (unrolled) ------------------------
    wih0 = wA_ref[A_WIH + 0:A_WIH + 1, :]                    # (1, 4*HPE)
    wih1 = wA_ref[A_WIH + 1:A_WIH + 2, :]
    b_e  = wA_ref[A_B:A_B + 1, :]
    whh  = wA_ref[A_WHH:A_WHH + HPE, :]                      # (HPE, 4*HPE)

    h = jnp.zeros((B, HPE), f32)
    c = jnp.zeros((B, HPE), f32)
    extract = jnp.zeros((B, EMB), f32)
    for t in range(T_OBS):                                   # fully unrolled
        x0 = xdata[:, X_ENC + 2 * t:X_ENC + 2 * t + 1]       # (B, 1)
        x1 = xdata[:, X_ENC + 2 * t + 1:X_ENC + 2 * t + 2]
        # K=2 input projection as VPU broadcast-MACs (overlaps the MXU matmul)
        gates = (x0 * wih0 + x1 * wih1
                 + jnp.dot(h, whh, preferred_element_type=f32) + b_e)
        i_g = jax.nn.sigmoid(gates[:, 0 * HPE:1 * HPE])      # lane-aligned slices
        f_g = jax.nn.sigmoid(gates[:, 1 * HPE:2 * HPE])
        g_g = jnp.tanh(gates[:, 2 * HPE:3 * HPE])
        o_g = jax.nn.sigmoid(gates[:, 3 * HPE:4 * HPE])
        c = f_g * c + i_g * g_g
        h = o_g * jnp.tanh(c)
        # interleaved emb_out partial matmul (hides under recurrence slack)
        extract = extract + jnp.dot(
            h, wD_ref[D_EMB + t * HPE:D_EMB + (t + 1) * HPE, :],
            preferred_element_type=f32)
    extract = extract + wD_ref[D_EMBB:D_EMBB + 1, :]         # emb_out bias

    misc_ref[:, OFF_EH:OFF_EH + HPE] = h
    misc_ref[:, OFF_EC:OFF_EC + HPE] = c

    # --------------------- vision (P on lanes, fused heads) -----------------
    # TODO(synk): Vision module internals are not provided in the source; this
    # is a synthetic conv + spatial-attention block matching the return shapes.
    sp0 = xdata[:, X_SP + 0:X_SP + 1]                        # start point (cond tail)
    sp1 = xdata[:, X_SP + 1:X_SP + 2]

    wcT  = wC_ref[C_WCT:C_WCT + F_CONV, :K_PATCH]            # (F, K)
    bc_c = wC_ref[C_BC:C_BC + F_CONV, 0:1]                   # (F, 1)
    feats = [jax.nn.relu(jnp.dot(wcT, patches_ref[b], preferred_element_type=f32)
                         + bc_c) for b in range(B)]          # B x (F, P_PAD)
    feat3 = jnp.stack(feats, axis=0)                         # (B, F, P_PAD)

    # 4 query projections fused; condition = [extract, start_point] applied as
    # one matmul on extract + broadcast-MACs for the 2 start-point rows.
    q_all = (jnp.dot(extract, wD_ref[D_WQ:D_WQ + EMB, :], preferred_element_type=f32)
             + sp0 * wD_ref[D_WQSP + 0:D_WQSP + 1, :]
             + sp1 * wD_ref[D_WQSP + 1:D_WQSP + 2, :])       # (B, 4*F)

    score_list = []
    for b in range(B):
        q_b = jnp.concatenate(
            [q_all[b:b + 1, a * F_CONV:(a + 1) * F_CONV] for a in range(N_HEADS)],
            axis=0)                                          # (4, F)
        score_list.append(jnp.dot(q_b, feats[b], preferred_element_type=f32))
    scores = jnp.stack(score_list, axis=0)                   # (B, 4, P_PAD)

    lane = jax.lax.broadcasted_iota(jnp.int32, (B, N_HEADS, P_PAD), 2)
    scores = jnp.where(lane < P_SPAT, scores, -1e30)         # mask padded lanes
    m = jnp.max(scores, axis=-1, keepdims=True)
    ee = jnp.exp(scores - m)
    attn_all = ee / jnp.sum(ee, axis=-1, keepdims=True)      # exact normalisation
    attn_ref[...] = attn_all                                 # one lane-dense store

    attn_rep = jnp.einsum('bqp,bfp->bqf', attn_all[:, 0:1, :], feat3,
                          preferred_element_type=f32)[:, 0, :]   # (B, F)

    vsn = jnp.tanh(
        jnp.dot(attn_rep, wD_ref[D_WV1:D_WV1 + F_CONV, :], preferred_element_type=f32)
        + jnp.dot(extract, wD_ref[D_WV2:D_WV2 + EMB, :], preferred_element_type=f32)
        + sp0 * wD_ref[D_WV2SP + 0:D_WV2SP + 1, :]
        + sp1 * wD_ref[D_WV2SP + 1:D_WV2SP + 2, :]
        + wD_ref[D_BV:D_BV + 1, :])                          # (B, VSN)

    misc_ref[:, OFF_VSN:OFF_VSN + VSN] = vsn
    misc_ref[:, OFF_AREP:OFF_AREP + F_CONV] = attn_rep

    # --------- decoder init: rank-1-factored tens_a / tens_b dim_red --------
    # dec_h0[b, i*RED+k] = [1; h][b, i] * ([1; vsn][b] @ red_w)[b, k] + red_b[k]
    proj = (jnp.dot(vsn, wD_ref[D_RW1:D_RW1 + VSN, :], preferred_element_type=f32)
            + wD_ref[D_RW0:D_RW0 + 1, :])                    # (B, 32), cols>=RED are 0
    p_tile = jnp.dot(proj, wC_ref[C_TILE:C_TILE + EMB, :], preferred_element_type=f32)
    e_mat = wC_ref[C_E:C_E + HPE, :]
    e0    = wC_ref[C_E0:C_E0 + 1, :]
    redb  = wC_ref[C_REDB:C_REDB + 1, :]
    a_exp = jnp.dot(h, e_mat, preferred_element_type=f32) + e0
    b_exp = jnp.dot(c, e_mat, preferred_element_type=f32) + e0
    dh = a_exp * p_tile + redb                               # (B, DPAD) decoder h0
    dc = b_exp * p_tile + redb                               # (B, DPAD) decoder c0

    # ----------- decoder LSTM: feedback folded into recurrent weight --------
    dwih0 = wB_ref[B_WIH + 0:B_WIH + 1, :]                   # (1, 4*DPAD)
    dwih1 = wB_ref[B_WIH + 1:B_WIH + 2, :]
    dbF   = wB_ref[B_BF:B_BF + 1, :]
    dwhhF = wB_ref[B_WHHF:B_WHHF + DPAD, :]                  # (DPAD, 4*DPAD)
    wout  = wC_ref[C_WOUT:C_WOUT + DPAD, :]                  # (DPAD, OUT_W)
    bout  = wC_ref[C_BOUT:C_BOUT + 1, :]

    # t = 0 correction: fused weights assume x_t = head(dh_{t-1}); at t = 0 the
    # real input is dx0, so add (dx0 - head(dh0)) @ W_ih via broadcast-MACs.
    s0 = jnp.dot(dh, wout, preferred_element_type=f32) + bout
    xc0 = xdata[:, X_DX0 + 0:X_DX0 + 1] - s0[:, 0:1]
    xc1 = xdata[:, X_DX0 + 1:X_DX0 + 2] - s0[:, 1:2]

    dh_steps = []
    for t in range(T_PRED):                                  # fully unrolled
        gates = jnp.dot(dh, dwhhF, preferred_element_type=f32) + dbF
        if t == 0:
            gates = gates + xc0 * dwih0 + xc1 * dwih1
        i_g = jax.nn.sigmoid(gates[:, 0 * DPAD:1 * DPAD])
        f_g = jax.nn.sigmoid(gates[:, 1 * DPAD:2 * DPAD])
        g_g = jnp.tanh(gates[:, 2 * DPAD:3 * DPAD])
        o_g = jax.nn.sigmoid(gates[:, 3 * DPAD:4 * DPAD])
        dc = f_g * dc + i_g * g_g
        dh = o_g * jnp.tanh(dc)
        dh_steps.append(dh)
        # TODO(synk): train-mode teacher forcing (host RNG coin flip) and the
        # stochastic/bst/top5 path sampling are not reproduced; eval path uses
        # autoregressive feedback, which is exactly the folded weight above.

    misc_ref[:, OFF_DH:OFF_DH + DPAD] = dh
    misc_ref[:, OFF_DC:OFF_DC + DPAD] = dc

    # batched output head — off the recurrence critical path, one lane-dense store
    dh_all = jnp.concatenate(dh_steps, axis=0)               # (T_PRED*B, DPAD)
    so_all = jnp.dot(dh_all, wout, preferred_element_type=f32) + bout
    traj_ref[...] = so_all                                   # (T_PRED*B, OUT_W)


# ============================= pallas_call wrapper ===========================

def run_seq2seq(xdata, patches_t, pk):
    f32 = jnp.float32
    out_shape = (
        jax.ShapeDtypeStruct((B, MISC_W), f32),              # state / vsn / attn_rep slab
        jax.ShapeDtypeStruct((B, N_HEADS, P_PAD), f32),      # 4 attention maps
        jax.ShapeDtypeStruct((T_PRED * B, OUT_W), f32),      # trajectory slab
    )
    # grid=() -> single invocation, every operand resident in VMEM (<3 MiB),
    # one HBM DMA in / out per (consolidated) slab.
    return pl.pallas_call(seq2seq_kernel, out_shape=out_shape)(
        xdata, patches_t, pk["slabA"], pk["slabB"], pk["slabC"], pk["slabD"])


# ================================== glue =====================================

def im2col_t(x_nchw):
    """(B, C, H, W) -> (B, C*KH*KW, Ho*Wo) patches with K on rows, P on cols."""
    bx, cc, hh, ww = x_nchw.shape
    ho, wo = hh - KH + 1, ww - KW + 1
    cols = []
    for i in range(KH):
        for j in range(KW):
            cols.append(x_nchw[:, :, i:i + ho, j:j + wo])    # (B, C, Ho, Wo)
    p = jnp.stack(cols, axis=2)                              # (B, C, KH*KW, Ho, Wo)
    return p.reshape(bx, cc * KH * KW, ho * wo)


def init_params(key):
    """Logical (unpadded) synthetic parameters with shapes implied by Seq2Seq."""
    def nrm(k, shape, scale=0.1):
        return scale * jax.random.normal(k, shape, jnp.float32)
    ks = jax.random.split(key, 20)
    return {
        # EncoderRNN (single-layer LSTM) — TODO(synk): internals not provided;
        # plain LSTM with a single combined bias assumed.
        "enc_wih": nrm(ks[0], (IN_SIZE, 4 * HID)),
        "enc_whh": nrm(ks[1], (HID, 4 * HID)),
        "enc_b":   nrm(ks[2], (1, 4 * HID)),
        # encoder.emb_out : Linear(T_obs*HID -> EMB)
        "emb_w":   nrm(ks[3], (T_OBS * HID, EMB)),
        "emb_b":   nrm(ks[4], (1, EMB)),
        # Vision module
        "vsn_wc":  nrm(ks[5], (K_PATCH, F_CONV)),
        "vsn_bc":  nrm(ks[6], (1, F_CONV)),
        "vsn_wq":  nrm(ks[7], (EMB + IN_SIZE, F_CONV)),
        "vsn_wq2": nrm(ks[8], (EMB + IN_SIZE, F_CONV)),
        "vsn_wq4": nrm(ks[9], (EMB + IN_SIZE, F_CONV)),
        "vsn_wq6": nrm(ks[10], (EMB + IN_SIZE, F_CONV)),
        "vsn_wv1": nrm(ks[11], (F_CONV, VSN)),
        "vsn_wv2": nrm(ks[12], (EMB + IN_SIZE, VSN)),
        "vsn_bv":  nrm(ks[13], (1, VSN)),
        # decoder.dim_red : Linear(VSN+1 -> RED), applied on last dim of tens
        "red_w":   nrm(ks[14], (VSN + 1, RED)),
        "red_b":   nrm(ks[15], (1, RED)),
        # DecoderRNN (single-layer LSTM, hidden = (HID+1)*RED) + output head (4)
        "dec_wih": nrm(ks[16], (IN_SIZE, 4 * DEC_HID)),
        "dec_whh": nrm(ks[17], (DEC_HID, 4 * DEC_HID)),
        "dec_b":   nrm(ks[18], (1, 4 * DEC_HID)),
        "dec_wout": nrm(ks[19], (DEC_HID, 2 * IN_SIZE)),
        "dec_bout": jnp.zeros((1, 2 * IN_SIZE), jnp.float32),
    }


def pack_params(p):
    """One-time repack into the 4 lane-dense slabs consumed by the kernel."""
    f32 = np.float32
    pnp = {k: np.asarray(v, f32) for k, v in p.items()}

    def pad_gate_cols(w, h, hp):
        # (..., 4*h) gate-blocked -> (..., 4*hp), each gate zero-padded to hp lanes
        parts = []
        for g in range(4):
            blk = w[..., g * h:(g + 1) * h]
            parts.append(blk)
            parts.append(np.zeros(blk.shape[:-1] + (hp - h,), f32))
        return np.concatenate(parts, axis=-1)

    # ---- slab A : encoder LSTM (lane dim 4*HPE) ----
    enc_wih_p = pad_gate_cols(pnp["enc_wih"], HID, HPE)               # (2, 512)
    enc_whh_p = np.zeros((HPE, 4 * HPE), f32)
    enc_whh_p[:HID] = pad_gate_cols(pnp["enc_whh"], HID, HPE)
    enc_b_p = pad_gate_cols(pnp["enc_b"], HID, HPE)                   # (1, 512)
    slab_a = np.zeros((A_ROWS, 4 * HPE), f32)
    slab_a[A_WIH:A_WIH + IN_SIZE] = enc_wih_p
    slab_a[A_B] = enc_b_p[0]
    slab_a[A_WHH:A_WHH + HPE] = enc_whh_p

    # ---- slab B : decoder LSTM with feedback folded into the recurrent weight ----
    dec_wih_p = pad_gate_cols(pnp["dec_wih"], DEC_HID, DPAD)          # (2, 1024)
    dec_whh_p = np.zeros((DPAD, 4 * DPAD), f32)
    dec_whh_p[:DEC_HID] = pad_gate_cols(pnp["dec_whh"], DEC_HID, DPAD)
    dec_b_p = pad_gate_cols(pnp["dec_b"], DEC_HID, DPAD)              # (1, 1024)
    perm = [0, 2, 1, 3]          # [mux, sx, muy, sy] -> [mux, muy, sx, sy]; involution
    wout_pad = np.zeros((DPAD, OUT_W), f32)
    wout_pad[:DEC_HID, :2 * IN_SIZE] = pnp["dec_wout"][:, perm]
    bout_pad = np.zeros((1, OUT_W), f32)
    bout_pad[0, :2 * IN_SIZE] = pnp["dec_bout"][0, perm]
    dec_whh_fused = dec_whh_p + wout_pad[:, :IN_SIZE] @ dec_wih_p     # fold feedback
    dec_b_fused = dec_b_p + bout_pad[:, :IN_SIZE] @ dec_wih_p
    slab_b = np.zeros((B_ROWS, 4 * DPAD), f32)
    slab_b[B_WIH:B_WIH + IN_SIZE] = dec_wih_p
    slab_b[B_BF] = dec_b_fused[0]
    slab_b[B_WHHF:B_WHHF + DPAD] = dec_whh_fused

    # ---- slab C : dim_red expansion, output head, conv weight (lane dim 256) ----
    e_mat = np.zeros((HPE, DPAD), f32)
    for j in range(HID):
        e_mat[j, (j + 1) * RED:(j + 2) * RED] = 1.0
    e0 = np.zeros((DPAD,), f32)
    e0[:RED] = 1.0
    tile32 = np.zeros((EMB, DPAD), f32)
    for i in range(HID + 1):
        tile32[:RED, i * RED:(i + 1) * RED] = np.eye(RED, dtype=f32)
    redb_tiled = np.zeros((DPAD,), f32)
    redb_tiled[:(HID + 1) * RED] = np.tile(pnp["red_b"][0], HID + 1)

    slab_c = np.zeros((C_ROWS, DPAD), f32)
    slab_c[C_E:C_E + HPE] = e_mat
    slab_c[C_E0] = e0
    slab_c[C_TILE:C_TILE + EMB] = tile32
    slab_c[C_REDB] = redb_tiled
    slab_c[C_BOUT] = bout_pad[0]
    slab_c[C_BC:C_BC + F_CONV, 0] = pnp["vsn_bc"][0]
    slab_c[C_WCT:C_WCT + F_CONV, :K_PATCH] = pnp["vsn_wc"].T
    slab_c[C_WOUT:C_WOUT + DPAD] = wout_pad

    # ---- slab D : emb_out blocks + vision small weights (lane dim 32) ----
    slab_d = np.zeros((D_ROWS, EMB), f32)
    emb_w3 = pnp["emb_w"].reshape(T_OBS, HID, EMB)
    for t in range(T_OBS):
        slab_d[D_EMB + t * HPE:D_EMB + t * HPE + HID] = emb_w3[t]
    slab_d[D_EMBB] = pnp["emb_b"][0]
    wq_all = np.concatenate([pnp["vsn_wq"], pnp["vsn_wq2"],
                             pnp["vsn_wq4"], pnp["vsn_wq6"]], axis=1)  # (EMB+2, 32)
    slab_d[D_WQ:D_WQ + EMB] = wq_all[:EMB]
    slab_d[D_WQSP:D_WQSP + IN_SIZE] = wq_all[EMB:EMB + IN_SIZE]
    slab_d[D_WV2:D_WV2 + EMB] = pnp["vsn_wv2"][:EMB]
    slab_d[D_WV2SP:D_WV2SP + IN_SIZE] = pnp["vsn_wv2"][EMB:EMB + IN_SIZE]
    slab_d[D_WV1:D_WV1 + F_CONV] = pnp["vsn_wv1"]
    slab_d[D_BV] = pnp["vsn_bv"][0]
    slab_d[D_RW1:D_RW1 + VSN, :RED] = pnp["red_w"][1:]
    slab_d[D_RW0, :RED] = pnp["red_w"][0]

    return {"slabA": jnp.asarray(slab_a), "slabB": jnp.asarray(slab_b),
            "slabC": jnp.asarray(slab_c), "slabD": jnp.asarray(slab_d)}


@functools.partial(jax.jit, static_argnames=("train_mode",))
def seq2seq_forward(packed, input_tensor, visual_input_tensor, output_tensor,
                    train_mode=False):
    del output_tensor  # only used by teacher forcing / bst paths (not in eval)
    f32 = jnp.float32
    # startpoint_mode == 'on'
    start_point = input_tensor[:, 0, :]
    x_z = input_tensor.at[:, 0, :].set(0.0)
    dec_x0 = x_z[:, -1, :]

    xdata = jnp.zeros((B, XDATA_W), f32)
    xdata = xdata.at[:, X_ENC:X_ENC + T_OBS * IN_SIZE].set(
        x_z.reshape(B, T_OBS * IN_SIZE))
    xdata = xdata.at[:, X_SP:X_SP + IN_SIZE].set(start_point)
    xdata = xdata.at[:, X_DX0:X_DX0 + IN_SIZE].set(dec_x0)

    patches = im2col_t(visual_input_tensor)                  # (B, K_PATCH, P_SPAT)
    patches_t = jnp.zeros((B, K_PATCH, P_PAD), f32).at[:, :, :P_SPAT].set(patches)

    misc, attn_all, traj = run_seq2seq(xdata, patches_t, packed)

    so = traj[:, :2 * IN_SIZE].reshape(T_PRED, B, 2 * IN_SIZE)
    so = jnp.transpose(so, (1, 0, 2))                        # (B, T_pred, 4) [mux,muy,sx,sy]
    outputs = so[..., :IN_SIZE]                              # (B, T_pred, 2)
    stochastic_outputs = so[..., jnp.array([0, 2, 1, 3])]    # back to [mux,sx,muy,sy]

    enc_h = misc[:, OFF_EH:OFF_EH + HID]
    enc_c = misc[:, OFF_EC:OFF_EC + HID]
    vsn = misc[:, OFF_VSN:OFF_VSN + VSN]
    attn_rep = misc[:, OFF_AREP:OFF_AREP + F_CONV]
    dec_h = misc[:, OFF_DH:OFF_DH + DEC_HID]
    dec_c = misc[:, OFF_DC:OFF_DC + DEC_HID]

    attn2 = attn_all[:, 1, :P_SPAT]
    attn4 = attn_all[:, 2, :P_SPAT]
    attn6 = attn_all[:, 3, :P_SPAT]

    encoder_hidden = (enc_h[None], enc_c[None])              # (1, B, HID) each
    decoder_hidden = (dec_h[None], dec_c[None])              # (1, B, DEC_HID) each

    return (outputs, stochastic_outputs, encoder_hidden, decoder_hidden,
            vsn, attn_rep, attn2, attn4, attn6)


# =================================== main ====================================

if __name__ == "__main__":
    key = jax.random.PRNGKey(0)
    k_par, k_in, k_vis, k_out = jax.random.split(key, 4)

    params = init_params(k_par)
    packed = pack_params(params)

    input_tensor  = jax.random.normal(k_in,  (B, T_OBS, IN_SIZE), jnp.float32)
    visual_input  = jax.random.normal(k_vis, (B, C_IN, HS, WS),   jnp.float32)
    output_tensor = jax.random.normal(k_out, (B, T_PRED, IN_SIZE), jnp.float32)

    results = seq2seq_forward(packed, input_tensor, visual_input, output_tensor,
                              train_mode=False)
    jax.block_until_ready(results)

    outs, souts, enc_hid, dec_hid, vsn, a_rep, a2, a4, a6 = results
    assert outs.shape == (B, T_PRED, IN_SIZE)
    assert souts.shape == (B, T_PRED, 2 * IN_SIZE)
    assert enc_hid[0].shape == (1, B, HID) and enc_hid[1].shape == (1, B, HID)
    assert dec_hid[0].shape == (1, B, DEC_HID) and dec_hid[1].shape == (1, B, DEC_HID)
    assert vsn.shape == (B, VSN)
    assert a_rep.shape == (B, F_CONV)
    assert a2.shape == (B, P_SPAT) and a4.shape == (B, P_SPAT) and a6.shape == (B, P_SPAT)
    assert bool(jnp.all(jnp.isfinite(outs))) and bool(jnp.all(jnp.isfinite(souts)))
    # attention maps are exactly normalised over the 196 real positions
    assert bool(jnp.all(jnp.abs(jnp.sum(a2, axis=-1) - 1.0) < 1e-4))
    print("KERNEL_OK")
</pallas_src>

<mosaic_0001>
module attributes {stable_mosaic.version = 11 : i64} {
  func.func @seq2seq_kernel(%arg0: memref<2x128xf32, #tpu.memory_space<vmem>>, %arg1: memref<2x36x256xf32, #tpu.memory_space<vmem>>, %arg2: memref<144x512xf32, #tpu.memory_space<vmem>>, %arg3: memref<272x1024xf32, #tpu.memory_space<vmem>>, %arg4: memref<456x256xf32, #tpu.memory_space<vmem>>, %arg5: memref<1168x32xf32, #tpu.memory_space<vmem>>, %arg6: memref<2x896xf32, #tpu.memory_space<vmem>>, %arg7: memref<2x4x256xf32, #tpu.memory_space<vmem>>, %arg8: memref<16x256xf32, #tpu.memory_space<vmem>>) attributes {dimension_semantics = [], scalar_prefetch = 0 : i64, scratch_operands = 0 : i64, tpu.core_type = #tpu.core_type<tc>} {
    %cst = arith.constant 0.000000e+00 : f32
    %0 = vector.broadcast %cst : f32 to vector<2x896xf32>
    %c0 = arith.constant 0 : index
    %c0_0 = arith.constant 0 : index
    %1 = vector.load %arg6[%c0, %c0_0] : memref<2x896xf32, #tpu.memory_space<vmem>>, vector<2x896xf32>
    tpu.vector_store %arg6[%c0, %c0_0], %0 {strides = array<i32>} : memref<2x896xf32, #tpu.memory_space<vmem>>, vector<2x896xf32>,
    %c0_1 = arith.constant 0 : index
    %c0_2 = arith.constant 0 : index
    %2 = vector.load %arg0[%c0_1, %c0_2] : memref<2x128xf32, #tpu.memory_space<vmem>>, vector<2x128xf32>
    %c0_3 = arith.constant 0 : index
    %c0_4 = arith.constant 0 : index
    %3 = vector.load %arg2[%c0_3, %c0_4] : memref<144x512xf32, #tpu.memory_space<vmem>>, vector<1x512xf32>
    %c1 = arith.constant 1 : index
    %c0_5 = arith.constant 0 : index
    %4 = vector.load %arg2[%c1, %c0_5] : memref<144x512xf32, #tpu.memory_space<vmem>>, vector<1x512xf32>
    %c8 = arith.constant 8 : index
    %c0_6 = arith.constant 0 : index
    %5 = vector.load %arg2[%c8, %c0_6] : memref<144x512xf32, #tpu.memory_space<vmem>>, vector<1x512xf32>
    %c16 = arith.constant 16 : index
    %c0_7 = arith.constant 0 : index
    %6 = vector.load %arg2[%c16, %c0_7] : memref<144x512xf32, #tpu.memory_space<vmem>>, vector<128x512xf32>
    %cst_8 = arith.constant 0.000000e+00 : f32
    %7 = vector.broadcast %cst_8 : f32 to vector<2x128xf32>
    %cst_9 = arith.constant 0.000000e+00 : f32
    %8 = vector.broadcast %cst_9 : f32 to vector<2x128xf32>
    %cst_10 = arith.constant 0.000000e+00 : f32
    %9 = vector.broadcast %cst_10 : f32 to vector<2x32xf32>
    %10 = vector.extract_strided_slice %2 {offsets = [0, 0], sizes = [2, 1], strides = [1, 1]} : vector<2x128xf32> to vector<2x1xf32>
    %11 = vector.extract_strided_slice %2 {offsets = [0, 1], sizes = [2, 1], strides = [1, 1]} : vector<2x128xf32> to vector<2x1xf32>
    %12 = vector.broadcast %10 : vector<2x1xf32> to vector<2x512xf32>
    %13 = vector.broadcast %3 : vector<1x512xf32> to vector<2x512xf32>
    %14 = arith.mulf %12, %13 : vector<2x512xf32>
    %15 = vector.broadcast %11 : vector<2x1xf32> to vector<2x512xf32>
    %16 = vector.broadcast %4 : vector<1x512xf32> to vector<2x512xf32>
    %17 = arith.mulf %15, %16 : vector<2x512xf32>
    %18 = arith.addf %14, %17 : vector<2x512xf32>
    %cst_11 = arith.constant dense<0.000000e+00> : vector<2x512xf32>
    %19 = tpu.matmul %7, %6, %cst_11 {dimension_numbers = #tpu.dot_dimension_numbers<[1], [0], [0], [1], [0, 0, 1, 1], [], []>} : vector<2x128xf32>, vector<128x512xf32>, vector<2x512xf32> -> vector<2x512xf32>
    %20 = arith.addf %18, %19 : vector<2x512xf32>
    %21 = vector.broadcast %5 : vector<1x512xf32> to vector<2x512xf32>
    %22 = arith.addf %20, %21 : vector<2x512xf32>
    %23 = vector.extract_strided_slice %22 {offsets = [0, 0], sizes = [2, 128], strides = [1, 1]} : vector<2x512xf32> to vector<2x128xf32>
    %24 = arith.negf %23 : vector<2x128xf32>
    %25 = math.exp %24 : vector<2x128xf32>
    %cst_12 = arith.constant 1.000000e+00 : f32
    %26 = vector.broadcast %cst_12 : f32 to vector<2x128xf32>
    %27 = arith.addf %26, %25 : vector<2x128xf32>
    %28 = arith.divf %26, %27 : vector<2x128xf32>
    %29 = vector.extract_strided_slice %22 {offsets = [0, 128], sizes = [2, 128], strides = [1, 1]} : vector<2x512xf32> to vector<2x128xf32>
    %30 = arith.negf %29 : vector<2x128xf32>
    %31 = math.exp %30 : vector<2x128xf32>
    %cst_13 = arith.constant 1.000000e+00 : f32
    %32 = vector.broadcast %cst_13 : f32 to vector<2x128xf32>
    %33 = arith.addf %32, %31 : vector<2x128xf32>
    %34 = arith.divf %32, %33 : vector<2x128xf32>
    %35 = vector.extract_strided_slice %22 {offsets = [0, 256], sizes = [2, 128], strides = [1, 1]} : vector<2x512xf32> to vector<2x128xf32>
    %36 = math.tanh %35 : vector<2x128xf32>
    %37 = vector.extract_strided_slice %22 {offsets = [0, 384], sizes = [2, 128], strides = [1, 1]} : vector<2x512xf32> to vector<2x128xf32>
    %38 = arith.negf %37 : vector<2x128xf32>
    %39 = math.exp %38 : vector<2x128xf32>
    %cst_14 = arith.constant 1.000000e+00 : f32
    %40 = vector.broadcast %cst_14 : f32 to vector<2x128xf32>
    %41 = arith.addf %40, %39 : vector<2x128xf32>
    %42 = arith.divf %40, %41 : vector<2x128xf32>
    %43 = arith.mulf %34, %8 : vector<2x128xf32>
    %44 = arith.mulf %28, %36 : vector<2x128xf32>
    %45 = arith.addf %43, %44 : vector<2x128xf32>
    %46 = math.tanh %45 : vector<2x128xf32>
    %47 = arith.mulf %42, %46 : vector<2x128xf32>
    %c0_15 = arith.constant 0 : index
    %c0_16 = arith.constant 0 : index
    %48 = vector.load %arg5[%c0_15, %c0_16] : memref<1168x32xf32, #tpu.memory_space<vmem>>, vector<128x32xf32>
    %cst_17 = arith.constant dense<0.000000e+00> : vector<2x32xf32>
    %49 = tpu.matmul %47, %48, %cst_17 {dimension_numbers = #tpu.dot_dimension_numbers<[1], [0], [0], [1], [0, 0, 1, 1], [], []>} : vector<2x128xf32>, vector<128x32xf32>, vector<2x32xf32> -> vector<2x32xf32>
    %50 = arith.addf %9, %49 : vector<2x32xf32>
    %51 = vector.extract_strided_slice %2 {offsets = [0, 2], sizes = [2, 1], strides = [1, 1]} : vector<2x128xf32> to vector<2x1xf32>
    %52 = vector.extract_strided_slice %2 {offsets = [0, 3], sizes = [2, 1], strides = [1, 1]} : vector<2x128xf32> to vector<2x1xf32>
    %53 = vector.broadcast %51 : vector<2x1xf32> to vector<2x512xf32>
    %54 = vector.broadcast %3 : vector<1x512xf32> to vector<2x512xf32>
    %55 = arith.mulf %53, %54 : vector<2x512xf32>
    %56 = vector.broadcast %52 : vector<2x1xf32> to vector<2x512xf32>
    %57 = vector.broadcast %4 : vector<1x512xf32> to vector<2x512xf32>
    %58 = arith.mulf %56, %57 : vector<2x512xf32>
    %59 = arith.addf %55, %58 : vector<2x512xf32>
    %cst_18 = arith.constant dense<0.000000e+00> : vector<2x512xf32>
    %60 = tpu.matmul %47, %6, %cst_18 {dimension_numbers = #tpu.dot_dimension_numbers<[1], [0], [0], [1], [0, 0, 1, 1], [], []>} : vector<2x128xf32>, vector<128x512xf32>, vector<2x512xf32> -> vector<2x512xf32>
    %61 = arith.addf %59, %60 : vector<2x512xf32>
    %62 = vector.broadcast %5 : vector<1x512xf32> to vector<2x512xf32>
    %63 = arith.addf %61, %62 : vector<2x512xf32>
    %64 = vector.extract_strided_slice %63 {offsets = [0, 0], sizes = [2, 128], strides = [1, 1]} : vector<2x512xf32> to vector<2x128xf32>
    %65 = arith.negf %64 : vector<2x128xf32>
    %66 = math.exp %65 : vector<2x128xf32>
    %cst_19 = arith.constant 1.000000e+00 : f32
    %67 = vector.broadcast %cst_19 : f32 to vector<2x128xf32>
    %68 = arith.addf %67, %66 : vector<2x128xf32>
    %69 = arith.divf %67, %68 : vector<2x128xf32>
    %70 = vector.extract_strided_slice %63 {offsets = [0, 128], sizes = [2, 128], strides = [1, 1]} : vector<2x512xf32> to vector<2x128xf32>
    %71 = arith.negf %70 : vector<2x128xf32>
    %72 = math.exp %71 : vector<2x128xf32>
    %cst_20 = arith.constant 1.000000e+00 : f32
    %73 = vector.broadcast %cst_20 : f32 to vector<2x128xf32>
    %74 = arith.addf %73, %72 : vector<2x128xf32>
    %75 = arith.divf %73, %74 : vector<2x128xf32>
    %76 = vector.extract_strided_slice %63 {offsets = [0, 256], sizes = [2, 128], strides = [1, 1]} : vector<2x512xf32> to vector<2x128xf32>
    %77 = math.tanh %76 : vector<2x128xf32>
    %78 = vector.extract_strided_slice %63 {offsets = [0, 384], sizes = [2, 128], strides = [1, 1]} : vector<2x512xf32> to vector<2x128xf32>
    %79 = arith.negf %78 : vector<2x128xf32>
    %80 = math.exp %79 : vector<2x128xf32>
    %cst_21 = arith.constant 1.000000e+00 : f32
    %81 = vector.broadcast %cst_21 : f32 to vector<2x128xf32>
    %82 = arith.addf %81, %80 : vector<2x128xf32>
    %83 = arith.divf %81, %82 : vector<2x128xf32>
    %84 = arith.mulf %75, %45 : vector<2x128xf32>
    %85 = arith.mulf %69, %77 : vector<2x128xf32>
    %86 = arith.addf %84, %85 : vector<2x128xf32>
    %87 = math.tanh %86 : vector<2x128xf32>
    %88 = arith.mulf %83, %87 : vector<2x128xf32>
    %c128 = arith.constant 128 : index
    %c0_22 = arith.constant 0 : index
    %89 = vector.load %arg5[%c128, %c0_22] : memref<1168x32xf32, #tpu.memory_space<vmem>>, vector<128x32xf32>
    %cst_23 = arith.constant dense<0.000000e+00> : vector<2x32xf32>
    %90 = tpu.matmul %88, %89, %cst_23 {dimension_numbers = #tpu.dot_dimension_numbers<[1], [0], [0], [1], [0, 0, 1, 1], [], []>} : vector<2x128xf32>, vector<128x32xf32>, vector<2x32xf32> -> vector<2x32xf32>
    %91 = arith.addf %50, %90 : vector<2x32xf32>
    %92 = vector.extract_strided_slice %2 {offsets = [0, 4], sizes = [2, 1], strides = [1, 1]} : vector<2x128xf32> to vector<2x1xf32>
    %93 = vector.extract_strided_slice %2 {offsets = [0, 5], sizes = [2, 1], strides = [1, 1]} : vector<2x128xf32> to vector<2x1xf32>
    %94 = vector.broadcast %92 : vector<2x1xf32> to vector<2x512xf32>
    %95 = vector.broadcast %3 : vector<1x512xf32> to vector<2x512xf32>
    %96 = arith.mulf %94, %95 : vector<2x512xf32>
    %97 = vector.broadcast %93 : vector<2x1xf32> to vector<2x512xf32>
    %98 = vector.broadcast %4 : vector<1x512xf32> to vector<2x512xf32>
    %99 = arith.mulf %97, %98 : vector<2x512xf32>
    %100 = arith.addf %96, %99 : vector<2x512xf32>
    %cst_24 = arith.constant dense<0.000000e+00> : vector<2x512xf32>
    %101 = tpu.matmul %88, %6, %cst_24 {dimension_numbers = #tpu.dot_dimension_numbers<[1], [0], [0], [1], [0, 0, 1, 1], [], []>} : vector<2x128xf32>, vector<128x512xf32>, vector<2x512xf32> -> vector<2x512xf32>
    %102 = arith.addf %100, %101 : vector<2x512xf32>
    %103 = vector.broadcast %5 : vector<1x512xf32> to vector<2x512xf32>
    %104 = arith.addf %102, %103 : vector<2x512xf32>
    %105 = vector.extract_strided_slice %104 {offsets = [0, 0], sizes = [2, 128], strides = [1, 1]} : vector<2x512xf32> to vector<2x128xf32>
    %106 = arith.negf %105 : vector<2x128xf32>
    %107 = math.exp %106 : vector<2x128xf32>
    %cst_25 = arith.constant 1.000000e+00 : f32
    %108 = vector.broadcast %cst_25 : f32 to vector<2x128xf32>
    %109 = arith.addf %108, %107 : vector<2x128xf32>
    %110 = arith.divf %108, %109 : vector<2x128xf32>
    %111 = vector.extract_strided_slice %104 {offsets = [0, 128], sizes = [2, 128], strides = [1, 1]} : vector<2x512xf32> to vector<2x128xf32>
    %112 = arith.negf %111 : vector<2x128xf32>
    %113 = math.exp %112 : vector<2x128xf32>
    %cst_26 = arith.constant 1.000000e+00 : f32
    %114 = vector.broadcast %cst_26 : f32 to vector<2x128xf32>
    %115 = arith.addf %114, %113 : vector<2x128xf32>
    %116 = arith.divf %114, %115 : vector<2x128xf32>
    %117 = vector.extract_strided_slice %104 {offsets = [0, 256], sizes = [2, 128], strides = [1, 1]} : vector<2x512xf32> to vector<2x128xf32>
    %118 = math.tanh %117 : vector<2x128xf32>
    %119 = vector.extract_strided_slice %104 {offsets = [0, 384], sizes = [2, 128], strides = [1, 1]} : vector<2x512xf32> to vector<2x128xf32>
    %120 = arith.negf %119 : vector<2x128xf32>
    %121 = math.exp %120 : vector<2x128xf32>
    %cst_27 = arith.constant 1.000000e+00 : f32
    %122 = vector.broadcast %cst_27 : f32 to vector<2x128xf32>
    %123 = arith.addf %122, %121 : vector<2x128xf32>
    %124 = arith.divf %122, %123 : vector<2x128xf32>
    %125 = arith.mulf %116, %86 : vector<2x128xf32>
    %126 = arith.mulf %110, %118 : vector<2x128xf32>
    %127 = arith.addf %125, %126 : vector<2x128xf32>
    %128 = math.tanh %127 : vector<2x128xf32>
    %129 = arith.mulf %124, %128 : vector<2x128xf32>
    %c256 = arith.constant 256 : index
    %c0_28 = arith.constant 0 : index
    %130 = vector.load %arg5[%c256, %c0_28] : memref<1168x32xf32, #tpu.memory_space<vmem>>, vector<128x32xf32>
    %cst_29 = arith.constant dense<0.000000e+00> : vector<2x32xf32>
    %131 = tpu.matmul %129, %130, %cst_29 {dimension_numbers = #tpu.dot_dimension_numbers<[1], [0], [0], [1], [0, 0, 1, 1], [], []>} : vector<2x128xf32>, vector<128x32xf32>, vector<2x32xf32> -> vector<2x32xf32>
    %132 = arith.addf %91, %131 : vector<2x32xf32>
    %133 = vector.extract_strided_slice %2 {offsets = [0, 6], sizes = [2, 1], strides = [1, 1]} : vector<2x128xf32> to vector<2x1xf32>
    %134 = vector.extract_strided_slice %2 {offsets = [0, 7], sizes = [2, 1], strides = [1, 1]} : vector<2x128xf32> to vector<2x1xf32>
    %135 = vector.broadcast %133 : vector<2x1xf32> to vector<2x512xf32>
    %136 = vector.broadcast %3 : vector<1x512xf32> to vector<2x512xf32>
    %137 = arith.mulf %135, %136 : vector<2x512xf32>
    %138 = vector.broadcast %134 : vector<2x1xf32> to vector<2x512xf32>
    %139 = vector.broadcast %4 : vector<1x512xf32> to vector<2x512xf32>
    %140 = arith.mulf %138, %139 : vector<2x512xf32>
    %141 = arith.addf %137, %140 : vector<2x512xf32>
    %cst_30 = arith.constant dense<0.000000e+00> : vector<2x512xf32>
    %142 = tpu.matmul %129, %6, %cst_30 {dimension_numbers = #tpu.dot_dimension_numbers<[1], [0], [0], [1], [0, 0, 1, 1], [], []>} : vector<2x128xf32>, vector<128x512xf32>, vector<2x512xf32> -> vector<2x512xf32>
    %143 = arith.addf %141, %142 : vector<2x512xf32>
    %144 = vector.broadcast %5 : vector<1x512xf32> to vector<2x512xf32>
    %145 = arith.addf %143, %144 : vector<2x512xf32>
    %146 = vector.extract_strided_slice %145 {offsets = [0, 0], sizes = [2, 128], strides = [1, 1]} : vector<2x512xf32> to vector<2x128xf32>
    %147 = arith.negf %146 : vector<2x128xf32>
    %148 = math.exp %147 : vector<2x128xf32>
    %cst_31 = arith.constant 1.000000e+00 : f32
    %149 = vector.broadcast %cst_31 : f32 to vector<2x128xf32>
    %150 = arith.addf %149, %148 : vector<2x128xf32>
    %151 = arith.divf %149, %150 : vector<2x128xf32>
    %152 = vector.extract_strided_slice %145 {offsets = [0, 128], sizes = [2, 128], strides = [1, 1]} : vector<2x512xf32> to vector<2x128xf32>
    %153 = arith.negf %152 : vector<2x128xf32>
    %154 = math.exp %153 : vector<2x128xf32>
    %cst_32 = arith.constant 1.000000e+00 : f32
    %155 = vector.broadcast %cst_32 : f32 to vector<2x128xf32>
    %156 = arith.addf %155, %154 : vector<2x128xf32>
    %157 = arith.divf %155, %156 : vector<2x128xf32>
    %158 = vector.extract_strided_slice %145 {offsets = [0, 256], sizes = [2, 128], strides = [1, 1]} : vector<2x512xf32> to vector<2x128xf32>
    %159 = math.tanh %158 : vector<2x128xf32>
    %160 = vector.extract_strided_slice %145 {offsets = [0, 384], sizes = [2, 128], strides = [1, 1]} : vector<2x512xf32> to vector<2x128xf32>
    %161 = arith.negf %160 : vector<2x128xf32>
    %162 = math.exp %161 : vector<2x128xf32>
    %cst_33 = arith.constant 1.000000e+00 : f32
    %163 = vector.broadcast %cst_33 : f32 to vector<2x128xf32>
    %164 = arith.addf %163, %162 : vector<2x128xf32>
    %165 = arith.divf %163, %164 : vector<2x128xf32>
    %166 = arith.mulf %157, %127 : vector<2x128xf32>
    %167 = arith.mulf %151, %159 : vector<2x128xf32>
    %168 = arith.addf %166, %167 : vector<2x128xf32>
    %169 = math.tanh %168 : vector<2x128xf32>
    %170 = arith.mulf %165, %169 : vector<2x128xf32>
    %c384 = arith.constant 384 : index
    %c0_34 = arith.constant 0 : index
    %171 = vector.load %arg5[%c384, %c0_34] : memref<1168x32xf32, #tpu.memory_space<vmem>>, vector<128x32xf32>
    %cst_35 = arith.constant dense<0.000000e+00> : vector<2x32xf32>
    %172 = tpu.matmul %170, %171, %cst_35 {dimension_numbers = #tpu.dot_dimension_numbers<[1], [0], [0], [1], [0, 0, 1, 1], [], []>} : vector<2x128xf32>, vector<128x32xf32>, vector<2x32xf32> -> vector<2x32xf32>
    %173 = arith.addf %132, %172 : vector<2x32xf32>
    %174 = vector.extract_strided_slice %2 {offsets = [0, 8], sizes = [2, 1], strides = [1, 1]} : vector<2x128xf32> to vector<2x1xf32>
    %175 = vector.extract_strided_slice %2 {offsets = [0, 9], sizes = [2, 1], strides = [1, 1]} : vector<2x128xf32> to vector<2x1xf32>
    %176 = vector.broadcast %174 : vector<2x1xf32> to vector<2x512xf32>
    %177 = vector.broadcast %3 : vector<1x512xf32> to vector<2x512xf32>
    %178 = arith.mulf %176, %177 : vector<2x512xf32>
    %179 = vector.broadcast %175 : vector<2x1xf32> to vector<2x512xf32>
    %180 = vector.broadcast %4 : vector<1x512xf32> to vector<2x512xf32>
    %181 = arith.mulf %179, %180 : vector<2x512xf32>
    %182 = arith.addf %178, %181 : vector<2x512xf32>
    %cst_36 = arith.constant dense<0.000000e+00> : vector<2x512xf32>
    %183 = tpu.matmul %170, %6, %cst_36 {dimension_numbers = #tpu.dot_dimension_numbers<[1], [0], [0], [1], [0, 0, 1, 1], [], []>} : vector<2x128xf32>, vector<128x512xf32>, vector<2x512xf32> -> vector<2x512xf32>
    %184 = arith.addf %182, %183 : vector<2x512xf32>
    %185 = vector.broadcast %5 : vector<1x512xf32> to vector<2x512xf32>
    %186 = arith.addf %184, %185 : vector<2x512xf32>
    %187 = vector.extract_strided_slice %186 {offsets = [0, 0], sizes = [2, 128], strides = [1, 1]} : vector<2x512xf32> to vector<2x128xf32>
    %188 = arith.negf %187 : vector<2x128xf32>
    %189 = math.exp %188 : vector<2x128xf32>
    %cst_37 = arith.constant 1.000000e+00 : f32
    %190 = vector.broadcast %cst_37 : f32 to vector<2x128xf32>
    %191 = arith.addf %190, %189 : vector<2x128xf32>
    %192 = arith.divf %190, %191 : vector<2x128xf32>
    %193 = vector.extract_strided_slice %186 {offsets = [0, 128], sizes = [2, 128], strides = [1, 1]} : vector<2x512xf32> to vector<2x128xf32>
    %194 = arith.negf %193 : vector<2x128xf32>
    %195 = math.exp %194 : vector<2x128xf32>
    %cst_38 = arith.constant 1.000000e+00 : f32
    %196 = vector.broadcast %cst_38 : f32 to vector<2x128xf32>
    %197 = arith.addf %196, %195 : vector<2x128xf32>
    %198 = arith.divf %196, %197 : vector<2x128xf32>
    %199 = vector.extract_strided_slice %186 {offsets = [0, 256], sizes = [2, 128], strides = [1, 1]} : vector<2x512xf32> to vector<2x128xf32>
    %200 = math.tanh %199 : vector<2x128xf32>
    %201 = vector.extract_strided_slice %186 {offsets = [0, 384], sizes = [2, 128], strides = [1, 1]} : vector<2x512xf32> to vector<2x128xf32>
    %202 = arith.negf %201 : vector<2x128xf32>
    %203 = math.exp %202 : vector<2x128xf32>
    %cst_39 = arith.constant 1.000000e+00 : f32
    %204 = vector.broadcast %cst_39 : f32 to vector<2x128xf32>
    %205 = arith.addf %204, %203 : vector<2x128xf32>
    %206 = arith.divf %204, %205 : vector<2x128xf32>
    %207 = arith.mulf %198, %168 : vector<2x128xf32>
    %208 = arith.mulf %192, %200 : vector<2x128xf32>
    %209 = arith.addf %207, %208 : vector<2x128xf32>
    %210 = math.tanh %209 : vector<2x128xf32>
    %211 = arith.mulf %206, %210 : vector<2x128xf32>
    %c512 = arith.constant 512 : index
    %c0_40 = arith.constant 0 : index
    %212 = vector.load %arg5[%c512, %c0_40] : memref<1168x32xf32, #tpu.memory_space<vmem>>, vector<128x32xf32>
    %cst_41 = arith.constant dense<0.000000e+00> : vector<2x32xf32>
    %213 = tpu.matmul %211, %212, %cst_41 {dimension_numbers = #tpu.dot_dimension_numbers<[1], [0], [0], [1], [0, 0, 1, 1], [], []>} : vector<2x128xf32>, vector<128x32xf32>, vector<2x32xf32> -> vector<2x32xf32>
    %214 = arith.addf %173, %213 : vector<2x32xf32>
    %215 = vector.extract_strided_slice %2 {offsets = [0, 10], sizes = [2, 1], strides = [1, 1]} : vector<2x128xf32> to vector<2x1xf32>
    %216 = vector.extract_strided_slice %2 {offsets = [0, 11], sizes = [2, 1], strides = [1, 1]} : vector<2x128xf32> to vector<2x1xf32>
    %217 = vector.broadcast %215 : vector<2x1xf32> to vector<2x512xf32>
    %218 = vector.broadcast %3 : vector<1x512xf32> to vector<2x512xf32>
    %219 = arith.mulf %217, %218 : vector<2x512xf32>
    %220 = vector.broadcast %216 : vector<2x1xf32> to vector<2x512xf32>
    %221 = vector.broadcast %4 : vector<1x512xf32> to vector<2x512xf32>
    %222 = arith.mulf %220, %221 : vector<2x512xf32>
    %223 = arith.addf %219, %222 : vector<2x512xf32>
    %cst_42 = arith.constant dense<0.000000e+00> : vector<2x512xf32>
    %224 = tpu.matmul %211, %6, %cst_42 {dimension_numbers = #tpu.dot_dimension_numbers<[1], [0], [0], [1], [0, 0, 1, 1], [], []>} : vector<2x128xf32>, vector<128x512xf32>, vector<2x512xf32> -> vector<2x512xf32>
    %225 = arith.addf %223, %224 : vector<2x512xf32>
    %226 = vector.broadcast %5 : vector<1x512xf32> to vector<2x512xf32>
    %227 = arith.addf %225, %226 : vector<2x512xf32>
    %228 = vector.extract_strided_slice %227 {offsets = [0, 0], sizes = [2, 128], strides = [1, 1]} : vector<2x512xf32> to vector<2x128xf32>
    %229 = arith.negf %228 : vector<2x128xf32>
    %230 = math.exp %229 : vector<2x128xf32>
    %cst_43 = arith.constant 1.000000e+00 : f32
    %231 = vector.broadcast %cst_43 : f32 to vector<2x128xf32>
    %232 = arith.addf %231, %230 : vector<2x128xf32>
    %233 = arith.divf %231, %232 : vector<2x128xf32>
    %234 = vector.extract_strided_slice %227 {offsets = [0, 128], sizes = [2, 128], strides = [1, 1]} : vector<2x512xf32> to vector<2x128xf32>
    %235 = arith.negf %234 : vector<2x128xf32>
    %236 = math.exp %235 : vector<2x128xf32>
    %cst_44 = arith.constant 1.000000e+00 : f32
    %237 = vector.broadcast %cst_44 : f32 to vector<2x128xf32>
    %238 = arith.addf %237, %236 : vector<2x128xf32>
    %239 = arith.divf %237, %238 : vector<2x128xf32>
    %240 = vector.extract_strided_slice %227 {offsets = [0, 256], sizes = [2, 128], strides = [1, 1]} : vector<2x512xf32> to vector<2x128xf32>
    %241 = math.tanh %240 : vector<2x128xf32>
    %242 = vector.extract_strided_slice %227 {offsets = [0, 384], sizes = [2, 128], strides = [1, 1]} : vector<2x512xf32> to vector<2x128xf32>
    %243 = arith.negf %242 : vector<2x128xf32>
    %244 = math.exp %243 : vector<2x128xf32>
    %cst_45 = arith.constant 1.000000e+00 : f32
    %245 = vector.broadcast %cst_45 : f32 to vector<2x128xf32>
    %246 = arith.addf %245, %244 : vector<2x128xf32>
    %247 = arith.divf %245, %246 : vector<2x128xf32>
    %248 = arith.mulf %239, %209 : vector<2x128xf32>
    %249 = arith.mulf %233, %241 : vector<2x128xf32>
    %250 = arith.addf %248, %249 : vector<2x128xf32>
    %251 = math.tanh %250 : vector<2x128xf32>
    %252 = arith.mulf %247, %251 : vector<2x128xf32>
    %c640 = arith.constant 640 : index
    %c0_46 = arith.constant 0 : index
    %253 = vector.load %arg5[%c640, %c0_46] : memref<1168x32xf32, #tpu.memory_space<vmem>>, vector<128x32xf32>
    %cst_47 = arith.constant dense<0.000000e+00> : vector<2x32xf32>
    %254 = tpu.matmul %252, %253, %cst_47 {dimension_numbers = #tpu.dot_dimension_numbers<[1], [0], [0], [1], [0, 0, 1, 1], [], []>} : vector<2x128xf32>, vector<128x32xf32>, vector<2x32xf32> -> vector<2x32xf32>
    %255 = arith.addf %214, %254 : vector<2x32xf32>
    %256 = vector.extract_strided_slice %2 {offsets = [0, 12], sizes = [2, 1], strides = [1, 1]} : vector<2x128xf32> to vector<2x1xf32>
    %257 = vector.extract_strided_slice %2 {offsets = [0, 13], sizes = [2, 1], strides = [1, 1]} : vector<2x128xf32> to vector<2x1xf32>
    %258 = vector.broadcast %256 : vector<2x1xf32> to vector<2x512xf32>
    %259 = vector.broadcast %3 : vector<1x512xf32> to vector<2x512xf32>
    %260 = arith.mulf %258, %259 : vector<2x512xf32>
    %261 = vector.broadcast %257 : vector<2x1xf32> to vector<2x512xf32>
    %262 = vector.broadcast %4 : vector<1x512xf32> to vector<2x512xf32>
    %263 = arith.mulf %261, %262 : vector<2x512xf32>
    %264 = arith.addf %260, %263 : vector<2x512xf32>
    %cst_48 = arith.constant dense<0.000000e+00> : vector<2x512xf32>
    %265 = tpu.matmul %252, %6, %cst_48 {dimension_numbers = #tpu.dot_dimension_numbers<[1], [0], [0], [1], [0, 0, 1, 1], [], []>} : vector<2x128xf32>, vector<128x512xf32>, vector<2x512xf32> -> vector<2x512xf32>
    %266 = arith.addf %264, %265 : vector<2x512xf32>
    %267 = vector.broadcast %5 : vector<1x512xf32> to vector<2x512xf32>
    %268 = arith.addf %266, %267 : vector<2x512xf32>
    %269 = vector.extract_strided_slice %268 {offsets = [0, 0], sizes = [2, 128], strides = [1, 1]} : vector<2x512xf32> to vector<2x128xf32>
    %270 = arith.negf %269 : vector<2x128xf32>
    %271 = math.exp %270 : vector<2x128xf32>
    %cst_49 = arith.constant 1.000000e+00 : f32
    %272 = vector.broadcast %cst_49 : f32 to vector<2x128xf32>
    %273 = arith.addf %272, %271 : vector<2x128xf32>
    %274 = arith.divf %272, %273 : vector<2x128xf32>
    %275 = vector.extract_strided_slice %268 {offsets = [0, 128], sizes = [2, 128], strides = [1, 1]} : vector<2x512xf32> to vector<2x128xf32>
    %276 = arith.negf %275 : vector<2x128xf32>
    %277 = math.exp %276 : vector<2x128xf32>
    %cst_50 = arith.constant 1.000000e+00 : f32
    %278 = vector.broadcast %cst_50 : f32 to vector<2x128xf32>
    %279 = arith.addf %278, %277 : vector<2x128xf32>
    %280 = arith.divf %278, %279 : vector<2x128xf32>
    %281 = vector.extract_strided_slice %268 {offsets = [0, 256], sizes = [2, 128], strides = [1, 1]} : vector<2x512xf32> to vector<2x128xf32>
    %282 = math.tanh %281 : vector<2x128xf32>
    %283 = vector.extract_strided_slice %268 {offsets = [0, 384], sizes = [2, 128], strides = [1, 1]} : vector<2x512xf32> to vector<2x128xf32>
    %284 = arith.negf %283 : vector<2x128xf32>
    %285 = math.exp %284 : vector<2x128xf32>
    %cst_51 = arith.constant 1.000000e+00 : f32
    %286 = vector.broadcast %cst_51 : f32 to vector<2x128xf32>
    %287 = arith.addf %286, %285 : vector<2x128xf32>
    %288 = arith.divf %286, %287 : vector<2x128xf32>
    %289 = arith.mulf %280, %250 : vector<2x128xf32>
    %290 = arith.mulf %274, %282 : vector<2x128xf32>
    %291 = arith.addf %289, %290 : vector<2x128xf32>
    %292 = math.tanh %291 : vector<2x128xf32>
    %293 = arith.mulf %288, %292 : vector<2x128xf32>
    %c768 = arith.constant 768 : index
    %c0_52 = arith.constant 0 : index
    %294 = vector.load %arg5[%c768, %c0_52] : memref<1168x32xf32, #tpu.memory_space<vmem>>, vector<128x32xf32>
    %cst_53 = arith.constant dense<0.000000e+00> : vector<2x32xf32>
    %295 = tpu.matmul %293, %294, %cst_53 {dimension_numbers = #tpu.dot_dimension_numbers<[1], [0], [0], [1], [0, 0, 1, 1], [], []>} : vector<2x128xf32>, vector<128x32xf32>, vector<2x32xf32> -> vector<2x32xf32>
    %296 = arith.addf %255, %295 : vector<2x32xf32>
    %297 = vector.extract_strided_slice %2 {offsets = [0, 14], sizes = [2, 1], strides = [1, 1]} : vector<2x128xf32> to vector<2x1xf32>
    %298 = vector.extract_strided_slice %2 {offsets = [0, 15], sizes = [2, 1], strides = [1, 1]} : vector<2x128xf32> to vector<2x1xf32>
    %299 = vector.broadcast %297 : vector<2x1xf32> to vector<2x512xf32>
    %300 = vector.broadcast %3 : vector<1x512xf32> to vector<2x512xf32>
    %301 = arith.mulf %299, %300 : vector<2x512xf32>
    %302 = vector.broadcast %298 : vector<2x1xf32> to vector<2x512xf32>
    %303 = vector.broadcast %4 : vector<1x512xf32> to vector<2x512xf32>
    %304 = arith.mulf %302, %303 : vector<2x512xf32>
    %305 = arith.addf %301, %304 : vector<2x512xf32>
    %cst_54 = arith.constant dense<0.000000e+00> : vector<2x512xf32>
    %306 = tpu.matmul %293, %6, %cst_54 {dimension_numbers = #tpu.dot_dimension_numbers<[1], [0], [0], [1], [0, 0, 1, 1], [], []>} : vector<2x128xf32>, vector<128x512xf32>, vector<2x512xf32> -> vector<2x512xf32>
    %307 = arith.addf %305, %306 : vector<2x512xf32>
    %308 = vector.broadcast %5 : vector<1x512xf32> to vector<2x512xf32>
    %309 = arith.addf %307, %308 : vector<2x512xf32>
    %310 = vector.extract_strided_slice %309 {offsets = [0, 0], sizes = [2, 128], strides = [1, 1]} : vector<2x512xf32> to vector<2x128xf32>
    %311 = arith.negf %310 : vector<2x128xf32>
    %312 = math.exp %311 : vector<2x128xf32>
    %cst_55 = arith.constant 1.000000e+00 : f32
    %313 = vector.broadcast %cst_55 : f32 to vector<2x128xf32>
    %314 = arith.addf %313, %312 : vector<2x128xf32>
    %315 = arith.divf %313, %314 : vector<2x128xf32>
    %316 = vector.extract_strided_slice %309 {offsets = [0, 128], sizes = [2, 128], strides = [1, 1]} : vector<2x512xf32> to vector<2x128xf32>
    %317 = arith.negf %316 : vector<2x128xf32>
    %318 = math.exp %317 : vector<2x128xf32>
    %cst_56 = arith.constant 1.000000e+00 : f32
    %319 = vector.broadcast %cst_56 : f32 to vector<2x128xf32>
    %320 = arith.addf %319, %318 : vector<2x128xf32>
    %321 = arith.divf %319, %320 : vector<2x128xf32>
    %322 = vector.extract_strided_slice %309 {offsets = [0, 256], sizes = [2, 128], strides = [1, 1]} : vector<2x512xf32> to vector<2x128xf32>
    %323 = math.tanh %322 : vector<2x128xf32>
    %324 = vector.extract_strided_slice %309 {offsets = [0, 384], sizes = [2, 128], strides = [1, 1]} : vector<2x512xf32> to vector<2x128xf32>
    %325 = arith.negf %324 : vector<2x128xf32>
    %326 = math.exp %325 : vector<2x128xf32>
    %cst_57 = arith.constant 1.000000e+00 : f32
    %327 = vector.broadcast %cst_57 : f32 to vector<2x128xf32>
    %328 = arith.addf %327, %326 : vector<2x128xf32>
    %329 = arith.divf %327, %328 : vector<2x128xf32>
    %330 = arith.mulf %321, %291 : vector<2x128xf32>
    %331 = arith.mulf %315, %323 : vector<2x128xf32>
    %332 = arith.addf %330, %331 : vector<2x128xf32>
    %333 = math.tanh %332 : vector<2x128xf32>
    %334 = arith.mulf %329, %333 : vector<2x128xf32>
    %c896 = arith.constant 896 : index
    %c0_58 = arith.constant 0 : index
    %335 = vector.load %arg5[%c896, %c0_58] : memref<1168x32xf32, #tpu.memory_space<vmem>>, vector<128x32xf32>
    %cst_59 = arith.constant dense<0.000000e+00> : vector<2x32xf32>
    %336 = tpu.matmul %334, %335, %cst_59 {dimension_numbers = #tpu.dot_dimension_numbers<[1], [0], [0], [1], [0, 0, 1, 1], [], []>} : vector<2x128xf32>, vector<128x32xf32>, vector<2x32xf32> -> vector<2x32xf32>
    %337 = arith.addf %296, %336 : vector<2x32xf32>
    %c1024 = arith.constant 1024 : index
    %c0_60 = arith.constant 0 : index
    %338 = vector.load %arg5[%c1024, %c0_60] : memref<1168x32xf32, #tpu.memory_space<vmem>>, vector<1x32xf32>
    %339 = vector.broadcast %338 : vector<1x32xf32> to vector<2x32xf32>
    %340 = arith.addf %337, %339 : vector<2x32xf32>
    %c0_61 = arith.constant 0 : index
    %c0_62 = arith.constant 0 : index
    %341 = vector.load %arg6[%c0_61, %c0_62] : memref<2x896xf32, #tpu.memory_space<vmem>>, vector<2x128xf32>
    tpu.vector_store %arg6[%c0_61, %c0_62], %334 {strides = array<i32>} : memref<2x896xf32, #tpu.memory_space<vmem>>, vector<2x128xf32>,
    %c0_63 = arith.constant 0 : index
    %c128_64 = arith.constant 128 : index
    %342 = vector.load %arg6[%c0_63, %c128_64] : memref<2x896xf32, #tpu.memory_space<vmem>>, vector<2x128xf32>
    tpu.vector_store %arg6[%c0_63, %c128_64], %332 {strides = array<i32>} : memref<2x896xf32, #tpu.memory_space<vmem>>, vector<2x128xf32>,
    %343 = vector.extract_strided_slice %2 {offsets = [0, 16], sizes = [2, 1], strides = [1, 1]} : vector<2x128xf32> to vector<2x1xf32>
    %344 = vector.extract_strided_slice %2 {offsets = [0, 17], sizes = [2, 1], strides = [1, 1]} : vector<2x128xf32> to vector<2x1xf32>
    %c192 = arith.constant 192 : index
    %c0_65 = arith.constant 0 : index
    %345 = vector.load %arg4[%c192, %c0_65] : memref<456x256xf32, #tpu.memory_space<vmem>>, vector<8x36xf32>
    %c184 = arith.constant 184 : index
    %c0_66 = arith.constant 0 : index
    %346 = vector.load %arg4[%c184, %c0_66] : memref<456x256xf32, #tpu.memory_space<vmem>>, vector<8x1xf32>
    %c0_67 = arith.constant 0 : index
    %c0_68 = arith.constant 0 : index
    %c0_69 = arith.constant 0 : index
    %347 = vector.load %arg1[%c0_67, %c0_68, %c0_69] : memref<2x36x256xf32, #tpu.memory_space<vmem>>, vector<1x36x256xf32>
    %348 = vector.shape_cast %347 : vector<1x36x256xf32> to vector<36x256xf32>
    %cst_70 = arith.constant dense<0.000000e+00> : vector<8x256xf32>
    %349 = tpu.matmul %345, %348, %cst_70 {dimension_numbers = #tpu.dot_dimension_numbers<[1], [0], [0], [1], [0, 0, 1, 1], [], []>} : vector<8x36xf32>, vector<36x256xf32>, vector<8x256xf32> -> vector<8x256xf32>
    %350 = vector.broadcast %346 : vector<8x1xf32> to vector<8x256xf32>
    %351 = arith.addf %349, %350 : vector<8x256xf32>
    %cst_71 = arith.constant 0.000000e+00 : f32
    %352 = vector.broadcast %cst_71 : f32 to vector<8x256xf32>
    %353 = arith.maximumf %351, %352 : vector<8x256xf32>
    %c1_72 = arith.constant 1 : index
    %c0_73 = arith.constant 0 : index
    %c0_74 = arith.constant 0 : index
    %354 = vector.load %arg1[%c1_72, %c0_73, %c0_74] : memref<2x36x256xf32, #tpu.memory_space<vmem>>, vector<1x36x256xf32>
    %355 = vector.shape_cast %354 : vector<1x36x256xf32> to vector<36x256xf32>
    %cst_75 = arith.constant dense<0.000000e+00> : vector<8x256xf32>
    %356 = tpu.matmul %345, %355, %cst_75 {dimension_numbers = #tpu.dot_dimension_numbers<[1], [0], [0], [1], [0, 0, 1, 1], [], []>} : vector<8x36xf32>, vector<36x256xf32>, vector<8x256xf32> -> vector<8x256xf32>
    %357 = vector.broadcast %346 : vector<8x1xf32> to vector<8x256xf32>
    %358 = arith.addf %356, %357 : vector<8x256xf32>
    %cst_76 = arith.constant 0.000000e+00 : f32
    %359 = vector.broadcast %cst_76 : f32 to vector<8x256xf32>
    %360 = arith.maximumf %358, %359 : vector<8x256xf32>
    %361 = vector.shape_cast %353 : vector<8x256xf32> to vector<1x8x256xf32>
    %362 = vector.shape_cast %360 : vector<8x256xf32> to vector<1x8x256xf32>
    %363 = tpu.concatenate %361, %362 in 0 : vector<1x8x256xf32>, vector<1x8x256xf32> -> vector<2x8x256xf32>
    %c1032 = arith.constant 1032 : index
    %c0_77 = arith.constant 0 : index
    %364 = vector.load %arg5[%c1032, %c0_77] : memref<1168x32xf32, #tpu.memory_space<vmem>>, vector<32x32xf32>
    %cst_78 = arith.constant dense<0.000000e+00> : vector<2x32xf32>
    %365 = tpu.matmul %340, %364, %cst_78 {dimension_numbers = #tpu.dot_dimension_numbers<[1], [0], [0], [1], [0, 0, 1, 1], [], []>} : vector<2x32xf32>, vector<32x32xf32>, vector<2x32xf32> -> vector<2x32xf32>
    %c1064 = arith.constant 1064 : index
    %c0_79 = arith.constant 0 : index
    %366 = vector.load %arg5[%c1064, %c0_79] : memref<1168x32xf32, #tpu.memory_space<vmem>>, vector<1x32xf32>
    %367 = vector.broadcast %343 : vector<2x1xf32> to vector<2x32xf32>
    %368 = vector.broadcast %366 : vector<1x32xf32> to vector<2x32xf32>
    %369 = arith.mulf %367, %368 : vector<2x32xf32>
    %370 = arith.addf %365, %369 : vector<2x32xf32>
    %c1065 = arith.constant 1065 : index
    %c0_80 = arith.constant 0 : index
    %371 = vector.load %arg5[%c1065, %c0_80] : memref<1168x32xf32, #tpu.memory_space<vmem>>, vector<1x32xf32>
    %372 = vector.broadcast %344 : vector<2x1xf32> to vector<2x32xf32>
    %373 = vector.broadcast %371 : vector<1x32xf32> to vector<2x32xf32>
    %374 = arith.mulf %372, %373 : vector<2x32xf32>
    %375 = arith.addf %370, %374 : vector<2x32xf32>
    %376 = vector.extract_strided_slice %375 {offsets = [0, 0], sizes = [1, 8], strides = [1, 1]} : vector<2x32xf32> to vector<1x8xf32>
    %377 = vector.extract_strided_slice %375 {offsets = [0, 8], sizes = [1, 8], strides = [1, 1]} : vector<2x32xf32> to vector<1x8xf32>
    %378 = vector.extract_strided_slice %375 {offsets = [0, 16], sizes = [1, 8], strides = [1, 1]} : vector<2x32xf32> to vector<1x8xf32>
    %379 = vector.extract_strided_slice %375 {offsets = [0, 24], sizes = [1, 8], strides = [1, 1]} : vector<2x32xf32> to vector<1x8xf32>
    %380 = tpu.concatenate %376, %377, %378, %379 in 0 : vector<1x8xf32>, vector<1x8xf32>, vector<1x8xf32>, vector<1x8xf32> -> vector<4x8xf32>
    %cst_81 = arith.constant dense<0.000000e+00> : vector<4x256xf32>
    %381 = tpu.matmul %380, %353, %cst_81 {dimension_numbers = #tpu.dot_dimension_numbers<[1], [0], [0], [1], [0, 0, 1, 1], [], []>} : vector<4x8xf32>, vector<8x256xf32>, vector<4x256xf32> -> vector<4x256xf32>
    %382 = vector.extract_strided_slice %375 {offsets = [1, 0], sizes = [1, 8], strides = [1, 1]} : vector<2x32xf32> to vector<1x8xf32>
    %383 = vector.extract_strided_slice %375 {offsets = [1, 8], sizes = [1, 8], strides = [1, 1]} : vector<2x32xf32> to vector<1x8xf32>
    %384 = vector.extract_strided_slice %375 {offsets = [1, 16], sizes = [1, 8], strides = [1, 1]} : vector<2x32xf32> to vector<1x8xf32>
    %385 = vector.extract_strided_slice %375 {offsets = [1, 24], sizes = [1, 8], strides = [1, 1]} : vector<2x32xf32> to vector<1x8xf32>
    %386 = tpu.concatenate %382, %383, %384, %385 in 0 : vector<1x8xf32>, vector<1x8xf32>, vector<1x8xf32>, vector<1x8xf32> -> vector<4x8xf32>
    %cst_82 = arith.constant dense<0.000000e+00> : vector<4x256xf32>
    %387 = tpu.matmul %386, %360, %cst_82 {dimension_numbers = #tpu.dot_dimension_numbers<[1], [0], [0], [1], [0, 0, 1, 1], [], []>} : vector<4x8xf32>, vector<8x256xf32>, vector<4x256xf32> -> vector<4x256xf32>
    %388 = vector.shape_cast %381 : vector<4x256xf32> to vector<1x4x256xf32>
    %389 = vector.shape_cast %387 : vector<4x256xf32> to vector<1x4x256xf32>
    %390 = tpu.concatenate %388, %389 in 0 : vector<1x4x256xf32>, vector<1x4x256xf32> -> vector<2x4x256xf32>
    %391 = tpu.iota {dimensions = array<i32: 2>} : vector<2x4x256xi32>
    %c196_i32 = arith.constant 196 : i32
    %392 = vector.broadcast %c196_i32 : i32 to vector<2x4x256xi32>
    %393 = arith.cmpi slt, %391, %392 : vector<2x4x256xi32>
    %cst_83 = arith.constant -1.000000e+30 : f32
    %394 = vector.broadcast %cst_83 : f32 to vector<2x4x256xf32>
    %395 = arith.select %393, %390, %394 : vector<2x4x256xi1>, vector<2x4x256xf32>
    %cst_84 = arith.constant dense<0xFF800000> : vector<2x4xf32>
    %396 = vector.multi_reduction <maximumf>, %395, %cst_84 [2] : vector<2x4x256xf32> to vector<2x4xf32>
    %397 = vector.shape_cast %396 : vector<2x4xf32> to vector<2x4x1xf32>
    %398 = vector.broadcast %397 : vector<2x4x1xf32> to vector<2x4x256xf32>
    %399 = arith.subf %395, %398 : vector<2x4x256xf32>
    %400 = math.exp %399 : vector<2x4x256xf32>
    %cst_85 = arith.constant dense<0.000000e+00> : vector<2x4xf32>
    %401 = vector.multi_reduction <add>, %400, %cst_85 [2] : vector<2x4x256xf32> to vector<2x4xf32>
    %402 = vector.shape_cast %401 : vector<2x4xf32> to vector<2x4x1xf32>
    %403 = vector.broadcast %402 : vector<2x4x1xf32> to vector<2x4x256xf32>
    %404 = arith.divf %400, %403 : vector<2x4x256xf32>
    %c0_86 = arith.constant 0 : index
    %c0_87 = arith.constant 0 : index
    %c0_88 = arith.constant 0 : index
    %405 = vector.load %arg7[%c0_86, %c0_87, %c0_88] : memref<2x4x256xf32, #tpu.memory_space<vmem>>, vector<2x4x256xf32>
    tpu.vector_store %arg7[%c0_86, %c0_87, %c0_88], %404 {strides = array<i32>} : memref<2x4x256xf32, #tpu.memory_space<vmem>>, vector<2x4x256xf32>,
    %406 = vector.extract_strided_slice %404 {offsets = [0, 0, 0], sizes = [2, 1, 256], strides = [1, 1, 1]} : vector<2x4x256xf32> to vector<2x1x256xf32>
    "tpu.trace_start"() <{level = 10 : i32, message = "bqp,bfp->bqf"}> : () -> ()
    %cst_89 = arith.constant dense<0.000000e+00> : vector<2x1x8xf32>
    %407 = tpu.matmul %406, %363, %cst_89 {dimension_numbers = #tpu.dot_dimension_numbers<[2], [2], [1], [1], [0, 0, 0, 1, 1, 1], [0], [0]>} : vector<2x1x256xf32>, vector<2x8x256xf32>, vector<2x1x8xf32> -> vector<2x1x8xf32>
    "tpu.trace_stop"() : () -> ()
    %408 = vector.shape_cast %407 : vector<2x1x8xf32> to vector<2x8xf32>
    %c1112 = arith.constant 1112 : index
    %c0_90 = arith.constant 0 : index
    %409 = vector.load %arg5[%c1112, %c0_90] : memref<1168x32xf32, #tpu.memory_space<vmem>>, vector<8x32xf32>
    %cst_91 = arith.constant dense<0.000000e+00> : vector<2x32xf32>
    %410 = tpu.matmul %408, %409, %cst_91 {dimension_numbers = #tpu.dot_dimension_numbers<[1], [0], [0], [1], [0, 0, 1, 1], [], []>} : vector<2x8xf32>, vector<8x32xf32>, vector<2x32xf32> -> vector<2x32xf32>
    %c1072 = arith.constant 1072 : index
    %c0_92 = arith.constant 0 : index
    %411 = vector.load %arg5[%c1072, %c0_92] : memref<1168x32xf32, #tpu.memory_space<vmem>>, vector<32x32xf32>
    %cst_93 = arith.constant dense<0.000000e+00> : vector<2x32xf32>
    %412 = tpu.matmul %340, %411, %cst_93 {dimension_numbers = #tpu.dot_dimension_numbers<[1], [0], [0], [1], [0, 0, 1, 1], [], []>} : vector<2x32xf32>, vector<32x32xf32>, vector<2x32xf32> -> vector<2x32xf32>
    %413 = arith.addf %410, %412 : vector<2x32xf32>
    %c1104 = arith.constant 1104 : index
    %c0_94 = arith.constant 0 : index
    %414 = vector.load %arg5[%c1104, %c0_94] : memref<1168x32xf32, #tpu.memory_space<vmem>>, vector<1x32xf32>
    %415 = vector.broadcast %343 : vector<2x1xf32> to vector<2x32xf32>
    %416 = vector.broadcast %414 : vector<1x32xf32> to vector<2x32xf32>
    %417 = arith.mulf %415, %416 : vector<2x32xf32>
    %418 = arith.addf %413, %417 : vector<2x32xf32>
    %c1105 = arith.constant 1105 : index
    %c0_95 = arith.constant 0 : index
    %419 = vector.load %arg5[%c1105, %c0_95] : memref<1168x32xf32, #tpu.memory_space<vmem>>, vector<1x32xf32>
    %420 = vector.broadcast %344 : vector<2x1xf32> to vector<2x32xf32>
    %421 = vector.broadcast %419 : vector<1x32xf32> to vector<2x32xf32>
    %422 = arith.mulf %420, %421 : vector<2x32xf32>
    %423 = arith.addf %418, %422 : vector<2x32xf32>
    %c1120 = arith.constant 1120 : index
    %c0_96 = arith.constant 0 : index
    %424 = vector.load %arg5[%c1120, %c0_96] : memref<1168x32xf32, #tpu.memory_space<vmem>>, vector<1x32xf32>
    %425 = vector.broadcast %424 : vector<1x32xf32> to vector<2x32xf32>
    %426 = arith.addf %423, %425 : vector<2x32xf32>
    %427 = math.tanh %426 : vector<2x32xf32>
    %c0_97 = arith.constant 0 : index
    %c256_98 = arith.constant 256 : index
    %428 = vector.load %arg6[%c0_97, %c256_98] : memref<2x896xf32, #tpu.memory_space<vmem>>, vector<2x32xf32>
    tpu.vector_store %arg6[%c0_97, %c256_98], %427 {strides = array<i32>} : memref<2x896xf32, #tpu.memory_space<vmem>>, vector<2x32xf32>,
    %c0_99 = arith.constant 0 : index
    %c288 = arith.constant 288 : index
    %429 = vector.load %arg6[%c0_99, %c288] : memref<2x896xf32, #tpu.memory_space<vmem>>, vector<2x8xf32>
    tpu.vector_store %arg6[%c0_99, %c288], %408 {strides = array<i32>} : memref<2x896xf32, #tpu.memory_space<vmem>>, vector<2x8xf32>,
    %c1128 = arith.constant 1128 : index
    %c0_100 = arith.constant 0 : index
    %430 = vector.load %arg5[%c1128, %c0_100] : memref<1168x32xf32, #tpu.memory_space<vmem>>, vector<32x32xf32>
    %cst_101 = arith.constant dense<0.000000e+00> : vector<2x32xf32>
    %431 = tpu.matmul %427, %430, %cst_101 {dimension_numbers = #tpu.dot_dimension_numbers<[1], [0], [0], [1], [0, 0, 1, 1], [], []>} : vector<2x32xf32>, vector<32x32xf32>, vector<2x32xf32> -> vector<2x32xf32>
    %c1160 = arith.constant 1160 : index
    %c0_102 = arith.constant 0 : index
    %432 = vector.load %arg5[%c1160, %c0_102] : memref<1168x32xf32, #tpu.memory_space<vmem>>, vector<1x32xf32>
    %433 = vector.broadcast %432 : vector<1x32xf32> to vector<2x32xf32>
    %434 = arith.addf %431, %433 : vector<2x32xf32>
    %c136 = arith.constant 136 : index
    %c0_103 = arith.constant 0 : index
    %435 = vector.load %arg4[%c136, %c0_103] : memref<456x256xf32, #tpu.memory_space<vmem>>, vector<32x256xf32>
    %cst_104 = arith.constant dense<0.000000e+00> : vector<2x256xf32>
    %436 = tpu.matmul %434, %435, %cst_104 {dimension_numbers = #tpu.dot_dimension_numbers<[1], [0], [0], [1], [0, 0, 1, 1], [], []>} : vector<2x32xf32>, vector<32x256xf32>, vector<2x256xf32> -> vector<2x256xf32>
    %c0_105 = arith.constant 0 : index
    %c0_106 = arith.constant 0 : index
    %437 = vector.load %arg4[%c0_105, %c0_106] : memref<456x256xf32, #tpu.memory_space<vmem>>, vector<128x256xf32>
    %c128_107 = arith.constant 128 : index
    %c0_108 = arith.constant 0 : index
    %438 = vector.load %arg4[%c128_107, %c0_108] : memref<456x256xf32, #tpu.memory_space<vmem>>, vector<1x256xf32>
    %c168 = arith.constant 168 : index
    %c0_109 = arith.constant 0 : index
    %439 = vector.load %arg4[%c168, %c0_109] : memref<456x256xf32, #tpu.memory_space<vmem>>, vector<1x256xf32>
    %cst_110 = arith.constant dense<0.000000e+00> : vector<2x256xf32>
    %440 = tpu.matmul %334, %437, %cst_110 {dimension_numbers = #tpu.dot_dimension_numbers<[1], [0], [0], [1], [0, 0, 1, 1], [], []>} : vector<2x128xf32>, vector<128x256xf32>, vector<2x256xf32> -> vector<2x256xf32>
    %441 = vector.broadcast %438 : vector<1x256xf32> to vector<2x256xf32>
    %442 = arith.addf %440, %441 : vector<2x256xf32>
    %cst_111 = arith.constant dense<0.000000e+00> : vector<2x256xf32>
    %443 = tpu.matmul %332, %437, %cst_111 {dimension_numbers = #tpu.dot_dimension_numbers<[1], [0], [0], [1], [0, 0, 1, 1], [], []>} : vector<2x128xf32>, vector<128x256xf32>, vector<2x256xf32> -> vector<2x256xf32>
    %444 = vector.broadcast %438 : vector<1x256xf32> to vector<2x256xf32>
    %445 = arith.addf %443, %444 : vector<2x256xf32>
    %446 = arith.mulf %442, %436 : vector<2x256xf32>
    %447 = vector.broadcast %439 : vector<1x256xf32> to vector<2x256xf32>
    %448 = arith.addf %446, %447 : vector<2x256xf32>
    %449 = arith.mulf %445, %436 : vector<2x256xf32>
    %450 = vector.broadcast %439 : vector<1x256xf32> to vector<2x256xf32>
    %451 = arith.addf %449, %450 : vector<2x256xf32>
    %c0_112 = arith.constant 0 : index
    %c0_113 = arith.constant 0 : index
    %452 = vector.load %arg3[%c0_112, %c0_113] : memref<272x1024xf32, #tpu.memory_space<vmem>>, vector<1x1024xf32>
    %c1_114 = arith.constant 1 : index
    %c0_115 = arith.constant 0 : index
    %453 = vector.load %arg3[%c1_114, %c0_115] : memref<272x1024xf32, #tpu.memory_space<vmem>>, vector<1x1024xf32>
    %c8_116 = arith.constant 8 : index
    %c0_117 = arith.constant 0 : index
    %454 = vector.load %arg3[%c8_116, %c0_117] : memref<272x1024xf32, #tpu.memory_space<vmem>>, vector<1x1024xf32>
    %c16_118 = arith.constant 16 : index
    %c0_119 = arith.constant 0 : index
    %455 = vector.load %arg3[%c16_118, %c0_119] : memref<272x1024xf32, #tpu.memory_space<vmem>>, vector<256x1024xf32>
    %c200 = arith.constant 200 : index
    %c0_120 = arith.constant 0 : index
    %456 = vector.load %arg4[%c200, %c0_120] : memref<456x256xf32, #tpu.memory_space<vmem>>, vector<256x256xf32>
    %c176 = arith.constant 176 : index
    %c0_121 = arith.constant 0 : index
    %457 = vector.load %arg4[%c176, %c0_121] : memref<456x256xf32, #tpu.memory_space<vmem>>, vector<1x256xf32>
    %cst_122 = arith.constant dense<0.000000e+00> : vector<2x256xf32>
    %458 = tpu.matmul %448, %456, %cst_122 {dimension_numbers = #tpu.dot_dimension_numbers<[1], [0], [0], [1], [0, 0, 1, 1], [], []>} : vector<2x256xf32>, vector<256x256xf32>, vector<2x256xf32> -> vector<2x256xf32>
    %459 = vector.broadcast %457 : vector<1x256xf32> to vector<2x256xf32>
    %460 = arith.addf %458, %459 : vector<2x256xf32>
    %461 = vector.extract_strided_slice %2 {offsets = [0, 18], sizes = [2, 1], strides = [1, 1]} : vector<2x128xf32> to vector<2x1xf32>
    %462 = vector.extract_strided_slice %460 {offsets = [0, 0], sizes = [2, 1], strides = [1, 1]} : vector<2x256xf32> to vector<2x1xf32>
    %463 = arith.subf %461, %462 : vector<2x1xf32>
    %464 = vector.extract_strided_slice %2 {offsets = [0, 19], sizes = [2, 1], strides = [1, 1]} : vector<2x128xf32> to vector<2x1xf32>
    %465 = vector.extract_strided_slice %460 {offsets = [0, 1], sizes = [2, 1], strides = [1, 1]} : vector<2x256xf32> to vector<2x1xf32>
    %466 = arith.subf %464, %465 : vector<2x1xf32>
    %cst_123 = arith.constant dense<0.000000e+00> : vector<2x1024xf32>
    %467 = tpu.matmul %448, %455, %cst_123 {dimension_numbers = #tpu.dot_dimension_numbers<[1], [0], [0], [1], [0, 0, 1, 1], [], []>} : vector<2x256xf32>, vector<256x1024xf32>, vector<2x1024xf32> -> vector<2x1024xf32>
    %468 = vector.broadcast %454 : vector<1x1024xf32> to vector<2x1024xf32>
    %469 = arith.addf %467, %468 : vector<2x1024xf32>
    %470 = vector.broadcast %463 : vector<2x1xf32> to vector<2x1024xf32>
    %471 = vector.broadcast %452 : vector<1x1024xf32> to vector<2x1024xf32>
    %472 = arith.mulf %470, %471 : vector<2x1024xf32>
    %473 = arith.addf %469, %472 : vector<2x1024xf32>
    %474 = vector.broadcast %466 : vector<2x1xf32> to vector<2x1024xf32>
    %475 = vector.broadcast %453 : vector<1x1024xf32> to vector<2x1024xf32>
    %476 = arith.mulf %474, %475 : vector<2x1024xf32>
    %477 = arith.addf %473, %476 : vector<2x1024xf32>
    %478 = vector.extract_strided_slice %477 {offsets = [0, 0], sizes = [2, 256], strides = [1, 1]} : vector<2x1024xf32> to vector<2x256xf32>
    %479 = arith.negf %478 : vector<2x256xf32>
    %480 = math.exp %479 : vector<2x256xf32>
    %cst_124 = arith.constant 1.000000e+00 : f32
    %481 = vector.broadcast %cst_124 : f32 to vector<2x256xf32>
    %482 = arith.addf %481, %480 : vector<2x256xf32>
    %483 = arith.divf %481, %482 : vector<2x256xf32>
    %484 = vector.extract_strided_slice %477 {offsets = [0, 256], sizes = [2, 256], strides = [1, 1]} : vector<2x1024xf32> to vector<2x256xf32>
    %485 = arith.negf %484 : vector<2x256xf32>
    %486 = math.exp %485 : vector<2x256xf32>
    %cst_125 = arith.constant 1.000000e+00 : f32
    %487 = vector.broadcast %cst_125 : f32 to vector<2x256xf32>
    %488 = arith.addf %487, %486 : vector<2x256xf32>
    %489 = arith.divf %487, %488 : vector<2x256xf32>
    %490 = vector.extract_strided_slice %477 {offsets = [0, 512], sizes = [2, 256], strides = [1, 1]} : vector<2x1024xf32> to vector<2x256xf32>
    %491 = math.tanh %490 : vector<2x256xf32>
    %492 = vector.extract_strided_slice %477 {offsets = [0, 768], sizes = [2, 256], strides = [1, 1]} : vector<2x1024xf32> to vector<2x256xf32>
    %493 = arith.negf %492 : vector<2x256xf32>
    %494 = math.exp %493 : vector<2x256xf32>
    %cst_126 = arith.constant 1.000000e+00 : f32
    %495 = vector.broadcast %cst_126 : f32 to vector<2x256xf32>
    %496 = arith.addf %495, %494 : vector<2x256xf32>
    %497 = arith.divf %495, %496 : vector<2x256xf32>
    %498 = arith.mulf %489, %451 : vector<2x256xf32>
    %499 = arith.mulf %483, %491 : vector<2x256xf32>
    %500 = arith.addf %498, %499 : vector<2x256xf32>
    %501 = math.tanh %500 : vector<2x256xf32>
    %502 = arith.mulf %497, %501 : vector<2x256xf32>
    %cst_127 = arith.constant dense<0.000000e+00> : vector<2x1024xf32>
    %503 = tpu.matmul %502, %455, %cst_127 {dimension_numbers = #tpu.dot_dimension_numbers<[1], [0], [0], [1], [0, 0, 1, 1], [], []>} : vector<2x256xf32>, vector<256x1024xf32>, vector<2x1024xf32> -> vector<2x1024xf32>
    %504 = vector.broadcast %454 : vector<1x1024xf32> to vector<2x1024xf32>
    %505 = arith.addf %503, %504 : vector<2x1024xf32>
    %506 = vector.extract_strided_slice %505 {offsets = [0, 0], sizes = [2, 256], strides = [1, 1]} : vector<2x1024xf32> to vector<2x256xf32>
    %507 = arith.negf %506 : vector<2x256xf32>
    %508 = math.exp %507 : vector<2x256xf32>
    %cst_128 = arith.constant 1.000000e+00 : f32
    %509 = vector.broadcast %cst_128 : f32 to vector<2x256xf32>
    %510 = arith.addf %509, %508 : vector<2x256xf32>
    %511 = arith.divf %509, %510 : vector<2x256xf32>
    %512 = vector.extract_strided_slice %505 {offsets = [0, 256], sizes = [2, 256], strides = [1, 1]} : vector<2x1024xf32> to vector<2x256xf32>
    %513 = arith.negf %512 : vector<2x256xf32>
    %514 = math.exp %513 : vector<2x256xf32>
    %cst_129 = arith.constant 1.000000e+00 : f32
    %515 = vector.broadcast %cst_129 : f32 to vector<2x256xf32>
    %516 = arith.addf %515, %514 : vector<2x256xf32>
    %517 = arith.divf %515, %516 : vector<2x256xf32>
    %518 = vector.extract_strided_slice %505 {offsets = [0, 512], sizes = [2, 256], strides = [1, 1]} : vector<2x1024xf32> to vector<2x256xf32>
    %519 = math.tanh %518 : vector<2x256xf32>
    %520 = vector.extract_strided_slice %505 {offsets = [0, 768], sizes = [2, 256], strides = [1, 1]} : vector<2x1024xf32> to vector<2x256xf32>
    %521 = arith.negf %520 : vector<2x256xf32>
    %522 = math.exp %521 : vector<2x256xf32>
    %cst_130 = arith.constant 1.000000e+00 : f32
    %523 = vector.broadcast %cst_130 : f32 to vector<2x256xf32>
    %524 = arith.addf %523, %522 : vector<2x256xf32>
    %525 = arith.divf %523, %524 : vector<2x256xf32>
    %526 = arith.mulf %517, %500 : vector<2x256xf32>
    %527 = arith.mulf %511, %519 : vector<2x256xf32>
    %528 = arith.addf %526, %527 : vector<2x256xf32>
    %529 = math.tanh %528 : vector<2x256xf32>
    %530 = arith.mulf %525, %529 : vector<2x256xf32>
    %cst_131 = arith.constant dense<0.000000e+00> : vector<2x1024xf32>
    %531 = tpu.matmul %530, %455, %cst_131 {dimension_numbers = #tpu.dot_dimension_numbers<[1], [0], [0], [1], [0, 0, 1, 1], [], []>} : vector<2x256xf32>, vector<256x1024xf32>, vector<2x1024xf32> -> vector<2x1024xf32>
    %532 = vector.broadcast %454 : vector<1x1024xf32> to vector<2x1024xf32>
    %533 = arith.addf %531, %532 : vector<2x1024xf32>
    %534 = vector.extract_strided_slice %533 {offsets = [0, 0], sizes = [2, 256], strides = [1, 1]} : vector<2x1024xf32> to vector<2x256xf32>
    %535 = arith.negf %534 : vector<2x256xf32>
    %536 = math.exp %535 : vector<2x256xf32>
    %cst_132 = arith.constant 1.000000e+00 : f32
    %537 = vector.broadcast %cst_132 : f32 to vector<2x256xf32>
    %538 = arith.addf %537, %536 : vector<2x256xf32>
    %539 = arith.divf %537, %538 : vector<2x256xf32>
    %540 = vector.extract_strided_slice %533 {offsets = [0, 256], sizes = [2, 256], strides = [1, 1]} : vector<2x1024xf32> to vector<2x256xf32>
    %541 = arith.negf %540 : vector<2x256xf32>
    %542 = math.exp %541 : vector<2x256xf32>
    %cst_133 = arith.constant 1.000000e+00 : f32
    %543 = vector.broadcast %cst_133 : f32 to vector<2x256xf32>
    %544 = arith.addf %543, %542 : vector<2x256xf32>
    %545 = arith.divf %543, %544 : vector<2x256xf32>
    %546 = vector.extract_strided_slice %533 {offsets = [0, 512], sizes = [2, 256], strides = [1, 1]} : vector<2x1024xf32> to vector<2x256xf32>
    %547 = math.tanh %546 : vector<2x256xf32>
    %548 = vector.extract_strided_slice %533 {offsets = [0, 768], sizes = [2, 256], strides = [1, 1]} : vector<2x1024xf32> to vector<2x256xf32>
    %549 = arith.negf %548 : vector<2x256xf32>
    %550 = math.exp %549 : vector<2x256xf32>
    %cst_134 = arith.constant 1.000000e+00 : f32
    %551 = vector.broadcast %cst_134 : f32 to vector<2x256xf32>
    %552 = arith.addf %551, %550 : vector<2x256xf32>
    %553 = arith.divf %551, %552 : vector<2x256xf32>
    %554 = arith.mulf %545, %528 : vector<2x256xf32>
    %555 = arith.mulf %539, %547 : vector<2x256xf32>
    %556 = arith.addf %554, %555 : vector<2x256xf32>
    %557 = math.tanh %556 : vector<2x256xf32>
    %558 = arith.mulf %553, %557 : vector<2x256xf32>
    %cst_135 = arith.constant dense<0.000000e+00> : vector<2x1024xf32>
    %559 = tpu.matmul %558, %455, %cst_135 {dimension_numbers = #tpu.dot_dimension_numbers<[1], [0], [0], [1], [0, 0, 1, 1], [], []>} : vector<2x256xf32>, vector<256x1024xf32>, vector<2x1024xf32> -> vector<2x1024xf32>
    %560 = vector.broadcast %454 : vector<1x1024xf32> to vector<2x1024xf32>
    %561 = arith.addf %559, %560 : vector<2x1024xf32>
    %562 = vector.extract_strided_slice %561 {offsets = [0, 0], sizes = [2, 256], strides = [1, 1]} : vector<2x1024xf32> to vector<2x256xf32>
    %563 = arith.negf %562 : vector<2x256xf32>
    %564 = math.exp %563 : vector<2x256xf32>
    %cst_136 = arith.constant 1.000000e+00 : f32
    %565 = vector.broadcast %cst_136 : f32 to vector<2x256xf32>
    %566 = arith.addf %565, %564 : vector<2x256xf32>
    %567 = arith.divf %565, %566 : vector<2x256xf32>
    %568 = vector.extract_strided_slice %561 {offsets = [0, 256], sizes = [2, 256], strides = [1, 1]} : vector<2x1024xf32> to vector<2x256xf32>
    %569 = arith.negf %568 : vector<2x256xf32>
    %570 = math.exp %569 : vector<2x256xf32>
    %cst_137 = arith.constant 1.000000e+00 : f32
    %571 = vector.broadcast %cst_137 : f32 to vector<2x256xf32>
    %572 = arith.addf %571, %570 : vector<2x256xf32>
    %573 = arith.divf %571, %572 : vector<2x256xf32>
    %574 = vector.extract_strided_slice %561 {offsets = [0, 512], sizes = [2, 256], strides = [1, 1]} : vector<2x1024xf32> to vector<2x256xf32>
    %575 = math.tanh %574 : vector<2x256xf32>
    %576 = vector.extract_strided_slice %561 {offsets = [0, 768], sizes = [2, 256], strides = [1, 1]} : vector<2x1024xf32> to vector<2x256xf32>
    %577 = arith.negf %576 : vector<2x256xf32>
    %578 = math.exp %577 : vector<2x256xf32>
    %cst_138 = arith.constant 1.000000e+00 : f32
    %579 = vector.broadcast %cst_138 : f32 to vector<2x256xf32>
    %580 = arith.addf %579, %578 : vector<2x256xf32>
    %581 = arith.divf %579, %580 : vector<2x256xf32>
    %582 = arith.mulf %573, %556 : vector<2x256xf32>
    %583 = arith.mulf %567, %575 : vector<2x256xf32>
    %584 = arith.addf %582, %583 : vector<2x256xf32>
    %585 = math.tanh %584 : vector<2x256xf32>
    %586 = arith.mulf %581, %585 : vector<2x256xf32>
    %cst_139 = arith.constant dense<0.000000e+00> : vector<2x1024xf32>
    %587 = tpu.matmul %586, %455, %cst_139 {dimension_numbers = #tpu.dot_dimension_numbers<[1], [0], [0], [1], [0, 0, 1, 1], [], []>} : vector<2x256xf32>, vector<256x1024xf32>, vector<2x1024xf32> -> vector<2x1024xf32>
    %588 = vector.broadcast %454 : vector<1x1024xf32> to vector<2x1024xf32>
    %589 = arith.addf %587, %588 : vector<2x1024xf32>
    %590 = vector.extract_strided_slice %589 {offsets = [0, 0], sizes = [2, 256], strides = [1, 1]} : vector<2x1024xf32> to vector<2x256xf32>
    %591 = arith.negf %590 : vector<2x256xf32>
    %592 = math.exp %591 : vector<2x256xf32>
    %cst_140 = arith.constant 1.000000e+00 : f32
    %593 = vector.broadcast %cst_140 : f32 to vector<2x256xf32>
    %594 = arith.addf %593, %592 : vector<2x256xf32>
    %595 = arith.divf %593, %594 : vector<2x256xf32>
    %596 = vector.extract_strided_slice %589 {offsets = [0, 256], sizes = [2, 256], strides = [1, 1]} : vector<2x1024xf32> to vector<2x256xf32>
    %597 = arith.negf %596 : vector<2x256xf32>
    %598 = math.exp %597 : vector<2x256xf32>
    %cst_141 = arith.constant 1.000000e+00 : f32
    %599 = vector.broadcast %cst_141 : f32 to vector<2x256xf32>
    %600 = arith.addf %599, %598 : vector<2x256xf32>
    %601 = arith.divf %599, %600 : vector<2x256xf32>
    %602 = vector.extract_strided_slice %589 {offsets = [0, 512], sizes = [2, 256], strides = [1, 1]} : vector<2x1024xf32> to vector<2x256xf32>
    %603 = math.tanh %602 : vector<2x256xf32>
    %604 = vector.extract_strided_slice %589 {offsets = [0, 768], sizes = [2, 256], strides = [1, 1]} : vector<2x1024xf32> to vector<2x256xf32>
    %605 = arith.negf %604 : vector<2x256xf32>
    %606 = math.exp %605 : vector<2x256xf32>
    %cst_142 = arith.constant 1.000000e+00 : f32
    %607 = vector.broadcast %cst_142 : f32 to vector<2x256xf32>
    %608 = arith.addf %607, %606 : vector<2x256xf32>
    %609 = arith.divf %607, %608 : vector<2x256xf32>
    %610 = arith.mulf %601, %584 : vector<2x256xf32>
    %611 = arith.mulf %595, %603 : vector<2x256xf32>
    %612 = arith.addf %610, %611 : vector<2x256xf32>
    %613 = math.tanh %612 : vector<2x256xf32>
    %614 = arith.mulf %609, %613 : vector<2x256xf32>
    %cst_143 = arith.constant dense<0.000000e+00> : vector<2x1024xf32>
    %615 = tpu.matmul %614, %455, %cst_143 {dimension_numbers = #tpu.dot_dimension_numbers<[1], [0], [0], [1], [0, 0, 1, 1], [], []>} : vector<2x256xf32>, vector<256x1024xf32>, vector<2x1024xf32> -> vector<2x1024xf32>
    %616 = vector.broadcast %454 : vector<1x1024xf32> to vector<2x1024xf32>
    %617 = arith.addf %615, %616 : vector<2x1024xf32>
    %618 = vector.extract_strided_slice %617 {offsets = [0, 0], sizes = [2, 256], strides = [1, 1]} : vector<2x1024xf32> to vector<2x256xf32>
    %619 = arith.negf %618 : vector<2x256xf32>
    %620 = math.exp %619 : vector<2x256xf32>
    %cst_144 = arith.constant 1.000000e+00 : f32
    %621 = vector.broadcast %cst_144 : f32 to vector<2x256xf32>
    %622 = arith.addf %621, %620 : vector<2x256xf32>
    %623 = arith.divf %621, %622 : vector<2x256xf32>
    %624 = vector.extract_strided_slice %617 {offsets = [0, 256], sizes = [2, 256], strides = [1, 1]} : vector<2x1024xf32> to vector<2x256xf32>
    %625 = arith.negf %624 : vector<2x256xf32>
    %626 = math.exp %625 : vector<2x256xf32>
    %cst_145 = arith.constant 1.000000e+00 : f32
    %627 = vector.broadcast %cst_145 : f32 to vector<2x256xf32>
    %628 = arith.addf %627, %626 : vector<2x256xf32>
    %629 = arith.divf %627, %628 : vector<2x256xf32>
    %630 = vector.extract_strided_slice %617 {offsets = [0, 512], sizes = [2, 256], strides = [1, 1]} : vector<2x1024xf32> to vector<2x256xf32>
    %631 = math.tanh %630 : vector<2x256xf32>
    %632 = vector.extract_strided_slice %617 {offsets = [0, 768], sizes = [2, 256], strides = [1, 1]} : vector<2x1024xf32> to vector<2x256xf32>
    %633 = arith.negf %632 : vector<2x256xf32>
    %634 = math.exp %633 : vector<2x256xf32>
    %cst_146 = arith.constant 1.000000e+00 : f32
    %635 = vector.broadcast %cst_146 : f32 to vector<2x256xf32>
    %636 = arith.addf %635, %634 : vector<2x256xf32>
    %637 = arith.divf %635, %636 : vector<2x256xf32>
    %638 = arith.mulf %629, %612 : vector<2x256xf32>
    %639 = arith.mulf %623, %631 : vector<2x256xf32>
    %640 = arith.addf %638, %639 : vector<2x256xf32>
    %641 = math.tanh %640 : vector<2x256xf32>
    %642 = arith.mulf %637, %641 : vector<2x256xf32>
    %cst_147 = arith.constant dense<0.000000e+00> : vector<2x1024xf32>
    %643 = tpu.matmul %642, %455, %cst_147 {dimension_numbers = #tpu.dot_dimension_numbers<[1], [0], [0], [1], [0, 0, 1, 1], [], []>} : vector<2x256xf32>, vector<256x1024xf32>, vector<2x1024xf32> -> vector<2x1024xf32>
    %644 = vector.broadcast %454 : vector<1x1024xf32> to vector<2x1024xf32>
    %645 = arith.addf %643, %644 : vector<2x1024xf32>
    %646 = vector.extract_strided_slice %645 {offsets = [0, 0], sizes = [2, 256], strides = [1, 1]} : vector<2x1024xf32> to vector<2x256xf32>
    %647 = arith.negf %646 : vector<2x256xf32>
    %648 = math.exp %647 : vector<2x256xf32>
    %cst_148 = arith.constant 1.000000e+00 : f32
    %649 = vector.broadcast %cst_148 : f32 to vector<2x256xf32>
    %650 = arith.addf %649, %648 : vector<2x256xf32>
    %651 = arith.divf %649, %650 : vector<2x256xf32>
    %652 = vector.extract_strided_slice %645 {offsets = [0, 256], sizes = [2, 256], strides = [1, 1]} : vector<2x1024xf32> to vector<2x256xf32>
    %653 = arith.negf %652 : vector<2x256xf32>
    %654 = math.exp %653 : vector<2x256xf32>
    %cst_149 = arith.constant 1.000000e+00 : f32
    %655 = vector.broadcast %cst_149 : f32 to vector<2x256xf32>
    %656 = arith.addf %655, %654 : vector<2x256xf32>
    %657 = arith.divf %655, %656 : vector<2x256xf32>
    %658 = vector.extract_strided_slice %645 {offsets = [0, 512], sizes = [2, 256], strides = [1, 1]} : vector<2x1024xf32> to vector<2x256xf32>
    %659 = math.tanh %658 : vector<2x256xf32>
    %660 = vector.extract_strided_slice %645 {offsets = [0, 768], sizes = [2, 256], strides = [1, 1]} : vector<2x1024xf32> to vector<2x256xf32>
    %661 = arith.negf %660 : vector<2x256xf32>
    %662 = math.exp %661 : vector<2x256xf32>
    %cst_150 = arith.constant 1.000000e+00 : f32
    %663 = vector.broadcast %cst_150 : f32 to vector<2x256xf32>
    %664 = arith.addf %663, %662 : vector<2x256xf32>
    %665 = arith.divf %663, %664 : vector<2x256xf32>
    %666 = arith.mulf %657, %640 : vector<2x256xf32>
    %667 = arith.mulf %651, %659 : vector<2x256xf32>
    %668 = arith.addf %666, %667 : vector<2x256xf32>
    %669 = math.tanh %668 : vector<2x256xf32>
    %670 = arith.mulf %665, %669 : vector<2x256xf32>
    %cst_151 = arith.constant dense<0.000000e+00> : vector<2x1024xf32>
    %671 = tpu.matmul %670, %455, %cst_151 {dimension_numbers = #tpu.dot_dimension_numbers<[1], [0], [0], [1], [0, 0, 1, 1], [], []>} : vector<2x256xf32>, vector<256x1024xf32>, vector<2x1024xf32> -> vector<2x1024xf32>
    %672 = vector.broadcast %454 : vector<1x1024xf32> to vector<2x1024xf32>
    %673 = arith.addf %671, %672 : vector<2x1024xf32>
    %674 = vector.extract_strided_slice %673 {offsets = [0, 0], sizes = [2, 256], strides = [1, 1]} : vector<2x1024xf32> to vector<2x256xf32>
    %675 = arith.negf %674 : vector<2x256xf32>
    %676 = math.exp %675 : vector<2x256xf32>
    %cst_152 = arith.constant 1.000000e+00 : f32
    %677 = vector.broadcast %cst_152 : f32 to vector<2x256xf32>
    %678 = arith.addf %677, %676 : vector<2x256xf32>
    %679 = arith.divf %677, %678 : vector<2x256xf32>
    %680 = vector.extract_strided_slice %673 {offsets = [0, 256], sizes = [2, 256], strides = [1, 1]} : vector<2x1024xf32> to vector<2x256xf32>
    %681 = arith.negf %680 : vector<2x256xf32>
    %682 = math.exp %681 : vector<2x256xf32>
    %cst_153 = arith.constant 1.000000e+00 : f32
    %683 = vector.broadcast %cst_153 : f32 to vector<2x256xf32>
    %684 = arith.addf %683, %682 : vector<2x256xf32>
    %685 = arith.divf %683, %684 : vector<2x256xf32>
    %686 = vector.extract_strided_slice %673 {offsets = [0, 512], sizes = [2, 256], strides = [1, 1]} : vector<2x1024xf32> to vector<2x256xf32>
    %687 = math.tanh %686 : vector<2x256xf32>
    %688 = vector.extract_strided_slice %673 {offsets = [0, 768], sizes = [2, 256], strides = [1, 1]} : vector<2x1024xf32> to vector<2x256xf32>
    %689 = arith.negf %688 : vector<2x256xf32>
    %690 = math.exp %689 : vector<2x256xf32>
    %cst_154 = arith.constant 1.000000e+00 : f32
    %691 = vector.broadcast %cst_154 : f32 to vector<2x256xf32>
    %692 = arith.addf %691, %690 : vector<2x256xf32>
    %693 = arith.divf %691, %692 : vector<2x256xf32>
    %694 = arith.mulf %685, %668 : vector<2x256xf32>
    %695 = arith.mulf %679, %687 : vector<2x256xf32>
    %696 = arith.addf %694, %695 : vector<2x256xf32>
    %697 = math.tanh %696 : vector<2x256xf32>
    %698 = arith.mulf %693, %697 : vector<2x256xf32>
    %c0_155 = arith.constant 0 : index
    %c384_156 = arith.constant 384 : index
    %699 = vector.load %arg6[%c0_155, %c384_156] : memref<2x896xf32, #tpu.memory_space<vmem>>, vector<2x256xf32>
    tpu.vector_store %arg6[%c0_155, %c384_156], %698 {strides = array<i32>} : memref<2x896xf32, #tpu.memory_space<vmem>>, vector<2x256xf32>,
    %c0_157 = arith.constant 0 : index
    %c640_158 = arith.constant 640 : index
    %700 = vector.load %arg6[%c0_157, %c640_158] : memref<2x896xf32, #tpu.memory_space<vmem>>, vector<2x256xf32>
    tpu.vector_store %arg6[%c0_157, %c640_158], %696 {strides = array<i32>} : memref<2x896xf32, #tpu.memory_space<vmem>>, vector<2x256xf32>,
    %701 = tpu.concatenate %502, %530, %558, %586, %614, %642, %670, %698 in 0 : vector<2x256xf32>, vector<2x256xf32>, vector<2x256xf32>, vector<2x256xf32>, vector<2x256xf32>, vector<2x256xf32>, vector<2x256xf32>, vector<2x256xf32> -> vector<16x256xf32>
    %cst_159 = arith.constant dense<0.000000e+00> : vector<16x256xf32>
    %702 = tpu.matmul %701, %456, %cst_159 {dimension_numbers = #tpu.dot_dimension_numbers<[1], [0], [0], [1], [0, 0, 1, 1], [], []>} : vector<16x256xf32>, vector<256x256xf32>, vector<16x256xf32> -> vector<16x256xf32>
    %703 = vector.broadcast %457 : vector<1x256xf32> to vector<16x256xf32>
    %704 = arith.addf %702, %703 : vector<16x256xf32>
    %c0_160 = arith.constant 0 : index
    %c0_161 = arith.constant 0 : index
    %705 = vector.load %arg8[%c0_160, %c0_161] : memref<16x256xf32, #tpu.memory_space<vmem>>, vector<16x256xf32>
    tpu.vector_store %arg8[%c0_160, %c0_161], %704 {strides = array<i32>} : memref<16x256xf32, #tpu.memory_space<vmem>>, vector<16x256xf32>,
    return
  }
}

</mosaic_0001>

<llo_original>
// kernel: seq2seq_forward.1
$region0: #{seq2seq_forward.1}
  #allocation0 [shape = 'u32[]', space=smem, size = 0x4, offset = 0x4, fixed_abs, tag = 'smem constant byte address 0x4 - core index']
  #allocation1 [shape = 'u32[144,128]{1,0:T(1,128)}', space=vmem, size = 0x12000, scoped, tag = 'internal scratch']
  %s0 = inlined_call_operand.vmem [shape: f32[2,128], index: 0, kind: input, shape index: {}]
  %s1 = inlined_call_operand.vmem [shape: f32[2,36,256], index: 1, kind: input, shape index: {}]
  %s2 = inlined_call_operand.vmem [shape: f32[144,512], index: 2, kind: input, shape index: {}]
  %s3 = inlined_call_operand.vmem [shape: f32[272,1024], index: 3, kind: input, shape index: {}]
  %s4 = inlined_call_operand.vmem [shape: f32[456,256], index: 4, kind: input, shape index: {}]
  %s5 = inlined_call_operand.vmem [shape: f32[1168,32], index: 5, kind: input, shape index: {}]
  %s6 = inlined_call_operand.vmem [shape: f32[2,896], index: 6, kind: output, shape index: {0}]
  %s7 = inlined_call_operand.vmem [shape: f32[2,4,256], index: 7, kind: output, shape index: {1}]
  %s8 = inlined_call_operand.vmem [shape: f32[16,256], index: 8, kind: output, shape index: {2}]
  %9 = xla_tuple %s6, %s7, %s8
  %s10 = sld [smem:[#allocation0]]
  $region50: #{seq2seq_forward.1} parent=0
    _
  %s12 = ssub.s32 1, %s10
  %s13 = scalar_select 0, %s12, %s10
  // Predicated region
  $region2: #{seq2seq_forward.1} parent=0 // pred_check
    _
  $region3: #{seq2seq_forward.1} parent=0 // pred_check_branch
    %15 = sbr.rel (0) target = $region5
  $region4: #{seq2seq_forward.1} parent=0 // pred_region
    _
  $region5: #{seq2seq_forward.1} parent=0 // pred_fallthru
    _
  // Predicated region
  $region6: #{seq2seq_forward.1} parent=0 // pred_check
    _
  $region7: #{seq2seq_forward.1} parent=0 // pred_check_branch
    %17 = sbr.rel (0) target = $region9
  $region8: #{seq2seq_forward.1} parent=0 // pred_region
    _
  $region9: #{seq2seq_forward.1} parent=0 // pred_fallthru
    _
  // Predicated region
  $region10: #{seq2seq_forward.1} parent=0 // pred_check
    _
  $region11: #{seq2seq_forward.1} parent=0 // pred_check_branch
    %19 = sbr.rel (0) target = $region13
  $region12: #{seq2seq_forward.1} parent=0 // pred_region
    _
  $region13: #{seq2seq_forward.1} parent=0 // pred_fallthru
    _
  // Predicated region
  $region14: #{seq2seq_forward.1} parent=0 // pred_check
    _
  $region15: #{seq2seq_forward.1} parent=0 // pred_check_branch
    %21 = sbr.rel (0) target = $region17
  $region16: #{seq2seq_forward.1} parent=0 // pred_region
    _
  $region17: #{seq2seq_forward.1} parent=0 // pred_fallthru
    _
  // Predicated region
  $region18: #{seq2seq_forward.1} parent=0 // pred_check
    _
  $region19: #{seq2seq_forward.1} parent=0 // pred_check_branch
    %23 = sbr.rel (0) target = $region21
  $region20: #{seq2seq_forward.1} parent=0 // pred_region
    _
  $region21: #{seq2seq_forward.1} parent=0 // pred_fallthru
    _
  // Predicated region
  $region22: #{seq2seq_forward.1} parent=0 // pred_check
    _
  $region23: #{seq2seq_forward.1} parent=0 // pred_check_branch
    %25 = sbr.rel (0) target = $region25
  $region24: #{seq2seq_forward.1} parent=0 // pred_region
    _
  $region25: #{seq2seq_forward.1} parent=0 // pred_fallthru
    _
  %26 = vst [vmem:[%s6] sm:$0xff] 0.0
  %27 = vst [vmem:[%s6 + $0x8] sm:$0x3f] 0.0
  %v28 = vld [vmem:[%s0] sm:$0x3]
  %v29 = vld [vmem:[%s2] ss:$8 sm:$0xf]
  %s30 = scalar_lea.vmem %s2, 1
  %v31 = vld [vmem:[%s30] ss:$8 sm:$0xf]
  %s32 = scalar_lea.vmem %s2, 32
  %v33 = vld [vmem:[%s32] ss:$8 sm:$0xf]
  %v34 = vld [vmem:[%s2 + $0x40] sm:$0xff]
  %v35 = vld [vmem:[%s2 + $0x48] sm:$0xff]
  %v36 = vld [vmem:[%s2 + $0x50] sm:$0xff]
  %v37 = vld [vmem:[%s2 + $0x58] sm:$0xff]
  %v38 = vld [vmem:[%s2 + $0x60] sm:$0xff]
  %v39 = vld [vmem:[%s2 + $0x68] sm:$0xff]
  %v40 = vld [vmem:[%s2 + $0x70] sm:$0xff]
  %v41 = vld [vmem:[%s2 + $0x78] sm:$0xff]
  %v42 = vld [vmem:[%s2 + $0x80] sm:$0xff]
  %v43 = vld [vmem:[%s2 + $0x88] sm:$0xff]
  %v44 = vld [vmem:[%s2 + $0x90] sm:$0xff]
  %v45 = vld [vmem:[%s2 + $0x98] sm:$0xff]
  %v46 = vld [vmem:[%s2 + $0xa0] sm:$0xff]
  %v47 = vld [vmem:[%s2 + $0xa8] sm:$0xff]
  %v48 = vld [vmem:[%s2 + $0xb0] sm:$0xff]
  %v49 = vld [vmem:[%s2 + $0xb8] sm:$0xff]
  %v50 = vld [vmem:[%s2 + $0xc0] sm:$0xff]
  %v51 = vld [vmem:[%s2 + $0xc8] sm:$0xff]
  %v52 = vld [vmem:[%s2 + $0xd0] sm:$0xff]
  %v53 = vld [vmem:[%s2 + $0xd8] sm:$0xff]
  %v54 = vld [vmem:[%s2 + $0xe0] sm:$0xff]
  %v55 = vld [vmem:[%s2 + $0xe8] sm:$0xff]
  %v56 = vld [vmem:[%s2 + $0xf0] sm:$0xff]
  %v57 = vld [vmem:[%s2 + $0xf8] sm:$0xff]
  %v58 = vld [vmem:[%s2 + $0x100] sm:$0xff]
  %v59 = vld [vmem:[%s2 + $0x108] sm:$0xff]
  %v60 = vld [vmem:[%s2 + $0x110] sm:$0xff]
  %v61 = vld [vmem:[%s2 + $0x118] sm:$0xff]
  %v62 = vld [vmem:[%s2 + $0x120] sm:$0xff]
  %v63 = vld [vmem:[%s2 + $0x128] sm:$0xff]
  %v64 = vld [vmem:[%s2 + $0x130] sm:$0xff]
  %v65 = vld [vmem:[%s2 + $0x138] sm:$0xff]
  %v66 = vld [vmem:[%s2 + $0x140] sm:$0xff]
  %v67 = vld [vmem:[%s2 + $0x148] sm:$0xff]
  %v68 = vld [vmem:[%s2 + $0x150] sm:$0xff]
  %v69 = vld [vmem:[%s2 + $0x158] sm:$0xff]
  %v70 = vld [vmem:[%s2 + $0x160] sm:$0xff]
  %v71 = vld [vmem:[%s2 + $0x168] sm:$0xff]
  %v72 = vld [vmem:[%s2 + $0x170] sm:$0xff]
  %v73 = vld [vmem:[%s2 + $0x178] sm:$0xff]
  %v74 = vld [vmem:[%s2 + $0x180] sm:$0xff]
  %v75 = vld [vmem:[%s2 + $0x188] sm:$0xff]
  %v76 = vld [vmem:[%s2 + $0x190] sm:$0xff]
  %v77 = vld [vmem:[%s2 + $0x198] sm:$0xff]
  %v78 = vld [vmem:[%s2 + $0x1a0] sm:$0xff]
  %v79 = vld [vmem:[%s2 + $0x1a8] sm:$0xff]
  %v80 = vld [vmem:[%s2 + $0x1b0] sm:$0xff]
  %v81 = vld [vmem:[%s2 + $0x1b8] sm:$0xff]
  %v82 = vld [vmem:[%s2 + $0x1c0] sm:$0xff]
  %v83 = vld [vmem:[%s2 + $0x1c8] sm:$0xff]
  %v84 = vld [vmem:[%s2 + $0x1d0] sm:$0xff]
  %v85 = vld [vmem:[%s2 + $0x1d8] sm:$0xff]
  %v86 = vld [vmem:[%s2 + $0x1e0] sm:$0xff]
  %v87 = vld [vmem:[%s2 + $0x1e8] sm:$0xff]
  %v88 = vld [vmem:[%s2 + $0x1f0] sm:$0xff]
  %v89 = vld [vmem:[%s2 + $0x1f8] sm:$0xff]
  %v90 = vld [vmem:[%s2 + $0x200] sm:$0xff]
  %v91 = vld [vmem:[%s2 + $0x208] sm:$0xff]
  %v92 = vld [vmem:[%s2 + $0x210] sm:$0xff]
  %v93 = vld [vmem:[%s2 + $0x218] sm:$0xff]
  %v94 = vld [vmem:[%s2 + $0x220] sm:$0xff]
  %v95 = vld [vmem:[%s2 + $0x228] sm:$0xff]
  %v96 = vld [vmem:[%s2 + $0x230] sm:$0xff]
  %v97 = vld [vmem:[%s2 + $0x238] sm:$0xff]
  %99 = vset.pattern.permute.xlu0 0
  %100 = vperm.xlu0 %99, %v28
  %v101 = vpop.permute.xlu0 %100
  %v104 = vlaneseq
  %v105 = vshrl.u32 %v104, 7
  %v106 = vsub.s32 0, %v105
  %v107 = vrot.slane %v29, %v106
  %v108 = vlaneseq
  %v109 = vshrl.u32 %v108, 7
  %v110 = vsub.s32 1, %v109
  %v111 = vrot.slane %v29, %v110
  %v112 = vlaneseq
  %v113 = vshrl.u32 %v112, 7
  %v114 = vsub.s32 2, %v113
  %v115 = vrot.slane %v29, %v114
  %v116 = vlaneseq
  %v117 = vshrl.u32 %v116, 7
  %v118 = vsub.s32 3, %v117
  %v119 = vrot.slane %v29, %v118
  %v124 = vmul.f32 %v101, %v107
  %v125 = vmul.f32 %v101, %v111
  %v126 = vmul.f32 %v101, %v115
  %v127 = vmul.f32 %v101, %v119
  %128 = vset.pattern.permute.xlu0 1
  %129 = vperm.xlu0 %128, %v28
  %v130 = vpop.permute.xlu0 %129
  %v133 = vlaneseq
  %v134 = vshrl.u32 %v133, 7
  %v135 = vsub.s32 0, %v134
  %v136 = vrot.slane %v31, %v135
  %v137 = vlaneseq
  %v138 = vshrl.u32 %v137, 7
  %v139 = vsub.s32 1, %v138
  %v140 = vrot.slane %v31, %v139
  %v141 = vlaneseq
  %v142 = vshrl.u32 %v141, 7
  %v143 = vsub.s32 2, %v142
  %v144 = vrot.slane %v31, %v143
  %v145 = vlaneseq
  %v146 = vshrl.u32 %v145, 7
  %v147 = vsub.s32 3, %v146
  %v148 = vrot.slane %v31, %v147
  %v153 = vmul.f32 %v130, %v136
  %v154 = vmul.f32 %v130, %v140
  %v155 = vmul.f32 %v130, %v144
  %v156 = vmul.f32 %v130, %v148
  %v157 = vadd.f32 %v124, %v153
  %v158 = vadd.f32 %v125, %v154
  %v159 = vadd.f32 %v126, %v155
  %v160 = vadd.f32 %v127, %v156
  %161 = vmatprep.subr.mxu0 %v35
  %162 = vmatpush1.msra.mxu0 %v34
  %163 = vmatprep.subr.mxu0 %v39
  %164 = vmatpush1.msra.mxu0 %v38
  %165 = vmatprep.subr.mxu0 %v43
  %166 = vmatpush1.msra.mxu0 %v42
  %167 = vmatprep.subr.mxu0 %v47
  %168 = vmatpush1.msra.mxu0 %v46
  %169 = vmatprep.subr.mxu0 %v51
  %170 = vmatpush1.msra.mxu0 %v50
  %171 = vmatprep.subr.mxu0 %v55
  %172 = vmatpush1.msra.mxu0 %v54
  %173 = vmatprep.subr.mxu0 %v59
  %174 = vmatpush1.msra.mxu0 %v58
  %175 = vmatprep.subr.mxu0 %v63
  %176 = vmatpush1.msra.mxu0 %v62
  %177 = vmatprep.subr.mxu0 %v67
  %178 = vmatpush1.msra.mxu0 %v66
  %179 = vmatprep.subr.mxu0 %v71
  %180 = vmatpush1.msra.mxu0 %v70
  %181 = vmatprep.subr.mxu0 %v75
  %182 = vmatpush1.msra.mxu0 %v74
  %183 = vmatprep.subr.mxu0 %v79
  %184 = vmatpush1.msra.mxu0 %v78
  %185 = vmatprep.subr.mxu0 %v83
  %186 = vmatpush1.msra.mxu0 %v82
  %187 = vmatprep.subr.mxu0 %v87
  %188 = vmatpush1.msra.mxu0 %v86
  %189 = vmatprep.subr.mxu0 %v91
  %190 = vmatpush1.msra.mxu0 %v90
  %191 = vmatprep.subr.mxu0 %v95
  %192 = vmatpush1.msra.mxu0 %v94
  %193 = vmatprep.subr.mxu0 0.0
  %194 = vmatpush1.msra.mxu0 0.0
  %195 = vmatprep.subr.mxu0 0.0
  %196 = vmatpush1.msra.mxu0 0.0
  %197 = vmatprep.subr.mxu0 0.0
  %198 = vmatpush1.msra.mxu0 0.0
  %199 = vmatprep.subr.mxu0 0.0
  %200 = vmatpush1.msra.mxu0 0.0
  %201 = vmatprep.subr.mxu0 0.0
  %202 = vmatpush1.msra.mxu0 0.0
  %203 = vmatprep.subr.mxu0 0.0
  %204 = vmatpush1.msra.mxu0 0.0
  %205 = vmatprep.subr.mxu0 0.0
  %206 = vmatpush1.msra.mxu0 0.0
  %207 = vmatprep.subr.mxu0 0.0
  %208 = vmatpush1.msra.mxu0 0.0
  %209 = vmatprep.subr.mxu0 0.0
  %210 = vmatpush1.msra.mxu0 0.0
  %211 = vmatprep.subr.mxu0 0.0
  %212 = vmatpush1.msra.mxu0 0.0
  %213 = vmatprep.subr.mxu0 0.0
  %214 = vmatpush1.msra.mxu0 0.0
  %215 = vmatprep.subr.mxu0 0.0
  %216 = vmatpush1.msra.mxu0 0.0
  %217 = vmatprep.subr.mxu0 0.0
  %218 = vmatpush1.msra.mxu0 0.0
  %219 = vmatprep.subr.mxu0 0.0
  %220 = vmatpush1.msra.mxu0 0.0
  %221 = vmatprep.subr.mxu0 0.0
  %222 = vmatpush1.msra.mxu0 0.0
  %223 = vmatprep.subr.mxu0 0.0
  %224 = vmatpush1.msra.mxu0 0.0
  %225 = vmatprep.mubr.f32.mxu0 0.0
  %226 = vmatmul.mubr.f32.gmra.mrb[0].mxu0 0.0
  %v227 = vpop.f32.mrb[0].mxu0
  %v228 = vadd.f32 0.0, %v227
  %v229 = vpop.f32.mrb[0].mxu0
  %v230 = vadd.f32 0.0, %v229
  %231 = vdwg.mxu0
  %232 = vmatprep.subr.mxu0 %v37
  %233 = vmatpush1.msra.mxu0 %v36
  %234 = vmatprep.subr.mxu0 %v41
  %235 = vmatpush1.msra.mxu0 %v40
  %236 = vmatprep.subr.mxu0 %v45
  %237 = vmatpush1.msra.mxu0 %v44
  %238 = vmatprep.subr.mxu0 %v49
  %239 = vmatpush1.msra.mxu0 %v48
  %240 = vmatprep.subr.mxu0 %v53
  %241 = vmatpush1.msra.mxu0 %v52
  %242 = vmatprep.subr.mxu0 %v57
  %243 = vmatpush1.msra.mxu0 %v56
  %244 = vmatprep.subr.mxu0 %v61
  %245 = vmatpush1.msra.mxu0 %v60
  %246 = vmatprep.subr.mxu0 %v65
  %247 = vmatpush1.msra.mxu0 %v64
  %248 = vmatprep.subr.mxu0 %v69
  %249 = vmatpush1.msra.mxu0 %v68
  %250 = vmatprep.subr.mxu0 %v73
  %251 = vmatpush1.msra.mxu0 %v72
  %252 = vmatprep.subr.mxu0 %v77
  %253 = vmatpush1.msra.mxu0 %v76
  %254 = vmatprep.subr.mxu0 %v81
  %255 = vmatpush1.msra.mxu0 %v80
  %256 = vmatprep.subr.mxu0 %v85
  %257 = vmatpush1.msra.mxu0 %v84
  %258 = vmatprep.subr.mxu0 %v89
  %259 = vmatpush1.msra.mxu0 %v88
  %260 = vmatprep.subr.mxu0 %v93
  %261 = vmatpush1.msra.mxu0 %v92
  %262 = vmatprep.subr.mxu0 %v97
  %263 = vmatpush1.msra.mxu0 %v96
  %264 = vmatprep.subr.mxu0 0.0
  %265 = vmatpush1.msra.mxu0 0.0
  %266 = vmatprep.subr.mxu0 0.0
  %267 = vmatpush1.msra.mxu0 0.0
  %268 = vmatprep.subr.mxu0 0.0
  %269 = vmatpush1.msra.mxu0 0.0
  %270 = vmatprep.subr.mxu0 0.0
  %271 = vmatpush1.msra.mxu0 0.0
  %272 = vmatprep.subr.mxu0 0.0
  %273 = vmatpush1.msra.mxu0 0.0
  %274 = vmatprep.subr.mxu0 0.0
  %275 = vmatpush1.msra.mxu0 0.0
  %276 = vmatprep.subr.mxu0 0.0
  %277 = vmatpush1.msra.mxu0 0.0
  %278 = vmatprep.subr.mxu0 0.0
  %279 = vmatpush1.msra.mxu0 0.0
  %280 = vmatprep.subr.mxu0 0.0
  %281 = vmatpush1.msra.mxu0 0.0
  %282 = vmatprep.subr.mxu0 0.0
  %283 = vmatpush1.msra.mxu0 0.0
  %284 = vmatprep.subr.mxu0 0.0
  %285 = vmatpush1.msra.mxu0 0.0
  %286 = vmatprep.subr.mxu0 0.0
  %287 = vmatpush1.msra.mxu0 0.0
  %288 = vmatprep.subr.mxu0 0.0
  %289 = vmatpush1.msra.mxu0 0.0
  %290 = vmatprep.subr.mxu0 0.0
  %291 = vmatpush1.msra.mxu0 0.0
  %292 = vmatprep.subr.mxu0 0.0
  %293 = vmatpush1.msra.mxu0 0.0
  %294 = vmatprep.subr.mxu0 0.0
  %295 = vmatpush1.msra.mxu0 0.0
  %296 = vmatprep.mubr.f32.mxu0 0.0
  %297 = vmatmul.mubr.f32.gmra.mrb[0].mxu0 0.0
  %v298 = vpop.f32.mrb[0].mxu0
  %v299 = vadd.f32 0.0, %v298
  %v300 = vpop.f32.mrb[0].mxu0
  %v301 = vadd.f32 0.0, %v300
  %302 = vdwg.mxu0
  %v303 = vadd.f32 %v157, %v228
  %v304 = vadd.f32 %v158, %v230
  %v305 = vadd.f32 %v159, %v299
  %v306 = vadd.f32 %v160, %v301
  %v308 = vlaneseq
  %v309 = vshrl.u32 %v308, 7
  %v310 = vsub.s32 0, %v309
  %v311 = vrot.slane %v33, %v310
  %v312 = vlaneseq
  %v313 = vshrl.u32 %v312, 7
  %v314 = vsub.s32 1, %v313
  %v315 = vrot.slane %v33, %v314
  %v316 = vlaneseq
  %v317 = vshrl.u32 %v316, 7
  %v318 = vsub.s32 2, %v317
  %v319 = vrot.slane %v33, %v318
  %v320 = vlaneseq
  %v321 = vshrl.u32 %v320, 7
  %v322 = vsub.s32 3, %v321
  %v323 = vrot.slane %v33, %v322
  %v328 = vadd.f32 %v303, %v311
  %v329 = vadd.f32 %v304, %v315
  %v330 = vadd.f32 %v305, %v319
  %v331 = vadd.f32 %v306, %v323
  %v332 = vxor.u32 %v328, 2147483648
  %v333 = vmul.f32 %v332, 1.442695
  %v334 = vpow.pop %v333
  %v335 = vadd.f32 %v334, 1.0
  %v336 = vrcp.pop %v335
  %v337 = vmul.f32 1.0, %v336
  %v338 = vxor.u32 %v329, 2147483648
  %v339 = vmul.f32 %v338, 1.442695
  %v340 = vpow.pop %v339
  %v341 = vadd.f32 %v340, 1.0
  %v342 = vrcp.pop %v341
  %v343 = vmul.f32 1.0, %v342
  %v344 = vtanh.pop %v330
  %v345 = vxor.u32 %v331, 2147483648
  %v346 = vmul.f32 %v345, 1.442695
  %v347 = vpow.pop %v346
  %v348 = vadd.f32 %v347, 1.0
  %v349 = vrcp.pop %v348
  %v350 = vmul.f32 1.0, %v349
  %v351 = vmul.f32 %v343, 0.0
  %v352 = vmul.f32 %v337, %v344
  %v353 = vadd.f32 %v351, %v352
  %v354 = vtanh.pop %v353
  %v355 = vmul.f32 %v350, %v354
  %v356 = vld [vmem:[%s5] sm:$0xff]
  %v357 = vld [vmem:[%s5 + $0x8] sm:$0xff]
  %v358 = vld [vmem:[%s5 + $0x10] sm:$0xff]
  %v359 = vld [vmem:[%s5 + $0x18] sm:$0xff]
  %v360 = vld [vmem:[%s5 + $0x20] sm:$0xff]
  %v361 = vld [vmem:[%s5 + $0x28] sm:$0xff]
  %v362 = vld [vmem:[%s5 + $0x30] sm:$0xff]
  %v363 = vld [vmem:[%s5 + $0x38] sm:$0xff]
  %v364 = vld [vmem:[%s5 + $0x40] sm:$0xff]
  %v365 = vld [vmem:[%s5 + $0x48] sm:$0xff]
  %v366 = vld [vmem:[%s5 + $0x50] sm:$0xff]
  %v367 = vld [vmem:[%s5 + $0x58] sm:$0xff]
  %v368 = vld [vmem:[%s5 + $0x60] sm:$0xff]
  %v369 = vld [vmem:[%s5 + $0x68] sm:$0xff]
  %v370 = vld [vmem:[%s5 + $0x70] sm:$0xff]
  %v371 = vld [vmem:[%s5 + $0x78] sm:$0xff]
  %372 = vset.pattern.permute.xlu0 2
  %373 = vperm.xlu0 %372, %v28
  %v374 = vpop.permute.xlu0 %373
  %v376 = vmul.f32 %v374, %v107
  %v377 = vmul.f32 %v374, %v111
  %v378 = vmul.f32 %v374, %v115
  %v379 = vmul.f32 %v374, %v119
  %380 = vset.pattern.permute.xlu0 3
  %381 = vperm.xlu0 %380, %v28
  %v382 = vpop.permute.xlu0 %381
  %v384 = vmul.f32 %v382, %v136
  %v385 = vmul.f32 %v382, %v140
  %v386 = vmul.f32 %v382, %v144
  %v387 = vmul.f32 %v382, %v148
  %v388 = vadd.f32 %v376, %v384
  %v389 = vadd.f32 %v377, %v385
  %v390 = vadd.f32 %v378, %v386
  %v391 = vadd.f32 %v379, %v387
  %392 = vmatprep.subr.mxu0 %v35
  %393 = vmatpush1.msra.mxu0 %v34
  %394 = vmatprep.subr.mxu0 %v39
  %395 = vmatpush1.msra.mxu0 %v38
  %396 = vmatprep.subr.mxu0 %v43
  %397 = vmatpush1.msra.mxu0 %v42
  %398 = vmatprep.subr.mxu0 %v47
  %399 = vmatpush1.msra.mxu0 %v46
  %400 = vmatprep.subr.mxu0 %v51
  %401 = vmatpush1.msra.mxu0 %v50
  %402 = vmatprep.subr.mxu0 %v55
  %403 = vmatpush1.msra.mxu0 %v54
  %404 = vmatprep.subr.mxu0 %v59
  %405 = vmatpush1.msra.mxu0 %v58
  %406 = vmatprep.subr.mxu0 %v63
  %407 = vmatpush1.msra.mxu0 %v62
  %408 = vmatprep.subr.mxu0 %v67
  %409 = vmatpush1.msra.mxu0 %v66
  %410 = vmatprep.subr.mxu0 %v71
  %411 = vmatpush1.msra.mxu0 %v70
  %412 = vmatprep.subr.mxu0 %v75
  %413 = vmatpush1.msra.mxu0 %v74
  %414 = vmatprep.subr.mxu0 %v79
  %415 = vmatpush1.msra.mxu0 %v78
  %416 = vmatprep.subr.mxu0 %v83
  %417 = vmatpush1.msra.mxu0 %v82
  %418 = vmatprep.subr.mxu0 %v87
  %419 = vmatpush1.msra.mxu0 %v86
  %420 = vmatprep.subr.mxu0 %v91
  %421 = vmatpush1.msra.mxu0 %v90
  %422 = vmatprep.subr.mxu0 %v95
  %423 = vmatpush1.msra.mxu0 %v94
  %424 = vmatprep.subr.mxu0 0.0
  %425 = vmatpush1.msra.mxu0 0.0
  %426 = vmatprep.subr.mxu0 0.0
  %427 = vmatpush1.msra.mxu0 0.0
  %428 = vmatprep.subr.mxu0 0.0
  %429 = vmatpush1.msra.mxu0 0.0
  %430 = vmatprep.subr.mxu0 0.0
  %431 = vmatpush1.msra.mxu0 0.0
  %432 = vmatprep.subr.mxu0 0.0
  %433 = vmatpush1.msra.mxu0 0.0
  %434 = vmatprep.subr.mxu0 0.0
  %435 = vmatpush1.msra.mxu0 0.0
  %436 = vmatprep.subr.mxu0 0.0
  %437 = vmatpush1.msra.mxu0 0.0
  %438 = vmatprep.subr.mxu0 0.0
  %439 = vmatpush1.msra.mxu0 0.0
  %440 = vmatprep.subr.mxu0 0.0
  %441 = vmatpush1.msra.mxu0 0.0
  %442 = vmatprep.subr.mxu0 0.0
  %443 = vmatpush1.msra.mxu0 0.0
  %444 = vmatprep.subr.mxu0 0.0
  %445 = vmatpush1.msra.mxu0 0.0
  %446 = vmatprep.subr.mxu0 0.0
  %447 = vmatpush1.msra.mxu0 0.0
  %448 = vmatprep.subr.mxu0 0.0
  %449 = vmatpush1.msra.mxu0 0.0
  %450 = vmatprep.subr.mxu0 0.0
  %451 = vmatpush1.msra.mxu0 0.0
  %452 = vmatprep.subr.mxu0 0.0
  %453 = vmatpush1.msra.mxu0 0.0
  %454 = vmatprep.subr.mxu0 0.0
  %455 = vmatpush1.msra.mxu0 0.0
  %456 = vmatprep.mubr.f32.mxu0 0.0
  %457 = vmatmul.mubr.f32.gmra.mrb[0].mxu0 %v355
  %v458 = vpop.f32.mrb[0].mxu0
  %v459 = vadd.f32 0.0, %v458
  %v460 = vpop.f32.mrb[0].mxu0
  %v461 = vadd.f32 0.0, %v460
  %462 = vdwg.mxu0
  %463 = vmatprep.subr.mxu0 %v37
  %464 = vmatpush1.msra.mxu0 %v36
  %465 = vmatprep.subr.mxu0 %v41
  %466 = vmatpush1.msra.mxu0 %v40
  %467 = vmatprep.subr.mxu0 %v45
  %468 = vmatpush1.msra.mxu0 %v44
  %469 = vmatprep.subr.mxu0 %v49
  %470 = vmatpush1.msra.mxu0 %v48
  %471 = vmatprep.subr.mxu0 %v53
  %472 = vmatpush1.msra.mxu0 %v52
  %473 = vmatprep.subr.mxu0 %v57
  %474 = vmatpush1.msra.mxu0 %v56
  %475 = vmatprep.subr.mxu0 %v61
  %476 = vmatpush1.msra.mxu0 %v60
  %477 = vmatprep.subr.mxu0 %v65
  %478 = vmatpush1.msra.mxu0 %v64
  %479 = vmatprep.subr.mxu0 %v69
  %480 = vmatpush1.msra.mxu0 %v68
  %481 = vmatprep.subr.mxu0 %v73
  %482 = vmatpush1.msra.mxu0 %v72
  %483 = vmatprep.subr.mxu0 %v77
  %484 = vmatpush1.msra.mxu0 %v76
  %485 = vmatprep.subr.mxu0 %v81
  %486 = vmatpush1.msra.mxu0 %v80
  %487 = vmatprep.subr.mxu0 %v85
  %488 = vmatpush1.msra.mxu0 %v84
  %489 = vmatprep.subr.mxu0 %v89
  %490 = vmatpush1.msra.mxu0 %v88
  %491 = vmatprep.subr.mxu0 %v93
  %492 = vmatpush1.msra.mxu0 %v92
  %493 = vmatprep.subr.mxu0 %v97
  %494 = vmatpush1.msra.mxu0 %v96
  %495 = vmatprep.subr.mxu0 0.0
  %496 = vmatpush1.msra.mxu0 0.0
  %497 = vmatprep.subr.mxu0 0.0
  %498 = vmatpush1.msra.mxu0 0.0
  %499 = vmatprep.subr.mxu0 0.0
  %500 = vmatpush1.msra.mxu0 0.0
  %501 = vmatprep.subr.mxu0 0.0
  %502 = vmatpush1.msra.mxu0 0.0
  %503 = vmatprep.subr.mxu0 0.0
  %504 = vmatpush1.msra.mxu0 0.0
  %505 = vmatprep.subr.mxu0 0.0
  %506 = vmatpush1.msra.mxu0 0.0
  %507 = vmatprep.subr.mxu0 0.0
  %508 = vmatpush1.msra.mxu0 0.0
  %509 = vmatprep.subr.mxu0 0.0
  %510 = vmatpush1.msra.mxu0 0.0
  %511 = vmatprep.subr.mxu0 0.0
  %512 = vmatpush1.msra.mxu0 0.0
  %513 = vmatprep.subr.mxu0 0.0
  %514 = vmatpush1.msra.mxu0 0.0
  %515 = vmatprep.subr.mxu0 0.0
  %516 = vmatpush1.msra.mxu0 0.0
  %517 = vmatprep.subr.mxu0 0.0
  %518 = vmatpush1.msra.mxu0 0.0
  %519 = vmatprep.subr.mxu0 0.0
  %520 = vmatpush1.msra.mxu0 0.0
  %521 = vmatprep.subr.mxu0 0.0
  %522 = vmatpush1.msra.mxu0 0.0
  %523 = vmatprep.subr.mxu0 0.0
  %524 = vmatpush1.msra.mxu0 0.0
  %525 = vmatprep.subr.mxu0 0.0
  %526 = vmatpush1.msra.mxu0 0.0
  %527 = vmatprep.mubr.f32.mxu0 0.0
  %528 = vmatmul.mubr.f32.gmra.mrb[0].mxu0 %v355
  %v529 = vpop.f32.mrb[0].mxu0
  %v530 = vadd.f32 0.0, %v529
  %v531 = vpop.f32.mrb[0].mxu0
  %v532 = vadd.f32 0.0, %v531
  %533 = vdwg.mxu0
  %v534 = vadd.f32 %v388, %v459
  %v535 = vadd.f32 %v389, %v461
  %v536 = vadd.f32 %v390, %v530
  %v537 = vadd.f32 %v391, %v532
  %v538 = vadd.f32 %v534, %v311
  %v539 = vadd.f32 %v535, %v315
  %v540 = vadd.f32 %v536, %v319
  %v541 = vadd.f32 %v537, %v323
  %v542 = vxor.u32 %v538, 2147483648
  %v543 = vmul.f32 %v542, 1.442695
  %v544 = vpow.pop %v543
  %v545 = vadd.f32 %v544, 1.0
  %v546 = vrcp.pop %v545
  %v547 = vmul.f32 1.0, %v546
  %v548 = vxor.u32 %v539, 2147483648
  %v549 = vmul.f32 %v548, 1.442695
  %v550 = vpow.pop %v549
  %v551 = vadd.f32 %v550, 1.0
  %v552 = vrcp.pop %v551
  %v553 = vmul.f32 1.0, %v552
  %v554 = vtanh.pop %v540
  %v555 = vxor.u32 %v541, 2147483648
  %v556 = vmul.f32 %v555, 1.442695
  %v557 = vpow.pop %v556
  %v558 = vadd.f32 %v557, 1.0
  %v559 = vrcp.pop %v558
  %v560 = vmul.f32 1.0, %v559
  %v561 = vmul.f32 %v553, %v353
  %v562 = vmul.f32 %v547, %v554
  %v563 = vadd.f32 %v561, %v562
  %v564 = vtanh.pop %v563
  %v565 = vmul.f32 %v560, %v564
  %v566 = vld [vmem:[%s5 + $0x80] sm:$0xff]
  %v567 = vld [vmem:[%s5 + $0x88] sm:$0xff]
  %v568 = vld [vmem:[%s5 + $0x90] sm:$0xff]
  %v569 = vld [vmem:[%s5 + $0x98] sm:$0xff]
  %v570 = vld [vmem:[%s5 + $0xa0] sm:$0xff]
  %v571 = vld [vmem:[%s5 + $0xa8] sm:$0xff]
  %v572 = vld [vmem:[%s5 + $0xb0] sm:$0xff]
  %v573 = vld [vmem:[%s5 + $0xb8] sm:$0xff]
  %v574 = vld [vmem:[%s5 + $0xc0] sm:$0xff]
  %v575 = vld [vmem:[%s5 + $0xc8] sm:$0xff]
  %v576 = vld [vmem:[%s5 + $0xd0] sm:$0xff]
  %v577 = vld [vmem:[%s5 + $0xd8] sm:$0xff]
  %v578 = vld [vmem:[%s5 + $0xe0] sm:$0xff]
  %v579 = vld [vmem:[%s5 + $0xe8] sm:$0xff]
  %v580 = vld [vmem:[%s5 + $0xf0] sm:$0xff]
  %v581 = vld [vmem:[%s5 + $0xf8] sm:$0xff]
  %582 = vmatprep.subr.mxu0 0.0
  %583 = vmatpush1.msra.mxu0 %v566
  %584 = vmatprep.subr.mxu0 0.0
  %585 = vmatpush1.msra.mxu0 %v567
  %586 = vmatprep.subr.mxu0 0.0
  %587 = vmatpush1.msra.mxu0 %v568
  %588 = vmatprep.subr.mxu0 0.0
  %589 = vmatpush1.msra.mxu0 %v569
  %590 = vmatprep.subr.mxu0 0.0
  %591 = vmatpush1.msra.mxu0 %v570
  %592 = vmatprep.subr.mxu0 0.0
  %593 = vmatpush1.msra.mxu0 %v571
  %594 = vmatprep.subr.mxu0 0.0
  %595 = vmatpush1.msra.mxu0 %v572
  %596 = vmatprep.subr.mxu0 0.0
  %597 = vmatpush1.msra.mxu0 %v573
  %598 = vmatprep.subr.mxu0 0.0
  %599 = vmatpush1.msra.mxu0 %v574
  %600 = vmatprep.subr.mxu0 0.0
  %601 = vmatpush1.msra.mxu0 %v575
  %602 = vmatprep.subr.mxu0 0.0
  %603 = vmatpush1.msra.mxu0 %v576
  %604 = vmatprep.subr.mxu0 0.0
  %605 = vmatpush1.msra.mxu0 %v577
  %606 = vmatprep.subr.mxu0 0.0
  %607 = vmatpush1.msra.mxu0 %v578
  %608 = vmatprep.subr.mxu0 0.0
  %609 = vmatpush1.msra.mxu0 %v579
  %610 = vmatprep.subr.mxu0 0.0
  %611 = vmatpush1.msra.mxu0 %v580
  %612 = vmatprep.subr.mxu0 0.0
  %613 = vmatpush1.msra.mxu0 %v581
  %614 = vmatprep.subr.mxu0 0.0
  %615 = vmatpush1.msra.mxu0 0.0
  %616 = vmatprep.subr.mxu0 0.0
  %617 = vmatpush1.msra.mxu0 0.0
  %618 = vmatprep.subr.mxu0 0.0
  %619 = vmatpush1.msra.mxu0 0.0
  %620 = vmatprep.subr.mxu0 0.0
  %621 = vmatpush1.msra.mxu0 0.0
  %622 = vmatprep.subr.mxu0 0.0
  %623 = vmatpush1.msra.mxu0 0.0
  %624 = vmatprep.subr.mxu0 0.0
  %625 = vmatpush1.msra.mxu0 0.0
  %626 = vmatprep.subr.mxu0 0.0
  %627 = vmatpush1.msra.mxu0 0.0
  %628 = vmatprep.subr.mxu0 0.0
  %629 = vmatpush1.msra.mxu0 0.0
  %630 = vmatprep.subr.mxu0 0.0
  %631 = vmatpush1.msra.mxu0 0.0
  %632 = vmatprep.subr.mxu0 0.0
  %633 = vmatpush1.msra.mxu0 0.0
  %634 = vmatprep.subr.mxu0 0.0
  %635 = vmatpush1.msra.mxu0 0.0
  %636 = vmatprep.subr.mxu0 0.0
  %637 = vmatpush1.msra.mxu0 0.0
  %638 = vmatprep.subr.mxu0 0.0
  %639 = vmatpush1.msra.mxu0 0.0
  %640 = vmatprep.subr.mxu0 0.0
  %641 = vmatpush1.msra.mxu0 0.0
  %642 = vmatprep.subr.mxu0 0.0
  %643 = vmatpush1.msra.mxu0 0.0
  %644 = vmatprep.subr.mxu0 0.0
  %645 = vmatpush1.msra.mxu0 0.0
  %646 = vmatprep.mubr.f32.mxu0 0.0
  %647 = vmatmul.mubr.f32.gmra.mrb[0].mxu0 %v565
  %v648 = vpop.f32.mrb[0].mxu0
  %v649 = vadd.f32 0.0, %v648
  %v650 = vpop.f32.mrb[0].mxu0
  %651 = vdwg.mxu0
  %652 = vmatprep.subr.mxu0 0.0
  %653 = vmatpush1.msra.mxu0 %v356
  %654 = vmatprep.subr.mxu0 0.0
  %655 = vmatpush1.msra.mxu0 %v357
  %656 = vmatprep.subr.mxu0 0.0
  %657 = vmatpush1.msra.mxu0 %v358
  %658 = vmatprep.subr.mxu0 0.0
  %659 = vmatpush1.msra.mxu0 %v359
  %660 = vmatprep.subr.mxu0 0.0
  %661 = vmatpush1.msra.mxu0 %v360
  %662 = vmatprep.subr.mxu0 0.0
  %663 = vmatpush1.msra.mxu0 %v361
  %664 = vmatprep.subr.mxu0 0.0
  %665 = vmatpush1.msra.mxu0 %v362
  %666 = vmatprep.subr.mxu0 0.0
  %667 = vmatpush1.msra.mxu0 %v363
  %668 = vmatprep.subr.mxu0 0.0
  %669 = vmatpush1.msra.mxu0 %v364
  %670 = vmatprep.subr.mxu0 0.0
  %671 = vmatpush1.msra.mxu0 %v365
  %672 = vmatprep.subr.mxu0 0.0
  %673 = vmatpush1.msra.mxu0 %v366
  %674 = vmatprep.subr.mxu0 0.0
  %675 = vmatpush1.msra.mxu0 %v367
  %676 = vmatprep.subr.mxu0 0.0
  %677 = vmatpush1.msra.mxu0 %v368
  %678 = vmatprep.subr.mxu0 0.0
  %679 = vmatpush1.msra.mxu0 %v369
  %680 = vmatprep.subr.mxu0 0.0
  %681 = vmatpush1.msra.mxu0 %v370
  %682 = vmatprep.subr.mxu0 0.0
  %683 = vmatpush1.msra.mxu0 %v371
  %684 = vmatprep.subr.mxu0 0.0
  %685 = vmatpush1.msra.mxu0 0.0
  %686 = vmatprep.subr.mxu0 0.0
  %687 = vmatpush1.msra.mxu0 0.0
  %688 = vmatprep.subr.mxu0 0.0
  %689 = vmatpush1.msra.mxu0 0.0
  %690 = vmatprep.subr.mxu0 0.0
  %691 = vmatpush1.msra.mxu0 0.0
  %692 = vmatprep.subr.mxu0 0.0
  %693 = vmatpush1.msra.mxu0 0.0
  %694 = vmatprep.subr.mxu0 0.0
  %695 = vmatpush1.msra.mxu0 0.0
  %696 = vmatprep.subr.mxu0 0.0
  %697 = vmatpush1.msra.mxu0 0.0
  %698 = vmatprep.subr.mxu0 0.0
  %699 = vmatpush1.msra.mxu0 0.0
  %700 = vmatprep.subr.mxu0 0.0
  %701 = vmatpush1.msra.mxu0 0.0
  %702 = vmatprep.subr.mxu0 0.0
  %703 = vmatpush1.msra.mxu0 0.0
  %704 = vmatprep.subr.mxu0 0.0
  %705 = vmatpush1.msra.mxu0 0.0
  %706 = vmatprep.subr.mxu0 0.0
  %707 = vmatpush1.msra.mxu0 0.0
  %708 = vmatprep.subr.mxu0 0.0
  %709 = vmatpush1.msra.mxu0 0.0
  %710 = vmatprep.subr.mxu0 0.0
  %711 = vmatpush1.msra.mxu0 0.0
  %712 = vmatprep.subr.mxu0 0.0
  %713 = vmatpush1.msra.mxu0 0.0
  %714 = vmatprep.subr.mxu0 0.0
  %715 = vmatpush1.msra.mxu0 0.0
  %716 = vmatprep.mubr.f32.mxu0 0.0
  %717 = vmatmul.mubr.f32.gmra.mrb[0].mxu0 %v355
  %v718 = vpop.f32.mrb[0].mxu0
  %v719 = vadd.f32 %v649, %v718
  %v720 = vpop.f32.mrb[0].mxu0
  %721 = vdwg.mxu0
  %722 = vset.pattern.permute.xlu0 4
  %723 = vperm.xlu0 %722, %v28
  %v724 = vpop.permute.xlu0 %723
  %v726 = vmul.f32 %v724, %v107
  %v727 = vmul.f32 %v724, %v111
  %v728 = vmul.f32 %v724, %v115
  %v729 = vmul.f32 %v724, %v119
  %730 = vset.pattern.permute.xlu0 5
  %731 = vperm.xlu0 %730, %v28
  %v732 = vpop.permute.xlu0 %731
  %v734 = vmul.f32 %v732, %v136
  %v735 = vmul.f32 %v732, %v140
  %v736 = vmul.f32 %v732, %v144
  %v737 = vmul.f32 %v732, %v148
  %v738 = vadd.f32 %v726, %v734
  %v739 = vadd.f32 %v727, %v735
  %v740 = vadd.f32 %v728, %v736
  %v741 = vadd.f32 %v729, %v737
  %742 = vmatprep.subr.mxu0 %v35
  %743 = vmatpush1.msra.mxu0 %v34
  %744 = vmatprep.subr.mxu0 %v39
  %745 = vmatpush1.msra.mxu0 %v38
  %746 = vmatprep.subr.mxu0 %v43
  %747 = vmatpush1.msra.mxu0 %v42
  %748 = vmatprep.subr.mxu0 %v47
  %749 = vmatpush1.msra.mxu0 %v46
  %750 = vmatprep.subr.mxu0 %v51
  %751 = vmatpush1.msra.mxu0 %v50
  %752 = vmatprep.subr.mxu0 %v55
  %753 = vmatpush1.msra.mxu0 %v54
  %754 = vmatprep.subr.mxu0 %v59
  %755 = vmatpush1.msra.mxu0 %v58
  %756 = vmatprep.subr.mxu0 %v63
  %757 = vmatpush1.msra.mxu0 %v62
  %758 = vmatprep.subr.mxu0 %v67
  %759 = vmatpush1.msra.mxu0 %v66
  %760 = vmatprep.subr.mxu0 %v71
  %761 = vmatpush1.msra.mxu0 %v70
  %762 = vmatprep.subr.mxu0 %v75
  %763 = vmatpush1.msra.mxu0 %v74
  %764 = vmatprep.subr.mxu0 %v79
  %765 = vmatpush1.msra.mxu0 %v78
  %766 = vmatprep.subr.mxu0 %v83
  %767 = vmatpush1.msra.mxu0 %v82
  %768 = vmatprep.subr.mxu0 %v87
  %769 = vmatpush1.msra.mxu0 %v86
  %770 = vmatprep.subr.mxu0 %v91
  %771 = vmatpush1.msra.mxu0 %v90
  %772 = vmatprep.subr.mxu0 %v95
  %773 = vmatpush1.msra.mxu0 %v94
  %774 = vmatprep.subr.mxu0 0.0
  %775 = vmatpush1.msra.mxu0 0.0
  %776 = vmatprep.subr.mxu0 0.0
  %777 = vmatpush1.msra.mxu0 0.0
  %778 = vmatprep.subr.mxu0 0.0
  %779 = vmatpush1.msra.mxu0 0.0
  %780 = vmatprep.subr.mxu0 0.0
  %781 = vmatpush1.msra.mxu0 0.0
  %782 = vmatprep.subr.mxu0 0.0
  %783 = vmatpush1.msra.mxu0 0.0
  %784 = vmatprep.subr.mxu0 0.0
  %785 = vmatpush1.msra.mxu0 0.0
  %786 = vmatprep.subr.mxu0 0.0
  %787 = vmatpush1.msra.mxu0 0.0
  %788 = vmatprep.subr.mxu0 0.0
  %789 = vmatpush1.msra.mxu0 0.0
  %790 = vmatprep.subr.mxu0 0.0
  %791 = vmatpush1.msra.mxu0 0.0
  %792 = vmatprep.subr.mxu0 0.0
  %793 = vmatpush1.msra.mxu0 0.0
  %794 = vmatprep.subr.mxu0 0.0
  %795 = vmatpush1.msra.mxu0 0.0
  %796 = vmatprep.subr.mxu0 0.0
  %797 = vmatpush1.msra.mxu0 0.0
  %798 = vmatprep.subr.mxu0 0.0
  %799 = vmatpush1.msra.mxu0 0.0
  %800 = vmatprep.subr.mxu0 0.0
  %801 = vmatpush1.msra.mxu0 0.0
  %802 = vmatprep.subr.mxu0 0.0
  %803 = vmatpush1.msra.mxu0 0.0
  %804 = vmatprep.subr.mxu0 0.0
  %805 = vmatpush1.msra.mxu0 0.0
  %806 = vmatprep.mubr.f32.mxu0 0.0
  %807 = vmatmul.mubr.f32.gmra.mrb[0].mxu0 %v565
  %v808 = vpop.f32.mrb[0].mxu0
  %v809 = vadd.f32 0.0, %v808
  %v810 = vpop.f32.mrb[0].mxu0
  %v811 = vadd.f32 0.0, %v810
  %812 = vdwg.mxu0
  %813 = vmatprep.subr.mxu0 %v37
  %814 = vmatpush1.msra.mxu0 %v36
  %815 = vmatprep.subr.mxu0 %v41
  %816 = vmatpush1.msra.mxu0 %v40
  %817 = vmatprep.subr.mxu0 %v45
  %818 = vmatpush1.msra.mxu0 %v44
  %819 = vmatprep.subr.mxu0 %v49
  %820 = vmatpush1.msra.mxu0 %v48
  %821 = vmatprep.subr.mxu0 %v53
  %822 = vmatpush1.msra.mxu0 %v52
  %823 = vmatprep.subr.mxu0 %v57
  %824 = vmatpush1.msra.mxu0 %v56
  %825 = vmatprep.subr.mxu0 %v61
  %826 = vmatpush1.msra.mxu0 %v60
  %827 = vmatprep.subr.mxu0 %v65
  %828 = vmatpush1.msra.mxu0 %v64
  %829 = vmatprep.subr.mxu0 %v69
  %830 = vmatpush1.msra.mxu0 %v68
  %831 = vmatprep.subr.mxu0 %v73
  %832 = vmatpush1.msra.mxu0 %v72
  %833 = vmatprep.subr.mxu0 %v77
  %834 = vmatpush1.msra.mxu0 %v76
  %835 = vmatprep.subr.mxu0 %v81
  %836 = vmatpush1.msra.mxu0 %v80
  %837 = vmatprep.subr.mxu0 %v85
  %838 = vmatpush1.msra.mxu0 %v84
  %839 = vmatprep.subr.mxu0 %v89
  %840 = vmatpush1.msra.mxu0 %v88
  %841 = vmatprep.subr.mxu0 %v93
  %842 = vmatpush1.msra.mxu0 %v92
  %843 = vmatprep.subr.mxu0 %v97
  %844 = vmatpush1.msra.mxu0 %v96
  %845 = vmatprep.subr.mxu0 0.0
  %846 = vmatpush1.msra.mxu0 0.0
  %847 = vmatprep.subr.mxu0 0.0
  %848 = vmatpush1.msra.mxu0 0.0
  %849 = vmatprep.subr.mxu0 0.0
  %850 = vmatpush1.msra.mxu0 0.0
  %851 = vmatprep.subr.mxu0 0.0
  %852 = vmatpush1.msra.mxu0 0.0
  %853 = vmatprep.subr.mxu0 0.0
  %854 = vmatpush1.msra.mxu0 0.0
  %855 = vmatprep.subr.mxu0 0.0
  %856 = vmatpush1.msra.mxu0 0.0
  %857 = vmatprep.subr.mxu0 0.0
  %858 = vmatpush1.msra.mxu0 0.0
  %859 = vmatprep.subr.mxu0 0.0
  %860 = vmatpush1.msra.mxu0 0.0
  %861 = vmatprep.subr.mxu0 0.0
  %862 = vmatpush1.msra.mxu0 0.0
  %863 = vmatprep.subr.mxu0 0.0
  %864 = vmatpush1.msra.mxu0 0.0
  %865 = vmatprep.subr.mxu0 0.0
  %866 = vmatpush1.msra.mxu0 0.0
  %867 = vmatprep.subr.mxu0 0.0
  %868 = vmatpush1.msra.mxu0 0.0
  %869 = vmatprep.subr.mxu0 0.0
  %870 = vmatpush1.msra.mxu0 0.0
  %871 = vmatprep.subr.mxu0 0.0
  %872 = vmatpush1.msra.mxu0 0.0
  %873 = vmatprep.subr.mxu0 0.0
  %874 = vmatpush1.msra.mxu0 0.0
  %875 = vmatprep.subr.mxu0 0.0
  %876 = vmatpush1.msra.mxu0 0.0
  %877 = vmatprep.mubr.f32.mxu0 0.0
  %878 = vmatmul.mubr.f32.gmra.mrb[0].mxu0 %v565
  %v879 = vpop.f32.mrb[0].mxu0
  %v880 = vadd.f32 0.0, %v879
  %v881 = vpop.f32.mrb[0].mxu0
  %v882 = vadd.f32 0.0, %v881
  %883 = vdwg.mxu0
  %v884 = vadd.f32 %v738, %v809
  %v885 = vadd.f32 %v739, %v811
  %v886 = vadd.f32 %v740, %v880
  %v887 = vadd.f32 %v741, %v882
  %v888 = vadd.f32 %v884, %v311
  %v889 = vadd.f32 %v885, %v315
  %v890 = vadd.f32 %v886, %v319
  %v891 = vadd.f32 %v887, %v323
  %v892 = vxor.u32 %v888, 2147483648
  %v893 = vmul.f32 %v892, 1.442695
  %v894 = vpow.pop %v893
  %v895 = vadd.f32 %v894, 1.0
  %v896 = vrcp.pop %v895
  %v897 = vmul.f32 1.0, %v896
  %v898 = vxor.u32 %v889, 2147483648
  %v899 = vmul.f32 %v898, 1.442695
  %v900 = vpow.pop %v899
  %v901 = vadd.f32 %v900, 1.0
  %v902 = vrcp.pop %v901
  %v903 = vmul.f32 1.0, %v902
  %v904 = vtanh.pop %v890
  %v905 = vxor.u32 %v891, 2147483648
  %v906 = vmul.f32 %v905, 1.442695
  %v907 = vpow.pop %v906
  %v908 = vadd.f32 %v907, 1.0
  %v909 = vrcp.pop %v908
  %v910 = vmul.f32 1.0, %v909
  %v911 = vmul.f32 %v903, %v563
  %v912 = vmul.f32 %v897, %v904
  %v913 = vadd.f32 %v911, %v912
  %v914 = vtanh.pop %v913
  %v915 = vmul.f32 %v910, %v914
  %v916 = vld [vmem:[%s5 + $0x100] sm:$0xff]
  %v917 = vld [vmem:[%s5 + $0x108] sm:$0xff]
  %v918 = vld [vmem:[%s5 + $0x110] sm:$0xff]
  %v919 = vld [vmem:[%s5 + $0x118] sm:$0xff]
  %v920 = vld [vmem:[%s5 + $0x120] sm:$0xff]
  %v921 = vld [vmem:[%s5 + $0x128] sm:$0xff]
  %v922 = vld [vmem:[%s5 + $0x130] sm:$0xff]
  %v923 = vld [vmem:[%s5 + $0x138] sm:$0xff]
  %v924 = vld [vmem:[%s5 + $0x140] sm:$0xff]
  %v925 = vld [vmem:[%s5 + $0x148] sm:$0xff]
  %v926 = vld [vmem:[%s5 + $0x150] sm:$0xff]
  %v927 = vld [vmem:[%s5 + $0x158] sm:$0xff]
  %v928 = vld [vmem:[%s5 + $0x160] sm:$0xff]
  %v929 = vld [vmem:[%s5 + $0x168] sm:$0xff]
  %v930 = vld [vmem:[%s5 + $0x170] sm:$0xff]
  %v931 = vld [vmem:[%s5 + $0x178] sm:$0xff]
  %932 = vmatprep.subr.mxu0 0.0
  %933 = vmatpush1.msra.mxu0 %v916
  %934 = vmatprep.subr.mxu0 0.0
  %935 = vmatpush1.msra.mxu0 %v917
  %936 = vmatprep.subr.mxu0 0.0
  %937 = vmatpush1.msra.mxu0 %v918
  %938 = vmatprep.subr.mxu0 0.0
  %939 = vmatpush1.msra.mxu0 %v919
  %940 = vmatprep.subr.mxu0 0.0
  %941 = vmatpush1.msra.mxu0 %v920
  %942 = vmatprep.subr.mxu0 0.0
  %943 = vmatpush1.msra.mxu0 %v921
  %944 = vmatprep.subr.mxu0 0.0
  %945 = vmatpush1.msra.mxu0 %v922
  %946 = vmatprep.subr.mxu0 0.0
  %947 = vmatpush1.msra.mxu0 %v923
  %948 = vmatprep.subr.mxu0 0.0
  %949 = vmatpush1.msra.mxu0 %v924
  %950 = vmatprep.subr.mxu0 0.0
  %951 = vmatpush1.msra.mxu0 %v925
  %952 = vmatprep.subr.mxu0 0.0
  %953 = vmatpush1.msra.mxu0 %v926
  %954 = vmatprep.subr.mxu0 0.0
  %955 = vmatpush1.msra.mxu0 %v927
  %956 = vmatprep.subr.mxu0 0.0
  %957 = vmatpush1.msra.mxu0 %v928
  %958 = vmatprep.subr.mxu0 0.0
  %959 = vmatpush1.msra.mxu0 %v929
  %960 = vmatprep.subr.mxu0 0.0
  %961 = vmatpush1.msra.mxu0 %v930
  %962 = vmatprep.subr.mxu0 0.0
  %963 = vmatpush1.msra.mxu0 %v931
  %964 = vmatprep.subr.mxu0 0.0
  %965 = vmatpush1.msra.mxu0 0.0
  %966 = vmatprep.subr.mxu0 0.0
  %967 = vmatpush1.msra.mxu0 0.0
  %968 = vmatprep.subr.mxu0 0.0
  %969 = vmatpush1.msra.mxu0 0.0
  %970 = vmatprep.subr.mxu0 0.0
  %971 = vmatpush1.msra.mxu0 0.0
  %972 = vmatprep.subr.mxu0 0.0
  %973 = vmatpush1.msra.mxu0 0.0
  %974 = vmatprep.subr.mxu0 0.0
  %975 = vmatpush1.msra.mxu0 0.0
  %976 = vmatprep.subr.mxu0 0.0
  %977 = vmatpush1.msra.mxu0 0.0
  %978 = vmatprep.subr.mxu0 0.0
  %979 = vmatpush1.msra.mxu0 0.0
  %980 = vmatprep.subr.mxu0 0.0
  %981 = vmatpush1.msra.mxu0 0.0
  %982 = vmatprep.subr.mxu0 0.0
  %983 = vmatpush1.msra.mxu0 0.0
  %984 = vmatprep.subr.mxu0 0.0
  %985 = vmatpush1.msra.mxu0 0.0
  %986 = vmatprep.subr.mxu0 0.0
  %987 = vmatpush1.msra.mxu0 0.0
  %988 = vmatprep.subr.mxu0 0.0
  %989 = vmatpush1.msra.mxu0 0.0
  %990 = vmatprep.subr.mxu0 0.0
  %991 = vmatpush1.msra.mxu0 0.0
  %992 = vmatprep.subr.mxu0 0.0
  %993 = vmatpush1.msra.mxu0 0.0
  %994 = vmatprep.subr.mxu0 0.0
  %995 = vmatpush1.msra.mxu0 0.0
  %996 = vmatprep.mubr.f32.mxu0 0.0
  %997 = vmatmul.mubr.f32.gmra.mrb[0].mxu0 %v915
  %v998 = vpop.f32.mrb[0].mxu0
  %v999 = vadd.f32 0.0, %v998
  %v1000 = vpop.f32.mrb[0].mxu0
  %1001 = vdwg.mxu0
  %v1002 = vadd.f32 %v719, %v999
  %1003 = vset.pattern.permute.xlu0 6
  %1004 = vperm.xlu0 %1003, %v28
  %v1005 = vpop.permute.xlu0 %1004
  %v1007 = vmul.f32 %v1005, %v107
  %v1008 = vmul.f32 %v1005, %v111
  %v1009 = vmul.f32 %v1005, %v115
  %v1010 = vmul.f32 %v1005, %v119
  %1011 = vset.pattern.permute.xlu0 7
  %1012 = vperm.xlu0 %1011, %v28
  %v1013 = vpop.permute.xlu0 %1012
  %v1015 = vmul.f32 %v1013, %v136
  %v1016 = vmul.f32 %v1013, %v140
  %v1017 = vmul.f32 %v1013, %v144
  %v1018 = vmul.f32 %v1013, %v148
  %v1019 = vadd.f32 %v1007, %v1015
  %v1020 = vadd.f32 %v1008, %v1016
  %v1021 = vadd.f32 %v1009, %v1017
  %v1022 = vadd.f32 %v1010, %v1018
  %1023 = vmatprep.subr.mxu0 %v35
  %1024 = vmatpush1.msra.mxu0 %v34
  %1025 = vmatprep.subr.mxu0 %v39
  %1026 = vmatpush1.msra.mxu0 %v38
  %1027 = vmatprep.subr.mxu0 %v43
  %1028 = vmatpush1.msra.mxu0 %v42
  %1029 = vmatprep.subr.mxu0 %v47
  %1030 = vmatpush1.msra.mxu0 %v46
  %1031 = vmatprep.subr.mxu0 %v51
  %1032 = vmatpush1.msra.mxu0 %v50
  %1033 = vmatprep.subr.mxu0 %v55
  %1034 = vmatpush1.msra.mxu0 %v54
  %1035 = vmatprep.subr.mxu0 %v59
  %1036 = vmatpush1.msra.mxu0 %v58
  %1037 = vmatprep.subr.mxu0 %v63
  %1038 = vmatpush1.msra.mxu0 %v62
  %1039 = vmatprep.subr.mxu0 %v67
  %1040 = vmatpush1.msra.mxu0 %v66
  %1041 = vmatprep.subr.mxu0 %v71
  %1042 = vmatpush1.msra.mxu0 %v70
  %1043 = vmatprep.subr.mxu0 %v75
  %1044 = vmatpush1.msra.mxu0 %v74
  %1045 = vmatprep.subr.mxu0 %v79
  %1046 = vmatpush1.msra.mxu0 %v78
  %1047 = vmatprep.subr.mxu0 %v83
  %1048 = vmatpush1.msra.mxu0 %v82
  %1049 = vmatprep.subr.mxu0 %v87
  %1050 = vmatpush1.msra.mxu0 %v86
  %1051 = vmatprep.subr.mxu0 %v91
  %1052 = vmatpush1.msra.mxu0 %v90
  %1053 = vmatprep.subr.mxu0 %v95
  %1054 = vmatpush1.msra.mxu0 %v94
  %1055 = vmatprep.subr.mxu0 0.0
  %1056 = vmatpush1.msra.mxu0 0.0
  %1057 = vmatprep.subr.mxu0 0.0
  %1058 = vmatpush1.msra.mxu0 0.0
  %1059 = vmatprep.subr.mxu0 0.0
  %1060 = vmatpush1.msra.mxu0 0.0
  %1061 = vmatprep.subr.mxu0 0.0
  %1062 = vmatpush1.msra.mxu0 0.0
  %1063 = vmatprep.subr.mxu0 0.0
  %1064 = vmatpush1.msra.mxu0 0.0
  %1065 = vmatprep.subr.mxu0 0.0
  %1066 = vmatpush1.msra.mxu0 0.0
  %1067 = vmatprep.subr.mxu0 0.0
  %1068 = vmatpush1.msra.mxu0 0.0
  %1069 = vmatprep.subr.mxu0 0.0
  %1070 = vmatpush1.msra.mxu0 0.0
  %1071 = vmatprep.subr.mxu0 0.0
  %1072 = vmatpush1.msra.mxu0 0.0
  %1073 = vmatprep.subr.mxu0 0.0
  %1074 = vmatpush1.msra.mxu0 0.0
  %1075 = vmatprep.subr.mxu0 0.0
  %1076 = vmatpush1.msra.mxu0 0.0
  %1077 = vmatprep.subr.mxu0 0.0
  %1078 = vmatpush1.msra.mxu0 0.0
  %1079 = vmatprep.subr.mxu0 0.0
  %1080 = vmatpush1.msra.mxu0 0.0
  %1081 = vmatprep.subr.mxu0 0.0
  %1082 = vmatpush1.msra.mxu0 0.0
  %1083 = vmatprep.subr.mxu0 0.0
  %1084 = vmatpush1.msra.mxu0 0.0
  %1085 = vmatprep.subr.mxu0 0.0
  %1086 = vmatpush1.msra.mxu0 0.0
  %1087 = vmatprep.mubr.f32.mxu0 0.0
  %1088 = vmatmul.mubr.f32.gmra.mrb[0].mxu0 %v915
  %v1089 = vpop.f32.mrb[0].mxu0
  %v1090 = vadd.f32 0.0, %v1089
  %v1091 = vpop.f32.mrb[0].mxu0
  %v1092 = vadd.f32 0.0, %v1091
  %1093 = vdwg.mxu0
  %1094 = vmatprep.subr.mxu0 %v37
  %1095 = vmatpush1.msra.mxu0 %v36
  %1096 = vmatprep.subr.mxu0 %v41
  %1097 = vmatpush1.msra.mxu0 %v40
  %1098 = vmatprep.subr.mxu0 %v45
  %1099 = vmatpush1.msra.mxu0 %v44
  %1100 = vmatprep.subr.mxu0 %v49
  %1101 = vmatpush1.msra.mxu0 %v48
  %1102 = vmatprep.subr.mxu0 %v53
  %1103 = vmatpush1.msra.mxu0 %v52
  %1104 = vmatprep.subr.mxu0 %v57
  %1105 = vmatpush1.msra.mxu0 %v56
  %1106 = vmatprep.subr.mxu0 %v61
  %1107 = vmatpush1.msra.mxu0 %v60
  %1108 = vmatprep.subr.mxu0 %v65
  %1109 = vmatpush1.msra.mxu0 %v64
  %1110 = vmatprep.subr.mxu0 %v69
  %1111 = vmatpush1.msra.mxu0 %v68
  %1112 = vmatprep.subr.mxu0 %v73
  %1113 = vmatpush1.msra.mxu0 %v72
  %1114 = vmatprep.subr.mxu0 %v77
  %1115 = vmatpush1.msra.mxu0 %v76
  %1116 = vmatprep.subr.mxu0 %v81
  %1117 = vmatpush1.msra.mxu0 %v80
  %1118 = vmatprep.subr.mxu0 %v85
  %1119 = vmatpush1.msra.mxu0 %v84
  %1120 = vmatprep.subr.mxu0 %v89
  %1121 = vmatpush1.msra.mxu0 %v88
  %1122 = vmatprep.subr.mxu0 %v93
  %1123 = vmatpush1.msra.mxu0 %v92
  %1124 = vmatprep.subr.mxu0 %v97
  %1125 = vmatpush1.msra.mxu0 %v96
  %1126 = vmatprep.subr.mxu0 0.0
  %1127 = vmatpush1.msra.mxu0 0.0
  %1128 = vmatprep.subr.mxu0 0.0
  %1129 = vmatpush1.msra.mxu0 0.0
  %1130 = vmatprep.subr.mxu0 0.0
  %1131 = vmatpush1.msra.mxu0 0.0
  %1132 = vmatprep.subr.mxu0 0.0
  %1133 = vmatpush1.msra.mxu0 0.0
  %1134 = vmatprep.subr.mxu0 0.0
  %1135 = vmatpush1.msra.mxu0 0.0
  %1136 = vmatprep.subr.mxu0 0.0
  %1137 = vmatpush1.msra.mxu0 0.0
  %1138 = vmatprep.subr.mxu0 0.0
  %1139 = vmatpush1.msra.mxu0 0.0
  %1140 = vmatprep.subr.mxu0 0.0
  %1141 = vmatpush1.msra.mxu0 0.0
  %1142 = vmatprep.subr.mxu0 0.0
  %1143 = vmatpush1.msra.mxu0 0.0
  %1144 = vmatprep.subr.mxu0 0.0
  %1145 = vmatpush1.msra.mxu0 0.0
  %1146 = vmatprep.subr.mxu0 0.0
  %1147 = vmatpush1.msra.mxu0 0.0
  %1148 = vmatprep.subr.mxu0 0.0
  %1149 = vmatpush1.msra.mxu0 0.0
  %1150 = vmatprep.subr.mxu0 0.0
  %1151 = vmatpush1.msra.mxu0 0.0
  %1152 = vmatprep.subr.mxu0 0.0
  %1153 = vmatpush1.msra.mxu0 0.0
  %1154 = vmatprep.subr.mxu0 0.0
  %1155 = vmatpush1.msra.mxu0 0.0
  %1156 = vmatprep.subr.mxu0 0.0
  %1157 = vmatpush1.msra.mxu0 0.0
  %1158 = vmatprep.mubr.f32.mxu0 0.0
  %1159 = vmatmul.mubr.f32.gmra.mrb[0].mxu0 %v915
  %v1160 = vpop.f32.mrb[0].mxu0
  %v1161 = vadd.f32 0.0, %v1160
  %v1162 = vpop.f32.mrb[0].mxu0
  %v1163 = vadd.f32 0.0, %v1162
  %1164 = vdwg.mxu0
  %v1165 = vadd.f32 %v1019, %v1090
  %v1166 = vadd.f32 %v1020, %v1092
  %v1167 = vadd.f32 %v1021, %v1161
  %v1168 = vadd.f32 %v1022, %v1163
  %v1169 = vadd.f32 %v1165, %v311
  %v1170 = vadd.f32 %v1166, %v315
  %v1171 = vadd.f32 %v1167, %v319
  %v1172 = vadd.f32 %v1168, %v323
  %v1173 = vxor.u32 %v1169, 2147483648
  %v1174 = vmul.f32 %v1173, 1.442695
  %v1175 = vpow.pop %v1174
  %v1176 = vadd.f32 %v1175, 1.0
  %v1177 = vrcp.pop %v1176
  %v1178 = vmul.f32 1.0, %v1177
  %v1179 = vxor.u32 %v1170, 2147483648
  %v1180 = vmul.f32 %v1179, 1.442695
  %v1181 = vpow.pop %v1180
  %v1182 = vadd.f32 %v1181, 1.0
  %v1183 = vrcp.pop %v1182
  %v1184 = vmul.f32 1.0, %v1183
  %v1185 = vtanh.pop %v1171
  %v1186 = vxor.u32 %v1172, 2147483648
  %v1187 = vmul.f32 %v1186, 1.442695
  %v1188 = vpow.pop %v1187
  %v1189 = vadd.f32 %v1188, 1.0
  %v1190 = vrcp.pop %v1189
  %v1191 = vmul.f32 1.0, %v1190
  %v1192 = vmul.f32 %v1184, %v913
  %v1193 = vmul.f32 %v1178, %v1185
  %v1194 = vadd.f32 %v1192, %v1193
  %v1195 = vtanh.pop %v1194
  %v1196 = vmul.f32 %v1191, %v1195
  %v1197 = vld [vmem:[%s5 + $0x180] sm:$0xff]
  %v1198 = vld [vmem:[%s5 + $0x188] sm:$0xff]
  %v1199 = vld [vmem:[%s5 + $0x190] sm:$0xff]
  %v1200 = vld [vmem:[%s5 + $0x198] sm:$0xff]
  %v1201 = vld [vmem:[%s5 + $0x1a0] sm:$0xff]
  %v1202 = vld [vmem:[%s5 + $0x1a8] sm:$0xff]
  %v1203 = vld [vmem:[%s5 + $0x1b0] sm:$0xff]
  %v1204 = vld [vmem:[%s5 + $0x1b8] sm:$0xff]
  %v1205 = vld [vmem:[%s5 + $0x1c0] sm:$0xff]
  %v1206 = vld [vmem:[%s5 + $0x1c8] sm:$0xff]
  %v1207 = vld [vmem:[%s5 + $0x1d0] sm:$0xff]
  %v1208 = vld [vmem:[%s5 + $0x1d8] sm:$0xff]
  %v1209 = vld [vmem:[%s5 + $0x1e0] sm:$0xff]
  %v1210 = vld [vmem:[%s5 + $0x1e8] sm:$0xff]
  %v1211 = vld [vmem:[%s5 + $0x1f0] sm:$0xff]
  %v1212 = vld [vmem:[%s5 + $0x1f8] sm:$0xff]
  %1213 = vmatprep.subr.mxu0 0.0
  %1214 = vmatpush1.msra.mxu0 %v1197
  %1215 = vmatprep.subr.mxu0 0.0
  %1216 = vmatpush1.msra.mxu0 %v1198
  %1217 = vmatprep.subr.mxu0 0.0
  %1218 = vmatpush1.msra.mxu0 %v1199
  %1219 = vmatprep.subr.mxu0 0.0
  %1220 = vmatpush1.msra.mxu0 %v1200
  %1221 = vmatprep.subr.mxu0 0.0
  %1222 = vmatpush1.msra.mxu0 %v1201
  %1223 = vmatprep.subr.mxu0 0.0
  %1224 = vmatpush1.msra.mxu0 %v1202
  %1225 = vmatprep.subr.mxu0 0.0
  %1226 = vmatpush1.msra.mxu0 %v1203
  %1227 = vmatprep.subr.mxu0 0.0
  %1228 = vmatpush1.msra.mxu0 %v1204
  %1229 = vmatprep.subr.mxu0 0.0
  %1230 = vmatpush1.msra.mxu0 %v1205
  %1231 = vmatprep.subr.mxu0 0.0
  %1232 = vmatpush1.msra.mxu0 %v1206
  %1233 = vmatprep.subr.mxu0 0.0
  %1234 = vmatpush1.msra.mxu0 %v1207
  %1235 = vmatprep.subr.mxu0 0.0
  %1236 = vmatpush1.msra.mxu0 %v1208
  %1237 = vmatprep.subr.mxu0 0.0
  %1238 = vmatpush1.msra.mxu0 %v1209
  %1239 = vmatprep.subr.mxu0 0.0
  %1240 = vmatpush1.msra.mxu0 %v1210
  %1241 = vmatprep.subr.mxu0 0.0
  %1242 = vmatpush1.msra.mxu0 %v1211
  %1243 = vmatprep.subr.mxu0 0.0
  %1244 = vmatpush1.msra.mxu0 %v1212
  %1245 = vmatprep.subr.mxu0 0.0
  %1246 = vmatpush1.msra.mxu0 0.0
  %1247 = vmatprep.subr.mxu0 0.0
  %1248 = vmatpush1.msra.mxu0 0.0
  %1249 = vmatprep.subr.mxu0 0.0
  %1250 = vmatpush1.msra.mxu0 0.0
  %1251 = vmatprep.subr.mxu0 0.0
  %1252 = vmatpush1.msra.mxu0 0.0
  %1253 = vmatprep.subr.mxu0 0.0
  %1254 = vmatpush1.msra.mxu0 0.0
  %1255 = vmatprep.subr.mxu0 0.0
  %1256 = vmatpush1.msra.mxu0 0.0
  %1257 = vmatprep.subr.mxu0 0.0
  %1258 = vmatpush1.msra.mxu0 0.0
  %1259 = vmatprep.subr.mxu0 0.0
  %1260 = vmatpush1.msra.mxu0 0.0
  %1261 = vmatprep.subr.mxu0 0.0
  %1262 = vmatpush1.msra.mxu0 0.0
  %1263 = vmatprep.subr.mxu0 0.0
  %1264 = vmatpush1.msra.mxu0 0.0
  %1265 = vmatprep.subr.mxu0 0.0
  %1266 = vmatpush1.msra.mxu0 0.0
  %1267 = vmatprep.subr.mxu0 0.0
  %1268 = vmatpush1.msra.mxu0 0.0
  %1269 = vmatprep.subr.mxu0 0.0
  %1270 = vmatpush1.msra.mxu0 0.0
  %1271 = vmatprep.subr.mxu0 0.0
  %1272 = vmatpush1.msra.mxu0 0.0
  %1273 = vmatprep.subr.mxu0 0.0
  %1274 = vmatpush1.msra.mxu0 0.0
  %1275 = vmatprep.subr.mxu0 0.0
  %1276 = vmatpush1.msra.mxu0 0.0
  %1277 = vmatprep.mubr.f32.mxu0 0.0
  %1278 = vmatmul.mubr.f32.gmra.mrb[0].mxu0 %v1196
  %v1279 = vpop.f32.mrb[0].mxu0
  %v1280 = vadd.f32 0.0, %v1279
  %v1281 = vpop.f32.mrb[0].mxu0
  %1282 = vdwg.mxu0
  %v1283 = vadd.f32 %v1002, %v1280
  %1284 = vset.pattern.permute.xlu0 8
  %1285 = vperm.xlu0 %1284, %v28
  %v1286 = vpop.permute.xlu0 %1285
  %v1288 = vmul.f32 %v1286, %v107
  %v1289 = vmul.f32 %v1286, %v111
  %v1290 = vmul.f32 %v1286, %v115
  %v1291 = vmul.f32 %v1286, %v119
  %1292 = vset.pattern.permute.xlu0 9
  %1293 = vperm.xlu0 %1292, %v28
  %v1294 = vpop.permute.xlu0 %1293
  %v1296 = vmul.f32 %v1294, %v136
  %v1297 = vmul.f32 %v1294, %v140
  %v1298 = vmul.f32 %v1294, %v144
  %v1299 = vmul.f32 %v1294, %v148
  %v1300 = vadd.f32 %v1288, %v1296
  %v1301 = vadd.f32 %v1289, %v1297
  %v1302 = vadd.f32 %v1290, %v1298
  %v1303 = vadd.f32 %v1291, %v1299
  %1304 = vmatprep.subr.mxu0 %v35
  %1305 = vmatpush1.msra.mxu0 %v34
  %1306 = vmatprep.subr.mxu0 %v39
  %1307 = vmatpush1.msra.mxu0 %v38
  %1308 = vmatprep.subr.mxu0 %v43
  %1309 = vmatpush1.msra.mxu0 %v42
  %1310 = vmatprep.subr.mxu0 %v47
  %1311 = vmatpush1.msra.mxu0 %v46
  %1312 = vmatprep.subr.mxu0 %v51
  %1313 = vmatpush1.msra.mxu0 %v50
  %1314 = vmatprep.subr.mxu0 %v55
  %1315 = vmatpush1.msra.mxu0 %v54
  %1316 = vmatprep.subr.mxu0 %v59
  %1317 = vmatpush1.msra.mxu0 %v58
  %1318 = vmatprep.subr.mxu0 %v63
  %1319 = vmatpush1.msra.mxu0 %v62
  %1320 = vmatprep.subr.mxu0 %v67
  %1321 = vmatpush1.msra.mxu0 %v66
  %1322 = vmatprep.subr.mxu0 %v71
  %1323 = vmatpush1.msra.mxu0 %v70
  %1324 = vmatprep.subr.mxu0 %v75
  %1325 = vmatpush1.msra.mxu0 %v74
  %1326 = vmatprep.subr.mxu0 %v79
  %1327 = vmatpush1.msra.mxu0 %v78
  %1328 = vmatprep.subr.mxu0 %v83
  %1329 = vmatpush1.msra.mxu0 %v82
  %1330 = vmatprep.subr.mxu0 %v87
  %1331 = vmatpush1.msra.mxu0 %v86
  %1332 = vmatprep.subr.mxu0 %v91
  %1333 = vmatpush1.msra.mxu0 %v90
  %1334 = vmatprep.subr.mxu0 %v95
  %1335 = vmatpush1.msra.mxu0 %v94
  %1336 = vmatprep.subr.mxu0 0.0
  %1337 = vmatpush1.msra.mxu0 0.0
  %1338 = vmatprep.subr.mxu0 0.0
  %1339 = vmatpush1.msra.mxu0 0.0
  %1340 = vmatprep.subr.mxu0 0.0
  %1341 = vmatpush1.msra.mxu0 0.0
  %1342 = vmatprep.subr.mxu0 0.0
  %1343 = vmatpush1.msra.mxu0 0.0
  %1344 = vmatprep.subr.mxu0 0.0
  %1345 = vmatpush1.msra.mxu0 0.0
  %1346 = vmatprep.subr.mxu0 0.0
  %1347 = vmatpush1.msra.mxu0 0.0
  %1348 = vmatprep.subr.mxu0 0.0
  %1349 = vmatpush1.msra.mxu0 0.0
  %1350 = vmatprep.subr.mxu0 0.0
  %1351 = vmatpush1.msra.mxu0 0.0
  %1352 = vmatprep.subr.mxu0 0.0
  %1353 = vmatpush1.msra.mxu0 0.0
  %1354 = vmatprep.subr.mxu0 0.0
  %1355 = vmatpush1.msra.mxu0 0.0
  %1356 = vmatprep.subr.mxu0 0.0
  %1357 = vmatpush1.msra.mxu0 0.0
  %1358 = vmatprep.subr.mxu0 0.0
  %1359 = vmatpush1.msra.mxu0 0.0
  %1360 = vmatprep.subr.mxu0 0.0
  %1361 = vmatpush1.msra.mxu0 0.0
  %1362 = vmatprep.subr.mxu0 0.0
  %1363 = vmatpush1.msra.mxu0 0.0
  %1364 = vmatprep.subr.mxu0 0.0
  %1365 = vmatpush1.msra.mxu0 0.0
  %1366 = vmatprep.subr.mxu0 0.0
  %1367 = vmatpush1.msra.mxu0 0.0
  %1368 = vmatprep.mubr.f32.mxu0 0.0
  %1369 = vmatmul.mubr.f32.gmra.mrb[0].mxu0 %v1196
  %v1370 = vpop.f32.mrb[0].mxu0
  %v1371 = vadd.f32 0.0, %v1370
  %v1372 = vpop.f32.mrb[0].mxu0
  %v1373 = vadd.f32 0.0, %v1372
  %1374 = vdwg.mxu0
  %1375 = vmatprep.subr.mxu0 %v37
  %1376 = vmatpush1.msra.mxu0 %v36
  %1377 = vmatprep.subr.mxu0 %v41
  %1378 = vmatpush1.msra.mxu0 %v40
  %1379 = vmatprep.subr.mxu0 %v45
  %1380 = vmatpush1.msra.mxu0 %v44
  %1381 = vmatprep.subr.mxu0 %v49
  %1382 = vmatpush1.msra.mxu0 %v48
  %1383 = vmatprep.subr.mxu0 %v53
  %1384 = vmatpush1.msra.mxu0 %v52
  %1385 = vmatprep.subr.mxu0 %v57
  %1386 = vmatpush1.msra.mxu0 %v56
  %1387 = vmatprep.subr.mxu0 %v61
  %1388 = vmatpush1.msra.mxu0 %v60
  %1389 = vmatprep.subr.mxu0 %v65
  %1390 = vmatpush1.msra.mxu0 %v64
  %1391 = vmatprep.subr.mxu0 %v69
  %1392 = vmatpush1.msra.mxu0 %v68
  %1393 = vmatprep.subr.mxu0 %v73
  %1394 = vmatpush1.msra.mxu0 %v72
  %1395 = vmatprep.subr.mxu0 %v77
  %1396 = vmatpush1.msra.mxu0 %v76
  %1397 = vmatprep.subr.mxu0 %v81
  %1398 = vmatpush1.msra.mxu0 %v80
  %1399 = vmatprep.subr.mxu0 %v85
  %1400 = vmatpush1.msra.mxu0 %v84
  %1401 = vmatprep.subr.mxu0 %v89
  %1402 = vmatpush1.msra.mxu0 %v88
  %1403 = vmatprep.subr.mxu0 %v93
  %1404 = vmatpush1.msra.mxu0 %v92
  %1405 = vmatprep.subr.mxu0 %v97
  %1406 = vmatpush1.msra.mxu0 %v96
  %1407 = vmatprep.subr.mxu0 0.0
  %1408 = vmatpush1.msra.mxu0 0.0
  %1409 = vmatprep.subr.mxu0 0.0
  %1410 = vmatpush1.msra.mxu0 0.0
  %1411 = vmatprep.subr.mxu0 0.0
  %1412 = vmatpush1.msra.mxu0 0.0
  %1413 = vmatprep.subr.mxu0 0.0
  %1414 = vmatpush1.msra.mxu0 0.0
  %1415 = vmatprep.subr.mxu0 0.0
  %1416 = vmatpush1.msra.mxu0 0.0
  %1417 = vmatprep.subr.mxu0 0.0
  %1418 = vmatpush1.msra.mxu0 0.0
  %1419 = vmatprep.subr.mxu0 0.0
  %1420 = vmatpush1.msra.mxu0 0.0
  %1421 = vmatprep.subr.mxu0 0.0
  %1422 = vmatpush1.msra.mxu0 0.0
  %1423 = vmatprep.subr.mxu0 0.0
  %1424 = vmatpush1.msra.mxu0 0.0
  %1425 = vmatprep.subr.mxu0 0.0
  %1426 = vmatpush1.msra.mxu0 0.0
  %1427 = vmatprep.subr.mxu0 0.0
  %1428 = vmatpush1.msra.mxu0 0.0
  %1429 = vmatprep.subr.mxu0 0.0
  %1430 = vmatpush1.msra.mxu0 0.0
  %1431 = vmatprep.subr.mxu0 0.0
  %1432 = vmatpush1.msra.mxu0 0.0
  %1433 = vmatprep.subr.mxu0 0.0
  %1434 = vmatpush1.msra.mxu0 0.0
  %1435 = vmatprep.subr.mxu0 0.0
  %1436 = vmatpush1.msra.mxu0 0.0
  %1437 = vmatprep.subr.mxu0 0.0
  %1438 = vmatpush1.msra.mxu0 0.0
  %1439 = vmatprep.mubr.f32.mxu0 0.0
  %1440 = vmatmul.mubr.f32.gmra.mrb[0].mxu0 %v1196
  %v1441 = vpop.f32.mrb[0].mxu0
  %v1442 = vadd.f32 0.0, %v1441
  %v1443 = vpop.f32.mrb[0].mxu0
  %v1444 = vadd.f32 0.0, %v1443
  %1445 = vdwg.mxu0
  %v1446 = vadd.f32 %v1300, %v1371
  %v1447 = vadd.f32 %v1301, %v1373
  %v1448 = vadd.f32 %v1302, %v1442
  %v1449 = vadd.f32 %v1303, %v1444
  %v1450 = vadd.f32 %v1446, %v311
  %v1451 = vadd.f32 %v1447, %v315
  %v1452 = vadd.f32 %v1448, %v319
  %v1453 = vadd.f32 %v1449, %v323
  %v1454 = vxor.u32 %v1450, 2147483648
  %v1455 = vmul.f32 %v1454, 1.442695
  %v1456 = vpow.pop %v1455
  %v1457 = vadd.f32 %v1456, 1.0
  %v1458 = vrcp.pop %v1457
  %v1459 = vmul.f32 1.0, %v1458
  %v1460 = vxor.u32 %v1451, 2147483648
  %v1461 = vmul.f32 %v1460, 1.442695
  %v1462 = vpow.pop %v1461
  %v1463 = vadd.f32 %v1462, 1.0
  %v1464 = vrcp.pop %v1463
  %v1465 = vmul.f32 1.0, %v1464
  %v1466 = vtanh.pop %v1452
  %v1467 = vxor.u32 %v1453, 2147483648
  %v1468 = vmul.f32 %v1467, 1.442695
  %v1469 = vpow.pop %v1468
  %v1470 = vadd.f32 %v1469, 1.0
  %v1471 = vrcp.pop %v1470
  %v1472 = vmul.f32 1.0, %v1471
  %v1473 = vmul.f32 %v1465, %v1194
  %v1474 = vmul.f32 %v1459, %v1466
  %v1475 = vadd.f32 %v1473, %v1474
  %v1476 = vtanh.pop %v1475
  %v1477 = vmul.f32 %v1472, %v1476
  %v1478 = vld [vmem:[%s5 + $0x200] sm:$0xff]
  %v1479 = vld [vmem:[%s5 + $0x208] sm:$0xff]
  %v1480 = vld [vmem:[%s5 + $0x210] sm:$0xff]
  %v1481 = vld [vmem:[%s5 + $0x218] sm:$0xff]
  %v1482 = vld [vmem:[%s5 + $0x220] sm:$0xff]
  %v1483 = vld [vmem:[%s5 + $0x228] sm:$0xff]
  %v1484 = vld [vmem:[%s5 + $0x230] sm:$0xff]
  %v1485 = vld [vmem:[%s5 + $0x238] sm:$0xff]
  %v1486 = vld [vmem:[%s5 + $0x240] sm:$0xff]
  %v1487 = vld [vmem:[%s5 + $0x248] sm:$0xff]
  %v1488 = vld [vmem:[%s5 + $0x250] sm:$0xff]
  %v1489 = vld [vmem:[%s5 + $0x258] sm:$0xff]
  %v1490 = vld [vmem:[%s5 + $0x260] sm:$0xff]
  %v1491 = vld [vmem:[%s5 + $0x268] sm:$0xff]
  %v1492 = vld [vmem:[%s5 + $0x270] sm:$0xff]
  %v1493 = vld [vmem:[%s5 + $0x278] sm:$0xff]
  %1494 = vmatprep.subr.mxu0 0.0
  %1495 = vmatpush1.msra.mxu0 %v1478
  %1496 = vmatprep.subr.mxu0 0.0
  %1497 = vmatpush1.msra.mxu0 %v1479
  %1498 = vmatprep.subr.mxu0 0.0
  %1499 = vmatpush1.msra.mxu0 %v1480
  %1500 = vmatprep.subr.mxu0 0.0
  %1501 = vmatpush1.msra.mxu0 %v1481
  %1502 = vmatprep.subr.mxu0 0.0
  %1503 = vmatpush1.msra.mxu0 %v1482
  %1504 = vmatprep.subr.mxu0 0.0
  %1505 = vmatpush1.msra.mxu0 %v1483
  %1506 = vmatprep.subr.mxu0 0.0
  %1507 = vmatpush1.msra.mxu0 %v1484
  %1508 = vmatprep.subr.mxu0 0.0
  %1509 = vmatpush1.msra.mxu0 %v1485
  %1510 = vmatprep.subr.mxu0 0.0
  %1511 = vmatpush1.msra.mxu0 %v1486
  %1512 = vmatprep.subr.mxu0 0.0
  %1513 = vmatpush1.msra.mxu0 %v1487
  %1514 = vmatprep.subr.mxu0 0.0
  %1515 = vmatpush1.msra.mxu0 %v1488
  %1516 = vmatprep.subr.mxu0 0.0
  %1517 = vmatpush1.msra.mxu0 %v1489
  %1518 = vmatprep.subr.mxu0 0.0
  %1519 = vmatpush1.msra.mxu0 %v1490
  %1520 = vmatprep.subr.mxu0 0.0
  %1521 = vmatpush1.msra.mxu0 %v1491
  %1522 = vmatprep.subr.mxu0 0.0
  %1523 = vmatpush1.msra.mxu0 %v1492
  %1524 = vmatprep.subr.mxu0 0.0
  %1525 = vmatpush1.msra.mxu0 %v1493
  %1526 = vmatprep.subr.mxu0 0.0
  %1527 = vmatpush1.msra.mxu0 0.0
  %1528 = vmatprep.subr.mxu0 0.0
  %1529 = vmatpush1.msra.mxu0 0.0
  %1530 = vmatprep.subr.mxu0 0.0
  %1531 = vmatpush1.msra.mxu0 0.0
  %1532 = vmatprep.subr.mxu0 0.0
  %1533 = vmatpush1.msra.mxu0 0.0
  %1534 = vmatprep.subr.mxu0 0.0
  %1535 = vmatpush1.msra.mxu0 0.0
  %1536 = vmatprep.subr.mxu0 0.0
  %1537 = vmatpush1.msra.mxu0 0.0
  %1538 = vmatprep.subr.mxu0 0.0
  %1539 = vmatpush1.msra.mxu0 0.0
  %1540 = vmatprep.subr.mxu0 0.0
  %1541 = vmatpush1.msra.mxu0 0.0
  %1542 = vmatprep.subr.mxu0 0.0
  %1543 = vmatpush1.msra.mxu0 0.0
  %1544 = vmatprep.subr.mxu0 0.0
  %1545 = vmatpush1.msra.mxu0 0.0
  %1546 = vmatprep.subr.mxu0 0.0
  %1547 = vmatpush1.msra.mxu0 0.0
  %1548 = vmatprep.subr.mxu0 0.0
  %1549 = vmatpush1.msra.mxu0 0.0
  %1550 = vmatprep.subr.mxu0 0.0
  %1551 = vmatpush1.msra.mxu0 0.0
  %1552 = vmatprep.subr.mxu0 0.0
  %1553 = vmatpush1.msra.mxu0 0.0
  %1554 = vmatprep.subr.mxu0 0.0
  %1555 = vmatpush1.msra.mxu0 0.0
  %1556 = vmatprep.subr.mxu0 0.0
  %1557 = vmatpush1.msra.mxu0 0.0
  %1558 = vmatprep.mubr.f32.mxu0 0.0
  %1559 = vmatmul.mubr.f32.gmra.mrb[0].mxu0 %v1477
  %v1560 = vpop.f32.mrb[0].mxu0
  %v1561 = vadd.f32 0.0, %v1560
  %v1562 = vpop.f32.mrb[0].mxu0
  %1563 = vdwg.mxu0
  %v1564 = vadd.f32 %v1283, %v1561
  %1565 = vset.pattern.permute.xlu0 10
  %1566 = vperm.xlu0 %1565, %v28
  %v1567 = vpop.permute.xlu0 %1566
  %v1569 = vmul.f32 %v1567, %v107
  %v1570 = vmul.f32 %v1567, %v111
  %v1571 = vmul.f32 %v1567, %v115
  %v1572 = vmul.f32 %v1567, %v119
  %1573 = vset.pattern.permute.xlu0 11
  %1574 = vperm.xlu0 %1573, %v28
  %v1575 = vpop.permute.xlu0 %1574
  %v1577 = vmul.f32 %v1575, %v136
  %v1578 = vmul.f32 %v1575, %v140
  %v1579 = vmul.f32 %v1575, %v144
  %v1580 = vmul.f32 %v1575, %v148
  %v1581 = vadd.f32 %v1569, %v1577
  %v1582 = vadd.f32 %v1570, %v1578
  %v1583 = vadd.f32 %v1571, %v1579
  %v1584 = vadd.f32 %v1572, %v1580
  %1585 = vmatprep.subr.mxu0 %v35
  %1586 = vmatpush1.msra.mxu0 %v34
  %1587 = vmatprep.subr.mxu0 %v39
  %1588 = vmatpush1.msra.mxu0 %v38
  %1589 = vmatprep.subr.mxu0 %v43
  %1590 = vmatpush1.msra.mxu0 %v42
  %1591 = vmatprep.subr.mxu0 %v47
  %1592 = vmatpush1.msra.mxu0 %v46
  %1593 = vmatprep.subr.mxu0 %v51
  %1594 = vmatpush1.msra.mxu0 %v50
  %1595 = vmatprep.subr.mxu0 %v55
  %1596 = vmatpush1.msra.mxu0 %v54
  %1597 = vmatprep.subr.mxu0 %v59
  %1598 = vmatpush1.msra.mxu0 %v58
  %1599 = vmatprep.subr.mxu0 %v63
  %1600 = vmatpush1.msra.mxu0 %v62
  %1601 = vmatprep.subr.mxu0 %v67
  %1602 = vmatpush1.msra.mxu0 %v66
  %1603 = vmatprep.subr.mxu0 %v71
  %1604 = vmatpush1.msra.mxu0 %v70
  %1605 = vmatprep.subr.mxu0 %v75
  %1606 = vmatpush1.msra.mxu0 %v74
  %1607 = vmatprep.subr.mxu0 %v79
  %1608 = vmatpush1.msra.mxu0 %v78
  %1609 = vmatprep.subr.mxu0 %v83
  %1610 = vmatpush1.msra.mxu0 %v82
  %1611 = vmatprep.subr.mxu0 %v87
  %1612 = vmatpush1.msra.mxu0 %v86
  %1613 = vmatprep.subr.mxu0 %v91
  %1614 = vmatpush1.msra.mxu0 %v90
  %1615 = vmatprep.subr.mxu0 %v95
  %1616 = vmatpush1.msra.mxu0 %v94
  %1617 = vmatprep.subr.mxu0 0.0
  %1618 = vmatpush1.msra.mxu0 0.0
  %1619 = vmatprep.subr.mxu0 0.0
  %1620 = vmatpush1.msra.mxu0 0.0
  %1621 = vmatprep.subr.mxu0 0.0
  %1622 = vmatpush1.msra.mxu0 0.0
  %1623 = vmatprep.subr.mxu0 0.0
  %1624 = vmatpush1.msra.mxu0 0.0
  %1625 = vmatprep.subr.mxu0 0.0
  %1626 = vmatpush1.msra.mxu0 0.0
  %1627 = vmatprep.subr.mxu0 0.0
  %1628 = vmatpush1.msra.mxu0 0.0
  %1629 = vmatprep.subr.mxu0 0.0
  %1630 = vmatpush1.msra.mxu0 0.0
  %1631 = vmatprep.subr.mxu0 0.0
  %1632 = vmatpush1.msra.mxu0 0.0
  %1633 = vmatprep.subr.mxu0 0.0
  %1634 = vmatpush1.msra.mxu0 0.0
  %1635 = vmatprep.subr.mxu0 0.0
  %1636 = vmatpush1.msra.mxu0 0.0
  %1637 = vmatprep.subr.mxu0 0.0
  %1638 = vmatpush1.msra.mxu0 0.0
  %1639 = vmatprep.subr.mxu0 0.0
  %1640 = vmatpush1.msra.mxu0 0.0
  %1641 = vmatprep.subr.mxu0 0.0
  %1642 = vmatpush1.msra.mxu0 0.0
  %1643 = vmatprep.subr.mxu0 0.0
  %1644 = vmatpush1.msra.mxu0 0.0
  %1645 = vmatprep.subr.mxu0 0.0
  %1646 = vmatpush1.msra.mxu0 0.0
  %1647 = vmatprep.subr.mxu0 0.0
  %1648 = vmatpush1.msra.mxu0 0.0
  %1649 = vmatprep.mubr.f32.mxu0 0.0
  %1650 = vmatmul.mubr.f32.gmra.mrb[0].mxu0 %v1477
  %v1651 = vpop.f32.mrb[0].mxu0
  %v1652 = vadd.f32 0.0, %v1651
  %v1653 = vpop.f32.mrb[0].mxu0
  %v1654 = vadd.f32 0.0, %v1653
  %1655 = vdwg.mxu0
  %1656 = vmatprep.subr.mxu0 %v37
  %1657 = vmatpush1.msra.mxu0 %v36
  %1658 = vmatprep.subr.mxu0 %v41
  %1659 = vmatpush1.msra.mxu0 %v40
  %1660 = vmatprep.subr.mxu0 %v45
  %1661 = vmatpush1.msra.mxu0 %v44
  %1662 = vmatprep.subr.mxu0 %v49
  %1663 = vmatpush1.msra.mxu0 %v48
  %1664 = vmatprep.subr.mxu0 %v53
  %1665 = vmatpush1.msra.mxu0 %v52
  %1666 = vmatprep.subr.mxu0 %v57
  %1667 = vmatpush1.msra.mxu0 %v56
  %1668 = vmatprep.subr.mxu0 %v61
  %1669 = vmatpush1.msra.mxu0 %v60
  %1670 = vmatprep.subr.mxu0 %v65
  %1671 = vmatpush1.msra.mxu0 %v64
  %1672 = vmatprep.subr.mxu0 %v69
  %1673 = vmatpush1.msra.mxu0 %v68
  %1674 = vmatprep.subr.mxu0 %v73
  %1675 = vmatpush1.msra.mxu0 %v72
  %1676 = vmatprep.subr.mxu0 %v77
  %1677 = vmatpush1.msra.mxu0 %v76
  %1678 = vmatprep.subr.mxu0 %v81
  %1679 = vmatpush1.msra.mxu0 %v80
  %1680 = vmatprep.subr.mxu0 %v85
  %1681 = vmatpush1.msra.mxu0 %v84
  %1682 = vmatprep.subr.mxu0 %v89
  %1683 = vmatpush1.msra.mxu0 %v88
  %1684 = vmatprep.subr.mxu0 %v93
  %1685 = vmatpush1.msra.mxu0 %v92
  %1686 = vmatprep.subr.mxu0 %v97
  %1687 = vmatpush1.msra.mxu0 %v96
  %1688 = vmatprep.subr.mxu0 0.0
  %1689 = vmatpush1.msra.mxu0 0.0
  %1690 = vmatprep.subr.mxu0 0.0
  %1691 = vmatpush1.msra.mxu0 0.0
  %1692 = vmatprep.subr.mxu0 0.0
  %1693 = vmatpush1.msra.mxu0 0.0
  %1694 = vmatprep.subr.mxu0 0.0
  %1695 = vmatpush1.msra.mxu0 0.0
  %1696 = vmatprep.subr.mxu0 0.0
  %1697 = vmatpush1.msra.mxu0 0.0
  %1698 = vmatprep.subr.mxu0 0.0
  %1699 = vmatpush1.msra.mxu0 0.0
  %1700 = vmatprep.subr.mxu0 0.0
  %1701 = vmatpush1.msra.mxu0 0.0
  %1702 = vmatprep.subr.mxu0 0.0
  %1703 = vmatpush1.msra.mxu0 0.0
  %1704 = vmatprep.subr.mxu0 0.0
  %1705 = vmatpush1.msra.mxu0 0.0
  %1706 = vmatprep.subr.mxu0 0.0
  %1707 = vmatpush1.msra.mxu0 0.0
  %1708 = vmatprep.subr.mxu0 0.0
  %1709 = vmatpush1.msra.mxu0 0.0
  %1710 = vmatprep.subr.mxu0 0.0
  %1711 = vmatpush1.msra.mxu0 0.0
  %1712 = vmatprep.subr.mxu0 0.0
  %1713 = vmatpush1.msra.mxu0 0.0
  %1714 = vmatprep.subr.mxu0 0.0
  %1715 = vmatpush1.msra.mxu0 0.0
  %1716 = vmatprep.subr.mxu0 0.0
  %1717 = vmatpush1.msra.mxu0 0.0
  %1718 = vmatprep.subr.mxu0 0.0
  %1719 = vmatpush1.msra.mxu0 0.0
  %1720 = vmatprep.mubr.f32.mxu0 0.0
  %1721 = vmatmul.mubr.f32.gmra.mrb[0].mxu0 %v1477
  %v1722 = vpop.f32.mrb[0].mxu0
  %v1723 = vadd.f32 0.0, %v1722
  %v1724 = vpop.f32.mrb[0].mxu0
  %v1725 = vadd.f32 0.0, %v1724
  %1726 = vdwg.mxu0
  %v1727 = vadd.f32 %v1581, %v1652
  %v1728 = vadd.f32 %v1582, %v1654
  %v1729 = vadd.f32 %v1583, %v1723
  %v1730 = vadd.f32 %v1584, %v1725
  %v1731 = vadd.f32 %v1727, %v311
  %v1732 = vadd.f32 %v1728, %v315
  %v1733 = vadd.f32 %v1729, %v319
  %v1734 = vadd.f32 %v1730, %v323
  %v1735 = vxor.u32 %v1731, 2147483648
  %v1736 = vmul.f32 %v1735, 1.442695
  %v1737 = vpow.pop %v1736
  %v1738 = vadd.f32 %v1737, 1.0
  %v1739 = vrcp.pop %v1738
  %v1740 = vmul.f32 1.0, %v1739
  %v1741 = vxor.u32 %v1732, 2147483648
  %v1742 = vmul.f32 %v1741, 1.442695
  %v1743 = vpow.pop %v1742
  %v1744 = vadd.f32 %v1743, 1.0
  %v1745 = vrcp.pop %v1744
  %v1746 = vmul.f32 1.0, %v1745
  %v1747 = vtanh.pop %v1733
  %v1748 = vxor.u32 %v1734, 2147483648
  %v1749 = vmul.f32 %v1748, 1.442695
  %v1750 = vpow.pop %v1749
  %v1751 = vadd.f32 %v1750, 1.0
  %v1752 = vrcp.pop %v1751
  %v1753 = vmul.f32 1.0, %v1752
  %v1754 = vmul.f32 %v1746, %v1475
  %v1755 = vmul.f32 %v1740, %v1747
  %v1756 = vadd.f32 %v1754, %v1755
  %v1757 = vtanh.pop %v1756
  %v1758 = vmul.f32 %v1753, %v1757
  %v1759 = vld [vmem:[%s5 + $0x280] sm:$0xff]
  %v1760 = vld [vmem:[%s5 + $0x288] sm:$0xff]
  %v1761 = vld [vmem:[%s5 + $0x290] sm:$0xff]
  %v1762 = vld [vmem:[%s5 + $0x298] sm:$0xff]
  %v1763 = vld [vmem:[%s5 + $0x2a0] sm:$0xff]
  %v1764 = vld [vmem:[%s5 + $0x2a8] sm:$0xff]
  %v1765 = vld [vmem:[%s5 + $0x2b0] sm:$0xff]
  %v1766 = vld [vmem:[%s5 + $0x2b8] sm:$0xff]
  %v1767 = vld [vmem:[%s5 + $0x2c0] sm:$0xff]
  %v1768 = vld [vmem:[%s5 + $0x2c8] sm:$0xff]
  %v1769 = vld [vmem:[%s5 + $0x2d0] sm:$0xff]
  %v1770 = vld [vmem:[%s5 + $0x2d8] sm:$0xff]
  %v1771 = vld [vmem:[%s5 + $0x2e0] sm:$0xff]
  %v1772 = vld [vmem:[%s5 + $0x2e8] sm:$0xff]
  %v1773 = vld [vmem:[%s5 + $0x2f0] sm:$0xff]
  %v1774 = vld [vmem:[%s5 + $0x2f8] sm:$0xff]
  %1775 = vmatprep.subr.mxu0 0.0
  %1776 = vmatpush1.msra.mxu0 %v1759
  %1777 = vmatprep.subr.mxu0 0.0
  %1778 = vmatpush1.msra.mxu0 %v1760
  %1779 = vmatprep.subr.mxu0 0.0
  %1780 = vmatpush1.msra.mxu0 %v1761
  %1781 = vmatprep.subr.mxu0 0.0
  %1782 = vmatpush1.msra.mxu0 %v1762
  %1783 = vmatprep.subr.mxu0 0.0
  %1784 = vmatpush1.msra.mxu0 %v1763
  %1785 = vmatprep.subr.mxu0 0.0
  %1786 = vmatpush1.msra.mxu0 %v1764
  %1787 = vmatprep.subr.mxu0 0.0
  %1788 = vmatpush1.msra.mxu0 %v1765
  %1789 = vmatprep.subr.mxu0 0.0
  %1790 = vmatpush1.msra.mxu0 %v1766
  %1791 = vmatprep.subr.mxu0 0.0
  %1792 = vmatpush1.msra.mxu0 %v1767
  %1793 = vmatprep.subr.mxu0 0.0
  %1794 = vmatpush1.msra.mxu0 %v1768
  %1795 = vmatprep.subr.mxu0 0.0
  %1796 = vmatpush1.msra.mxu0 %v1769
  %1797 = vmatprep.subr.mxu0 0.0
  %1798 = vmatpush1.msra.mxu0 %v1770
  %1799 = vmatprep.subr.mxu0 0.0
  %1800 = vmatpush1.msra.mxu0 %v1771
  %1801 = vmatprep.subr.mxu0 0.0
  %1802 = vmatpush1.msra.mxu0 %v1772
  %1803 = vmatprep.subr.mxu0 0.0
  %1804 = vmatpush1.msra.mxu0 %v1773
  %1805 = vmatprep.subr.mxu0 0.0
  %1806 = vmatpush1.msra.mxu0 %v1774
  %1807 = vmatprep.subr.mxu0 0.0
  %1808 = vmatpush1.msra.mxu0 0.0
  %1809 = vmatprep.subr.mxu0 0.0
  %1810 = vmatpush1.msra.mxu0 0.0
  %1811 = vmatprep.subr.mxu0 0.0
  %1812 = vmatpush1.msra.mxu0 0.0
  %1813 = vmatprep.subr.mxu0 0.0
  %1814 = vmatpush1.msra.mxu0 0.0
  %1815 = vmatprep.subr.mxu0 0.0
  %1816 = vmatpush1.msra.mxu0 0.0
  %1817 = vmatprep.subr.mxu0 0.0
  %1818 = vmatpush1.msra.mxu0 0.0
  %1819 = vmatprep.subr.mxu0 0.0
  %1820 = vmatpush1.msra.mxu0 0.0
  %1821 = vmatprep.subr.mxu0 0.0
  %1822 = vmatpush1.msra.mxu0 0.0
  %1823 = vmatprep.subr.mxu0 0.0
  %1824 = vmatpush1.msra.mxu0 0.0
  %1825 = vmatprep.subr.mxu0 0.0
  %1826 = vmatpush1.msra.mxu0 0.0
  %1827 = vmatprep.subr.mxu0 0.0
  %1828 = vmatpush1.msra.mxu0 0.0
  %1829 = vmatprep.subr.mxu0 0.0
  %1830 = vmatpush1.msra.mxu0 0.0
  %1831 = vmatprep.subr.mxu0 0.0
  %1832 = vmatpush1.msra.mxu0 0.0
  %1833 = vmatprep.subr.mxu0 0.0
  %1834 = vmatpush1.msra.mxu0 0.0
  %1835 = vmatprep.subr.mxu0 0.0
  %1836 = vmatpush1.msra.mxu0 0.0
  %1837 = vmatprep.subr.mxu0 0.0
  %1838 = vmatpush1.msra.mxu0 0.0
  %1839 = vmatprep.mubr.f32.mxu0 0.0
  %1840 = vmatmul.mubr.f32.gmra.mrb[0].mxu0 %v1758
  %v1841 = vpop.f32.mrb[0].mxu0
  %v1842 = vadd.f32 0.0, %v1841
  %v1843 = vpop.f32.mrb[0].mxu0
  %1844 = vdwg.mxu0
  %v1845 = vadd.f32 %v1564, %v1842
  %1846 = vset.pattern.permute.xlu0 12
  %1847 = vperm.xlu0 %1846, %v28
  %v1848 = vpop.permute.xlu0 %1847
  %v1850 = vmul.f32 %v1848, %v107
  %v1851 = vmul.f32 %v1848, %v111
  %v1852 = vmul.f32 %v1848, %v115
  %v1853 = vmul.f32 %v1848, %v119
  %1854 = vset.pattern.permute.xlu0 13
  %1855 = vperm.xlu0 %1854, %v28
  %v1856 = vpop.permute.xlu0 %1855
  %v1858 = vmul.f32 %v1856, %v136
  %v1859 = vmul.f32 %v1856, %v140
  %v1860 = vmul.f32 %v1856, %v144
  %v1861 = vmul.f32 %v1856, %v148
  %v1862 = vadd.f32 %v1850, %v1858
  %v1863 = vadd.f32 %v1851, %v1859
  %v1864 = vadd.f32 %v1852, %v1860
  %v1865 = vadd.f32 %v1853, %v1861
  %1866 = vmatprep.subr.mxu0 %v35
  %1867 = vmatpush1.msra.mxu0 %v34
  %1868 = vmatprep.subr.mxu0 %v39
  %1869 = vmatpush1.msra.mxu0 %v38
  %1870 = vmatprep.subr.mxu0 %v43
  %1871 = vmatpush1.msra.mxu0 %v42
  %1872 = vmatprep.subr.mxu0 %v47
  %1873 = vmatpush1.msra.mxu0 %v46
  %1874 = vmatprep.subr.mxu0 %v51
  %1875 = vmatpush1.msra.mxu0 %v50
  %1876 = vmatprep.subr.mxu0 %v55
  %1877 = vmatpush1.msra.mxu0 %v54
  %1878 = vmatprep.subr.mxu0 %v59
  %1879 = vmatpush1.msra.mxu0 %v58
  %1880 = vmatprep.subr.mxu0 %v63
  %1881 = vmatpush1.msra.mxu0 %v62
  %1882 = vmatprep.subr.mxu0 %v67
  %1883 = vmatpush1.msra.mxu0 %v66
  %1884 = vmatprep.subr.mxu0 %v71
  %1885 = vmatpush1.msra.mxu0 %v70
  %1886 = vmatprep.subr.mxu0 %v75
  %1887 = vmatpush1.msra.mxu0 %v74
  %1888 = vmatprep.subr.mxu0 %v79
  %1889 = vmatpush1.msra.mxu0 %v78
  %1890 = vmatprep.subr.mxu0 %v83
  %1891 = vmatpush1.msra.mxu0 %v82
  %1892 = vmatprep.subr.mxu0 %v87
  %1893 = vmatpush1.msra.mxu0 %v86
  %1894 = vmatprep.subr.mxu0 %v91
  %1895 = vmatpush1.msra.mxu0 %v90
  %1896 = vmatprep.subr.mxu0 %v95
  %1897 = vmatpush1.msra.mxu0 %v94
  %1898 = vmatprep.subr.mxu0 0.0
  %1899 = vmatpush1.msra.mxu0 0.0
  %1900 = vmatprep.subr.mxu0 0.0
  %1901 = vmatpush1.msra.mxu0 0.0
  %1902 = vmatprep.subr.mxu0 0.0
  %1903 = vmatpush1.msra.mxu0 0.0
  %1904 = vmatprep.subr.mxu0 0.0
  %1905 = vmatpush1.msra.mxu0 0.0
  %1906 = vmatprep.subr.mxu0 0.0
  %1907 = vmatpush1.msra.mxu0 0.0
  %1908 = vmatprep.subr.mxu0 0.0
  %1909 = vmatpush1.msra.mxu0 0.0
  %1910 = vmatprep.subr.mxu0 0.0
  %1911 = vmatpush1.msra.mxu0 0.0
  %1912 = vmatprep.subr.mxu0 0.0
  %1913 = vmatpush1.msra.mxu0 0.0
  %1914 = vmatprep.subr.mxu0 0.0
  %1915 = vmatpush1.msra.mxu0 0.0
  %1916 = vmatprep.subr.mxu0 0.0
  %1917 = vmatpush1.msra.mxu0 0.0
  %1918 = vmatprep.subr.mxu0 0.0
  %1919 = vmatpush1.msra.mxu0 0.0
  %1920 = vmatprep.subr.mxu0 0.0
  %1921 = vmatpush1.msra.mxu0 0.0
  %1922 = vmatprep.subr.mxu0 0.0
  %1923 = vmatpush1.msra.mxu0 0.0
  %1924 = vmatprep.subr.mxu0 0.0
  %1925 = vmatpush1.msra.mxu0 0.0
  %1926 = vmatprep.subr.mxu0 0.0
  %1927 = vmatpush1.msra.mxu0 0.0
  %1928 = vmatprep.subr.mxu0 0.0
  %1929 = vmatpush1.msra.mxu0 0.0
  %1930 = vmatprep.mubr.f32.mxu0 0.0
  %1931 = vmatmul.mubr.f32.gmra.mrb[0].mxu0 %v1758
  %v1932 = vpop.f32.mrb[0].mxu0
  %v1933 = vadd.f32 0.0, %v1932
  %v1934 = vpop.f32.mrb[0].mxu0
  %v1935 = vadd.f32 0.0, %v1934
  %1936 = vdwg.mxu0
  %1937 = vmatprep.subr.mxu0 %v37
  %1938 = vmatpush1.msra.mxu0 %v36
  %1939 = vmatprep.subr.mxu0 %v41
  %1940 = vmatpush1.msra.mxu0 %v40
  %1941 = vmatprep.subr.mxu0 %v45
  %1942 = vmatpush1.msra.mxu0 %v44
  %1943 = vmatprep.subr.mxu0 %v49
  %1944 = vmatpush1.msra.mxu0 %v48
  %1945 = vmatprep.subr.mxu0 %v53
  %1946 = vmatpush1.msra.mxu0 %v52
  %1947 = vmatprep.subr.mxu0 %v57
  %1948 = vmatpush1.msra.mxu0 %v56
  %1949 = vmatprep.subr.mxu0 %v61
  %1950 = vmatpush1.msra.mxu0 %v60
  %1951 = vmatprep.subr.mxu0 %v65
  %1952 = vmatpush1.msra.mxu0 %v64
  %1953 = vmatprep.subr.mxu0 %v69
  %1954 = vmatpush1.msra.mxu0 %v68
  %1955 = vmatprep.subr.mxu0 %v73
  %1956 = vmatpush1.msra.mxu0 %v72
  %1957 = vmatprep.subr.mxu0 %v77
  %1958 = vmatpush1.msra.mxu0 %v76
  %1959 = vmatprep.subr.mxu0 %v81
  %1960 = vmatpush1.msra.mxu0 %v80
  %1961 = vmatprep.subr.mxu0 %v85
  %1962 = vmatpush1.msra.mxu0 %v84
  %1963 = vmatprep.subr.mxu0 %v89
  %1964 = vmatpush1.msra.mxu0 %v88
  %1965 = vmatprep.subr.mxu0 %v93
  %1966 = vmatpush1.msra.mxu0 %v92
  %1967 = vmatprep.subr.mxu0 %v97
  %1968 = vmatpush1.msra.mxu0 %v96
  %1969 = vmatprep.subr.mxu0 0.0
  %1970 = vmatpush1.msra.mxu0 0.0
  %1971 = vmatprep.subr.mxu0 0.0
  %1972 = vmatpush1.msra.mxu0 0.0
  %1973 = vmatprep.subr.mxu0 0.0
  %1974 = vmatpush1.msra.mxu0 0.0
  %1975 = vmatprep.subr.mxu0 0.0
  %1976 = vmatpush1.msra.mxu0 0.0
  %1977 = vmatprep.subr.mxu0 0.0
  %1978 = vmatpush1.msra.mxu0 0.0
  %1979 = vmatprep.subr.mxu0 0.0
  %1980 = vmatpush1.msra.mxu0 0.0
  %1981 = vmatprep.subr.mxu0 0.0
  %1982 = vmatpush1.msra.mxu0 0.0
  %1983 = vmatprep.subr.mxu0 0.0
  %1984 = vmatpush1.msra.mxu0 0.0
  %1985 = vmatprep.subr.mxu0 0.0
  %1986 = vmatpush1.msra.mxu0 0.0
  %1987 = vmatprep.subr.mxu0 0.0
  %1988 = vmatpush1.msra.mxu0 0.0
  %1989 = vmatprep.subr.mxu0 0.0
  %1990 = vmatpush1.msra.mxu0 0.0
  %1991 = vmatprep.subr.mxu0 0.0
  %1992 = vmatpush1.msra.mxu0 0.0
  %1993 = vmatprep.subr.mxu0 0.0
  %1994 = vmatpush1.msra.mxu0 0.0
  %1995 = vmatprep.subr.mxu0 0.0
  %1996 = vmatpush1.msra.mxu0 0.0
  %1997 = vmatprep.subr.mxu0 0.0
  %1998 = vmatpush1.msra.mxu0 0.0
  %1999 = vmatprep.subr.mxu0 0.0
  %2000 = vmatpush1.msra.mxu0 0.0
  %2001 = vmatprep.mubr.f32.mxu0 0.0
  %2002 = vmatmul.mubr.f32.gmra.mrb[0].mxu0 %v1758
  %v2003 = vpop.f32.mrb[0].mxu0
  %v2004 = vadd.f32 0.0, %v2003
  %v2005 = vpop.f32.mrb[0].mxu0
  %v2006 = vadd.f32 0.0, %v2005
  %2007 = vdwg.mxu0
  %v2008 = vadd.f32 %v1862, %v1933
  %v2009 = vadd.f32 %v1863, %v1935
  %v2010 = vadd.f32 %v1864, %v2004
  %v2011 = vadd.f32 %v1865, %v2006
  %v2012 = vadd.f32 %v2008, %v311
  %v2013 = vadd.f32 %v2009, %v315
  %v2014 = vadd.f32 %v2010, %v319
  %v2015 = vadd.f32 %v2011, %v323
  %v2016 = vxor.u32 %v2012, 2147483648
  %v2017 = vmul.f32 %v2016, 1.442695
  %v2018 = vpow.pop %v2017
  %v2019 = vadd.f32 %v2018, 1.0
  %v2020 = vrcp.pop %v2019
  %v2021 = vmul.f32 1.0, %v2020
  %v2022 = vxor.u32 %v2013, 2147483648
  %v2023 = vmul.f32 %v2022, 1.442695
  %v2024 = vpow.pop %v2023
  %v2025 = vadd.f32 %v2024, 1.0
  %v2026 = vrcp.pop %v2025
  %v2027 = vmul.f32 1.0, %v2026
  %v2028 = vtanh.pop %v2014
  %v2029 = vxor.u32 %v2015, 2147483648
  %v2030 = vmul.f32 %v2029, 1.442695
  %v2031 = vpow.pop %v2030
  %v2032 = vadd.f32 %v2031, 1.0
  %v2033 = vrcp.pop %v2032
  %v2034 = vmul.f32 1.0, %v2033
  %v2035 = vmul.f32 %v2027, %v1756
  %v2036 = vmul.f32 %v2021, %v2028
  %v2037 = vadd.f32 %v2035, %v2036
  %v2038 = vtanh.pop %v2037
  %v2039 = vmul.f32 %v2034, %v2038
  %v2040 = vld [vmem:[%s5 + $0x300] sm:$0xff]
  %v2041 = vld [vmem:[%s5 + $0x308] sm:$0xff]
  %v2042 = vld [vmem:[%s5 + $0x310] sm:$0xff]
  %v2043 = vld [vmem:[%s5 + $0x318] sm:$0xff]
  %v2044 = vld [vmem:[%s5 + $0x320] sm:$0xff]
  %v2045 = vld [vmem:[%s5 + $0x328] sm:$0xff]
  %v2046 = vld [vmem:[%s5 + $0x330] sm:$0xff]
  %v2047 = vld [vmem:[%s5 + $0x338] sm:$0xff]
  %v2048 = vld [vmem:[%s5 + $0x340] sm:$0xff]
  %v2049 = vld [vmem:[%s5 + $0x348] sm:$0xff]
  %v2050 = vld [vmem:[%s5 + $0x350] sm:$0xff]
  %v2051 = vld [vmem:[%s5 + $0x358] sm:$0xff]
  %v2052 = vld [vmem:[%s5 + $0x360] sm:$0xff]
  %v2053 = vld [vmem:[%s5 + $0x368] sm:$0xff]
  %v2054 = vld [vmem:[%s5 + $0x370] sm:$0xff]
  %v2055 = vld [vmem:[%s5 + $0x378] sm:$0xff]
  %2056 = vmatprep.subr.mxu0 0.0
  %2057 = vmatpush1.msra.mxu0 %v2040
  %2058 = vmatprep.subr.mxu0 0.0
  %2059 = vmatpush1.msra.mxu0 %v2041
  %2060 = vmatprep.subr.mxu0 0.0
  %2061 = vmatpush1.msra.mxu0 %v2042
  %2062 = vmatprep.subr.mxu0 0.0
  %2063 = vmatpush1.msra.mxu0 %v2043
  %2064 = vmatprep.subr.mxu0 0.0
  %2065 = vmatpush1.msra.mxu0 %v2044
  %2066 = vmatprep.subr.mxu0 0.0
  %2067 = vmatpush1.msra.mxu0 %v2045
  %2068 = vmatprep.subr.mxu0 0.0
  %2069 = vmatpush1.msra.mxu0 %v2046
  %2070 = vmatprep.subr.mxu0 0.0
  %2071 = vmatpush1.msra.mxu0 %v2047
  %2072 = vmatprep.subr.mxu0 0.0
  %2073 = vmatpush1.msra.mxu0 %v2048
  %2074 = vmatprep.subr.mxu0 0.0
  %2075 = vmatpush1.msra.mxu0 %v2049
  %2076 = vmatprep.subr.mxu0 0.0
  %2077 = vmatpush1.msra.mxu0 %v2050
  %2078 = vmatprep.subr.mxu0 0.0
  %2079 = vmatpush1.msra.mxu0 %v2051
  %2080 = vmatprep.subr.mxu0 0.0
  %2081 = vmatpush1.msra.mxu0 %v2052
  %2082 = vmatprep.subr.mxu0 0.0
  %2083 = vmatpush1.msra.mxu0 %v2053
  %2084 = vmatprep.subr.mxu0 0.0
  %2085 = vmatpush1.msra.mxu0 %v2054
  %2086 = vmatprep.subr.mxu0 0.0
  %2087 = vmatpush1.msra.mxu0 %v2055
  %2088 = vmatprep.subr.mxu0 0.0
  %2089 = vmatpush1.msra.mxu0 0.0
  %2090 = vmatprep.subr.mxu0 0.0
  %2091 = vmatpush1.msra.mxu0 0.0
  %2092 = vmatprep.subr.mxu0 0.0
  %2093 = vmatpush1.msra.mxu0 0.0
  %2094 = vmatprep.subr.mxu0 0.0
  %2095 = vmatpush1.msra.mxu0 0.0
  %2096 = vmatprep.subr.mxu0 0.0
  %2097 = vmatpush1.msra.mxu0 0.0
  %2098 = vmatprep.subr.mxu0 0.0
  %2099 = vmatpush1.msra.mxu0 0.0
  %2100 = vmatprep.subr.mxu0 0.0
  %2101 = vmatpush1.msra.mxu0 0.0
  %2102 = vmatprep.subr.mxu0 0.0
  %2103 = vmatpush1.msra.mxu0 0.0
  %2104 = vmatprep.subr.mxu0 0.0
  %2105 = vmatpush1.msra.mxu0 0.0
  %2106 = vmatprep.subr.mxu0 0.0
  %2107 = vmatpush1.msra.mxu0 0.0
  %2108 = vmatprep.subr.mxu0 0.0
  %2109 = vmatpush1.msra.mxu0 0.0
  %2110 = vmatprep.subr.mxu0 0.0
  %2111 = vmatpush1.msra.mxu0 0.0
  %2112 = vmatprep.subr.mxu0 0.0
  %2113 = vmatpush1.msra.mxu0 0.0
  %2114 = vmatprep.subr.mxu0 0.0
  %2115 = vmatpush1.msra.mxu0 0.0
  %2116 = vmatprep.subr.mxu0 0.0
  %2117 = vmatpush1.msra.mxu0 0.0
  %2118 = vmatprep.subr.mxu0 0.0
  %2119 = vmatpush1.msra.mxu0 0.0
  %2120 = vmatprep.mubr.f32.mxu0 0.0
  %2121 = vmatmul.mubr.f32.gmra.mrb[0].mxu0 %v2039
  %v2122 = vpop.f32.mrb[0].mxu0
  %v2123 = vadd.f32 0.0, %v2122
  %v2124 = vpop.f32.mrb[0].mxu0
  %2125 = vdwg.mxu0
  %v2126 = vadd.f32 %v1845, %v2123
  %2127 = vset.pattern.permute.xlu0 14
  %2128 = vperm.xlu0 %2127, %v28
  %v2129 = vpop.permute.xlu0 %2128
  %v2131 = vmul.f32 %v2129, %v107
  %v2132 = vmul.f32 %v2129, %v111
  %v2133 = vmul.f32 %v2129, %v115
  %v2134 = vmul.f32 %v2129, %v119
  %2135 = vset.pattern.permute.xlu0 15
  %2136 = vperm.xlu0 %2135, %v28
  %v2137 = vpop.permute.xlu0 %2136
  %v2139 = vmul.f32 %v2137, %v136
  %v2140 = vmul.f32 %v2137, %v140
  %v2141 = vmul.f32 %v2137, %v144
  %v2142 = vmul.f32 %v2137, %v148
  %v2143 = vadd.f32 %v2131, %v2139
  %v2144 = vadd.f32 %v2132, %v2140
  %v2145 = vadd.f32 %v2133, %v2141
  %v2146 = vadd.f32 %v2134, %v2142
  %2147 = vmatprep.subr.mxu0 %v35
  %2148 = vmatpush1.msra.mxu0 %v34
  %2149 = vmatprep.subr.mxu0 %v39
  %2150 = vmatpush1.msra.mxu0 %v38
  %2151 = vmatprep.subr.mxu0 %v43
  %2152 = vmatpush1.msra.mxu0 %v42
  %2153 = vmatprep.subr.mxu0 %v47
  %2154 = vmatpush1.msra.mxu0 %v46
  %2155 = vmatprep.subr.mxu0 %v51
  %2156 = vmatpush1.msra.mxu0 %v50
  %2157 = vmatprep.subr.mxu0 %v55
  %2158 = vmatpush1.msra.mxu0 %v54
  %2159 = vmatprep.subr.mxu0 %v59
  %2160 = vmatpush1.msra.mxu0 %v58
  %2161 = vmatprep.subr.mxu0 %v63
  %2162 = vmatpush1.msra.mxu0 %v62
  %2163 = vmatprep.subr.mxu0 %v67
  %2164 = vmatpush1.msra.mxu0 %v66
  %2165 = vmatprep.subr.mxu0 %v71
  %2166 = vmatpush1.msra.mxu0 %v70
  %2167 = vmatprep.subr.mxu0 %v75
  %2168 = vmatpush1.msra.mxu0 %v74
  %2169 = vmatprep.subr.mxu0 %v79
  %2170 = vmatpush1.msra.mxu0 %v78
  %2171 = vmatprep.subr.mxu0 %v83
  %2172 = vmatpush1.msra.mxu0 %v82
  %2173 = vmatprep.subr.mxu0 %v87
  %2174 = vmatpush1.msra.mxu0 %v86
  %2175 = vmatprep.subr.mxu0 %v91
  %2176 = vmatpush1.msra.mxu0 %v90
  %2177 = vmatprep.subr.mxu0 %v95
  %2178 = vmatpush1.msra.mxu0 %v94
  %2179 = vmatprep.subr.mxu0 0.0
  %2180 = vmatpush1.msra.mxu0 0.0
  %2181 = vmatprep.subr.mxu0 0.0
  %2182 = vmatpush1.msra.mxu0 0.0
  %2183 = vmatprep.subr.mxu0 0.0
  %2184 = vmatpush1.msra.mxu0 0.0
  %2185 = vmatprep.subr.mxu0 0.0
  %2186 = vmatpush1.msra.mxu0 0.0
  %2187 = vmatprep.subr.mxu0 0.0
  %2188 = vmatpush1.msra.mxu0 0.0
  %2189 = vmatprep.subr.mxu0 0.0
  %2190 = vmatpush1.msra.mxu0 0.0
  %2191 = vmatprep.subr.mxu0 0.0
  %2192 = vmatpush1.msra.mxu0 0.0
  %2193 = vmatprep.subr.mxu0 0.0
  %2194 = vmatpush1.msra.mxu0 0.0
  %2195 = vmatprep.subr.mxu0 0.0
  %2196 = vmatpush1.msra.mxu0 0.0
  %2197 = vmatprep.subr.mxu0 0.0
  %2198 = vmatpush1.msra.mxu0 0.0
  %2199 = vmatprep.subr.mxu0 0.0
  %2200 = vmatpush1.msra.mxu0 0.0
  %2201 = vmatprep.subr.mxu0 0.0
  %2202 = vmatpush1.msra.mxu0 0.0
  %2203 = vmatprep.subr.mxu0 0.0
  %2204 = vmatpush1.msra.mxu0 0.0
  %2205 = vmatprep.subr.mxu0 0.0
  %2206 = vmatpush1.msra.mxu0 0.0
  %2207 = vmatprep.subr.mxu0 0.0
  %2208 = vmatpush1.msra.mxu0 0.0
  %2209 = vmatprep.subr.mxu0 0.0
  %2210 = vmatpush1.msra.mxu0 0.0
  %2211 = vmatprep.mubr.f32.mxu0 0.0
  %2212 = vmatmul.mubr.f32.gmra.mrb[0].mxu0 %v2039
  %v2213 = vpop.f32.mrb[0].mxu0
  %v2214 = vadd.f32 0.0, %v2213
  %v2215 = vpop.f32.mrb[0].mxu0
  %v2216 = vadd.f32 0.0, %v2215
  %2217 = vdwg.mxu0
  %2218 = vmatprep.subr.mxu0 %v37
  %2219 = vmatpush1.msra.mxu0 %v36
  %2220 = vmatprep.subr.mxu0 %v41
  %2221 = vmatpush1.msra.mxu0 %v40
  %2222 = vmatprep.subr.mxu0 %v45
  %2223 = vmatpush1.msra.mxu0 %v44
  %2224 = vmatprep.subr.mxu0 %v49
  %2225 = vmatpush1.msra.mxu0 %v48
  %2226 = vmatprep.subr.mxu0 %v53
  %2227 = vmatpush1.msra.mxu0 %v52
  %2228 = vmatprep.subr.mxu0 %v57
  %2229 = vmatpush1.msra.mxu0 %v56
  %2230 = vmatprep.subr.mxu0 %v61
  %2231 = vmatpush1.msra.mxu0 %v60
  %2232 = vmatprep.subr.mxu0 %v65
  %2233 = vmatpush1.msra.mxu0 %v64
  %2234 = vmatprep.subr.mxu0 %v69
  %2235 = vmatpush1.msra.mxu0 %v68
  %2236 = vmatprep.subr.mxu0 %v73
  %2237 = vmatpush1.msra.mxu0 %v72
  %2238 = vmatprep.subr.mxu0 %v77
  %2239 = vmatpush1.msra.mxu0 %v76
  %2240 = vmatprep.subr.mxu0 %v81
  %2241 = vmatpush1.msra.mxu0 %v80
  %2242 = vmatprep.subr.mxu0 %v85
  %2243 = vmatpush1.msra.mxu0 %v84
  %2244 = vmatprep.subr.mxu0 %v89
  %2245 = vmatpush1.msra.mxu0 %v88
  %2246 = vmatprep.subr.mxu0 %v93
  %2247 = vmatpush1.msra.mxu0 %v92
  %2248 = vmatprep.subr.mxu0 %v97
  %2249 = vmatpush1.msra.mxu0 %v96
  %2250 = vmatprep.subr.mxu0 0.0
  %2251 = vmatpush1.msra.mxu0 0.0
  %2252 = vmatprep.subr.mxu0 0.0
  %2253 = vmatpush1.msra.mxu0 0.0
  %2254 = vmatprep.subr.mxu0 0.0
  %2255 = vmatpush1.msra.mxu0 0.0
  %2256 = vmatprep.subr.mxu0 0.0
  %2257 = vmatpush1.msra.mxu0 0.0
  %2258 = vmatprep.subr.mxu0 0.0
  %2259 = vmatpush1.msra.mxu0 0.0
  %2260 = vmatprep.subr.mxu0 0.0
  %2261 = vmatpush1.msra.mxu0 0.0
  %2262 = vmatprep.subr.mxu0 0.0
  %2263 = vmatpush1.msra.mxu0 0.0
  %2264 = vmatprep.subr.mxu0 0.0
  %2265 = vmatpush1.msra.mxu0 0.0
  %2266 = vmatprep.subr.mxu0 0.0
  %2267 = vmatpush1.msra.mxu0 0.0
  %2268 = vmatprep.subr.mxu0 0.0
  %2269 = vmatpush1.msra.mxu0 0.0
  %2270 = vmatprep.subr.mxu0 0.0
  %2271 = vmatpush1.msra.mxu0 0.0
  %2272 = vmatprep.subr.mxu0 0.0
  %2273 = vmatpush1.msra.mxu0 0.0
  %2274 = vmatprep.subr.mxu0 0.0
  %2275 = vmatpush1.msra.mxu0 0.0
  %2276 = vmatprep.subr.mxu0 0.0
  %2277 = vmatpush1.msra.mxu0 0.0
  %2278 = vmatprep.subr.mxu0 0.0
  %2279 = vmatpush1.msra.mxu0 0.0
  %2280 = vmatprep.subr.mxu0 0.0
  %2281 = vmatpush1.msra.mxu0 0.0
  %2282 = vmatprep.mubr.f32.mxu0 0.0
  %2283 = vmatmul.mubr.f32.gmra.mrb[0].mxu0 %v2039
  %v2284 = vpop.f32.mrb[0].mxu0
  %v2285 = vadd.f32 0.0, %v2284
  %v2286 = vpop.f32.mrb[0].mxu0
  %v2287 = vadd.f32 0.0, %v2286
  %2288 = vdwg.mxu0
  %v2289 = vadd.f32 %v2143, %v2214
  %v2290 = vadd.f32 %v2144, %v2216
  %v2291 = vadd.f32 %v2145, %v2285
  %v2292 = vadd.f32 %v2146, %v2287
  %v2293 = vadd.f32 %v2289, %v311
  %v2294 = vadd.f32 %v2290, %v315
  %v2295 = vadd.f32 %v2291, %v319
  %v2296 = vadd.f32 %v2292, %v323
  %v2297 = vxor.u32 %v2293, 2147483648
  %v2298 = vmul.f32 %v2297, 1.442695
  %v2299 = vpow.pop %v2298
  %v2300 = vadd.f32 %v2299, 1.0
  %v2301 = vrcp.pop %v2300
  %v2302 = vmul.f32 1.0, %v2301
  %v2303 = vxor.u32 %v2294, 2147483648
  %v2304 = vmul.f32 %v2303, 1.442695
  %v2305 = vpow.pop %v2304
  %v2306 = vadd.f32 %v2305, 1.0
  %v2307 = vrcp.pop %v2306
  %v2308 = vmul.f32 1.0, %v2307
  %v2309 = vtanh.pop %v2295
  %v2310 = vxor.u32 %v2296, 2147483648
  %v2311 = vmul.f32 %v2310, 1.442695
  %v2312 = vpow.pop %v2311
  %v2313 = vadd.f32 %v2312, 1.0
  %v2314 = vrcp.pop %v2313
  %v2315 = vmul.f32 1.0, %v2314
  %v2316 = vmul.f32 %v2308, %v2037
  %v2317 = vmul.f32 %v2302, %v2309
  %v2318 = vadd.f32 %v2316, %v2317
  %v2319 = vtanh.pop %v2318
  %v2320 = vmul.f32 %v2315, %v2319
  %v2321 = vld [vmem:[%s5 + $0x380] sm:$0xff]
  %v2322 = vld [vmem:[%s5 + $0x388] sm:$0xff]
  %v2323 = vld [vmem:[%s5 + $0x390] sm:$0xff]
  %v2324 = vld [vmem:[%s5 + $0x398] sm:$0xff]
  %v2325 = vld [vmem:[%s5 + $0x3a0] sm:$0xff]
  %v2326 = vld [vmem:[%s5 + $0x3a8] sm:$0xff]
  %v2327 = vld [vmem:[%s5 + $0x3b0] sm:$0xff]
  %v2328 = vld [vmem:[%s5 + $0x3b8] sm:$0xff]
  %v2329 = vld [vmem:[%s5 + $0x3c0] sm:$0xff]
  %v2330 = vld [vmem:[%s5 + $0x3c8] sm:$0xff]
  %v2331 = vld [vmem:[%s5 + $0x3d0] sm:$0xff]
  %v2332 = vld [vmem:[%s5 + $0x3d8] sm:$0xff]
  %v2333 = vld [vmem:[%s5 + $0x3e0] sm:$0xff]
  %v2334 = vld [vmem:[%s5 + $0x3e8] sm:$0xff]
  %v2335 = vld [vmem:[%s5 + $0x3f0] sm:$0xff]
  %v2336 = vld [vmem:[%s5 + $0x3f8] sm:$0xff]
  %2337 = vmatprep.subr.mxu0 0.0
  %2338 = vmatpush1.msra.mxu0 %v2321
  %2339 = vmatprep.subr.mxu0 0.0
  %2340 = vmatpush1.msra.mxu0 %v2322
  %2341 = vmatprep.subr.mxu0 0.0
  %2342 = vmatpush1.msra.mxu0 %v2323
  %2343 = vmatprep.subr.mxu0 0.0
  %2344 = vmatpush1.msra.mxu0 %v2324
  %2345 = vmatprep.subr.mxu0 0.0
  %2346 = vmatpush1.msra.mxu0 %v2325
  %2347 = vmatprep.subr.mxu0 0.0
  %2348 = vmatpush1.msra.mxu0 %v2326
  %2349 = vmatprep.subr.mxu0 0.0
  %2350 = vmatpush1.msra.mxu0 %v2327
  %2351 = vmatprep.subr.mxu0 0.0
  %2352 = vmatpush1.msra.mxu0 %v2328
  %2353 = vmatprep.subr.mxu0 0.0
  %2354 = vmatpush1.msra.mxu0 %v2329
  %2355 = vmatprep.subr.mxu0 0.0
  %2356 = vmatpush1.msra.mxu0 %v2330
  %2357 = vmatprep.subr.mxu0 0.0
  %2358 = vmatpush1.msra.mxu0 %v2331
  %2359 = vmatprep.subr.mxu0 0.0
  %2360 = vmatpush1.msra.mxu0 %v2332
  %2361 = vmatprep.subr.mxu0 0.0
  %2362 = vmatpush1.msra.mxu0 %v2333
  %2363 = vmatprep.subr.mxu0 0.0
  %2364 = vmatpush1.msra.mxu0 %v2334
  %2365 = vmatprep.subr.mxu0 0.0
  %2366 = vmatpush1.msra.mxu0 %v2335
  %2367 = vmatprep.subr.mxu0 0.0
  %2368 = vmatpush1.msra.mxu0 %v2336
  %2369 = vmatprep.subr.mxu0 0.0
  %2370 = vmatpush1.msra.mxu0 0.0
  %2371 = vmatprep.subr.mxu0 0.0
  %2372 = vmatpush1.msra.mxu0 0.0
  %2373 = vmatprep.subr.mxu0 0.0
  %2374 = vmatpush1.msra.mxu0 0.0
  %2375 = vmatprep.subr.mxu0 0.0
  %2376 = vmatpush1.msra.mxu0 0.0
  %2377 = vmatprep.subr.mxu0 0.0
  %2378 = vmatpush1.msra.mxu0 0.0
  %2379 = vmatprep.subr.mxu0 0.0
  %2380 = vmatpush1.msra.mxu0 0.0
  %2381 = vmatprep.subr.mxu0 0.0
  %2382 = vmatpush1.msra.mxu0 0.0
  %2383 = vmatprep.subr.mxu0 0.0
  %2384 = vmatpush1.msra.mxu0 0.0
  %2385 = vmatprep.subr.mxu0 0.0
  %2386 = vmatpush1.msra.mxu0 0.0
  %2387 = vmatprep.subr.mxu0 0.0
  %2388 = vmatpush1.msra.mxu0 0.0
  %2389 = vmatprep.subr.mxu0 0.0
  %2390 = vmatpush1.msra.mxu0 0.0
  %2391 = vmatprep.subr.mxu0 0.0
  %2392 = vmatpush1.msra.mxu0 0.0
  %2393 = vmatprep.subr.mxu0 0.0
  %2394 = vmatpush1.msra.mxu0 0.0
  %2395 = vmatprep.subr.mxu0 0.0
  %2396 = vmatpush1.msra.mxu0 0.0
  %2397 = vmatprep.subr.mxu0 0.0
  %2398 = vmatpush1.msra.mxu0 0.0
  %2399 = vmatprep.subr.mxu0 0.0
  %2400 = vmatpush1.msra.mxu0 0.0
  %2401 = vmatprep.mubr.f32.mxu0 0.0
  %2402 = vmatmul.mubr.f32.gmra.mrb[0].mxu0 %v2320
  %v2403 = vpop.f32.mrb[0].mxu0
  %v2404 = vadd.f32 0.0, %v2403
  %v2405 = vpop.f32.mrb[0].mxu0
  %2406 = vdwg.mxu0
  %v2407 = vadd.f32 %v2126, %v2404
  %v2408 = vld [vmem:[%s5 + $0x400] sm:$0x1]
  %v2409 = vlaneseq
  %v2410 = vshrl.u32 %v2409, 7
  %v2411 = vsub.s32 0, %v2410
  %v2412 = vrot.slane %v2408, %v2411
  %v2413 = vadd.f32 %v2407, %v2412
  %2414 = vst [vmem:[%s6] sm:$0x3] %v2320
  %2415 = vst [vmem:[%s6 + $0x2] sm:$0x3] %v2318
  %v2416 = vld [vmem:[%s4 + $0x180] sm:$0xff]
  %v2417 = vld [vmem:[%s4 + $0x170] sm:$0xff]
  %v2418 = vld [vmem:[%s1] sm:$0xff]
  %v2419 = vld [vmem:[%s1 + $0x8] sm:$0xff]
  %v2420 = vld [vmem:[%s1 + $0x10] sm:$0xff]
  %v2421 = vld [vmem:[%s1 + $0x18] sm:$0xff]
  %v2422 = vld [vmem:[%s1 + $0x20] sm:$0xff]
  %v2423 = vld [vmem:[%s1 + $0x28] sm:$0xff]
  %v2424 = vld [vmem:[%s1 + $0x30] sm:$0xff]
  %v2425 = vld [vmem:[%s1 + $0x38] sm:$0xff]
  %v2426 = vld [vmem:[%s1 + $0x40] sm:$0xf]
  %v2427 = vld [vmem:[%s1 + $0x48] sm:$0xf]
  %2429 = vset.pattern.permute.xlu0 0
  %2430 = vperm.xlu0 %2429, %v2417
  %v2431 = vpop.permute.xlu0 %2430
  %vm2433 = vcmask 293888
  %v2435 = vsel %vm2433, %v2416, 0
  %vm2437 = vcmask 1043456
  %v2439 = vsel %vm2437, %v2426, 0
  %v2442 = vsel %vm2437, %v2427, 0
  %2444 = vmatprep.subr.mxu0 %v2419
  %2445 = vmatpush1.msra.mxu0 %v2418
  %2446 = vmatprep.subr.mxu0 %v2421
  %2447 = vmatpush1.msra.mxu0 %v2420
  %2448 = vmatprep.subr.mxu0 %v2423
  %2449 = vmatpush1.msra.mxu0 %v2422
  %2450 = vmatprep.subr.mxu0 %v2425
  %2451 = vmatpush1.msra.mxu0 %v2424
  %2452 = vmatprep.subr.mxu0 %v2442
  %2453 = vmatpush1.msra.mxu0 %v2439
  %2454 = vmatprep.subr.mxu0 0.0
  %2455 = vmatpush1.msra.mxu0 0.0
  %2456 = vmatprep.subr.mxu0 0.0
  %2457 = vmatpush1.msra.mxu0 0.0
  %2458 = vmatprep.subr.mxu0 0.0
  %2459 = vmatpush1.msra.mxu0 0.0
  %2460 = vmatprep.subr.mxu0 0.0
  %2461 = vmatpush1.msra.mxu0 0.0
  %2462 = vmatprep.subr.mxu0 0.0
  %2463 = vmatpush1.msra.mxu0 0.0
  %2464 = vmatprep.subr.mxu0 0.0
  %2465 = vmatpush1.msra.mxu0 0.0
  %2466 = vmatprep.subr.mxu0 0.0
  %2467 = vmatpush1.msra.mxu0 0.0
  %2468 = vmatprep.subr.mxu0 0.0
  %2469 = vmatpush1.msra.mxu0 0.0
  %2470 = vmatprep.subr.mxu0 0.0
  %2471 = vmatpush1.msra.mxu0 0.0
  %2472 = vmatprep.subr.mxu0 0.0
  %2473 = vmatpush1.msra.mxu0 0.0
  %2474 = vmatprep.subr.mxu0 0.0
  %2475 = vmatpush1.msra.mxu0 0.0
  %2476 = vmatprep.subr.mxu0 0.0
  %2477 = vmatpush1.msra.mxu0 0.0
  %2478 = vmatprep.subr.mxu0 0.0
  %2479 = vmatpush1.msra.mxu0 0.0
  %2480 = vmatprep.subr.mxu0 0.0
  %2481 = vmatpush1.msra.mxu0 0.0
  %2482 = vmatprep.subr.mxu0 0.0
  %2483 = vmatpush1.msra.mxu0 0.0
  %2484 = vmatprep.subr.mxu0 0.0
  %2485 = vmatpush1.msra.mxu0 0.0
  %2486 = vmatprep.subr.mxu0 0.0
  %2487 = vmatpush1.msra.mxu0 0.0
  %2488 = vmatprep.subr.mxu0 0.0
  %2489 = vmatpush1.msra.mxu0 0.0
  %2490 = vmatprep.subr.mxu0 0.0
  %2491 = vmatpush1.msra.mxu0 0.0
  %2492 = vmatprep.subr.mxu0 0.0
  %2493 = vmatpush1.msra.mxu0 0.0
  %2494 = vmatprep.subr.mxu0 0.0
  %2495 = vmatpush1.msra.mxu0 0.0
  %2496 = vmatprep.subr.mxu0 0.0
  %2497 = vmatpush1.msra.mxu0 0.0
  %2498 = vmatprep.subr.mxu0 0.0
  %2499 = vmatpush1.msra.mxu0 0.0
  %2500 = vmatprep.subr.mxu0 0.0
  %2501 = vmatpush1.msra.mxu0 0.0
  %2502 = vmatprep.subr.mxu0 0.0
  %2503 = vmatpush1.msra.mxu0 0.0
  %2504 = vmatprep.subr.mxu0 0.0
  %2505 = vmatpush1.msra.mxu0 0.0
  %2506 = vmatprep.subr.mxu0 0.0
  %2507 = vmatpush1.msra.mxu0 0.0
  %2508 = vmatprep.mubr.f32.mxu0 0.0
  %2509 = vmatmul.mubr.f32.gmra.mrb[0].mxu0 %v2435
  %v2510 = vpop.f32.mrb[0].mxu0
  %v2511 = vadd.f32 %v2431, %v2510
  %v2512 = vpop.f32.mrb[0].mxu0
  %v2513 = vadd.f32 %v2431, %v2512
  %2514 = vdwg.mxu0
  %v2515 = vmax.f32 %v2511, 0.0
  %v2516 = vmax.f32 %v2513, 0.0
  %s2517 = scalar_lea.vmem %s1, 80
  %v2518 = vld [vmem:[%s2517] sm:$0xff]
  %v2519 = vld [vmem:[%s2517 + $0x8] sm:$0xff]
  %v2520 = vld [vmem:[%s2517 + $0x10] sm:$0xff]
  %v2521 = vld [vmem:[%s2517 + $0x18] sm:$0xff]
  %v2522 = vld [vmem:[%s2517 + $0x20] sm:$0xff]
  %v2523 = vld [vmem:[%s2517 + $0x28] sm:$0xff]
  %v2524 = vld [vmem:[%s2517 + $0x30] sm:$0xff]
  %v2525 = vld [vmem:[%s2517 + $0x38] sm:$0xff]
  %v2526 = vld [vmem:[%s2517 + $0x40] sm:$0xf]
  %v2527 = vld [vmem:[%s2517 + $0x48] sm:$0xf]
  %v2529 = vsel %vm2437, %v2526, 0
  %v2532 = vsel %vm2437, %v2527, 0
  %2534 = vmatprep.subr.mxu0 %v2519
  %2535 = vmatpush1.msra.mxu0 %v2518
  %2536 = vmatprep.subr.mxu0 %v2521
  %2537 = vmatpush1.msra.mxu0 %v2520
  %2538 = vmatprep.subr.mxu0 %v2523
  %2539 = vmatpush1.msra.mxu0 %v2522
  %2540 = vmatprep.subr.mxu0 %v2525
  %2541 = vmatpush1.msra.mxu0 %v2524
  %2542 = vmatprep.subr.mxu0 %v2532
  %2543 = vmatpush1.msra.mxu0 %v2529
  %2544 = vmatprep.subr.mxu0 0.0
  %2545 = vmatpush1.msra.mxu0 0.0
  %2546 = vmatprep.subr.mxu0 0.0
  %2547 = vmatpush1.msra.mxu0 0.0
  %2548 = vmatprep.subr.mxu0 0.0
  %2549 = vmatpush1.msra.mxu0 0.0
  %2550 = vmatprep.subr.mxu0 0.0
  %2551 = vmatpush1.msra.mxu0 0.0
  %2552 = vmatprep.subr.mxu0 0.0
  %2553 = vmatpush1.msra.mxu0 0.0
  %2554 = vmatprep.subr.mxu0 0.0
  %2555 = vmatpush1.msra.mxu0 0.0
  %2556 = vmatprep.subr.mxu0 0.0
  %2557 = vmatpush1.msra.mxu0 0.0
  %2558 = vmatprep.subr.mxu0 0.0
  %2559 = vmatpush1.msra.mxu0 0.0
  %2560 = vmatprep.subr.mxu0 0.0
  %2561 = vmatpush1.msra.mxu0 0.0
  %2562 = vmatprep.subr.mxu0 0.0
  %2563 = vmatpush1.msra.mxu0 0.0
  %2564 = vmatprep.subr.mxu0 0.0
  %2565 = vmatpush1.msra.mxu0 0.0
  %2566 = vmatprep.subr.mxu0 0.0
  %2567 = vmatpush1.msra.mxu0 0.0
  %2568 = vmatprep.subr.mxu0 0.0
  %2569 = vmatpush1.msra.mxu0 0.0
  %2570 = vmatprep.subr.mxu0 0.0
  %2571 = vmatpush1.msra.mxu0 0.0
  %2572 = vmatprep.subr.mxu0 0.0
  %2573 = vmatpush1.msra.mxu0 0.0
  %2574 = vmatprep.subr.mxu0 0.0
  %2575 = vmatpush1.msra.mxu0 0.0
  %2576 = vmatprep.subr.mxu0 0.0
  %2577 = vmatpush1.msra.mxu0 0.0
  %2578 = vmatprep.subr.mxu0 0.0
  %2579 = vmatpush1.msra.mxu0 0.0
  %2580 = vmatprep.subr.mxu0 0.0
  %2581 = vmatpush1.msra.mxu0 0.0
  %2582 = vmatprep.subr.mxu0 0.0
  %2583 = vmatpush1.msra.mxu0 0.0
  %2584 = vmatprep.subr.mxu0 0.0
  %2585 = vmatpush1.msra.mxu0 0.0
  %2586 = vmatprep.subr.mxu0 0.0
  %2587 = vmatpush1.msra.mxu0 0.0
  %2588 = vmatprep.subr.mxu0 0.0
  %2589 = vmatpush1.msra.mxu0 0.0
  %2590 = vmatprep.subr.mxu0 0.0
  %2591 = vmatpush1.msra.mxu0 0.0
  %2592 = vmatprep.subr.mxu0 0.0
  %2593 = vmatpush1.msra.mxu0 0.0
  %2594 = vmatprep.subr.mxu0 0.0
  %2595 = vmatpush1.msra.mxu0 0.0
  %2596 = vmatprep.subr.mxu0 0.0
  %2597 = vmatpush1.msra.mxu0 0.0
  %2598 = vmatprep.mubr.f32.mxu0 0.0
  %2599 = vmatmul.mubr.f32.gmra.mrb[0].mxu0 %v2435
  %v2600 = vpop.f32.mrb[0].mxu0
  %v2601 = vadd.f32 %v2431, %v2600
  %v2602 = vpop.f32.mrb[0].mxu0
  %v2603 = vadd.f32 %v2431, %v2602
  %2604 = vdwg.mxu0
  %v2605 = vmax.f32 %v2601, 0.0
  %v2606 = vmax.f32 %v2603, 0.0
  %v2607 = vld [vmem:[%s5 + $0x408] sm:$0xff]
  %v2608 = vld [vmem:[%s5 + $0x410] sm:$0xff]
  %v2609 = vld [vmem:[%s5 + $0x418] sm:$0xff]
  %v2610 = vld [vmem:[%s5 + $0x420] sm:$0xff]
  %v2611 = vld [vmem:[%s5 + $0x428] sm:$0x1]
  %2612 = vset.pattern.permute.xlu0 16
  %2613 = vperm.xlu0 %2612, %v28
  %v2614 = vpop.permute.xlu0 %2613
  %v2616 = vlaneseq
  %v2617 = vshrl.u32 %v2616, 7
  %v2618 = vsub.s32 0, %v2617
  %v2619 = vrot.slane %v2611, %v2618
  %v2620 = vmul.f32 %v2614, %v2619
  %vm2621 = vcmask 261120
  %v2623 = vsel %vm2621, %v2413, 0
  %2625 = vmatprep.subr.mxu0 0.0
  %2626 = vmatpush1.msra.mxu0 %v2607
  %2627 = vmatprep.subr.mxu0 0.0
  %2628 = vmatpush1.msra.mxu0 %v2608
  %2629 = vmatprep.subr.mxu0 0.0
  %2630 = vmatpush1.msra.mxu0 %v2609
  %2631 = vmatprep.subr.mxu0 0.0
  %2632 = vmatpush1.msra.mxu0 %v2610
  %2633 = vmatprep.subr.mxu0 0.0
  %2634 = vmatpush1.msra.mxu0 0.0
  %2635 = vmatprep.subr.mxu0 0.0
  %2636 = vmatpush1.msra.mxu0 0.0
  %2637 = vmatprep.subr.mxu0 0.0
  %2638 = vmatpush1.msra.mxu0 0.0
  %2639 = vmatprep.subr.mxu0 0.0
  %2640 = vmatpush1.msra.mxu0 0.0
  %2641 = vmatprep.subr.mxu0 0.0
  %2642 = vmatpush1.msra.mxu0 0.0
  %2643 = vmatprep.subr.mxu0 0.0
  %2644 = vmatpush1.msra.mxu0 0.0
  %2645 = vmatprep.subr.mxu0 0.0
  %2646 = vmatpush1.msra.mxu0 0.0
  %2647 = vmatprep.subr.mxu0 0.0
  %2648 = vmatpush1.msra.mxu0 0.0
  %2649 = vmatprep.subr.mxu0 0.0
  %2650 = vmatpush1.msra.mxu0 0.0
  %2651 = vmatprep.subr.mxu0 0.0
  %2652 = vmatpush1.msra.mxu0 0.0
  %2653 = vmatprep.subr.mxu0 0.0
  %2654 = vmatpush1.msra.mxu0 0.0
  %2655 = vmatprep.subr.mxu0 0.0
  %2656 = vmatpush1.msra.mxu0 0.0
  %2657 = vmatprep.subr.mxu0 0.0
  %2658 = vmatpush1.msra.mxu0 0.0
  %2659 = vmatprep.subr.mxu0 0.0
  %2660 = vmatpush1.msra.mxu0 0.0
  %2661 = vmatprep.subr.mxu0 0.0
  %2662 = vmatpush1.msra.mxu0 0.0
  %2663 = vmatprep.subr.mxu0 0.0
  %2664 = vmatpush1.msra.mxu0 0.0
  %2665 = vmatprep.subr.mxu0 0.0
  %2666 = vmatpush1.msra.mxu0 0.0
  %2667 = vmatprep.subr.mxu0 0.0
  %2668 = vmatpush1.msra.mxu0 0.0
  %2669 = vmatprep.subr.mxu0 0.0
  %2670 = vmatpush1.msra.mxu0 0.0
  %2671 = vmatprep.subr.mxu0 0.0
  %2672 = vmatpush1.msra.mxu0 0.0
  %2673 = vmatprep.subr.mxu0 0.0
  %2674 = vmatpush1.msra.mxu0 0.0
  %2675 = vmatprep.subr.mxu0 0.0
  %2676 = vmatpush1.msra.mxu0 0.0
  %2677 = vmatprep.subr.mxu0 0.0
  %2678 = vmatpush1.msra.mxu0 0.0
  %2679 = vmatprep.subr.mxu0 0.0
  %2680 = vmatpush1.msra.mxu0 0.0
  %2681 = vmatprep.subr.mxu0 0.0
  %2682 = vmatpush1.msra.mxu0 0.0
  %2683 = vmatprep.subr.mxu0 0.0
  %2684 = vmatpush1.msra.mxu0 0.0
  %2685 = vmatprep.subr.mxu0 0.0
  %2686 = vmatpush1.msra.mxu0 0.0
  %2687 = vmatprep.subr.mxu0 0.0
  %2688 = vmatpush1.msra.mxu0 0.0
  %2689 = vmatprep.mubr.f32.mxu0 0.0
  %2690 = vmatmul.mubr.f32.gmra.mrb[0].mxu0 %v2623
  %v2691 = vpop.f32.mrb[0].mxu0
  %v2692 = vadd.f32 %v2620, %v2691
  %v2693 = vpop.f32.mrb[0].mxu0
  %2694 = vdwg.mxu0
  %v2695 = vld [vmem:[%s5 + $0x429] sm:$0x1]
  %2696 = vset.pattern.permute.xlu0 17
  %2697 = vperm.xlu0 %2696, %v28
  %v2698 = vpop.permute.xlu0 %2697
  %v2700 = vlaneseq
  %v2701 = vshrl.u32 %v2700, 7
  %v2702 = vsub.s32 0, %v2701
  %v2703 = vrot.slane %v2695, %v2702
  %v2704 = vmul.f32 %v2698, %v2703
  %v2705 = vadd.f32 %v2692, %v2704
  %v2707 = vrot.slane %v2705, 7
  %2708 = vrot.lane.b32.xlu0 %v2707, 120
  %v2709 = vpop.permute.xlu0 %2708
  %v2711 = vrot.slane %v2705, 6
  %2712 = vrot.lane.b32.xlu0 %v2711, 112
  %v2713 = vpop.permute.xlu0 %2712
  %v2715 = vrot.slane %v2705, 5
  %2716 = vrot.lane.b32.xlu0 %v2715, 104
  %v2717 = vpop.permute.xlu0 %2716
  %vm2719 = vcmask 1040384
  %v2720 = vsel %vm2719, %v2705, %v2709
  %vm2721 = vcmask 1041408
  %v2722 = vsel %vm2721, %v2720, %v2713
  %vm2723 = vcmask 1042432
  %v2724 = vsel %vm2723, %v2722, %v2717
  %vm2725 = vcmask 64512
  %v2727 = vsel %vm2725, %v2724, 0
  %2729 = vmatprep.subr.mxu0 %v2516
  %2730 = vmatpush1.msra.mxu0 %v2515
  %2731 = vmatprep.subr.mxu0 0.0
  %2732 = vmatpush1.msra.mxu0 0.0
  %2733 = vmatprep.subr.mxu0 0.0
  %2734 = vmatpush1.msra.mxu0 0.0
  %2735 = vmatprep.subr.mxu0 0.0
  %2736 = vmatpush1.msra.mxu0 0.0
  %2737 = vmatprep.subr.mxu0 0.0
  %2738 = vmatpush1.msra.mxu0 0.0
  %2739 = vmatprep.subr.mxu0 0.0
  %2740 = vmatpush1.msra.mxu0 0.0
  %2741 = vmatprep.subr.mxu0 0.0
  %2742 = vmatpush1.msra.mxu0 0.0
  %2743 = vmatprep.subr.mxu0 0.0
  %2744 = vmatpush1.msra.mxu0 0.0
  %2745 = vmatprep.subr.mxu0 0.0
  %2746 = vmatpush1.msra.mxu0 0.0
  %2747 = vmatprep.subr.mxu0 0.0
  %2748 = vmatpush1.msra.mxu0 0.0
  %2749 = vmatprep.subr.mxu0 0.0
  %2750 = vmatpush1.msra.mxu0 0.0
  %2751 = vmatprep.subr.mxu0 0.0
  %2752 = vmatpush1.msra.mxu0 0.0
  %2753 = vmatprep.subr.mxu0 0.0
  %2754 = vmatpush1.msra.mxu0 0.0
  %2755 = vmatprep.subr.mxu0 0.0
  %2756 = vmatpush1.msra.mxu0 0.0
  %2757 = vmatprep.subr.mxu0 0.0
  %2758 = vmatpush1.msra.mxu0 0.0
  %2759 = vmatprep.subr.mxu0 0.0
  %2760 = vmatpush1.msra.mxu0 0.0
  %2761 = vmatprep.subr.mxu0 0.0
  %2762 = vmatpush1.msra.mxu0 0.0
  %2763 = vmatprep.subr.mxu0 0.0
  %2764 = vmatpush1.msra.mxu0 0.0
  %2765 = vmatprep.subr.mxu0 0.0
  %2766 = vmatpush1.msra.mxu0 0.0
  %2767 = vmatprep.subr.mxu0 0.0
  %2768 = vmatpush1.msra.mxu0 0.0
  %2769 = vmatprep.subr.mxu0 0.0
  %2770 = vmatpush1.msra.mxu0 0.0
  %2771 = vmatprep.subr.mxu0 0.0
  %2772 = vmatpush1.msra.mxu0 0.0
  %2773 = vmatprep.subr.mxu0 0.0
  %2774 = vmatpush1.msra.mxu0 0.0
  %2775 = vmatprep.subr.mxu0 0.0
  %2776 = vmatpush1.msra.mxu0 0.0
  %2777 = vmatprep.subr.mxu0 0.0
  %2778 = vmatpush1.msra.mxu0 0.0
  %2779 = vmatprep.subr.mxu0 0.0
  %2780 = vmatpush1.msra.mxu0 0.0
  %2781 = vmatprep.subr.mxu0 0.0
  %2782 = vmatpush1.msra.mxu0 0.0
  %2783 = vmatprep.subr.mxu0 0.0
  %2784 = vmatpush1.msra.mxu0 0.0
  %2785 = vmatprep.subr.mxu0 0.0
  %2786 = vmatpush1.msra.mxu0 0.0
  %2787 = vmatprep.subr.mxu0 0.0
  %2788 = vmatpush1.msra.mxu0 0.0
  %2789 = vmatprep.subr.mxu0 0.0
  %2790 = vmatpush1.msra.mxu0 0.0
  %2791 = vmatprep.subr.mxu0 0.0
  %2792 = vmatpush1.msra.mxu0 0.0
  %2793 = vmatprep.mubr.f32.mxu0 0.0
  %2794 = vmatmul.mubr.f32.gmra.mrb[0].mxu0 %v2727
  %v2795 = vpop.f32.mrb[0].mxu0
  %v2796 = vadd.f32 0.0, %v2795
  %v2797 = vpop.f32.mrb[0].mxu0
  %v2798 = vadd.f32 0.0, %v2797
  %2799 = vdwg.mxu0
  %v2800 = vrot.slane %v2705, 1
  %2802 = vrot.lane.b32.xlu0 %v2705, 120
  %v2803 = vpop.permute.xlu0 %2802
  %2805 = vrot.lane.b32.xlu0 %v2707, 112
  %v2806 = vpop.permute.xlu0 %2805
  %2808 = vrot.lane.b32.xlu0 %v2711, 104
  %v2809 = vpop.permute.xlu0 %2808
  %v2811 = vsel %vm2719, %v2800, %v2803
  %v2812 = vsel %vm2721, %v2811, %v2806
  %v2813 = vsel %vm2723, %v2812, %v2809
  %v2815 = vsel %vm2725, %v2813, 0
  %2817 = vmatprep.subr.mxu0 %v2606
  %2818 = vmatpush1.msra.mxu0 %v2605
  %2819 = vmatprep.subr.mxu0 0.0
  %2820 = vmatpush1.msra.mxu0 0.0
  %2821 = vmatprep.subr.mxu0 0.0
  %2822 = vmatpush1.msra.mxu0 0.0
  %2823 = vmatprep.subr.mxu0 0.0
  %2824 = vmatpush1.msra.mxu0 0.0
  %2825 = vmatprep.subr.mxu0 0.0
  %2826 = vmatpush1.msra.mxu0 0.0
  %2827 = vmatprep.subr.mxu0 0.0
  %2828 = vmatpush1.msra.mxu0 0.0
  %2829 = vmatprep.subr.mxu0 0.0
  %2830 = vmatpush1.msra.mxu0 0.0
  %2831 = vmatprep.subr.mxu0 0.0
  %2832 = vmatpush1.msra.mxu0 0.0
  %2833 = vmatprep.subr.mxu0 0.0
  %2834 = vmatpush1.msra.mxu0 0.0
  %2835 = vmatprep.subr.mxu0 0.0
  %2836 = vmatpush1.msra.mxu0 0.0
  %2837 = vmatprep.subr.mxu0 0.0
  %2838 = vmatpush1.msra.mxu0 0.0
  %2839 = vmatprep.subr.mxu0 0.0
  %2840 = vmatpush1.msra.mxu0 0.0
  %2841 = vmatprep.subr.mxu0 0.0
  %2842 = vmatpush1.msra.mxu0 0.0
  %2843 = vmatprep.subr.mxu0 0.0
  %2844 = vmatpush1.msra.mxu0 0.0
  %2845 = vmatprep.subr.mxu0 0.0
  %2846 = vmatpush1.msra.mxu0 0.0
  %2847 = vmatprep.subr.mxu0 0.0
  %2848 = vmatpush1.msra.mxu0 0.0
  %2849 = vmatprep.subr.mxu0 0.0
  %2850 = vmatpush1.msra.mxu0 0.0
  %2851 = vmatprep.subr.mxu0 0.0
  %2852 = vmatpush1.msra.mxu0 0.0
  %2853 = vmatprep.subr.mxu0 0.0
  %2854 = vmatpush1.msra.mxu0 0.0
  %2855 = vmatprep.subr.mxu0 0.0
  %2856 = vmatpush1.msra.mxu0 0.0
  %2857 = vmatprep.subr.mxu0 0.0
  %2858 = vmatpush1.msra.mxu0 0.0
  %2859 = vmatprep.subr.mxu0 0.0
  %2860 = vmatpush1.msra.mxu0 0.0
  %2861 = vmatprep.subr.mxu0 0.0
  %2862 = vmatpush1.msra.mxu0 0.0
  %2863 = vmatprep.subr.mxu0 0.0
  %2864 = vmatpush1.msra.mxu0 0.0
  %2865 = vmatprep.subr.mxu0 0.0
  %2866 = vmatpush1.msra.mxu0 0.0
  %2867 = vmatprep.subr.mxu0 0.0
  %2868 = vmatpush1.msra.mxu0 0.0
  %2869 = vmatprep.subr.mxu0 0.0
  %2870 = vmatpush1.msra.mxu0 0.0
  %2871 = vmatprep.subr.mxu0 0.0
  %2872 = vmatpush1.msra.mxu0 0.0
  %2873 = vmatprep.subr.mxu0 0.0
  %2874 = vmatpush1.msra.mxu0 0.0
  %2875 = vmatprep.subr.mxu0 0.0
  %2876 = vmatpush1.msra.mxu0 0.0
  %2877 = vmatprep.subr.mxu0 0.0
  %2878 = vmatpush1.msra.mxu0 0.0
  %2879 = vmatprep.subr.mxu0 0.0
  %2880 = vmatpush1.msra.mxu0 0.0
  %2881 = vmatprep.mubr.f32.mxu0 0.0
  %2882 = vmatmul.mubr.f32.gmra.mrb[0].mxu0 %v2815
  %v2883 = vpop.f32.mrb[0].mxu0
  %v2884 = vadd.f32 0.0, %v2883
  %v2885 = vpop.f32.mrb[0].mxu0
  %v2886 = vadd.f32 0.0, %v2885
  %2887 = vdwg.mxu0
  %v2888 = vlaneseq
  %v2889 = vand.u32 %v2888, 127
  %v2890 = vadd.s32 %v2889, 128
  %vm2891 = vcmp.lt.s32.totalorder %v2889, 196
  %vm2892 = vcmp.lt.s32.totalorder %v2890, 196
  %v2893 = vsel %vm2891, %v2796, -1e+30
  %v2894 = vsel %vm2892, %v2798, -1e+30
  %v2895 = vsel %vm2891, %v2884, -1e+30
  %v2896 = vsel %vm2892, %v2886, -1e+30
  %v2897 = vsel %vm2437, %v2893, -inf
  %v2898 = vsel %vm2437, %v2894, -inf
  %v2899 = vmax.f32 %v2897, %v2898
  %2900 = vmax.xlane.f32.xlu0 %v2899
  %v2901 = vpop.xlane.xlu0 %2900
  %v2902 = vsel %vm2437, %v2895, -inf
  %v2903 = vsel %vm2437, %v2896, -inf
  %v2904 = vmax.f32 %v2902, %v2903
  %2905 = vmax.xlane.f32.xlu0 %v2904
  %v2906 = vpop.xlane.xlu0 %2905
  %v2907 = vsub.f32 %v2893, %v2901
  %v2908 = vsub.f32 %v2894, %v2901
  %v2909 = vsub.f32 %v2895, %v2906
  %v2910 = vsub.f32 %v2896, %v2906
  %v2911 = vmul.f32 %v2907, 1.442695
  %v2912 = vpow.pop %v2911
  %v2913 = vmul.f32 %v2908, 1.442695
  %v2914 = vpow.pop %v2913
  %v2915 = vmul.f32 %v2909, 1.442695
  %v2916 = vpow.pop %v2915
  %v2917 = vmul.f32 %v2910, 1.442695
  %v2918 = vpow.pop %v2917
  %v2919 = vsel %vm2437, %v2912, 0.0
  %v2920 = vsel %vm2437, %v2914, 0.0
  %v2921 = vadd.f32 %v2919, %v2920
  %2922 = vadd.xlane.f32.xlu0 %v2921
  %v2923 = vpop.xlane.xlu0 %2922
  %v2924 = vsel %vm2437, %v2916, 0.0
  %v2925 = vsel %vm2437, %v2918, 0.0
  %v2926 = vadd.f32 %v2924, %v2925
  %2927 = vadd.xlane.f32.xlu0 %v2926
  %v2928 = vpop.xlane.xlu0 %2927
  %v2929 = vrcp.pop %v2923
  %v2930 = vmul.f32 %v2912, %v2929
  %v2931 = vmul.f32 %v2914, %v2929
  %v2932 = vrcp.pop %v2928
  %v2933 = vmul.f32 %v2916, %v2932
  %v2934 = vmul.f32 %v2918, %v2932
  %v2939 = vcombine.low %v2930, %v2931
  %v2940 = vcombine.low %v2933, %v2934
  %2943 = vst [vmem:[%s7] sm:$0xff] %v2939
  %2944 = vst [vmem:[%s7 + $0x8] sm:$0xff] %v2940
  %2945 = vmatprep.subr.mxu0 %v2516
  %2946 = vmatpush1.xpose.msra.mxu0 %v2515
  %2947 = vmatprep.subr.mxu0 0.0
  %2948 = vmatpush1.xpose.msra.mxu0 0.0
  %2949 = vmatprep.subr.mxu0 0.0
  %2950 = vmatpush1.xpose.msra.mxu0 0.0
  %2951 = vmatprep.subr.mxu0 0.0
  %2952 = vmatpush1.xpose.msra.mxu0 0.0
  %2953 = vmatprep.subr.mxu0 0.0
  %2954 = vmatpush1.xpose.msra.mxu0 0.0
  %2955 = vmatprep.subr.mxu0 0.0
  %2956 = vmatpush1.xpose.msra.mxu0 0.0
  %2957 = vmatprep.subr.mxu0 0.0
  %2958 = vmatpush1.xpose.msra.mxu0 0.0
  %2959 = vmatprep.subr.mxu0 0.0
  %2960 = vmatpush1.xpose.msra.mxu0 0.0
  %2961 = vmatprep.subr.mxu0 0.0
  %2962 = vmatpush1.xpose.msra.mxu0 0.0
  %2963 = vmatprep.subr.mxu0 0.0
  %2964 = vmatpush1.xpose.msra.mxu0 0.0
  %2965 = vmatprep.subr.mxu0 0.0
  %2966 = vmatpush1.xpose.msra.mxu0 0.0
  %2967 = vmatprep.subr.mxu0 0.0
  %2968 = vmatpush1.xpose.msra.mxu0 0.0
  %2969 = vmatprep.subr.mxu0 0.0
  %2970 = vmatpush1.xpose.msra.mxu0 0.0
  %2971 = vmatprep.subr.mxu0 0.0
  %2972 = vmatpush1.xpose.msra.mxu0 0.0
  %2973 = vmatprep.subr.mxu0 0.0
  %2974 = vmatpush1.xpose.msra.mxu0 0.0
  %2975 = vmatprep.subr.mxu0 0.0
  %2976 = vmatpush1.xpose.msra.mxu0 0.0
  %2977 = vmatprep.subr.mxu0 0.0
  %2978 = vmatpush1.xpose.msra.mxu0 0.0
  %2979 = vmatprep.subr.mxu0 0.0
  %2980 = vmatpush1.xpose.msra.mxu0 0.0
  %2981 = vmatprep.subr.mxu0 0.0
  %2982 = vmatpush1.xpose.msra.mxu0 0.0
  %2983 = vmatprep.subr.mxu0 0.0
  %2984 = vmatpush1.xpose.msra.mxu0 0.0
  %2985 = vmatprep.subr.mxu0 0.0
  %2986 = vmatpush1.xpose.msra.mxu0 0.0
  %2987 = vmatprep.subr.mxu0 0.0
  %2988 = vmatpush1.xpose.msra.mxu0 0.0
  %2989 = vmatprep.subr.mxu0 0.0
  %2990 = vmatpush1.xpose.msra.mxu0 0.0
  %2991 = vmatprep.subr.mxu0 0.0
  %2992 = vmatpush1.xpose.msra.mxu0 0.0
  %2993 = vmatprep.subr.mxu0 0.0
  %2994 = vmatpush1.xpose.msra.mxu0 0.0
  %2995 = vmatprep.subr.mxu0 0.0
  %2996 = vmatpush1.xpose.msra.mxu0 0.0
  %2997 = vmatprep.subr.mxu0 0.0
  %2998 = vmatpush1.xpose.msra.mxu0 0.0
  %2999 = vmatprep.subr.mxu0 0.0
  %3000 = vmatpush1.xpose.msra.mxu0 0.0
  %3001 = vmatprep.subr.mxu0 0.0
  %3002 = vmatpush1.xpose.msra.mxu0 0.0
  %3003 = vmatprep.subr.mxu0 0.0
  %3004 = vmatpush1.xpose.msra.mxu0 0.0
  %3005 = vmatprep.subr.mxu0 0.0
  %3006 = vmatpush1.xpose.msra.mxu0 0.0
  %3007 = vmatprep.subr.mxu0 0.0
  %3008 = vmatpush1.xpose.msra.mxu0 0.0
  %3009 = vmatprep.mubr.f32.mxu0 %v2931
  %3010 = vmatmul.mubr.f32.gmra.mrb[0].mxu0 %v2930
  %v3011 = vpop.f32.mrb[0].mxu0
  %v3012 = vadd.f32 0.0, %v3011
  %v3013 = vpop.f32.mrb[0].mxu0
  %3014 = vdwg.mxu0
  %3015 = vmatprep.subr.mxu0 %v2606
  %3016 = vmatpush1.xpose.msra.mxu0 %v2605
  %3017 = vmatprep.subr.mxu0 0.0
  %3018 = vmatpush1.xpose.msra.mxu0 0.0
  %3019 = vmatprep.subr.mxu0 0.0
  %3020 = vmatpush1.xpose.msra.mxu0 0.0
  %3021 = vmatprep.subr.mxu0 0.0
  %3022 = vmatpush1.xpose.msra.mxu0 0.0
  %3023 = vmatprep.subr.mxu0 0.0
  %3024 = vmatpush1.xpose.msra.mxu0 0.0
  %3025 = vmatprep.subr.mxu0 0.0
  %3026 = vmatpush1.xpose.msra.mxu0 0.0
  %3027 = vmatprep.subr.mxu0 0.0
  %3028 = vmatpush1.xpose.msra.mxu0 0.0
  %3029 = vmatprep.subr.mxu0 0.0
  %3030 = vmatpush1.xpose.msra.mxu0 0.0
  %3031 = vmatprep.subr.mxu0 0.0
  %3032 = vmatpush1.xpose.msra.mxu0 0.0
  %3033 = vmatprep.subr.mxu0 0.0
  %3034 = vmatpush1.xpose.msra.mxu0 0.0
  %3035 = vmatprep.subr.mxu0 0.0
  %3036 = vmatpush1.xpose.msra.mxu0 0.0
  %3037 = vmatprep.subr.mxu0 0.0
  %3038 = vmatpush1.xpose.msra.mxu0 0.0
  %3039 = vmatprep.subr.mxu0 0.0
  %3040 = vmatpush1.xpose.msra.mxu0 0.0
  %3041 = vmatprep.subr.mxu0 0.0
  %3042 = vmatpush1.xpose.msra.mxu0 0.0
  %3043 = vmatprep.subr.mxu0 0.0
  %3044 = vmatpush1.xpose.msra.mxu0 0.0
  %3045 = vmatprep.subr.mxu0 0.0
  %3046 = vmatpush1.xpose.msra.mxu0 0.0
  %3047 = vmatprep.subr.mxu0 0.0
  %3048 = vmatpush1.xpose.msra.mxu0 0.0
  %3049 = vmatprep.subr.mxu0 0.0
  %3050 = vmatpush1.xpose.msra.mxu0 0.0
  %3051 = vmatprep.subr.mxu0 0.0
  %3052 = vmatpush1.xpose.msra.mxu0 0.0
  %3053 = vmatprep.subr.mxu0 0.0
  %3054 = vmatpush1.xpose.msra.mxu0 0.0
  %3055 = vmatprep.subr.mxu0 0.0
  %3056 = vmatpush1.xpose.msra.mxu0 0.0
  %3057 = vmatprep.subr.mxu0 0.0
  %3058 = vmatpush1.xpose.msra.mxu0 0.0
  %3059 = vmatprep.subr.mxu0 0.0
  %3060 = vmatpush1.xpose.msra.mxu0 0.0
  %3061 = vmatprep.subr.mxu0 0.0
  %3062 = vmatpush1.xpose.msra.mxu0 0.0
  %3063 = vmatprep.subr.mxu0 0.0
  %3064 = vmatpush1.xpose.msra.mxu0 0.0
  %3065 = vmatprep.subr.mxu0 0.0
  %3066 = vmatpush1.xpose.msra.mxu0 0.0
  %3067 = vmatprep.subr.mxu0 0.0
  %3068 = vmatpush1.xpose.msra.mxu0 0.0
  %3069 = vmatprep.subr.mxu0 0.0
  %3070 = vmatpush1.xpose.msra.mxu0 0.0
  %3071 = vmatprep.subr.mxu0 0.0
  %3072 = vmatpush1.xpose.msra.mxu0 0.0
  %3073 = vmatprep.subr.mxu0 0.0
  %3074 = vmatpush1.xpose.msra.mxu0 0.0
  %3075 = vmatprep.subr.mxu0 0.0
  %3076 = vmatpush1.xpose.msra.mxu0 0.0
  %3077 = vmatprep.subr.mxu0 0.0
  %3078 = vmatpush1.xpose.msra.mxu0 0.0
  %3079 = vmatprep.mubr.f32.mxu0 %v2934
  %3080 = vmatmul.mubr.f32.gmra.mrb[0].mxu0 %v2933
  %v3081 = vpop.f32.mrb[0].mxu0
  %v3082 = vadd.f32 0.0, %v3081
  %v3083 = vpop.f32.mrb[0].mxu0
  %3084 = vdwg.mxu0
  %v3085 = vld [vmem:[%s5 + $0x458] sm:$0xff]
  %v3086 = vld [vmem:[%s5 + $0x430] sm:$0xff]
  %v3087 = vld [vmem:[%s5 + $0x438] sm:$0xff]
  %v3088 = vld [vmem:[%s5 + $0x440] sm:$0xff]
  %v3089 = vld [vmem:[%s5 + $0x448] sm:$0xff]
  %3090 = vmatprep.subr.mxu0 0.0
  %3091 = vmatpush1.msra.mxu0 %v3086
  %3092 = vmatprep.subr.mxu0 0.0
  %3093 = vmatpush1.msra.mxu0 %v3087
  %3094 = vmatprep.subr.mxu0 0.0
  %3095 = vmatpush1.msra.mxu0 %v3088
  %3096 = vmatprep.subr.mxu0 0.0
  %3097 = vmatpush1.msra.mxu0 %v3089
  %3098 = vmatprep.subr.mxu0 0.0
  %3099 = vmatpush1.msra.mxu0 0.0
  %3100 = vmatprep.subr.mxu0 0.0
  %3101 = vmatpush1.msra.mxu0 0.0
  %3102 = vmatprep.subr.mxu0 0.0
  %3103 = vmatpush1.msra.mxu0 0.0
  %3104 = vmatprep.subr.mxu0 0.0
  %3105 = vmatpush1.msra.mxu0 0.0
  %3106 = vmatprep.subr.mxu0 0.0
  %3107 = vmatpush1.msra.mxu0 0.0
  %3108 = vmatprep.subr.mxu0 0.0
  %3109 = vmatpush1.msra.mxu0 0.0
  %3110 = vmatprep.subr.mxu0 0.0
  %3111 = vmatpush1.msra.mxu0 0.0
  %3112 = vmatprep.subr.mxu0 0.0
  %3113 = vmatpush1.msra.mxu0 0.0
  %3114 = vmatprep.subr.mxu0 0.0
  %3115 = vmatpush1.msra.mxu0 0.0
  %3116 = vmatprep.subr.mxu0 0.0
  %3117 = vmatpush1.msra.mxu0 0.0
  %3118 = vmatprep.subr.mxu0 0.0
  %3119 = vmatpush1.msra.mxu0 0.0
  %3120 = vmatprep.subr.mxu0 0.0
  %3121 = vmatpush1.msra.mxu0 0.0
  %3122 = vmatprep.subr.mxu0 0.0
  %3123 = vmatpush1.msra.mxu0 0.0
  %3124 = vmatprep.subr.mxu0 0.0
  %3125 = vmatpush1.msra.mxu0 0.0
  %3126 = vmatprep.subr.mxu0 0.0
  %3127 = vmatpush1.msra.mxu0 0.0
  %3128 = vmatprep.subr.mxu0 0.0
  %3129 = vmatpush1.msra.mxu0 0.0
  %3130 = vmatprep.subr.mxu0 0.0
  %3131 = vmatpush1.msra.mxu0 0.0
  %3132 = vmatprep.subr.mxu0 0.0
  %3133 = vmatpush1.msra.mxu0 0.0
  %3134 = vmatprep.subr.mxu0 0.0
  %3135 = vmatpush1.msra.mxu0 0.0
  %3136 = vmatprep.subr.mxu0 0.0
  %3137 = vmatpush1.msra.mxu0 0.0
  %3138 = vmatprep.subr.mxu0 0.0
  %3139 = vmatpush1.msra.mxu0 0.0
  %3140 = vmatprep.subr.mxu0 0.0
  %3141 = vmatpush1.msra.mxu0 0.0
  %3142 = vmatprep.subr.mxu0 0.0
  %3143 = vmatpush1.msra.mxu0 0.0
  %3144 = vmatprep.subr.mxu0 0.0
  %3145 = vmatpush1.msra.mxu0 0.0
  %3146 = vmatprep.subr.mxu0 0.0
  %3147 = vmatpush1.msra.mxu0 0.0
  %3148 = vmatprep.subr.mxu0 0.0
  %3149 = vmatpush1.msra.mxu0 0.0
  %3150 = vmatprep.subr.mxu0 0.0
  %3151 = vmatpush1.msra.mxu0 0.0
  %3152 = vmatprep.subr.mxu0 0.0
  %3153 = vmatpush1.msra.mxu0 0.0
  %3154 = vmatprep.mubr.f32.mxu0 0.0
  %3155 = vmatmul.mubr.f32.gmra.mrb[0].mxu0 %v2623
  %v3156 = vpop.f32.mrb[0].mxu0
  %v3157 = vadd.f32 0.0, %v3156
  %v3158 = vpop.f32.mrb[0].mxu0
  %3159 = vdwg.mxu0
  %v3162 = vrot.slane %v3082, 7
  %vm3163 = vcmask 1041409
  %v3164 = vsel %vm3163, %v3162, %v3012
  %v3165 = vsel %vm2725, %v3164, 0
  %3167 = vmatprep.subr.mxu0 0.0
  %3168 = vmatpush1.msra.mxu0 %v3085
  %3169 = vmatprep.subr.mxu0 0.0
  %3170 = vmatpush1.msra.mxu0 0.0
  %3171 = vmatprep.subr.mxu0 0.0
  %3172 = vmatpush1.msra.mxu0 0.0
  %3173 = vmatprep.subr.mxu0 0.0
  %3174 = vmatpush1.msra.mxu0 0.0
  %3175 = vmatprep.subr.mxu0 0.0
  %3176 = vmatpush1.msra.mxu0 0.0
  %3177 = vmatprep.subr.mxu0 0.0
  %3178 = vmatpush1.msra.mxu0 0.0
  %3179 = vmatprep.subr.mxu0 0.0
  %3180 = vmatpush1.msra.mxu0 0.0
  %3181 = vmatprep.subr.mxu0 0.0
  %3182 = vmatpush1.msra.mxu0 0.0
  %3183 = vmatprep.subr.mxu0 0.0
  %3184 = vmatpush1.msra.mxu0 0.0
  %3185 = vmatprep.subr.mxu0 0.0
  %3186 = vmatpush1.msra.mxu0 0.0
  %3187 = vmatprep.subr.mxu0 0.0
  %3188 = vmatpush1.msra.mxu0 0.0
  %3189 = vmatprep.subr.mxu0 0.0
  %3190 = vmatpush1.msra.mxu0 0.0
  %3191 = vmatprep.subr.mxu0 0.0
  %3192 = vmatpush1.msra.mxu0 0.0
  %3193 = vmatprep.subr.mxu0 0.0
  %3194 = vmatpush1.msra.mxu0 0.0
  %3195 = vmatprep.subr.mxu0 0.0
  %3196 = vmatpush1.msra.mxu0 0.0
  %3197 = vmatprep.subr.mxu0 0.0
  %3198 = vmatpush1.msra.mxu0 0.0
  %3199 = vmatprep.subr.mxu0 0.0
  %3200 = vmatpush1.msra.mxu0 0.0
  %3201 = vmatprep.subr.mxu0 0.0
  %3202 = vmatpush1.msra.mxu0 0.0
  %3203 = vmatprep.subr.mxu0 0.0
  %3204 = vmatpush1.msra.mxu0 0.0
  %3205 = vmatprep.subr.mxu0 0.0
  %3206 = vmatpush1.msra.mxu0 0.0
  %3207 = vmatprep.subr.mxu0 0.0
  %3208 = vmatpush1.msra.mxu0 0.0
  %3209 = vmatprep.subr.mxu0 0.0
  %3210 = vmatpush1.msra.mxu0 0.0
  %3211 = vmatprep.subr.mxu0 0.0
  %3212 = vmatpush1.msra.mxu0 0.0
  %3213 = vmatprep.subr.mxu0 0.0
  %3214 = vmatpush1.msra.mxu0 0.0
  %3215 = vmatprep.subr.mxu0 0.0
  %3216 = vmatpush1.msra.mxu0 0.0
  %3217 = vmatprep.subr.mxu0 0.0
  %3218 = vmatpush1.msra.mxu0 0.0
  %3219 = vmatprep.subr.mxu0 0.0
  %3220 = vmatpush1.msra.mxu0 0.0
  %3221 = vmatprep.subr.mxu0 0.0
  %3222 = vmatpush1.msra.mxu0 0.0
  %3223 = vmatprep.subr.mxu0 0.0
  %3224 = vmatpush1.msra.mxu0 0.0
  %3225 = vmatprep.subr.mxu0 0.0
  %3226 = vmatpush1.msra.mxu0 0.0
  %3227 = vmatprep.subr.mxu0 0.0
  %3228 = vmatpush1.msra.mxu0 0.0
  %3229 = vmatprep.subr.mxu0 0.0
  %3230 = vmatpush1.msra.mxu0 0.0
  %3231 = vmatprep.mubr.f32.mxu0 0.0
  %3232 = vmatmul.mubr.f32.gmra.mrb[0].mxu0 %v3165
  %v3233 = vpop.f32.mrb[0].mxu0
  %v3234 = vadd.f32 %v3157, %v3233
  %v3235 = vpop.f32.mrb[0].mxu0
  %3236 = vdwg.mxu0
  %v3237 = vld [vmem:[%s5 + $0x450] sm:$0x1]
  %v3238 = vlaneseq
  %v3239 = vshrl.u32 %v3238, 7
  %v3240 = vsub.s32 0, %v3239
  %v3241 = vrot.slane %v3237, %v3240
  %v3242 = vmul.f32 %v2614, %v3241
  %v3243 = vadd.f32 %v3234, %v3242
  %v3244 = vld [vmem:[%s5 + $0x451] sm:$0x1]
  %v3245 = vlaneseq
  %v3246 = vshrl.u32 %v3245, 7
  %v3247 = vsub.s32 0, %v3246
  %v3248 = vrot.slane %v3244, %v3247
  %v3249 = vmul.f32 %v2698, %v3248
  %v3250 = vadd.f32 %v3243, %v3249
  %v3251 = vld [vmem:[%s5 + $0x460] sm:$0x1]
  %v3252 = vlaneseq
  %v3253 = vshrl.u32 %v3252, 7
  %v3254 = vsub.s32 0, %v3253
  %v3255 = vrot.slane %v3251, %v3254
  %v3256 = vadd.f32 %v3250, %v3255
  %v3257 = vtanh.pop %v3256
  %vm3258 = vcmask 254976
  %3259 = vst.msk [vmem:[%s6 + $0x4] sm:$0x3] %vm3258, %v3257
  %v3261 = vunpack.c.l.s4 1983009808
  %v3262 = vunpack.c.0.s8 %v3261
  %v3263 = vlaneseq
  %v3264 = vshrl.u32 %v3263, 7
  %v3265 = vsub.s32 %v3262, %v3264
  %v3266 = vrot.slane %v3012, %v3265
  %v3268 = vunpack.c.l.s4 1983009808
  %v3269 = vunpack.c.0.s8 %v3268
  %v3270 = vlaneseq
  %v3271 = vshrl.u32 %v3270, 7
  %v3272 = vsub.s32 %v3269, %v3271
  %v3273 = vrot.slane %v3082, %v3272
  %vm3274 = vcmask 1044484
  %v3275 = vsel %vm3274, %v3266, %v3266
  %vm3276 = vcmask 1046534
  %v3277 = vsel %vm3276, %v3266, %v3275
  %v3278 = vrot.slane %v3273, 7
  %v3279 = vsel %vm3163, %v3278, %v3277
  %vm3280 = vcmask 1043459
  %v3281 = vsel %vm3280, %v3278, %v3279
  %vm3282 = vcmask 1045509
  %v3283 = vsel %vm3282, %v3278, %v3281
  %vm3284 = vcmask 1047559
  %v3285 = vsel %vm3284, %v3278, %v3283
  %3286 = vrot.lane.b32.xlu0 %v3285, 32
  %v3287 = vpop.permute.xlu0 %3286
  %vm3289 = vcmask 320768
  %3290 = vst.msk [vmem:[%s6 + $0x4] sm:$0x3] %vm3289, %v3287
  %v3291 = vld [vmem:[%s5 + $0x468] sm:$0xff]
  %v3292 = vld [vmem:[%s5 + $0x470] sm:$0xff]
  %v3293 = vld [vmem:[%s5 + $0x478] sm:$0xff]
  %v3294 = vld [vmem:[%s5 + $0x480] sm:$0xff]
  %v3295 = vld [vmem:[%s5 + $0x488] sm:$0x1]
  %v3296 = vlaneseq
  %v3297 = vshrl.u32 %v3296, 7
  %v3298 = vsub.s32 0, %v3297
  %v3299 = vrot.slane %v3295, %v3298
  %v3301 = vsel %vm2621, %v3257, 0
  %3303 = vmatprep.subr.mxu0 0.0
  %3304 = vmatpush1.msra.mxu0 %v3291
  %3305 = vmatprep.subr.mxu0 0.0
  %3306 = vmatpush1.msra.mxu0 %v3292
  %3307 = vmatprep.subr.mxu0 0.0
  %3308 = vmatpush1.msra.mxu0 %v3293
  %3309 = vmatprep.subr.mxu0 0.0
  %3310 = vmatpush1.msra.mxu0 %v3294
  %3311 = vmatprep.subr.mxu0 0.0
  %3312 = vmatpush1.msra.mxu0 0.0
  %3313 = vmatprep.subr.mxu0 0.0
  %3314 = vmatpush1.msra.mxu0 0.0
  %3315 = vmatprep.subr.mxu0 0.0
  %3316 = vmatpush1.msra.mxu0 0.0
  %3317 = vmatprep.subr.mxu0 0.0
  %3318 = vmatpush1.msra.mxu0 0.0
  %3319 = vmatprep.subr.mxu0 0.0
  %3320 = vmatpush1.msra.mxu0 0.0
  %3321 = vmatprep.subr.mxu0 0.0
  %3322 = vmatpush1.msra.mxu0 0.0
  %3323 = vmatprep.subr.mxu0 0.0
  %3324 = vmatpush1.msra.mxu0 0.0
  %3325 = vmatprep.subr.mxu0 0.0
  %3326 = vmatpush1.msra.mxu0 0.0
  %3327 = vmatprep.subr.mxu0 0.0
  %3328 = vmatpush1.msra.mxu0 0.0
  %3329 = vmatprep.subr.mxu0 0.0
  %3330 = vmatpush1.msra.mxu0 0.0
  %3331 = vmatprep.subr.mxu0 0.0
  %3332 = vmatpush1.msra.mxu0 0.0
  %3333 = vmatprep.subr.mxu0 0.0
  %3334 = vmatpush1.msra.mxu0 0.0
  %3335 = vmatprep.subr.mxu0 0.0
  %3336 = vmatpush1.msra.mxu0 0.0
  %3337 = vmatprep.subr.mxu0 0.0
  %3338 = vmatpush1.msra.mxu0 0.0
  %3339 = vmatprep.subr.mxu0 0.0
  %3340 = vmatpush1.msra.mxu0 0.0
  %3341 = vmatprep.subr.mxu0 0.0
  %3342 = vmatpush1.msra.mxu0 0.0
  %3343 = vmatprep.subr.mxu0 0.0
  %3344 = vmatpush1.msra.mxu0 0.0
  %3345 = vmatprep.subr.mxu0 0.0
  %3346 = vmatpush1.msra.mxu0 0.0
  %3347 = vmatprep.subr.mxu0 0.0
  %3348 = vmatpush1.msra.mxu0 0.0
  %3349 = vmatprep.subr.mxu0 0.0
  %3350 = vmatpush1.msra.mxu0 0.0
  %3351 = vmatprep.subr.mxu0 0.0
  %3352 = vmatpush1.msra.mxu0 0.0
  %3353 = vmatprep.subr.mxu0 0.0
  %3354 = vmatpush1.msra.mxu0 0.0
  %3355 = vmatprep.subr.mxu0 0.0
  %3356 = vmatpush1.msra.mxu0 0.0
  %3357 = vmatprep.subr.mxu0 0.0
  %3358 = vmatpush1.msra.mxu0 0.0
  %3359 = vmatprep.subr.mxu0 0.0
  %3360 = vmatpush1.msra.mxu0 0.0
  %3361 = vmatprep.subr.mxu0 0.0
  %3362 = vmatpush1.msra.mxu0 0.0
  %3363 = vmatprep.subr.mxu0 0.0
  %3364 = vmatpush1.msra.mxu0 0.0
  %3365 = vmatprep.subr.mxu0 0.0
  %3366 = vmatpush1.msra.mxu0 0.0
  %3367 = vmatprep.mubr.f32.mxu0 0.0
  %3368 = vmatmul.mubr.f32.gmra.mrb[0].mxu0 %v3301
  %v3369 = vpop.f32.mrb[0].mxu0
  %v3370 = vadd.f32 %v3299, %v3369
  %v3371 = vpop.f32.mrb[0].mxu0
  %3372 = vdwg.mxu0
  %v3373 = vld [vmem:[%s4 + $0x110] sm:$0xff]
  %v3374 = vld [vmem:[%s4 + $0x118] sm:$0xff]
  %v3375 = vld [vmem:[%s4 + $0x120] sm:$0xff]
  %v3376 = vld [vmem:[%s4 + $0x128] sm:$0xff]
  %v3377 = vld [vmem:[%s4 + $0x130] sm:$0xff]
  %v3378 = vld [vmem:[%s4 + $0x138] sm:$0xff]
  %v3379 = vld [vmem:[%s4 + $0x140] sm:$0xff]
  %v3380 = vld [vmem:[%s4 + $0x148] sm:$0xff]
  %v3382 = vsel %vm2621, %v3370, 0
  %3384 = vmatprep.subr.mxu0 %v3374
  %3385 = vmatpush1.msra.mxu0 %v3373
  %3386 = vmatprep.subr.mxu0 %v3376
  %3387 = vmatpush1.msra.mxu0 %v3375
  %3388 = vmatprep.subr.mxu0 %v3378
  %3389 = vmatpush1.msra.mxu0 %v3377
  %3390 = vmatprep.subr.mxu0 %v3380
  %3391 = vmatpush1.msra.mxu0 %v3379
  %3392 = vmatprep.subr.mxu0 0.0
  %3393 = vmatpush1.msra.mxu0 0.0
  %3394 = vmatprep.subr.mxu0 0.0
  %3395 = vmatpush1.msra.mxu0 0.0
  %3396 = vmatprep.subr.mxu0 0.0
  %3397 = vmatpush1.msra.mxu0 0.0
  %3398 = vmatprep.subr.mxu0 0.0
  %3399 = vmatpush1.msra.mxu0 0.0
  %3400 = vmatprep.subr.mxu0 0.0
  %3401 = vmatpush1.msra.mxu0 0.0
  %3402 = vmatprep.subr.mxu0 0.0
  %3403 = vmatpush1.msra.mxu0 0.0
  %3404 = vmatprep.subr.mxu0 0.0
  %3405 = vmatpush1.msra.mxu0 0.0
  %3406 = vmatprep.subr.mxu0 0.0
  %3407 = vmatpush1.msra.mxu0 0.0
  %3408 = vmatprep.subr.mxu0 0.0
  %3409 = vmatpush1.msra.mxu0 0.0
  %3410 = vmatprep.subr.mxu0 0.0
  %3411 = vmatpush1.msra.mxu0 0.0
  %3412 = vmatprep.subr.mxu0 0.0
  %3413 = vmatpush1.msra.mxu0 0.0
  %3414 = vmatprep.subr.mxu0 0.0
  %3415 = vmatpush1.msra.mxu0 0.0
  %3416 = vmatprep.subr.mxu0 0.0
  %3417 = vmatpush1.msra.mxu0 0.0
  %3418 = vmatprep.subr.mxu0 0.0
  %3419 = vmatpush1.msra.mxu0 0.0
  %3420 = vmatprep.subr.mxu0 0.0
  %3421 = vmatpush1.msra.mxu0 0.0
  %3422 = vmatprep.subr.mxu0 0.0
  %3423 = vmatpush1.msra.mxu0 0.0
  %3424 = vmatprep.subr.mxu0 0.0
  %3425 = vmatpush1.msra.mxu0 0.0
  %3426 = vmatprep.subr.mxu0 0.0
  %3427 = vmatpush1.msra.mxu0 0.0
  %3428 = vmatprep.subr.mxu0 0.0
  %3429 = vmatpush1.msra.mxu0 0.0
  %3430 = vmatprep.subr.mxu0 0.0
  %3431 = vmatpush1.msra.mxu0 0.0
  %3432 = vmatprep.subr.mxu0 0.0
  %3433 = vmatpush1.msra.mxu0 0.0
  %3434 = vmatprep.subr.mxu0 0.0
  %3435 = vmatpush1.msra.mxu0 0.0
  %3436 = vmatprep.subr.mxu0 0.0
  %3437 = vmatpush1.msra.mxu0 0.0
  %3438 = vmatprep.subr.mxu0 0.0
  %3439 = vmatpush1.msra.mxu0 0.0
  %3440 = vmatprep.subr.mxu0 0.0
  %3441 = vmatpush1.msra.mxu0 0.0
  %3442 = vmatprep.subr.mxu0 0.0
  %3443 = vmatpush1.msra.mxu0 0.0
  %3444 = vmatprep.subr.mxu0 0.0
  %3445 = vmatpush1.msra.mxu0 0.0
  %3446 = vmatprep.subr.mxu0 0.0
  %3447 = vmatpush1.msra.mxu0 0.0
  %3448 = vmatprep.mubr.f32.mxu0 0.0
  %3449 = vmatmul.mubr.f32.gmra.mrb[0].mxu0 %v3382
  %v3450 = vpop.f32.mrb[0].mxu0
  %v3451 = vadd.f32 0.0, %v3450
  %v3452 = vpop.f32.mrb[0].mxu0
  %v3453 = vadd.f32 0.0, %v3452
  %3454 = vdwg.mxu0
  %v3455 = vld [vmem:[%s4] sm:$0xff]
  %v3456 = vld [vmem:[%s4 + $0x8] sm:$0xff]
  %v3457 = vld [vmem:[%s4 + $0x10] sm:$0xff]
  %v3458 = vld [vmem:[%s4 + $0x18] sm:$0xff]
  %v3459 = vld [vmem:[%s4 + $0x20] sm:$0xff]
  %v3460 = vld [vmem:[%s4 + $0x28] sm:$0xff]
  %v3461 = vld [vmem:[%s4 + $0x30] sm:$0xff]
  %v3462 = vld [vmem:[%s4 + $0x38] sm:$0xff]
  %v3463 = vld [vmem:[%s4 + $0x40] sm:$0xff]
  %v3464 = vld [vmem:[%s4 + $0x48] sm:$0xff]
  %v3465 = vld [vmem:[%s4 + $0x50] sm:$0xff]
  %v3466 = vld [vmem:[%s4 + $0x58] sm:$0xff]
  %v3467 = vld [vmem:[%s4 + $0x60] sm:$0xff]
  %v3468 = vld [vmem:[%s4 + $0x68] sm:$0xff]
  %v3469 = vld [vmem:[%s4 + $0x70] sm:$0xff]
  %v3470 = vld [vmem:[%s4 + $0x78] sm:$0xff]
  %v3471 = vld [vmem:[%s4 + $0x80] sm:$0xff]
  %v3472 = vld [vmem:[%s4 + $0x88] sm:$0xff]
  %v3473 = vld [vmem:[%s4 + $0x90] sm:$0xff]
  %v3474 = vld [vmem:[%s4 + $0x98] sm:$0xff]
  %v3475 = vld [vmem:[%s4 + $0xa0] sm:$0xff]
  %v3476 = vld [vmem:[%s4 + $0xa8] sm:$0xff]
  %v3477 = vld [vmem:[%s4 + $0xb0] sm:$0xff]
  %v3478 = vld [vmem:[%s4 + $0xb8] sm:$0xff]
  %v3479 = vld [vmem:[%s4 + $0xc0] sm:$0xff]
  %v3480 = vld [vmem:[%s4 + $0xc8] sm:$0xff]
  %v3481 = vld [vmem:[%s4 + $0xd0] sm:$0xff]
  %v3482 = vld [vmem:[%s4 + $0xd8] sm:$0xff]
  %v3483 = vld [vmem:[%s4 + $0xe0] sm:$0xff]
  %v3484 = vld [vmem:[%s4 + $0xe8] sm:$0xff]
  %v3485 = vld [vmem:[%s4 + $0xf0] sm:$0xff]
  %v3486 = vld [vmem:[%s4 + $0xf8] sm:$0xff]
  %s3487 = scalar_lea.vmem %s4, 256
  %v3488 = vld [vmem:[%s3487] ss:$8 sm:$0x3]
  %s3489 = scalar_lea.vmem %s4, 336
  %v3490 = vld [vmem:[%s3489] ss:$8 sm:$0x3]
  %v3492 = vlaneseq
  %v3493 = vshrl.u32 %v3492, 7
  %v3494 = vsub.s32 0, %v3493
  %v3495 = vrot.slane %v3488, %v3494
  %v3496 = vlaneseq
  %v3497 = vshrl.u32 %v3496, 7
  %v3498 = vsub.s32 1, %v3497
  %v3499 = vrot.slane %v3488, %v3498
  %3502 = vmatprep.subr.mxu0 %v3456
  %3503 = vmatpush1.msra.mxu0 %v3455
  %3504 = vmatprep.subr.mxu0 %v3458
  %3505 = vmatpush1.msra.mxu0 %v3457
  %3506 = vmatprep.subr.mxu0 %v3460
  %3507 = vmatpush1.msra.mxu0 %v3459
  %3508 = vmatprep.subr.mxu0 %v3462
  %3509 = vmatpush1.msra.mxu0 %v3461
  %3510 = vmatprep.subr.mxu0 %v3464
  %3511 = vmatpush1.msra.mxu0 %v3463
  %3512 = vmatprep.subr.mxu0 %v3466
  %3513 = vmatpush1.msra.mxu0 %v3465
  %3514 = vmatprep.subr.mxu0 %v3468
  %3515 = vmatpush1.msra.mxu0 %v3467
  %3516 = vmatprep.subr.mxu0 %v3470
  %3517 = vmatpush1.msra.mxu0 %v3469
  %3518 = vmatprep.subr.mxu0 %v3472
  %3519 = vmatpush1.msra.mxu0 %v3471
  %3520 = vmatprep.subr.mxu0 %v3474
  %3521 = vmatpush1.msra.mxu0 %v3473
  %3522 = vmatprep.subr.mxu0 %v3476
  %3523 = vmatpush1.msra.mxu0 %v3475
  %3524 = vmatprep.subr.mxu0 %v3478
  %3525 = vmatpush1.msra.mxu0 %v3477
  %3526 = vmatprep.subr.mxu0 %v3480
  %3527 = vmatpush1.msra.mxu0 %v3479
  %3528 = vmatprep.subr.mxu0 %v3482
  %3529 = vmatpush1.msra.mxu0 %v3481
  %3530 = vmatprep.subr.mxu0 %v3484
  %3531 = vmatpush1.msra.mxu0 %v3483
  %3532 = vmatprep.subr.mxu0 %v3486
  %3533 = vmatpush1.msra.mxu0 %v3485
  %3534 = vmatprep.subr.mxu0 0.0
  %3535 = vmatpush1.msra.mxu0 0.0
  %3536 = vmatprep.subr.mxu0 0.0
  %3537 = vmatpush1.msra.mxu0 0.0
  %3538 = vmatprep.subr.mxu0 0.0
  %3539 = vmatpush1.msra.mxu0 0.0
  %3540 = vmatprep.subr.mxu0 0.0
  %3541 = vmatpush1.msra.mxu0 0.0
  %3542 = vmatprep.subr.mxu0 0.0
  %3543 = vmatpush1.msra.mxu0 0.0
  %3544 = vmatprep.subr.mxu0 0.0
  %3545 = vmatpush1.msra.mxu0 0.0
  %3546 = vmatprep.subr.mxu0 0.0
  %3547 = vmatpush1.msra.mxu0 0.0
  %3548 = vmatprep.subr.mxu0 0.0
  %3549 = vmatpush1.msra.mxu0 0.0
  %3550 = vmatprep.subr.mxu0 0.0
  %3551 = vmatpush1.msra.mxu0 0.0
  %3552 = vmatprep.subr.mxu0 0.0
  %3553 = vmatpush1.msra.mxu0 0.0
  %3554 = vmatprep.subr.mxu0 0.0
  %3555 = vmatpush1.msra.mxu0 0.0
  %3556 = vmatprep.subr.mxu0 0.0
  %3557 = vmatpush1.msra.mxu0 0.0
  %3558 = vmatprep.subr.mxu0 0.0
  %3559 = vmatpush1.msra.mxu0 0.0
  %3560 = vmatprep.subr.mxu0 0.0
  %3561 = vmatpush1.msra.mxu0 0.0
  %3562 = vmatprep.subr.mxu0 0.0
  %3563 = vmatpush1.msra.mxu0 0.0
  %3564 = vmatprep.subr.mxu0 0.0
  %3565 = vmatpush1.msra.mxu0 0.0
  %3566 = vmatprep.mubr.f32.mxu0 0.0
  %3567 = vmatmul.mubr.f32.gmra.mrb[0].mxu0 %v2320
  %v3568 = vpop.f32.mrb[0].mxu0
  %v3569 = vadd.f32 %v3495, %v3568
  %v3570 = vpop.f32.mrb[0].mxu0
  %v3571 = vadd.f32 %v3499, %v3570
  %3572 = vdwg.mxu0
  %3573 = vmatprep.subr.mxu0 %v3456
  %3574 = vmatpush1.msra.mxu0 %v3455
  %3575 = vmatprep.subr.mxu0 %v3458
  %3576 = vmatpush1.msra.mxu0 %v3457
  %3577 = vmatprep.subr.mxu0 %v3460
  %3578 = vmatpush1.msra.mxu0 %v3459
  %3579 = vmatprep.subr.mxu0 %v3462
  %3580 = vmatpush1.msra.mxu0 %v3461
  %3581 = vmatprep.subr.mxu0 %v3464
  %3582 = vmatpush1.msra.mxu0 %v3463
  %3583 = vmatprep.subr.mxu0 %v3466
  %3584 = vmatpush1.msra.mxu0 %v3465
  %3585 = vmatprep.subr.mxu0 %v3468
  %3586 = vmatpush1.msra.mxu0 %v3467
  %3587 = vmatprep.subr.mxu0 %v3470
  %3588 = vmatpush1.msra.mxu0 %v3469
  %3589 = vmatprep.subr.mxu0 %v3472
  %3590 = vmatpush1.msra.mxu0 %v3471
  %3591 = vmatprep.subr.mxu0 %v3474
  %3592 = vmatpush1.msra.mxu0 %v3473
  %3593 = vmatprep.subr.mxu0 %v3476
  %3594 = vmatpush1.msra.mxu0 %v3475
  %3595 = vmatprep.subr.mxu0 %v3478
  %3596 = vmatpush1.msra.mxu0 %v3477
  %3597 = vmatprep.subr.mxu0 %v3480
  %3598 = vmatpush1.msra.mxu0 %v3479
  %3599 = vmatprep.subr.mxu0 %v3482
  %3600 = vmatpush1.msra.mxu0 %v3481
  %3601 = vmatprep.subr.mxu0 %v3484
  %3602 = vmatpush1.msra.mxu0 %v3483
  %3603 = vmatprep.subr.mxu0 %v3486
  %3604 = vmatpush1.msra.mxu0 %v3485
  %3605 = vmatprep.subr.mxu0 0.0
  %3606 = vmatpush1.msra.mxu0 0.0
  %3607 = vmatprep.subr.mxu0 0.0
  %3608 = vmatpush1.msra.mxu0 0.0
  %3609 = vmatprep.subr.mxu0 0.0
  %3610 = vmatpush1.msra.mxu0 0.0
  %3611 = vmatprep.subr.mxu0 0.0
  %3612 = vmatpush1.msra.mxu0 0.0
  %3613 = vmatprep.subr.mxu0 0.0
  %3614 = vmatpush1.msra.mxu0 0.0
  %3615 = vmatprep.subr.mxu0 0.0
  %3616 = vmatpush1.msra.mxu0 0.0
  %3617 = vmatprep.subr.mxu0 0.0
  %3618 = vmatpush1.msra.mxu0 0.0
  %3619 = vmatprep.subr.mxu0 0.0
  %3620 = vmatpush1.msra.mxu0 0.0
  %3621 = vmatprep.subr.mxu0 0.0
  %3622 = vmatpush1.msra.mxu0 0.0
  %3623 = vmatprep.subr.mxu0 0.0
  %3624 = vmatpush1.msra.mxu0 0.0
  %3625 = vmatprep.subr.mxu0 0.0
  %3626 = vmatpush1.msra.mxu0 0.0
  %3627 = vmatprep.subr.mxu0 0.0
  %3628 = vmatpush1.msra.mxu0 0.0
  %3629 = vmatprep.subr.mxu0 0.0
  %3630 = vmatpush1.msra.mxu0 0.0
  %3631 = vmatprep.subr.mxu0 0.0
  %3632 = vmatpush1.msra.mxu0 0.0
  %3633 = vmatprep.subr.mxu0 0.0
  %3634 = vmatpush1.msra.mxu0 0.0
  %3635 = vmatprep.subr.mxu0 0.0
  %3636 = vmatpush1.msra.mxu0 0.0
  %3637 = vmatprep.mubr.f32.mxu0 0.0
  %3638 = vmatmul.mubr.f32.gmra.mrb[0].mxu0 %v2318
  %v3639 = vpop.f32.mrb[0].mxu0
  %v3640 = vadd.f32 %v3495, %v3639
  %v3641 = vpop.f32.mrb[0].mxu0
  %v3642 = vadd.f32 %v3499, %v3641
  %3643 = vdwg.mxu0
  %v3644 = vmul.f32 %v3569, %v3451
  %v3645 = vmul.f32 %v3571, %v3453
  %v3647 = vlaneseq
  %v3648 = vshrl.u32 %v3647, 7
  %v3649 = vsub.s32 0, %v3648
  %v3650 = vrot.slane %v3490, %v3649
  %v3651 = vlaneseq
  %v3652 = vshrl.u32 %v3651, 7
  %v3653 = vsub.s32 1, %v3652
  %v3654 = vrot.slane %v3490, %v3653
  %v3657 = vadd.f32 %v3644, %v3650
  %v3658 = vadd.f32 %v3645, %v3654
  %v3659 = vmul.f32 %v3640, %v3451
  %v3660 = vmul.f32 %v3642, %v3453
  %v3661 = vadd.f32 %v3659, %v3650
  %v3662 = vadd.f32 %v3660, %v3654
  %v3663 = vld [vmem:[%s3] ss:$8 sm:$0xf]
  %v3664 = vld [vmem:[%s3] ss:$8 sm:$0xf0]
  %v3665 = vor.u32 %v3663, %v3664
  %s3666 = scalar_lea.vmem %s3, 1
  %v3667 = vld [vmem:[%s3666] ss:$8 sm:$0xf]
  %v3668 = vld [vmem:[%s3666] ss:$8 sm:$0xf0]
  %v3669 = vor.u32 %v3667, %v3668
  %s3670 = scalar_lea.vmem %s3, 64
  %v3671 = vld [vmem:[%s3670] ss:$8 sm:$0xf]
  %v3672 = vld [vmem:[%s3670] ss:$8 sm:$0xf0]
  %v3673 = vor.u32 %v3671, %v3672
  %v3674 = vld [vmem:[%s3 + $0x80] sm:$0xff]
  %v3675 = vld [vmem:[%s3 + $0x88] sm:$0xff]
  %v3676 = vld [vmem:[%s3 + $0x90] sm:$0xff]
  %v3677 = vld [vmem:[%s3 + $0x98] sm:$0xff]
  %v3678 = vld [vmem:[%s3 + $0xa0] sm:$0xff]
  %v3679 = vld [vmem:[%s3 + $0xa8] sm:$0xff]
  %v3680 = vld [vmem:[%s3 + $0xb0] sm:$0xff]
  %v3681 = vld [vmem:[%s3 + $0xb8] sm:$0xff]
  %v3682 = vld [vmem:[%s3 + $0xc0] sm:$0xff]
  %v3683 = vld [vmem:[%s3 + $0xc8] sm:$0xff]
  %v3684 = vld [vmem:[%s3 + $0xd0] sm:$0xff]
  %v3685 = vld [vmem:[%s3 + $0xd8] sm:$0xff]
  %v3686 = vld [vmem:[%s3 + $0xe0] sm:$0xff]
  %v3687 = vld [vmem:[%s3 + $0xe8] sm:$0xff]
  %v3688 = vld [vmem:[%s3 + $0xf0] sm:$0xff]
  %v3689 = vld [vmem:[%s3 + $0xf8] sm:$0xff]
  %v3690 = vld [vmem:[%s3 + $0x100] sm:$0xff]
  %v3691 = vld [vmem:[%s3 + $0x108] sm:$0xff]
  %v3692 = vld [vmem:[%s3 + $0x110] sm:$0xff]
  %v3693 = vld [vmem:[%s3 + $0x118] sm:$0xff]
  %v3694 = vld [vmem:[%s3 + $0x120] sm:$0xff]
  %v3695 = vld [vmem:[%s3 + $0x128] sm:$0xff]
  %v3696 = vld [vmem:[%s3 + $0x130] sm:$0xff]
  %v3697 = vld [vmem:[%s3 + $0x138] sm:$0xff]
  %v3698 = vld [vmem:[%s3 + $0x140] sm:$0xff]
  %v3699 = vld [vmem:[%s3 + $0x148] sm:$0xff]
  %v3700 = vld [vmem:[%s3 + $0x150] sm:$0xff]
  %v3701 = vld [vmem:[%s3 + $0x158] sm:$0xff]
  %v3702 = vld [vmem:[%s3 + $0x160] sm:$0xff]
  %v3703 = vld [vmem:[%s3 + $0x168] sm:$0xff]
  %v3704 = vld [vmem:[%s3 + $0x170] sm:$0xff]
  %v3705 = vld [vmem:[%s3 + $0x178] sm:$0xff]
  %v3706 = vld [vmem:[%s3 + $0x180] sm:$0xff]
  %v3707 = vld [vmem:[%s3 + $0x188] sm:$0xff]
  %v3708 = vld [vmem:[%s3 + $0x190] sm:$0xff]
  %v3709 = vld [vmem:[%s3 + $0x198] sm:$0xff]
  %v3710 = vld [vmem:[%s3 + $0x1a0] sm:$0xff]
  %v3711 = vld [vmem:[%s3 + $0x1a8] sm:$0xff]
  %v3712 = vld [vmem:[%s3 + $0x1b0] sm:$0xff]
  %v3713 = vld [vmem:[%s3 + $0x1b8] sm:$0xff]
  %v3714 = vld [vmem:[%s3 + $0x1c0] sm:$0xff]
  %v3715 = vld [vmem:[%s3 + $0x1c8] sm:$0xff]
  %v3716 = vld [vmem:[%s3 + $0x1d0] sm:$0xff]
  %v3717 = vld [vmem:[%s3 + $0x1d8] sm:$0xff]
  %v3718 = vld [vmem:[%s3 + $0x1e0] sm:$0xff]
  %v3719 = vld [vmem:[%s3 + $0x1e8] sm:$0xff]
  %v3720 = vld [vmem:[%s3 + $0x1f0] sm:$0xff]
  %v3721 = vld [vmem:[%s3 + $0x1f8] sm:$0xff]
  %v3722 = vld [vmem:[%s3 + $0x200] sm:$0xff]
  %v3723 = vld [vmem:[%s3 + $0x208] sm:$0xff]
  %v3724 = vld [vmem:[%s3 + $0x210] sm:$0xff]
  %v3725 = vld [vmem:[%s3 + $0x218] sm:$0xff]
  %v3726 = vld [vmem:[%s3 + $0x220] sm:$0xff]
  %v3727 = vld [vmem:[%s3 + $0x228] sm:$0xff]
  %v3728 = vld [vmem:[%s3 + $0x230] sm:$0xff]
  %v3729 = vld [vmem:[%s3 + $0x238] sm:$0xff]
  %v3730 = vld [vmem:[%s3 + $0x240] sm:$0xff]
  %v3731 = vld [vmem:[%s3 + $0x248] sm:$0xff]
  %v3732 = vld [vmem:[%s3 + $0x250] sm:$0xff]
  %v3733 = vld [vmem:[%s3 + $0x258] sm:$0xff]
  %v3734 = vld [vmem:[%s3 + $0x260] sm:$0xff]
  %v3735 = vld [vmem:[%s3 + $0x268] sm:$0xff]
  %v3736 = vld [vmem:[%s3 + $0x270] sm:$0xff]
  %v3737 = vld [vmem:[%s3 + $0x278] sm:$0xff]
  %v3738 = vld [vmem:[%s3 + $0x280] sm:$0xff]
  %v3739 = vld [vmem:[%s3 + $0x288] sm:$0xff]
  %v3740 = vld [vmem:[%s3 + $0x290] sm:$0xff]
  %v3741 = vld [vmem:[%s3 + $0x298] sm:$0xff]
  %v3742 = vld [vmem:[%s3 + $0x2a0] sm:$0xff]
  %v3743 = vld [vmem:[%s3 + $0x2a8] sm:$0xff]
  %v3744 = vld [vmem:[%s3 + $0x2b0] sm:$0xff]
  %v3745 = vld [vmem:[%s3 + $0x2b8] sm:$0xff]
  %v3746 = vld [vmem:[%s3 + $0x2c0] sm:$0xff]
  %v3747 = vld [vmem:[%s3 + $0x2c8] sm:$0xff]
  %v3748 = vld [vmem:[%s3 + $0x2d0] sm:$0xff]
  %v3749 = vld [vmem:[%s3 + $0x2d8] sm:$0xff]
  %v3750 = vld [vmem:[%s3 + $0x2e0] sm:$0xff]
  %v3751 = vld [vmem:[%s3 + $0x2e8] sm:$0xff]
  %v3752 = vld [vmem:[%s3 + $0x2f0] sm:$0xff]
  %v3753 = vld [vmem:[%s3 + $0x2f8] sm:$0xff]
  %v3754 = vld [vmem:[%s3 + $0x300] sm:$0xff]
  %v3755 = vld [vmem:[%s3 + $0x308] sm:$0xff]
  %v3756 = vld [vmem:[%s3 + $0x310] sm:$0xff]
  %v3757 = vld [vmem:[%s3 + $0x318] sm:$0xff]
  %v3758 = vld [vmem:[%s3 + $0x320] sm:$0xff]
  %v3759 = vld [vmem:[%s3 + $0x328] sm:$0xff]
  %v3760 = vld [vmem:[%s3 + $0x330] sm:$0xff]
  %v3761 = vld [vmem:[%s3 + $0x338] sm:$0xff]
  %v3762 = vld [vmem:[%s3 + $0x340] sm:$0xff]
  %v3763 = vld [vmem:[%s3 + $0x348] sm:$0xff]
  %v3764 = vld [vmem:[%s3 + $0x350] sm:$0xff]
  %v3765 = vld [vmem:[%s3 + $0x358] sm:$0xff]
  %v3766 = vld [vmem:[%s3 + $0x360] sm:$0xff]
  %v3767 = vld [vmem:[%s3 + $0x368] sm:$0xff]
  %v3768 = vld [vmem:[%s3 + $0x370] sm:$0xff]
  %v3769 = vld [vmem:[%s3 + $0x378] sm:$0xff]
  %v3770 = vld [vmem:[%s3 + $0x380] sm:$0xff]
  %v3771 = vld [vmem:[%s3 + $0x388] sm:$0xff]
  %v3772 = vld [vmem:[%s3 + $0x390] sm:$0xff]
  %v3773 = vld [vmem:[%s3 + $0x398] sm:$0xff]
  %v3774 = vld [vmem:[%s3 + $0x3a0] sm:$0xff]
  %v3775 = vld [vmem:[%s3 + $0x3a8] sm:$0xff]
  %v3776 = vld [vmem:[%s3 + $0x3b0] sm:$0xff]
  %v3777 = vld [vmem:[%s3 + $0x3b8] sm:$0xff]
  %v3778 = vld [vmem:[%s3 + $0x3c0] sm:$0xff]
  %v3779 = vld [vmem:[%s3 + $0x3c8] sm:$0xff]
  %v3780 = vld [vmem:[%s3 + $0x3d0] sm:$0xff]
  %v3781 = vld [vmem:[%s3 + $0x3d8] sm:$0xff]
  %v3782 = vld [vmem:[%s3 + $0x3e0] sm:$0xff]
  %v3783 = vld [vmem:[%s3 + $0x3e8] sm:$0xff]
  %v3784 = vld [vmem:[%s3 + $0x3f0] sm:$0xff]
  %v3785 = vld [vmem:[%s3 + $0x3f8] sm:$0xff]
  %v3786 = vld [vmem:[%s3 + $0x400] sm:$0xff]
  %v3787 = vld [vmem:[%s3 + $0x408] sm:$0xff]
  %v3788 = vld [vmem:[%s3 + $0x410] sm:$0xff]
  %v3789 = vld [vmem:[%s3 + $0x418] sm:$0xff]
  %v3790 = vld [vmem:[%s3 + $0x420] sm:$0xff]
  %v3791 = vld [vmem:[%s3 + $0x428] sm:$0xff]
  %v3792 = vld [vmem:[%s3 + $0x430] sm:$0xff]
  %v3793 = vld [vmem:[%s3 + $0x438] sm:$0xff]
  %v3794 = vld [vmem:[%s3 + $0x440] sm:$0xff]
  %v3795 = vld [vmem:[%s3 + $0x448] sm:$0xff]
  %v3796 = vld [vmem:[%s3 + $0x450] sm:$0xff]
  %v3797 = vld [vmem:[%s3 + $0x458] sm:$0xff]
  %v3798 = vld [vmem:[%s3 + $0x460] sm:$0xff]
  %v3799 = vld [vmem:[%s3 + $0x468] sm:$0xff]
  %v3800 = vld [vmem:[%s3 + $0x470] sm:$0xff]
  %v3801 = vld [vmem:[%s3 + $0x478] sm:$0xff]
  %v3802 = vld [vmem:[%s3 + $0x480] sm:$0xff]
  %v3803 = vld [vmem:[%s3 + $0x488] sm:$0xff]
  %v3804 = vld [vmem:[%s3 + $0x490] sm:$0xff]
  %v3805 = vld [vmem:[%s3 + $0x498] sm:$0xff]
  %v3806 = vld [vmem:[%s3 + $0x4a0] sm:$0xff]
  %v3807 = vld [vmem:[%s3 + $0x4a8] sm:$0xff]
  %v3808 = vld [vmem:[%s3 + $0x4b0] sm:$0xff]
  %v3809 = vld [vmem:[%s3 + $0x4b8] sm:$0xff]
  %v3810 = vld [vmem:[%s3 + $0x4c0] sm:$0xff]
  %v3811 = vld [vmem:[%s3 + $0x4c8] sm:$0xff]
  %v3812 = vld [vmem:[%s3 + $0x4d0] sm:$0xff]
  %v3813 = vld [vmem:[%s3 + $0x4d8] sm:$0xff]
  %v3814 = vld [vmem:[%s3 + $0x4e0] sm:$0xff]
  %v3815 = vld [vmem:[%s3 + $0x4e8] sm:$0xff]
  %v3816 = vld [vmem:[%s3 + $0x4f0] sm:$0xff]
  %v3817 = vld [vmem:[%s3 + $0x4f8] sm:$0xff]
  %v3818 = vld [vmem:[%s3 + $0x500] sm:$0xff]
  %v3819 = vld [vmem:[%s3 + $0x508] sm:$0xff]
  %v3820 = vld [vmem:[%s3 + $0x510] sm:$0xff]
  %v3821 = vld [vmem:[%s3 + $0x518] sm:$0xff]
  %v3822 = vld [vmem:[%s3 + $0x520] sm:$0xff]
  %v3823 = vld [vmem:[%s3 + $0x528] sm:$0xff]
  %v3824 = vld [vmem:[%s3 + $0x530] sm:$0xff]
  %v3825 = vld [vmem:[%s3 + $0x538] sm:$0xff]
  %v3826 = vld [vmem:[%s3 + $0x540] sm:$0xff]
  %v3827 = vld [vmem:[%s3 + $0x548] sm:$0xff]
  %v3828 = vld [vmem:[%s3 + $0x550] sm:$0xff]
  %v3829 = vld [vmem:[%s3 + $0x558] sm:$0xff]
  %v3830 = vld [vmem:[%s3 + $0x560] sm:$0xff]
  %v3831 = vld [vmem:[%s3 + $0x568] sm:$0xff]
  %v3832 = vld [vmem:[%s3 + $0x570] sm:$0xff]
  %v3833 = vld [vmem:[%s3 + $0x578] sm:$0xff]
  %v3834 = vld [vmem:[%s3 + $0x580] sm:$0xff]
  %v3835 = vld [vmem:[%s3 + $0x588] sm:$0xff]
  %v3836 = vld [vmem:[%s3 + $0x590] sm:$0xff]
  %v3837 = vld [vmem:[%s3 + $0x598] sm:$0xff]
  %v3838 = vld [vmem:[%s3 + $0x5a0] sm:$0xff]
  %v3839 = vld [vmem:[%s3 + $0x5a8] sm:$0xff]
  %v3840 = vld [vmem:[%s3 + $0x5b0] sm:$0xff]
  %v3841 = vld [vmem:[%s3 + $0x5b8] sm:$0xff]
  %v3842 = vld [vmem:[%s3 + $0x5c0] sm:$0xff]
  %v3843 = vld [vmem:[%s3 + $0x5c8] sm:$0xff]
  %v3844 = vld [vmem:[%s3 + $0x5d0] sm:$0xff]
  %v3845 = vld [vmem:[%s3 + $0x5d8] sm:$0xff]
  %v3846 = vld [vmem:[%s3 + $0x5e0] sm:$0xff]
  %v3847 = vld [vmem:[%s3 + $0x5e8] sm:$0xff]
  %v3848 = vld [vmem:[%s3 + $0x5f0] sm:$0xff]
  %v3849 = vld [vmem:[%s3 + $0x5f8] sm:$0xff]
  %v3850 = vld [vmem:[%s3 + $0x600] sm:$0xff]
  %v3851 = vld [vmem:[%s3 + $0x608] sm:$0xff]
  %v3852 = vld [vmem:[%s3 + $0x610] sm:$0xff]
  %v3853 = vld [vmem:[%s3 + $0x618] sm:$0xff]
  %v3854 = vld [vmem:[%s3 + $0x620] sm:$0xff]
  %v3855 = vld [vmem:[%s3 + $0x628] sm:$0xff]
  %v3856 = vld [vmem:[%s3 + $0x630] sm:$0xff]
  %v3857 = vld [vmem:[%s3 + $0x638] sm:$0xff]
  %v3858 = vld [vmem:[%s3 + $0x640] sm:$0xff]
  %v3859 = vld [vmem:[%s3 + $0x648] sm:$0xff]
  %v3860 = vld [vmem:[%s3 + $0x650] sm:$0xff]
  %v3861 = vld [vmem:[%s3 + $0x658] sm:$0xff]
  %v3862 = vld [vmem:[%s3 + $0x660] sm:$0xff]
  %v3863 = vld [vmem:[%s3 + $0x668] sm:$0xff]
  %v3864 = vld [vmem:[%s3 + $0x670] sm:$0xff]
  %v3865 = vld [vmem:[%s3 + $0x678] sm:$0xff]
  %v3866 = vld [vmem:[%s3 + $0x680] sm:$0xff]
  %v3867 = vld [vmem:[%s3 + $0x688] sm:$0xff]
  %v3868 = vld [vmem:[%s3 + $0x690] sm:$0xff]
  %v3869 = vld [vmem:[%s3 + $0x698] sm:$0xff]
  %v3870 = vld [vmem:[%s3 + $0x6a0] sm:$0xff]
  %v3871 = vld [vmem:[%s3 + $0x6a8] sm:$0xff]
  %v3872 = vld [vmem:[%s3 + $0x6b0] sm:$0xff]
  %v3873 = vld [vmem:[%s3 + $0x6b8] sm:$0xff]
  %v3874 = vld [vmem:[%s3 + $0x6c0] sm:$0xff]
  %v3875 = vld [vmem:[%s3 + $0x6c8] sm:$0xff]
  %v3876 = vld [vmem:[%s3 + $0x6d0] sm:$0xff]
  %v3877 = vld [vmem:[%s3 + $0x6d8] sm:$0xff]
  %v3878 = vld [vmem:[%s3 + $0x6e0] sm:$0xff]
  %v3879 = vld [vmem:[%s3 + $0x6e8] sm:$0xff]
  %v3880 = vld [vmem:[%s3 + $0x6f0] sm:$0xff]
  %v3881 = vld [vmem:[%s3 + $0x6f8] sm:$0xff]
  %v3882 = vld [vmem:[%s3 + $0x700] sm:$0xff]
  %v3883 = vld [vmem:[%s3 + $0x708] sm:$0xff]
  %v3884 = vld [vmem:[%s3 + $0x710] sm:$0xff]
  %v3885 = vld [vmem:[%s3 + $0x718] sm:$0xff]
  %v3886 = vld [vmem:[%s3 + $0x720] sm:$0xff]
  %v3887 = vld [vmem:[%s3 + $0x728] sm:$0xff]
  %v3888 = vld [vmem:[%s3 + $0x730] sm:$0xff]
  %v3889 = vld [vmem:[%s3 + $0x738] sm:$0xff]
  %v3890 = vld [vmem:[%s3 + $0x740] sm:$0xff]
  %v3891 = vld [vmem:[%s3 + $0x748] sm:$0xff]
  %v3892 = vld [vmem:[%s3 + $0x750] sm:$0xff]
  %v3893 = vld [vmem:[%s3 + $0x758] sm:$0xff]
  %v3894 = vld [vmem:[%s3 + $0x760] sm:$0xff]
  %v3895 = vld [vmem:[%s3 + $0x768] sm:$0xff]
  %v3896 = vld [vmem:[%s3 + $0x770] sm:$0xff]
  %v3897 = vld [vmem:[%s3 + $0x778] sm:$0xff]
  %v3898 = vld [vmem:[%s3 + $0x780] sm:$0xff]
  %v3899 = vld [vmem:[%s3 + $0x788] sm:$0xff]
  %v3900 = vld [vmem:[%s3 + $0x790] sm:$0xff]
  %v3901 = vld [vmem:[%s3 + $0x798] sm:$0xff]
  %v3902 = vld [vmem:[%s3 + $0x7a0] sm:$0xff]
  %v3903 = vld [vmem:[%s3 + $0x7a8] sm:$0xff]
  %v3904 = vld [vmem:[%s3 + $0x7b0] sm:$0xff]
  %v3905 = vld [vmem:[%s3 + $0x7b8] sm:$0xff]
  %v3906 = vld [vmem:[%s3 + $0x7c0] sm:$0xff]
  %v3907 = vld [vmem:[%s3 + $0x7c8] sm:$0xff]
  %v3908 = vld [vmem:[%s3 + $0x7d0] sm:$0xff]
  %v3909 = vld [vmem:[%s3 + $0x7d8] sm:$0xff]
  %v3910 = vld [vmem:[%s3 + $0x7e0] sm:$0xff]
  %v3911 = vld [vmem:[%s3 + $0x7e8] sm:$0xff]
  %v3912 = vld [vmem:[%s3 + $0x7f0] sm:$0xff]
  %v3913 = vld [vmem:[%s3 + $0x7f8] sm:$0xff]
  %v3914 = vld [vmem:[%s3 + $0x800] sm:$0xff]
  %v3915 = vld [vmem:[%s3 + $0x808] sm:$0xff]
  %v3916 = vld [vmem:[%s3 + $0x810] sm:$0xff]
  %v3917 = vld [vmem:[%s3 + $0x818] sm:$0xff]
  %v3918 = vld [vmem:[%s3 + $0x820] sm:$0xff]
  %v3919 = vld [vmem:[%s3 + $0x828] sm:$0xff]
  %v3920 = vld [vmem:[%s3 + $0x830] sm:$0xff]
  %v3921 = vld [vmem:[%s3 + $0x838] sm:$0xff]
  %v3922 = vld [vmem:[%s3 + $0x840] sm:$0xff]
  %v3923 = vld [vmem:[%s3 + $0x848] sm:$0xff]
  %v3924 = vld [vmem:[%s3 + $0x850] sm:$0xff]
  %v3925 = vld [vmem:[%s3 + $0x858] sm:$0xff]
  %v3926 = vld [vmem:[%s3 + $0x860] sm:$0xff]
  %v3927 = vld [vmem:[%s3 + $0x868] sm:$0xff]
  %v3928 = vld [vmem:[%s3 + $0x870] sm:$0xff]
  %v3929 = vld [vmem:[%s3 + $0x878] sm:$0xff]
  %v3930 = vld [vmem:[%s4 + $0x190] sm:$0xff]
  %v3931 = vld [vmem:[%s4 + $0x198] sm:$0xff]
  %v3932 = vld [vmem:[%s4 + $0x1a0] sm:$0xff]
  %v3933 = vld [vmem:[%s4 + $0x1a8] sm:$0xff]
  %v3934 = vld [vmem:[%s4 + $0x1b0] sm:$0xff]
  %v3935 = vld [vmem:[%s4 + $0x1b8] sm:$0xff]
  %v3936 = vld [vmem:[%s4 + $0x1c0] sm:$0xff]
  %v3937 = vld [vmem:[%s4 + $0x1c8] sm:$0xff]
  %v3938 = vld [vmem:[%s4 + $0x1d0] sm:$0xff]
  %v3939 = vld [vmem:[%s4 + $0x1d8] sm:$0xff]
  %v3940 = vld [vmem:[%s4 + $0x1e0] sm:$0xff]
  %v3941 = vld [vmem:[%s4 + $0x1e8] sm:$0xff]
  %v3942 = vld [vmem:[%s4 + $0x1f0] sm:$0xff]
  %v3943 = vld [vmem:[%s4 + $0x1f8] sm:$0xff]
  %v3944 = vld [vmem:[%s4 + $0x200] sm:$0xff]
  %v3945 = vld [vmem:[%s4 + $0x208] sm:$0xff]
  %v3946 = vld [vmem:[%s4 + $0x210] sm:$0xff]
  %v3947 = vld [vmem:[%s4 + $0x218] sm:$0xff]
  %v3948 = vld [vmem:[%s4 + $0x220] sm:$0xff]
  %v3949 = vld [vmem:[%s4 + $0x228] sm:$0xff]
  %v3950 = vld [vmem:[%s4 + $0x230] sm:$0xff]
  %v3951 = vld [vmem:[%s4 + $0x238] sm:$0xff]
  %v3952 = vld [vmem:[%s4 + $0x240] sm:$0xff]
  %v3953 = vld [vmem:[%s4 + $0x248] sm:$0xff]
  %v3954 = vld [vmem:[%s4 + $0x250] sm:$0xff]
  %v3955 = vld [vmem:[%s4 + $0x258] sm:$0xff]
  %v3956 = vld [vmem:[%s4 + $0x260] sm:$0xff]
  %v3957 = vld [vmem:[%s4 + $0x268] sm:$0xff]
  %v3958 = vld [vmem:[%s4 + $0x270] sm:$0xff]
  %v3959 = vld [vmem:[%s4 + $0x278] sm:$0xff]
  %v3960 = vld [vmem:[%s4 + $0x280] sm:$0xff]
  %v3961 = vld [vmem:[%s4 + $0x288] sm:$0xff]
  %v3962 = vld [vmem:[%s4 + $0x290] sm:$0xff]
  %v3963 = vld [vmem:[%s4 + $0x298] sm:$0xff]
  %v3964 = vld [vmem:[%s4 + $0x2a0] sm:$0xff]
  %v3965 = vld [vmem:[%s4 + $0x2a8] sm:$0xff]
  %v3966 = vld [vmem:[%s4 + $0x2b0] sm:$0xff]
  %v3967 = vld [vmem:[%s4 + $0x2b8] sm:$0xff]
  %v3968 = vld [vmem:[%s4 + $0x2c0] sm:$0xff]
  %v3969 = vld [vmem:[%s4 + $0x2c8] sm:$0xff]
  %v3970 = vld [vmem:[%s4 + $0x2d0] sm:$0xff]
  %v3971 = vld [vmem:[%s4 + $0x2d8] sm:$0xff]
  %v3972 = vld [vmem:[%s4 + $0x2e0] sm:$0xff]
  %v3973 = vld [vmem:[%s4 + $0x2e8] sm:$0xff]
  %v3974 = vld [vmem:[%s4 + $0x2f0] sm:$0xff]
  %v3975 = vld [vmem:[%s4 + $0x2f8] sm:$0xff]
  %v3976 = vld [vmem:[%s4 + $0x300] sm:$0xff]
  %v3977 = vld [vmem:[%s4 + $0x308] sm:$0xff]
  %v3978 = vld [vmem:[%s4 + $0x310] sm:$0xff]
  %v3979 = vld [vmem:[%s4 + $0x318] sm:$0xff]
  %v3980 = vld [vmem:[%s4 + $0x320] sm:$0xff]
  %v3981 = vld [vmem:[%s4 + $0x328] sm:$0xff]
  %v3982 = vld [vmem:[%s4 + $0x330] sm:$0xff]
  %v3983 = vld [vmem:[%s4 + $0x338] sm:$0xff]
  %v3984 = vld [vmem:[%s4 + $0x340] sm:$0xff]
  %v3985 = vld [vmem:[%s4 + $0x348] sm:$0xff]
  %v3986 = vld [vmem:[%s4 + $0x350] sm:$0xff]
  %v3987 = vld [vmem:[%s4 + $0x358] sm:$0xff]
  %v3988 = vld [vmem:[%s4 + $0x360] sm:$0xff]
  %v3989 = vld [vmem:[%s4 + $0x368] sm:$0xff]
  %v3990 = vld [vmem:[%s4 + $0x370] sm:$0xff]
  %v3991 = vld [vmem:[%s4 + $0x378] sm:$0xff]
  %v3992 = vld [vmem:[%s4 + $0x380] sm:$0xff]
  %v3993 = vld [vmem:[%s4 + $0x388] sm:$0xff]
  %s3994 = scalar_lea.vmem %s4, 352
  %v3995 = vld [vmem:[%s3994] ss:$8 sm:$0x3]
  %v3997 = vlaneseq
  %v3998 = vshrl.u32 %v3997, 7
  %v3999 = vsub.s32 0, %v3998
  %v4000 = vrot.slane %v3995, %v3999
  %v4001 = vlaneseq
  %v4002 = vshrl.u32 %v4001, 7
  %v4003 = vsub.s32 1, %v4002
  %v4004 = vrot.slane %v3995, %v4003
  %4007 = vmatprep.subr.mxu0 %v3931
  %4008 = vmatpush1.msra.mxu0 %v3930
  %4009 = vmatprep.subr.mxu0 %v3933
  %4010 = vmatpush1.msra.mxu0 %v3932
  %4011 = vmatprep.subr.mxu0 %v3935
  %4012 = vmatpush1.msra.mxu0 %v3934
  %4013 = vmatprep.subr.mxu0 %v3937
  %4014 = vmatpush1.msra.mxu0 %v3936
  %4015 = vmatprep.subr.mxu0 %v3939
  %4016 = vmatpush1.msra.mxu0 %v3938
  %4017 = vmatprep.subr.mxu0 %v3941
  %4018 = vmatpush1.msra.mxu0 %v3940
  %4019 = vmatprep.subr.mxu0 %v3943
  %4020 = vmatpush1.msra.mxu0 %v3942
  %4021 = vmatprep.subr.mxu0 %v3945
  %4022 = vmatpush1.msra.mxu0 %v3944
  %4023 = vmatprep.subr.mxu0 %v3947
  %4024 = vmatpush1.msra.mxu0 %v3946
  %4025 = vmatprep.subr.mxu0 %v3949
  %4026 = vmatpush1.msra.mxu0 %v3948
  %4027 = vmatprep.subr.mxu0 %v3951
  %4028 = vmatpush1.msra.mxu0 %v3950
  %4029 = vmatprep.subr.mxu0 %v3953
  %4030 = vmatpush1.msra.mxu0 %v3952
  %4031 = vmatprep.subr.mxu0 %v3955
  %4032 = vmatpush1.msra.mxu0 %v3954
  %4033 = vmatprep.subr.mxu0 %v3957
  %4034 = vmatpush1.msra.mxu0 %v3956
  %4035 = vmatprep.subr.mxu0 %v3959
  %4036 = vmatpush1.msra.mxu0 %v3958
  %4037 = vmatprep.subr.mxu0 %v3961
  %4038 = vmatpush1.msra.mxu0 %v3960
  %4039 = vmatprep.subr.mxu0 %v3963
  %4040 = vmatpush1.msra.mxu0 %v3962
  %4041 = vmatprep.subr.mxu0 %v3965
  %4042 = vmatpush1.msra.mxu0 %v3964
  %4043 = vmatprep.subr.mxu0 %v3967
  %4044 = vmatpush1.msra.mxu0 %v3966
  %4045 = vmatprep.subr.mxu0 %v3969
  %4046 = vmatpush1.msra.mxu0 %v3968
  %4047 = vmatprep.subr.mxu0 %v3971
  %4048 = vmatpush1.msra.mxu0 %v3970
  %4049 = vmatprep.subr.mxu0 %v3973
  %4050 = vmatpush1.msra.mxu0 %v3972
  %4051 = vmatprep.subr.mxu0 %v3975
  %4052 = vmatpush1.msra.mxu0 %v3974
  %4053 = vmatprep.subr.mxu0 %v3977
  %4054 = vmatpush1.msra.mxu0 %v3976
  %4055 = vmatprep.subr.mxu0 %v3979
  %4056 = vmatpush1.msra.mxu0 %v3978
  %4057 = vmatprep.subr.mxu0 %v3981
  %4058 = vmatpush1.msra.mxu0 %v3980
  %4059 = vmatprep.subr.mxu0 %v3983
  %4060 = vmatpush1.msra.mxu0 %v3982
  %4061 = vmatprep.subr.mxu0 %v3985
  %4062 = vmatpush1.msra.mxu0 %v3984
  %4063 = vmatprep.subr.mxu0 %v3987
  %4064 = vmatpush1.msra.mxu0 %v3986
  %4065 = vmatprep.subr.mxu0 %v3989
  %4066 = vmatpush1.msra.mxu0 %v3988
  %4067 = vmatprep.subr.mxu0 %v3991
  %4068 = vmatpush1.msra.mxu0 %v3990
  %4069 = vmatprep.subr.mxu0 %v3993
  %4070 = vmatpush1.msra.mxu0 %v3992
  %4071 = vmatprep.mubr.f32.mxu0 %v3658
  %4072 = vmatmul.mubr.f32.gmra.mrb[0].mxu0 %v3657
  %v4073 = vpop.f32.mrb[0].mxu0
  %v4074 = vadd.f32 %v4000, %v4073
  %v4075 = vpop.f32.mrb[0].mxu0
  %4076 = vdwg.mxu0
  %4078 = vrot.lane.b32.xlu0 %v4074, 18
  %v4079 = vpop.permute.xlu0 %4078
  %v4081 = vsub.f32 %v28, %v4079
  %v4083 = vlaneseq
  %v4084 = vshrl.u32 %v4083, 7
  %v4085 = vsub.s32 0, %v4084
  %v4086 = vrot.slane %v3673, %v4085
  %v4087 = vlaneseq
  %v4088 = vshrl.u32 %v4087, 7
  %v4089 = vsub.s32 1, %v4088
  %v4090 = vrot.slane %v3673, %v4089
  %v4091 = vlaneseq
  %v4092 = vshrl.u32 %v4091, 7
  %v4093 = vsub.s32 2, %v4092
  %v4094 = vrot.slane %v3673, %v4093
  %v4095 = vlaneseq
  %v4096 = vshrl.u32 %v4095, 7
  %v4097 = vsub.s32 3, %v4096
  %v4098 = vrot.slane %v3673, %v4097
  %v4099 = vlaneseq
  %v4100 = vshrl.u32 %v4099, 7
  %v4101 = vsub.s32 4, %v4100
  %v4102 = vrot.slane %v3673, %v4101
  %v4103 = vlaneseq
  %v4104 = vshrl.u32 %v4103, 7
  %v4105 = vsub.s32 5, %v4104
  %v4106 = vrot.slane %v3673, %v4105
  %v4107 = vlaneseq
  %v4108 = vshrl.u32 %v4107, 7
  %v4109 = vsub.s32 6, %v4108
  %v4110 = vrot.slane %v3673, %v4109
  %v4111 = vlaneseq
  %v4112 = vshrl.u32 %v4111, 7
  %v4113 = vsub.s32 7, %v4112
  %v4114 = vrot.slane %v3673, %v4113
  %4123 = vmatprep.subr.mxu0 %v3675
  %4124 = vmatpush1.msra.mxu0 %v3674
  %4125 = vmatprep.subr.mxu0 %v3683
  %4126 = vmatpush1.msra.mxu0 %v3682
  %4127 = vmatprep.subr.mxu0 %v3691
  %4128 = vmatpush1.msra.mxu0 %v3690
  %4129 = vmatprep.subr.mxu0 %v3699
  %4130 = vmatpush1.msra.mxu0 %v3698
  %4131 = vmatprep.subr.mxu0 %v3707
  %4132 = vmatpush1.msra.mxu0 %v3706
  %4133 = vmatprep.subr.mxu0 %v3715
  %4134 = vmatpush1.msra.mxu0 %v3714
  %4135 = vmatprep.subr.mxu0 %v3723
  %4136 = vmatpush1.msra.mxu0 %v3722
  %4137 = vmatprep.subr.mxu0 %v3731
  %4138 = vmatpush1.msra.mxu0 %v3730
  %4139 = vmatprep.subr.mxu0 %v3739
  %4140 = vmatpush1.msra.mxu0 %v3738
  %4141 = vmatprep.subr.mxu0 %v3747
  %4142 = vmatpush1.msra.mxu0 %v3746
  %4143 = vmatprep.subr.mxu0 %v3755
  %4144 = vmatpush1.msra.mxu0 %v3754
  %4145 = vmatprep.subr.mxu0 %v3763
  %4146 = vmatpush1.msra.mxu0 %v3762
  %4147 = vmatprep.subr.mxu0 %v3771
  %4148 = vmatpush1.msra.mxu0 %v3770
  %4149 = vmatprep.subr.mxu0 %v3779
  %4150 = vmatpush1.msra.mxu0 %v3778
  %4151 = vmatprep.subr.mxu0 %v3787
  %4152 = vmatpush1.msra.mxu0 %v3786
  %4153 = vmatprep.subr.mxu0 %v3795
  %4154 = vmatpush1.msra.mxu0 %v3794
  %4155 = vmatprep.subr.mxu0 %v3803
  %4156 = vmatpush1.msra.mxu0 %v3802
  %4157 = vmatprep.subr.mxu0 %v3811
  %4158 = vmatpush1.msra.mxu0 %v3810
  %4159 = vmatprep.subr.mxu0 %v3819
  %4160 = vmatpush1.msra.mxu0 %v3818
  %4161 = vmatprep.subr.mxu0 %v3827
  %4162 = vmatpush1.msra.mxu0 %v3826
  %4163 = vmatprep.subr.mxu0 %v3835
  %4164 = vmatpush1.msra.mxu0 %v3834
  %4165 = vmatprep.subr.mxu0 %v3843
  %4166 = vmatpush1.msra.mxu0 %v3842
  %4167 = vmatprep.subr.mxu0 %v3851
  %4168 = vmatpush1.msra.mxu0 %v3850
  %4169 = vmatprep.subr.mxu0 %v3859
  %4170 = vmatpush1.msra.mxu0 %v3858
  %4171 = vmatprep.subr.mxu0 %v3867
  %4172 = vmatpush1.msra.mxu0 %v3866
  %4173 = vmatprep.subr.mxu0 %v3875
  %4174 = vmatpush1.msra.mxu0 %v3874
  %4175 = vmatprep.subr.mxu0 %v3883
  %4176 = vmatpush1.msra.mxu0 %v3882
  %4177 = vmatprep.subr.mxu0 %v3891
  %4178 = vmatpush1.msra.mxu0 %v3890
  %4179 = vmatprep.subr.mxu0 %v3899
  %4180 = vmatpush1.msra.mxu0 %v3898
  %4181 = vmatprep.subr.mxu0 %v3907
  %4182 = vmatpush1.msra.mxu0 %v3906
  %4183 = vmatprep.subr.mxu0 %v3915
  %4184 = vmatpush1.msra.mxu0 %v3914
  %4185 = vmatprep.subr.mxu0 %v3923
  %4186 = vmatpush1.msra.mxu0 %v3922
  %4187 = vmatprep.mubr.f32.mxu0 %v3658
  %4188 = vmatmul.mubr.f32.gmra.mrb[0].mxu0 %v3657
  %v4189 = vpop.f32.mrb[0].mxu0
  %v4190 = vadd.f32 %v4086, %v4189
  %v4191 = vpop.f32.mrb[0].mxu0
  %v4192 = vadd.f32 %v4090, %v4191
  %4193 = vdwg.mxu0
  %4194 = vmatprep.subr.mxu0 %v3677
  %4195 = vmatpush1.msra.mxu0 %v3676
  %4196 = vmatprep.subr.mxu0 %v3685
  %4197 = vmatpush1.msra.mxu0 %v3684
  %4198 = vmatprep.subr.mxu0 %v3693
  %4199 = vmatpush1.msra.mxu0 %v3692
  %4200 = vmatprep.subr.mxu0 %v3701
  %4201 = vmatpush1.msra.mxu0 %v3700
  %4202 = vmatprep.subr.mxu0 %v3709
  %4203 = vmatpush1.msra.mxu0 %v3708
  %4204 = vmatprep.subr.mxu0 %v3717
  %4205 = vmatpush1.msra.mxu0 %v3716
  %4206 = vmatprep.subr.mxu0 %v3725
  %4207 = vmatpush1.msra.mxu0 %v3724
  %4208 = vmatprep.subr.mxu0 %v3733
  %4209 = vmatpush1.msra.mxu0 %v3732
  %4210 = vmatprep.subr.mxu0 %v3741
  %4211 = vmatpush1.msra.mxu0 %v3740
  %4212 = vmatprep.subr.mxu0 %v3749
  %4213 = vmatpush1.msra.mxu0 %v3748
  %4214 = vmatprep.subr.mxu0 %v3757
  %4215 = vmatpush1.msra.mxu0 %v3756
  %4216 = vmatprep.subr.mxu0 %v3765
  %4217 = vmatpush1.msra.mxu0 %v3764
  %4218 = vmatprep.subr.mxu0 %v3773
  %4219 = vmatpush1.msra.mxu0 %v3772
  %4220 = vmatprep.subr.mxu0 %v3781
  %4221 = vmatpush1.msra.mxu0 %v3780
  %4222 = vmatprep.subr.mxu0 %v3789
  %4223 = vmatpush1.msra.mxu0 %v3788
  %4224 = vmatprep.subr.mxu0 %v3797
  %4225 = vmatpush1.msra.mxu0 %v3796
  %4226 = vmatprep.subr.mxu0 %v3805
  %4227 = vmatpush1.msra.mxu0 %v3804
  %4228 = vmatprep.subr.mxu0 %v3813
  %4229 = vmatpush1.msra.mxu0 %v3812
  %4230 = vmatprep.subr.mxu0 %v3821
  %4231 = vmatpush1.msra.mxu0 %v3820
  %4232 = vmatprep.subr.mxu0 %v3829
  %4233 = vmatpush1.msra.mxu0 %v3828
  %4234 = vmatprep.subr.mxu0 %v3837
  %4235 = vmatpush1.msra.mxu0 %v3836
  %4236 = vmatprep.subr.mxu0 %v3845
  %4237 = vmatpush1.msra.mxu0 %v3844
  %4238 = vmatprep.subr.mxu0 %v3853
  %4239 = vmatpush1.msra.mxu0 %v3852
  %4240 = vmatprep.subr.mxu0 %v3861
  %4241 = vmatpush1.msra.mxu0 %v3860
  %4242 = vmatprep.subr.mxu0 %v3869
  %4243 = vmatpush1.msra.mxu0 %v3868
  %4244 = vmatprep.subr.mxu0 %v3877
  %4245 = vmatpush1.msra.mxu0 %v3876
  %4246 = vmatprep.subr.mxu0 %v3885
  %4247 = vmatpush1.msra.mxu0 %v3884
  %4248 = vmatprep.subr.mxu0 %v3893
  %4249 = vmatpush1.msra.mxu0 %v3892
  %4250 = vmatprep.subr.mxu0 %v3901
  %4251 = vmatpush1.msra.mxu0 %v3900
  %4252 = vmatprep.subr.mxu0 %v3909
  %4253 = vmatpush1.msra.mxu0 %v3908
  %4254 = vmatprep.subr.mxu0 %v3917
  %4255 = vmatpush1.msra.mxu0 %v3916
  %4256 = vmatprep.subr.mxu0 %v3925
  %4257 = vmatpush1.msra.mxu0 %v3924
  %4258 = vmatprep.mubr.f32.mxu0 %v3658
  %4259 = vmatmul.mubr.f32.gmra.mrb[0].mxu0 %v3657
  %v4260 = vpop.f32.mrb[0].mxu0
  %v4261 = vadd.f32 %v4094, %v4260
  %v4262 = vpop.f32.mrb[0].mxu0
  %v4263 = vadd.f32 %v4098, %v4262
  %4264 = vdwg.mxu0
  %4265 = vmatprep.subr.mxu0 %v3679
  %4266 = vmatpush1.msra.mxu0 %v3678
  %4267 = vmatprep.subr.mxu0 %v3687
  %4268 = vmatpush1.msra.mxu0 %v3686
  %4269 = vmatprep.subr.mxu0 %v3695
  %4270 = vmatpush1.msra.mxu0 %v3694
  %4271 = vmatprep.subr.mxu0 %v3703
  %4272 = vmatpush1.msra.mxu0 %v3702
  %4273 = vmatprep.subr.mxu0 %v3711
  %4274 = vmatpush1.msra.mxu0 %v3710
  %4275 = vmatprep.subr.mxu0 %v3719
  %4276 = vmatpush1.msra.mxu0 %v3718
  %4277 = vmatprep.subr.mxu0 %v3727
  %4278 = vmatpush1.msra.mxu0 %v3726
  %4279 = vmatprep.subr.mxu0 %v3735
  %4280 = vmatpush1.msra.mxu0 %v3734
  %4281 = vmatprep.subr.mxu0 %v3743
  %4282 = vmatpush1.msra.mxu0 %v3742
  %4283 = vmatprep.subr.mxu0 %v3751
  %4284 = vmatpush1.msra.mxu0 %v3750
  %4285 = vmatprep.subr.mxu0 %v3759
  %4286 = vmatpush1.msra.mxu0 %v3758
  %4287 = vmatprep.subr.mxu0 %v3767
  %4288 = vmatpush1.msra.mxu0 %v3766
  %4289 = vmatprep.subr.mxu0 %v3775
  %4290 = vmatpush1.msra.mxu0 %v3774
  %4291 = vmatprep.subr.mxu0 %v3783
  %4292 = vmatpush1.msra.mxu0 %v3782
  %4293 = vmatprep.subr.mxu0 %v3791
  %4294 = vmatpush1.msra.mxu0 %v3790
  %4295 = vmatprep.subr.mxu0 %v3799
  %4296 = vmatpush1.msra.mxu0 %v3798
  %4297 = vmatprep.subr.mxu0 %v3807
  %4298 = vmatpush1.msra.mxu0 %v3806
  %4299 = vmatprep.subr.mxu0 %v3815
  %4300 = vmatpush1.msra.mxu0 %v3814
  %4301 = vmatprep.subr.mxu0 %v3823
  %4302 = vmatpush1.msra.mxu0 %v3822
  %4303 = vmatprep.subr.mxu0 %v3831
  %4304 = vmatpush1.msra.mxu0 %v3830
  %4305 = vmatprep.subr.mxu0 %v3839
  %4306 = vmatpush1.msra.mxu0 %v3838
  %4307 = vmatprep.subr.mxu0 %v3847
  %4308 = vmatpush1.msra.mxu0 %v3846
  %4309 = vmatprep.subr.mxu0 %v3855
  %4310 = vmatpush1.msra.mxu0 %v3854
  %4311 = vmatprep.subr.mxu0 %v3863
  %4312 = vmatpush1.msra.mxu0 %v3862
  %4313 = vmatprep.subr.mxu0 %v3871
  %4314 = vmatpush1.msra.mxu0 %v3870
  %4315 = vmatprep.subr.mxu0 %v3879
  %4316 = vmatpush1.msra.mxu0 %v3878
  %4317 = vmatprep.subr.mxu0 %v3887
  %4318 = vmatpush1.msra.mxu0 %v3886
  %4319 = vmatprep.subr.mxu0 %v3895
  %4320 = vmatpush1.msra.mxu0 %v3894
  %4321 = vmatprep.subr.mxu0 %v3903
  %4322 = vmatpush1.msra.mxu0 %v3902
  %4323 = vmatprep.subr.mxu0 %v3911
  %4324 = vmatpush1.msra.mxu0 %v3910
  %4325 = vmatprep.subr.mxu0 %v3919
  %4326 = vmatpush1.msra.mxu0 %v3918
  %4327 = vmatprep.subr.mxu0 %v3927
  %4328 = vmatpush1.msra.mxu0 %v3926
  %4329 = vmatprep.mubr.f32.mxu0 %v3658
  %4330 = vmatmul.mubr.f32.gmra.mrb[0].mxu0 %v3657
  %v4331 = vpop.f32.mrb[0].mxu0
  %v4332 = vadd.f32 %v4102, %v4331
  %v4333 = vpop.f32.mrb[0].mxu0
  %v4334 = vadd.f32 %v4106, %v4333
  %4335 = vdwg.mxu0
  %4336 = vmatprep.subr.mxu0 %v3681
  %4337 = vmatpush1.msra.mxu0 %v3680
  %4338 = vmatprep.subr.mxu0 %v3689
  %4339 = vmatpush1.msra.mxu0 %v3688
  %4340 = vmatprep.subr.mxu0 %v3697
  %4341 = vmatpush1.msra.mxu0 %v3696
  %4342 = vmatprep.subr.mxu0 %v3705
  %4343 = vmatpush1.msra.mxu0 %v3704
  %4344 = vmatprep.subr.mxu0 %v3713
  %4345 = vmatpush1.msra.mxu0 %v3712
  %4346 = vmatprep.subr.mxu0 %v3721
  %4347 = vmatpush1.msra.mxu0 %v3720
  %4348 = vmatprep.subr.mxu0 %v3729
  %4349 = vmatpush1.msra.mxu0 %v3728
  %4350 = vmatprep.subr.mxu0 %v3737
  %4351 = vmatpush1.msra.mxu0 %v3736
  %4352 = vmatprep.subr.mxu0 %v3745
  %4353 = vmatpush1.msra.mxu0 %v3744
  %4354 = vmatprep.subr.mxu0 %v3753
  %4355 = vmatpush1.msra.mxu0 %v3752
  %4356 = vmatprep.subr.mxu0 %v3761
  %4357 = vmatpush1.msra.mxu0 %v3760
  %4358 = vmatprep.subr.mxu0 %v3769
  %4359 = vmatpush1.msra.mxu0 %v3768
  %4360 = vmatprep.subr.mxu0 %v3777
  %4361 = vmatpush1.msra.mxu0 %v3776
  %4362 = vmatprep.subr.mxu0 %v3785
  %4363 = vmatpush1.msra.mxu0 %v3784
  %4364 = vmatprep.subr.mxu0 %v3793
  %4365 = vmatpush1.msra.mxu0 %v3792
  %4366 = vmatprep.subr.mxu0 %v3801
  %4367 = vmatpush1.msra.mxu0 %v3800
  %4368 = vmatprep.subr.mxu0 %v3809
  %4369 = vmatpush1.msra.mxu0 %v3808
  %4370 = vmatprep.subr.mxu0 %v3817
  %4371 = vmatpush1.msra.mxu0 %v3816
  %4372 = vmatprep.subr.mxu0 %v3825
  %4373 = vmatpush1.msra.mxu0 %v3824
  %4374 = vmatprep.subr.mxu0 %v3833
  %4375 = vmatpush1.msra.mxu0 %v3832
  %4376 = vmatprep.subr.mxu0 %v3841
  %4377 = vmatpush1.msra.mxu0 %v3840
  %4378 = vmatprep.subr.mxu0 %v3849
  %4379 = vmatpush1.msra.mxu0 %v3848
  %4380 = vmatprep.subr.mxu0 %v3857
  %4381 = vmatpush1.msra.mxu0 %v3856
  %4382 = vmatprep.subr.mxu0 %v3865
  %4383 = vmatpush1.msra.mxu0 %v3864
  %4384 = vmatprep.subr.mxu0 %v3873
  %4385 = vmatpush1.msra.mxu0 %v3872
  %4386 = vmatprep.subr.mxu0 %v3881
  %4387 = vmatpush1.msra.mxu0 %v3880
  %4388 = vmatprep.subr.mxu0 %v3889
  %4389 = vmatpush1.msra.mxu0 %v3888
  %4390 = vmatprep.subr.mxu0 %v3897
  %4391 = vmatpush1.msra.mxu0 %v3896
  %4392 = vmatprep.subr.mxu0 %v3905
  %4393 = vmatpush1.msra.mxu0 %v3904
  %4394 = vmatprep.subr.mxu0 %v3913
  %4395 = vmatpush1.msra.mxu0 %v3912
  %4396 = vmatprep.subr.mxu0 %v3921
  %4397 = vmatpush1.msra.mxu0 %v3920
  %4398 = vmatprep.subr.mxu0 %v3929
  %4399 = vmatpush1.msra.mxu0 %v3928
  %4400 = vmatprep.mubr.f32.mxu0 %v3658
  %4401 = vmatmul.mubr.f32.gmra.mrb[0].mxu0 %v3657
  %v4402 = vpop.f32.mrb[0].mxu0
  %v4403 = vadd.f32 %v4110, %v4402
  %v4404 = vpop.f32.mrb[0].mxu0
  %v4405 = vadd.f32 %v4114, %v4404
  %4406 = vdwg.mxu0
  %4408 = vset.pattern.permute.xlu0 18
  %4409 = vperm.xlu0 %4408, %v4081
  %v4410 = vpop.permute.xlu0 %4409
  %v4413 = vlaneseq
  %v4414 = vshrl.u32 %v4413, 7
  %v4415 = vsub.s32 0, %v4414
  %v4416 = vrot.slane %v3665, %v4415
  %v4417 = vlaneseq
  %v4418 = vshrl.u32 %v4417, 7
  %v4419 = vsub.s32 1, %v4418
  %v4420 = vrot.slane %v3665, %v4419
  %v4421 = vlaneseq
  %v4422 = vshrl.u32 %v4421, 7
  %v4423 = vsub.s32 2, %v4422
  %v4424 = vrot.slane %v3665, %v4423
  %v4425 = vlaneseq
  %v4426 = vshrl.u32 %v4425, 7
  %v4427 = vsub.s32 3, %v4426
  %v4428 = vrot.slane %v3665, %v4427
  %v4429 = vlaneseq
  %v4430 = vshrl.u32 %v4429, 7
  %v4431 = vsub.s32 4, %v4430
  %v4432 = vrot.slane %v3665, %v4431
  %v4433 = vlaneseq
  %v4434 = vshrl.u32 %v4433, 7
  %v4435 = vsub.s32 5, %v4434
  %v4436 = vrot.slane %v3665, %v4435
  %v4437 = vlaneseq
  %v4438 = vshrl.u32 %v4437, 7
  %v4439 = vsub.s32 6, %v4438
  %v4440 = vrot.slane %v3665, %v4439
  %v4441 = vlaneseq
  %v4442 = vshrl.u32 %v4441, 7
  %v4443 = vsub.s32 7, %v4442
  %v4444 = vrot.slane %v3665, %v4443
  %v4453 = vmul.f32 %v4410, %v4416
  %v4454 = vmul.f32 %v4410, %v4420
  %v4455 = vmul.f32 %v4410, %v4424
  %v4456 = vmul.f32 %v4410, %v4428
  %v4457 = vmul.f32 %v4410, %v4432
  %v4458 = vmul.f32 %v4410, %v4436
  %v4459 = vmul.f32 %v4410, %v4440
  %v4460 = vmul.f32 %v4410, %v4444
  %v4461 = vadd.f32 %v4190, %v4453
  %v4462 = vadd.f32 %v4192, %v4454
  %v4463 = vadd.f32 %v4261, %v4455
  %v4464 = vadd.f32 %v4263, %v4456
  %v4465 = vadd.f32 %v4332, %v4457
  %v4466 = vadd.f32 %v4334, %v4458
  %v4467 = vadd.f32 %v4403, %v4459
  %v4468 = vadd.f32 %v4405, %v4460
  %4469 = vset.pattern.permute.xlu0 19
  %4470 = vperm.xlu0 %4469, %v4081
  %v4471 = vpop.permute.xlu0 %4470
  %v4474 = vlaneseq
  %v4475 = vshrl.u32 %v4474, 7
  %v4476 = vsub.s32 0, %v4475
  %v4477 = vrot.slane %v3669, %v4476
  %v4478 = vlaneseq
  %v4479 = vshrl.u32 %v4478, 7
  %v4480 = vsub.s32 1, %v4479
  %v4481 = vrot.slane %v3669, %v4480
  %v4482 = vlaneseq
  %v4483 = vshrl.u32 %v4482, 7
  %v4484 = vsub.s32 2, %v4483
  %v4485 = vrot.slane %v3669, %v4484
  %v4486 = vlaneseq
  %v4487 = vshrl.u32 %v4486, 7
  %v4488 = vsub.s32 3, %v4487
  %v4489 = vrot.slane %v3669, %v4488
  %v4490 = vlaneseq
  %v4491 = vshrl.u32 %v4490, 7
  %v4492 = vsub.s32 4, %v4491
  %v4493 = vrot.slane %v3669, %v4492
  %v4494 = vlaneseq
  %v4495 = vshrl.u32 %v4494, 7
  %v4496 = vsub.s32 5, %v4495
  %v4497 = vrot.slane %v3669, %v4496
  %v4498 = vlaneseq
  %v4499 = vshrl.u32 %v4498, 7
  %v4500 = vsub.s32 6, %v4499
  %v4501 = vrot.slane %v3669, %v4500
  %v4502 = vlaneseq
  %v4503 = vshrl.u32 %v4502, 7
  %v4504 = vsub.s32 7, %v4503
  %v4505 = vrot.slane %v3669, %v4504
  %v4514 = vmul.f32 %v4471, %v4477
  %v4515 = vmul.f32 %v4471, %v4481
  %v4516 = vmul.f32 %v4471, %v4485
  %v4517 = vmul.f32 %v4471, %v4489
  %v4518 = vmul.f32 %v4471, %v4493
  %v4519 = vmul.f32 %v4471, %v4497
  %v4520 = vmul.f32 %v4471, %v4501
  %v4521 = vmul.f32 %v4471, %v4505
  %v4522 = vadd.f32 %v4461, %v4514
  %v4523 = vadd.f32 %v4462, %v4515
  %v4524 = vadd.f32 %v4463, %v4516
  %v4525 = vadd.f32 %v4464, %v4517
  %v4526 = vadd.f32 %v4465, %v4518
  %v4527 = vadd.f32 %v4466, %v4519
  %v4528 = vadd.f32 %v4467, %v4520
  %v4529 = vadd.f32 %v4468, %v4521
  %v4530 = vxor.u32 %v4522, 2147483648
  %v4531 = vxor.u32 %v4523, 2147483648
  %v4532 = vmul.f32 %v4530, 1.442695
  %v4533 = vpow.pop %v4532
  %v4534 = vmul.f32 %v4531, 1.442695
  %v4535 = vpow.pop %v4534
  %v4536 = vadd.f32 %v4533, 1.0
  %v4537 = vadd.f32 %v4535, 1.0
  %v4538 = vrcp.pop %v4536
  %v4539 = vmul.f32 1.0, %v4538
  %v4540 = vrcp.pop %v4537
  %v4541 = vmul.f32 1.0, %v4540
  %v4542 = vxor.u32 %v4524, 2147483648
  %v4543 = vxor.u32 %v4525, 2147483648
  %v4544 = vmul.f32 %v4542, 1.442695
  %v4545 = vpow.pop %v4544
  %v4546 = vmul.f32 %v4543, 1.442695
  %v4547 = vpow.pop %v4546
  %v4548 = vadd.f32 %v4545, 1.0
  %v4549 = vadd.f32 %v4547, 1.0
  %v4550 = vrcp.pop %v4548
  %v4551 = vmul.f32 1.0, %v4550
  %v4552 = vrcp.pop %v4549
  %v4553 = vmul.f32 1.0, %v4552
  %v4554 = vtanh.pop %v4526
  %v4555 = vtanh.pop %v4527
  %v4556 = vxor.u32 %v4528, 2147483648
  %v4557 = vxor.u32 %v4529, 2147483648
  %v4558 = vmul.f32 %v4556, 1.442695
  %v4559 = vpow.pop %v4558
  %v4560 = vmul.f32 %v4557, 1.442695
  %v4561 = vpow.pop %v4560
  %v4562 = vadd.f32 %v4559, 1.0
  %v4563 = vadd.f32 %v4561, 1.0
  %v4564 = vrcp.pop %v4562
  %v4565 = vmul.f32 1.0, %v4564
  %v4566 = vrcp.pop %v4563
  %v4567 = vmul.f32 1.0, %v4566
  %v4568 = vmul.f32 %v4551, %v3661
  %v4569 = vmul.f32 %v4553, %v3662
  %v4570 = vmul.f32 %v4539, %v4554
  %v4571 = vmul.f32 %v4541, %v4555
  %v4572 = vadd.f32 %v4568, %v4570
  %v4573 = vadd.f32 %v4569, %v4571
  %v4574 = vtanh.pop %v4572
  %v4575 = vtanh.pop %v4573
  %v4576 = vmul.f32 %v4565, %v4574
  %v4577 = vmul.f32 %v4567, %v4575
  %4578 = vmatprep.subr.mxu0 %v3675
  %4579 = vmatpush1.msra.mxu0 %v3674
  %4580 = vmatprep.subr.mxu0 %v3683
  %4581 = vmatpush1.msra.mxu0 %v3682
  %4582 = vmatprep.subr.mxu0 %v3691
  %4583 = vmatpush1.msra.mxu0 %v3690
  %4584 = vmatprep.subr.mxu0 %v3699
  %4585 = vmatpush1.msra.mxu0 %v3698
  %4586 = vmatprep.subr.mxu0 %v3707
  %4587 = vmatpush1.msra.mxu0 %v3706
  %4588 = vmatprep.subr.mxu0 %v3715
  %4589 = vmatpush1.msra.mxu0 %v3714
  %4590 = vmatprep.subr.mxu0 %v3723
  %4591 = vmatpush1.msra.mxu0 %v3722
  %4592 = vmatprep.subr.mxu0 %v3731
  %4593 = vmatpush1.msra.mxu0 %v3730
  %4594 = vmatprep.subr.mxu0 %v3739
  %4595 = vmatpush1.msra.mxu0 %v3738
  %4596 = vmatprep.subr.mxu0 %v3747
  %4597 = vmatpush1.msra.mxu0 %v3746
  %4598 = vmatprep.subr.mxu0 %v3755
  %4599 = vmatpush1.msra.mxu0 %v3754
  %4600 = vmatprep.subr.mxu0 %v3763
  %4601 = vmatpush1.msra.mxu0 %v3762
  %4602 = vmatprep.subr.mxu0 %v3771
  %4603 = vmatpush1.msra.mxu0 %v3770
  %4604 = vmatprep.subr.mxu0 %v3779
  %4605 = vmatpush1.msra.mxu0 %v3778
  %4606 = vmatprep.subr.mxu0 %v3787
  %4607 = vmatpush1.msra.mxu0 %v3786
  %4608 = vmatprep.subr.mxu0 %v3795
  %4609 = vmatpush1.msra.mxu0 %v3794
  %4610 = vmatprep.subr.mxu0 %v3803
  %4611 = vmatpush1.msra.mxu0 %v3802
  %4612 = vmatprep.subr.mxu0 %v3811
  %4613 = vmatpush1.msra.mxu0 %v3810
  %4614 = vmatprep.subr.mxu0 %v3819
  %4615 = vmatpush1.msra.mxu0 %v3818
  %4616 = vmatprep.subr.mxu0 %v3827
  %4617 = vmatpush1.msra.mxu0 %v3826
  %4618 = vmatprep.subr.mxu0 %v3835
  %4619 = vmatpush1.msra.mxu0 %v3834
  %4620 = vmatprep.subr.mxu0 %v3843
  %4621 = vmatpush1.msra.mxu0 %v3842
  %4622 = vmatprep.subr.mxu0 %v3851
  %4623 = vmatpush1.msra.mxu0 %v3850
  %4624 = vmatprep.subr.mxu0 %v3859
  %4625 = vmatpush1.msra.mxu0 %v3858
  %4626 = vmatprep.subr.mxu0 %v3867
  %4627 = vmatpush1.msra.mxu0 %v3866
  %4628 = vmatprep.subr.mxu0 %v3875
  %4629 = vmatpush1.msra.mxu0 %v3874
  %4630 = vmatprep.subr.mxu0 %v3883
  %4631 = vmatpush1.msra.mxu0 %v3882
  %4632 = vmatprep.subr.mxu0 %v3891
  %4633 = vmatpush1.msra.mxu0 %v3890
  %4634 = vmatprep.subr.mxu0 %v3899
  %4635 = vmatpush1.msra.mxu0 %v3898
  %4636 = vmatprep.subr.mxu0 %v3907
  %4637 = vmatpush1.msra.mxu0 %v3906
  %4638 = vmatprep.subr.mxu0 %v3915
  %4639 = vmatpush1.msra.mxu0 %v3914
  %4640 = vmatprep.subr.mxu0 %v3923
  %4641 = vmatpush1.msra.mxu0 %v3922
  %4642 = vmatprep.mubr.f32.mxu0 %v4577
  %4643 = vmatmul.mubr.f32.gmra.mrb[0].mxu0 %v4576
  %v4644 = vpop.f32.mrb[0].mxu0
  %v4645 = vadd.f32 %v4086, %v4644
  %v4646 = vpop.f32.mrb[0].mxu0
  %v4647 = vadd.f32 %v4090, %v4646
  %4648 = vdwg.mxu0
  %4649 = vmatprep.subr.mxu0 %v3677
  %4650 = vmatpush1.msra.mxu0 %v3676
  %4651 = vmatprep.subr.mxu0 %v3685
  %4652 = vmatpush1.msra.mxu0 %v3684
  %4653 = vmatprep.subr.mxu0 %v3693
  %4654 = vmatpush1.msra.mxu0 %v3692
  %4655 = vmatprep.subr.mxu0 %v3701
  %4656 = vmatpush1.msra.mxu0 %v3700
  %4657 = vmatprep.subr.mxu0 %v3709
  %4658 = vmatpush1.msra.mxu0 %v3708
  %4659 = vmatprep.subr.mxu0 %v3717
  %4660 = vmatpush1.msra.mxu0 %v3716
  %4661 = vmatprep.subr.mxu0 %v3725
  %4662 = vmatpush1.msra.mxu0 %v3724
  %4663 = vmatprep.subr.mxu0 %v3733
  %4664 = vmatpush1.msra.mxu0 %v3732
  %4665 = vmatprep.subr.mxu0 %v3741
  %4666 = vmatpush1.msra.mxu0 %v3740
  %4667 = vmatprep.subr.mxu0 %v3749
  %4668 = vmatpush1.msra.mxu0 %v3748
  %4669 = vmatprep.subr.mxu0 %v3757
  %4670 = vmatpush1.msra.mxu0 %v3756
  %4671 = vmatprep.subr.mxu0 %v3765
  %4672 = vmatpush1.msra.mxu0 %v3764
  %4673 = vmatprep.subr.mxu0 %v3773
  %4674 = vmatpush1.msra.mxu0 %v3772
  %4675 = vmatprep.subr.mxu0 %v3781
  %4676 = vmatpush1.msra.mxu0 %v3780
  %4677 = vmatprep.subr.mxu0 %v3789
  %4678 = vmatpush1.msra.mxu0 %v3788
  %4679 = vmatprep.subr.mxu0 %v3797
  %4680 = vmatpush1.msra.mxu0 %v3796
  %4681 = vmatprep.subr.mxu0 %v3805
  %4682 = vmatpush1.msra.mxu0 %v3804
  %4683 = vmatprep.subr.mxu0 %v3813
  %4684 = vmatpush1.msra.mxu0 %v3812
  %4685 = vmatprep.subr.mxu0 %v3821
  %4686 = vmatpush1.msra.mxu0 %v3820
  %4687 = vmatprep.subr.mxu0 %v3829
  %4688 = vmatpush1.msra.mxu0 %v3828
  %4689 = vmatprep.subr.mxu0 %v3837
  %4690 = vmatpush1.msra.mxu0 %v3836
  %4691 = vmatprep.subr.mxu0 %v3845
  %4692 = vmatpush1.msra.mxu0 %v3844
  %4693 = vmatprep.subr.mxu0 %v3853
  %4694 = vmatpush1.msra.mxu0 %v3852
  %4695 = vmatprep.subr.mxu0 %v3861
  %4696 = vmatpush1.msra.mxu0 %v3860
  %4697 = vmatprep.subr.mxu0 %v3869
  %4698 = vmatpush1.msra.mxu0 %v3868
  %4699 = vmatprep.subr.mxu0 %v3877
  %4700 = vmatpush1.msra.mxu0 %v3876
  %4701 = vmatprep.subr.mxu0 %v3885
  %4702 = vmatpush1.msra.mxu0 %v3884
  %4703 = vmatprep.subr.mxu0 %v3893
  %4704 = vmatpush1.msra.mxu0 %v3892
  %4705 = vmatprep.subr.mxu0 %v3901
  %4706 = vmatpush1.msra.mxu0 %v3900
  %4707 = vmatprep.subr.mxu0 %v3909
  %4708 = vmatpush1.msra.mxu0 %v3908
  %4709 = vmatprep.subr.mxu0 %v3917
  %4710 = vmatpush1.msra.mxu0 %v3916
  %4711 = vmatprep.subr.mxu0 %v3925
  %4712 = vmatpush1.msra.mxu0 %v3924
  %4713 = vmatprep.mubr.f32.mxu0 %v4577
  %4714 = vmatmul.mubr.f32.gmra.mrb[0].mxu0 %v4576
  %v4715 = vpop.f32.mrb[0].mxu0
  %v4716 = vadd.f32 %v4094, %v4715
  %v4717 = vpop.f32.mrb[0].mxu0
  %v4718 = vadd.f32 %v4098, %v4717
  %4719 = vdwg.mxu0
  %4720 = vmatprep.subr.mxu0 %v3679
  %4721 = vmatpush1.msra.mxu0 %v3678
  %4722 = vmatprep.subr.mxu0 %v3687
  %4723 = vmatpush1.msra.mxu0 %v3686
  %4724 = vmatprep.subr.mxu0 %v3695
  %4725 = vmatpush1.msra.mxu0 %v3694
  %4726 = vmatprep.subr.mxu0 %v3703
  %4727 = vmatpush1.msra.mxu0 %v3702
  %4728 = vmatprep.subr.mxu0 %v3711
  %4729 = vmatpush1.msra.mxu0 %v3710
  %4730 = vmatprep.subr.mxu0 %v3719
  %4731 = vmatpush1.msra.mxu0 %v3718
  %4732 = vmatprep.subr.mxu0 %v3727
  %4733 = vmatpush1.msra.mxu0 %v3726
  %4734 = vmatprep.subr.mxu0 %v3735
  %4735 = vmatpush1.msra.mxu0 %v3734
  %4736 = vmatprep.subr.mxu0 %v3743
  %4737 = vmatpush1.msra.mxu0 %v3742
  %4738 = vmatprep.subr.mxu0 %v3751
  %4739 = vmatpush1.msra.mxu0 %v3750
  %4740 = vmatprep.subr.mxu0 %v3759
  %4741 = vmatpush1.msra.mxu0 %v3758
  %4742 = vmatprep.subr.mxu0 %v3767
  %4743 = vmatpush1.msra.mxu0 %v3766
  %4744 = vmatprep.subr.mxu0 %v3775
  %4745 = vmatpush1.msra.mxu0 %v3774
  %4746 = vmatprep.subr.mxu0 %v3783
  %4747 = vmatpush1.msra.mxu0 %v3782
  %4748 = vmatprep.subr.mxu0 %v3791
  %4749 = vmatpush1.msra.mxu0 %v3790
  %4750 = vmatprep.subr.mxu0 %v3799
  %4751 = vmatpush1.msra.mxu0 %v3798
  %4752 = vmatprep.subr.mxu0 %v3807
  %4753 = vmatpush1.msra.mxu0 %v3806
  %4754 = vmatprep.subr.mxu0 %v3815
  %4755 = vmatpush1.msra.mxu0 %v3814
  %4756 = vmatprep.subr.mxu0 %v3823
  %4757 = vmatpush1.msra.mxu0 %v3822
  %4758 = vmatprep.subr.mxu0 %v3831
  %4759 = vmatpush1.msra.mxu0 %v3830
  %4760 = vmatprep.subr.mxu0 %v3839
  %4761 = vmatpush1.msra.mxu0 %v3838
  %4762 = vmatprep.subr.mxu0 %v3847
  %4763 = vmatpush1.msra.mxu0 %v3846
  %4764 = vmatprep.subr.mxu0 %v3855
  %4765 = vmatpush1.msra.mxu0 %v3854
  %4766 = vmatprep.subr.mxu0 %v3863
  %4767 = vmatpush1.msra.mxu0 %v3862
  %4768 = vmatprep.subr.mxu0 %v3871
  %4769 = vmatpush1.msra.mxu0 %v3870
  %4770 = vmatprep.subr.mxu0 %v3879
  %4771 = vmatpush1.msra.mxu0 %v3878
  %4772 = vmatprep.subr.mxu0 %v3887
  %4773 = vmatpush1.msra.mxu0 %v3886
  %4774 = vmatprep.subr.mxu0 %v3895
  %4775 = vmatpush1.msra.mxu0 %v3894
  %4776 = vmatprep.subr.mxu0 %v3903
  %4777 = vmatpush1.msra.mxu0 %v3902
  %4778 = vmatprep.subr.mxu0 %v3911
  %4779 = vmatpush1.msra.mxu0 %v3910
  %4780 = vmatprep.subr.mxu0 %v3919
  %4781 = vmatpush1.msra.mxu0 %v3918
  %4782 = vmatprep.subr.mxu0 %v3927
  %4783 = vmatpush1.msra.mxu0 %v3926
  %4784 = vmatprep.mubr.f32.mxu0 %v4577
  %4785 = vmatmul.mubr.f32.gmra.mrb[0].mxu0 %v4576
  %v4786 = vpop.f32.mrb[0].mxu0
  %v4787 = vadd.f32 %v4102, %v4786
  %v4788 = vpop.f32.mrb[0].mxu0
  %v4789 = vadd.f32 %v4106, %v4788
  %4790 = vdwg.mxu0
  %4791 = vmatprep.subr.mxu0 %v3681
  %4792 = vmatpush1.msra.mxu0 %v3680
  %4793 = vmatprep.subr.mxu0 %v3689
  %4794 = vmatpush1.msra.mxu0 %v3688
  %4795 = vmatprep.subr.mxu0 %v3697
  %4796 = vmatpush1.msra.mxu0 %v3696
  %4797 = vmatprep.subr.mxu0 %v3705
  %4798 = vmatpush1.msra.mxu0 %v3704
  %4799 = vmatprep.subr.mxu0 %v3713
  %4800 = vmatpush1.msra.mxu0 %v3712
  %4801 = vmatprep.subr.mxu0 %v3721
  %4802 = vmatpush1.msra.mxu0 %v3720
  %4803 = vmatprep.subr.mxu0 %v3729
  %4804 = vmatpush1.msra.mxu0 %v3728
  %4805 = vmatprep.subr.mxu0 %v3737
  %4806 = vmatpush1.msra.mxu0 %v3736
  %4807 = vmatprep.subr.mxu0 %v3745
  %4808 = vmatpush1.msra.mxu0 %v3744
  %4809 = vmatprep.subr.mxu0 %v3753
  %4810 = vmatpush1.msra.mxu0 %v3752
  %4811 = vmatprep.subr.mxu0 %v3761
  %4812 = vmatpush1.msra.mxu0 %v3760
  %4813 = vmatprep.subr.mxu0 %v3769
  %4814 = vmatpush1.msra.mxu0 %v3768
  %4815 = vmatprep.subr.mxu0 %v3777
  %4816 = vmatpush1.msra.mxu0 %v3776
  %4817 = vmatprep.subr.mxu0 %v3785
  %4818 = vmatpush1.msra.mxu0 %v3784
  %4819 = vmatprep.subr.mxu0 %v3793
  %4820 = vmatpush1.msra.mxu0 %v3792
  %4821 = vmatprep.subr.mxu0 %v3801
  %4822 = vmatpush1.msra.mxu0 %v3800
  %4823 = vmatprep.subr.mxu0 %v3809
  %4824 = vmatpush1.msra.mxu0 %v3808
  %4825 = vmatprep.subr.mxu0 %v3817
  %4826 = vmatpush1.msra.mxu0 %v3816
  %4827 = vmatprep.subr.mxu0 %v3825
  %4828 = vmatpush1.msra.mxu0 %v3824
  %4829 = vmatprep.subr.mxu0 %v3833
  %4830 = vmatpush1.msra.mxu0 %v3832
  %4831 = vmatprep.subr.mxu0 %v3841
  %4832 = vmatpush1.msra.mxu0 %v3840
  %4833 = vmatprep.subr.mxu0 %v3849
  %4834 = vmatpush1.msra.mxu0 %v3848
  %4835 = vmatprep.subr.mxu0 %v3857
  %4836 = vmatpush1.msra.mxu0 %v3856
  %4837 = vmatprep.subr.mxu0 %v3865
  %4838 = vmatpush1.msra.mxu0 %v3864
  %4839 = vmatprep.subr.mxu0 %v3873
  %4840 = vmatpush1.msra.mxu0 %v3872
  %4841 = vmatprep.subr.mxu0 %v3881
  %4842 = vmatpush1.msra.mxu0 %v3880
  %4843 = vmatprep.subr.mxu0 %v3889
  %4844 = vmatpush1.msra.mxu0 %v3888
  %4845 = vmatprep.subr.mxu0 %v3897
  %4846 = vmatpush1.msra.mxu0 %v3896
  %4847 = vmatprep.subr.mxu0 %v3905
  %4848 = vmatpush1.msra.mxu0 %v3904
  %4849 = vmatprep.subr.mxu0 %v3913
  %4850 = vmatpush1.msra.mxu0 %v3912
  %4851 = vmatprep.subr.mxu0 %v3921
  %4852 = vmatpush1.msra.mxu0 %v3920
  %4853 = vmatprep.subr.mxu0 %v3929
  %4854 = vmatpush1.msra.mxu0 %v3928
  %4855 = vmatprep.mubr.f32.mxu0 %v4577
  %4856 = vmatmul.mubr.f32.gmra.mrb[0].mxu0 %v4576
  %v4857 = vpop.f32.mrb[0].mxu0
  %v4858 = vadd.f32 %v4110, %v4857
  %v4859 = vpop.f32.mrb[0].mxu0
  %v4860 = vadd.f32 %v4114, %v4859
  %4861 = vdwg.mxu0
  %v4862 = vxor.u32 %v4645, 2147483648
  %v4863 = vxor.u32 %v4647, 2147483648
  %v4864 = vmul.f32 %v4862, 1.442695
  %v4865 = vpow.pop %v4864
  %v4866 = vmul.f32 %v4863, 1.442695
  %v4867 = vpow.pop %v4866
  %v4868 = vadd.f32 %v4865, 1.0
  %v4869 = vadd.f32 %v4867, 1.0
  %v4870 = vrcp.pop %v4868
  %v4871 = vmul.f32 1.0, %v4870
  %v4872 = vrcp.pop %v4869
  %v4873 = vmul.f32 1.0, %v4872
  %v4874 = vxor.u32 %v4716, 2147483648
  %v4875 = vxor.u32 %v4718, 2147483648
  %v4876 = vmul.f32 %v4874, 1.442695
  %v4877 = vpow.pop %v4876
  %v4878 = vmul.f32 %v4875, 1.442695
  %v4879 = vpow.pop %v4878
  %v4880 = vadd.f32 %v4877, 1.0
  %v4881 = vadd.f32 %v4879, 1.0
  %v4882 = vrcp.pop %v4880
  %v4883 = vmul.f32 1.0, %v4882
  %v4884 = vrcp.pop %v4881
  %v4885 = vmul.f32 1.0, %v4884
  %v4886 = vtanh.pop %v4787
  %v4887 = vtanh.pop %v4789
  %v4888 = vxor.u32 %v4858, 2147483648
  %v4889 = vxor.u32 %v4860, 2147483648
  %v4890 = vmul.f32 %v4888, 1.442695
  %v4891 = vpow.pop %v4890
  %v4892 = vmul.f32 %v4889, 1.442695
  %v4893 = vpow.pop %v4892
  %v4894 = vadd.f32 %v4891, 1.0
  %v4895 = vadd.f32 %v4893, 1.0
  %v4896 = vrcp.pop %v4894
  %v4897 = vmul.f32 1.0, %v4896
  %v4898 = vrcp.pop %v4895
  %v4899 = vmul.f32 1.0, %v4898
  %v4900 = vmul.f32 %v4883, %v4572
  %v4901 = vmul.f32 %v4885, %v4573
  %v4902 = vmul.f32 %v4871, %v4886
  %v4903 = vmul.f32 %v4873, %v4887
  %v4904 = vadd.f32 %v4900, %v4902
  %v4905 = vadd.f32 %v4901, %v4903
  %v4906 = vtanh.pop %v4904
  %v4907 = vtanh.pop %v4905
  %v4908 = vmul.f32 %v4897, %v4906
  %v4909 = vmul.f32 %v4899, %v4907
  %4910 = vmatprep.subr.mxu0 %v3675
  %4911 = vmatpush1.msra.mxu0 %v3674
  %4912 = vmatprep.subr.mxu0 %v3683
  %4913 = vmatpush1.msra.mxu0 %v3682
  %4914 = vmatprep.subr.mxu0 %v3691
  %4915 = vmatpush1.msra.mxu0 %v3690
  %4916 = vmatprep.subr.mxu0 %v3699
  %4917 = vmatpush1.msra.mxu0 %v3698
  %4918 = vmatprep.subr.mxu0 %v3707
  %4919 = vmatpush1.msra.mxu0 %v3706
  %4920 = vmatprep.subr.mxu0 %v3715
  %4921 = vmatpush1.msra.mxu0 %v3714
  %4922 = vmatprep.subr.mxu0 %v3723
  %4923 = vmatpush1.msra.mxu0 %v3722
  %4924 = vmatprep.subr.mxu0 %v3731
  %4925 = vmatpush1.msra.mxu0 %v3730
  %4926 = vmatprep.subr.mxu0 %v3739
  %4927 = vmatpush1.msra.mxu0 %v3738
  %4928 = vmatprep.subr.mxu0 %v3747
  %4929 = vmatpush1.msra.mxu0 %v3746
  %4930 = vmatprep.subr.mxu0 %v3755
  %4931 = vmatpush1.msra.mxu0 %v3754
  %4932 = vmatprep.subr.mxu0 %v3763
  %4933 = vmatpush1.msra.mxu0 %v3762
  %4934 = vmatprep.subr.mxu0 %v3771
  %4935 = vmatpush1.msra.mxu0 %v3770
  %4936 = vmatprep.subr.mxu0 %v3779
  %4937 = vmatpush1.msra.mxu0 %v3778
  %4938 = vmatprep.subr.mxu0 %v3787
  %4939 = vmatpush1.msra.mxu0 %v3786
  %4940 = vmatprep.subr.mxu0 %v3795
  %4941 = vmatpush1.msra.mxu0 %v3794
  %4942 = vmatprep.subr.mxu0 %v3803
  %4943 = vmatpush1.msra.mxu0 %v3802
  %4944 = vmatprep.subr.mxu0 %v3811
  %4945 = vmatpush1.msra.mxu0 %v3810
  %4946 = vmatprep.subr.mxu0 %v3819
  %4947 = vmatpush1.msra.mxu0 %v3818
  %4948 = vmatprep.subr.mxu0 %v3827
  %4949 = vmatpush1.msra.mxu0 %v3826
  %4950 = vmatprep.subr.mxu0 %v3835
  %4951 = vmatpush1.msra.mxu0 %v3834
  %4952 = vmatprep.subr.mxu0 %v3843
  %4953 = vmatpush1.msra.mxu0 %v3842
  %4954 = vmatprep.subr.mxu0 %v3851
  %4955 = vmatpush1.msra.mxu0 %v3850
  %4956 = vmatprep.subr.mxu0 %v3859
  %4957 = vmatpush1.msra.mxu0 %v3858
  %4958 = vmatprep.subr.mxu0 %v3867
  %4959 = vmatpush1.msra.mxu0 %v3866
  %4960 = vmatprep.subr.mxu0 %v3875
  %4961 = vmatpush1.msra.mxu0 %v3874
  %4962 = vmatprep.subr.mxu0 %v3883
  %4963 = vmatpush1.msra.mxu0 %v3882
  %4964 = vmatprep.subr.mxu0 %v3891
  %4965 = vmatpush1.msra.mxu0 %v3890
  %4966 = vmatprep.subr.mxu0 %v3899
  %4967 = vmatpush1.msra.mxu0 %v3898
  %4968 = vmatprep.subr.mxu0 %v3907
  %4969 = vmatpush1.msra.mxu0 %v3906
  %4970 = vmatprep.subr.mxu0 %v3915
  %4971 = vmatpush1.msra.mxu0 %v3914
  %4972 = vmatprep.subr.mxu0 %v3923
  %4973 = vmatpush1.msra.mxu0 %v3922
  %4974 = vmatprep.mubr.f32.mxu0 %v4909
  %4975 = vmatmul.mubr.f32.gmra.mrb[0].mxu0 %v4908
  %v4976 = vpop.f32.mrb[0].mxu0
  %v4977 = vadd.f32 %v4086, %v4976
  %v4978 = vpop.f32.mrb[0].mxu0
  %v4979 = vadd.f32 %v4090, %v4978
  %4980 = vdwg.mxu0
  %4981 = vmatprep.subr.mxu0 %v3677
  %4982 = vmatpush1.msra.mxu0 %v3676
  %4983 = vmatprep.subr.mxu0 %v3685
  %4984 = vmatpush1.msra.mxu0 %v3684
  %4985 = vmatprep.subr.mxu0 %v3693
  %4986 = vmatpush1.msra.mxu0 %v3692
  %4987 = vmatprep.subr.mxu0 %v3701
  %4988 = vmatpush1.msra.mxu0 %v3700
  %4989 = vmatprep.subr.mxu0 %v3709
  %4990 = vmatpush1.msra.mxu0 %v3708
  %4991 = vmatprep.subr.mxu0 %v3717
  %4992 = vmatpush1.msra.mxu0 %v3716
  %4993 = vmatprep.subr.mxu0 %v3725
  %4994 = vmatpush1.msra.mxu0 %v3724
  %4995 = vmatprep.subr.mxu0 %v3733
  %4996 = vmatpush1.msra.mxu0 %v3732
  %4997 = vmatprep.subr.mxu0 %v3741
  %4998 = vmatpush1.msra.mxu0 %v3740
  %4999 = vmatprep.subr.mxu0 %v3749
  %5000 = vmatpush1.msra.mxu0 %v3748
  %5001 = vmatprep.subr.mxu0 %v3757
  %5002 = vmatpush1.msra.mxu0 %v3756
  %5003 = vmatprep.subr.mxu0 %v3765
  %5004 = vmatpush1.msra.mxu0 %v3764
  %5005 = vmatprep.subr.mxu0 %v3773
  %5006 = vmatpush1.msra.mxu0 %v3772
  %5007 = vmatprep.subr.mxu0 %v3781
  %5008 = vmatpush1.msra.mxu0 %v3780
  %5009 = vmatprep.subr.mxu0 %v3789
  %5010 = vmatpush1.msra.mxu0 %v3788
  %5011 = vmatprep.subr.mxu0 %v3797
  %5012 = vmatpush1.msra.mxu0 %v3796
  %5013 = vmatprep.subr.mxu0 %v3805
  %5014 = vmatpush1.msra.mxu0 %v3804
  %5015 = vmatprep.subr.mxu0 %v3813
  %5016 = vmatpush1.msra.mxu0 %v3812
  %5017 = vmatprep.subr.mxu0 %v3821
  %5018 = vmatpush1.msra.mxu0 %v3820
  %5019 = vmatprep.subr.mxu0 %v3829
  %5020 = vmatpush1.msra.mxu0 %v3828
  %5021 = vmatprep.subr.mxu0 %v3837
  %5022 = vmatpush1.msra.mxu0 %v3836
  %5023 = vmatprep.subr.mxu0 %v3845
  %5024 = vmatpush1.msra.mxu0 %v3844
  %5025 = vmatprep.subr.mxu0 %v3853
  %5026 = vmatpush1.msra.mxu0 %v3852
  %5027 = vmatprep.subr.mxu0 %v3861
  %5028 = vmatpush1.msra.mxu0 %v3860
  %5029 = vmatprep.subr.mxu0 %v3869
  %5030 = vmatpush1.msra.mxu0 %v3868
  %5031 = vmatprep.subr.mxu0 %v3877
  %5032 = vmatpush1.msra.mxu0 %v3876
  %5033 = vmatprep.subr.mxu0 %v3885
  %5034 = vmatpush1.msra.mxu0 %v3884
  %5035 = vmatprep.subr.mxu0 %v3893
  %5036 = vmatpush1.msra.mxu0 %v3892
  %5037 = vmatprep.subr.mxu0 %v3901
  %5038 = vmatpush1.msra.mxu0 %v3900
  %5039 = vmatprep.subr.mxu0 %v3909
  %5040 = vmatpush1.msra.mxu0 %v3908
  %5041 = vmatprep.subr.mxu0 %v3917
  %5042 = vmatpush1.msra.mxu0 %v3916
  %5043 = vmatprep.subr.mxu0 %v3925
  %5044 = vmatpush1.msra.mxu0 %v3924
  %5045 = vmatprep.mubr.f32.mxu0 %v4909
  %5046 = vmatmul.mubr.f32.gmra.mrb[0].mxu0 %v4908
  %v5047 = vpop.f32.mrb[0].mxu0
  %v5048 = vadd.f32 %v4094, %v5047
  %v5049 = vpop.f32.mrb[0].mxu0
  %v5050 = vadd.f32 %v4098, %v5049
  %5051 = vdwg.mxu0
  %5052 = vmatprep.subr.mxu0 %v3679
  %5053 = vmatpush1.msra.mxu0 %v3678
  %5054 = vmatprep.subr.mxu0 %v3687
  %5055 = vmatpush1.msra.mxu0 %v3686
  %5056 = vmatprep.subr.mxu0 %v3695
  %5057 = vmatpush1.msra.mxu0 %v3694
  %5058 = vmatprep.subr.mxu0 %v3703
  %5059 = vmatpush1.msra.mxu0 %v3702
  %5060 = vmatprep.subr.mxu0 %v3711
  %5061 = vmatpush1.msra.mxu0 %v3710
  %5062 = vmatprep.subr.mxu0 %v3719
  %5063 = vmatpush1.msra.mxu0 %v3718
  %5064 = vmatprep.subr.mxu0 %v3727
  %5065 = vmatpush1.msra.mxu0 %v3726
  %5066 = vmatprep.subr.mxu0 %v3735
  %5067 = vmatpush1.msra.mxu0 %v3734
  %5068 = vmatprep.subr.mxu0 %v3743
  %5069 = vmatpush1.msra.mxu0 %v3742
  %5070 = vmatprep.subr.mxu0 %v3751
  %5071 = vmatpush1.msra.mxu0 %v3750
  %5072 = vmatprep.subr.mxu0 %v3759
  %5073 = vmatpush1.msra.mxu0 %v3758
  %5074 = vmatprep.subr.mxu0 %v3767
  %5075 = vmatpush1.msra.mxu0 %v3766
  %5076 = vmatprep.subr.mxu0 %v3775
  %5077 = vmatpush1.msra.mxu0 %v3774
  %5078 = vmatprep.subr.mxu0 %v3783
  %5079 = vmatpush1.msra.mxu0 %v3782
  %5080 = vmatprep.subr.mxu0 %v3791
  %5081 = vmatpush1.msra.mxu0 %v3790
  %5082 = vmatprep.subr.mxu0 %v3799
  %5083 = vmatpush1.msra.mxu0 %v3798
  %5084 = vmatprep.subr.mxu0 %v3807
  %5085 = vmatpush1.msra.mxu0 %v3806
  %5086 = vmatprep.subr.mxu0 %v3815
  %5087 = vmatpush1.msra.mxu0 %v3814
  %5088 = vmatprep.subr.mxu0 %v3823
  %5089 = vmatpush1.msra.mxu0 %v3822
  %5090 = vmatprep.subr.mxu0 %v3831
  %5091 = vmatpush1.msra.mxu0 %v3830
  %5092 = vmatprep.subr.mxu0 %v3839
  %5093 = vmatpush1.msra.mxu0 %v3838
  %5094 = vmatprep.subr.mxu0 %v3847
  %5095 = vmatpush1.msra.mxu0 %v3846
  %5096 = vmatprep.subr.mxu0 %v3855
  %5097 = vmatpush1.msra.mxu0 %v3854
  %5098 = vmatprep.subr.mxu0 %v3863
  %5099 = vmatpush1.msra.mxu0 %v3862
  %5100 = vmatprep.subr.mxu0 %v3871
  %5101 = vmatpush1.msra.mxu0 %v3870
  %5102 = vmatprep.subr.mxu0 %v3879
  %5103 = vmatpush1.msra.mxu0 %v3878
  %5104 = vmatprep.subr.mxu0 %v3887
  %5105 = vmatpush1.msra.mxu0 %v3886
  %5106 = vmatprep.subr.mxu0 %v3895
  %5107 = vmatpush1.msra.mxu0 %v3894
  %5108 = vmatprep.subr.mxu0 %v3903
  %5109 = vmatpush1.msra.mxu0 %v3902
  %5110 = vmatprep.subr.mxu0 %v3911
  %5111 = vmatpush1.msra.mxu0 %v3910
  %5112 = vmatprep.subr.mxu0 %v3919
  %5113 = vmatpush1.msra.mxu0 %v3918
  %5114 = vmatprep.subr.mxu0 %v3927
  %5115 = vmatpush1.msra.mxu0 %v3926
  %5116 = vmatprep.mubr.f32.mxu0 %v4909
  %5117 = vmatmul.mubr.f32.gmra.mrb[0].mxu0 %v4908
  %v5118 = vpop.f32.mrb[0].mxu0
  %v5119 = vadd.f32 %v4102, %v5118
  %v5120 = vpop.f32.mrb[0].mxu0
  %v5121 = vadd.f32 %v4106, %v5120
  %5122 = vdwg.mxu0
  %5123 = vmatprep.subr.mxu0 %v3681
  %5124 = vmatpush1.msra.mxu0 %v3680
  %5125 = vmatprep.subr.mxu0 %v3689
  %5126 = vmatpush1.msra.mxu0 %v3688
  %5127 = vmatprep.subr.mxu0 %v3697
  %5128 = vmatpush1.msra.mxu0 %v3696
  %5129 = vmatprep.subr.mxu0 %v3705
  %5130 = vmatpush1.msra.mxu0 %v3704
  %5131 = vmatprep.subr.mxu0 %v3713
  %5132 = vmatpush1.msra.mxu0 %v3712
  %5133 = vmatprep.subr.mxu0 %v3721
  %5134 = vmatpush1.msra.mxu0 %v3720
  %5135 = vmatprep.subr.mxu0 %v3729
  %5136 = vmatpush1.msra.mxu0 %v3728
  %5137 = vmatprep.subr.mxu0 %v3737
  %5138 = vmatpush1.msra.mxu0 %v3736
  %5139 = vmatprep.subr.mxu0 %v3745
  %5140 = vmatpush1.msra.mxu0 %v3744
  %5141 = vmatprep.subr.mxu0 %v3753
  %5142 = vmatpush1.msra.mxu0 %v3752
  %5143 = vmatprep.subr.mxu0 %v3761
  %5144 = vmatpush1.msra.mxu0 %v3760
  %5145 = vmatprep.subr.mxu0 %v3769
  %5146 = vmatpush1.msra.mxu0 %v3768
  %5147 = vmatprep.subr.mxu0 %v3777
  %5148 = vmatpush1.msra.mxu0 %v3776
  %5149 = vmatprep.subr.mxu0 %v3785
  %5150 = vmatpush1.msra.mxu0 %v3784
  %5151 = vmatprep.subr.mxu0 %v3793
  %5152 = vmatpush1.msra.mxu0 %v3792
  %5153 = vmatprep.subr.mxu0 %v3801
  %5154 = vmatpush1.msra.mxu0 %v3800
  %5155 = vmatprep.subr.mxu0 %v3809
  %5156 = vmatpush1.msra.mxu0 %v3808
  %5157 = vmatprep.subr.mxu0 %v3817
  %5158 = vmatpush1.msra.mxu0 %v3816
  %5159 = vmatprep.subr.mxu0 %v3825
  %5160 = vmatpush1.msra.mxu0 %v3824
  %5161 = vmatprep.subr.mxu0 %v3833
  %5162 = vmatpush1.msra.mxu0 %v3832
  %5163 = vmatprep.subr.mxu0 %v3841
  %5164 = vmatpush1.msra.mxu0 %v3840
  %5165 = vmatprep.subr.mxu0 %v3849
  %5166 = vmatpush1.msra.mxu0 %v3848
  %5167 = vmatprep.subr.mxu0 %v3857
  %5168 = vmatpush1.msra.mxu0 %v3856
  %5169 = vmatprep.subr.mxu0 %v3865
  %5170 = vmatpush1.msra.mxu0 %v3864
  %5171 = vmatprep.subr.mxu0 %v3873
  %5172 = vmatpush1.msra.mxu0 %v3872
  %5173 = vmatprep.subr.mxu0 %v3881
  %5174 = vmatpush1.msra.mxu0 %v3880
  %5175 = vmatprep.subr.mxu0 %v3889
  %5176 = vmatpush1.msra.mxu0 %v3888
  %5177 = vmatprep.subr.mxu0 %v3897
  %5178 = vmatpush1.msra.mxu0 %v3896
  %5179 = vmatprep.subr.mxu0 %v3905
  %5180 = vmatpush1.msra.mxu0 %v3904
  %5181 = vmatprep.subr.mxu0 %v3913
  %5182 = vmatpush1.msra.mxu0 %v3912
  %5183 = vmatprep.subr.mxu0 %v3921
  %5184 = vmatpush1.msra.mxu0 %v3920
  %5185 = vmatprep.subr.mxu0 %v3929
  %5186 = vmatpush1.msra.mxu0 %v3928
  %5187 = vmatprep.mubr.f32.mxu0 %v4909
  %5188 = vmatmul.mubr.f32.gmra.mrb[0].mxu0 %v4908
  %v5189 = vpop.f32.mrb[0].mxu0
  %v5190 = vadd.f32 %v4110, %v5189
  %v5191 = vpop.f32.mrb[0].mxu0
  %v5192 = vadd.f32 %v4114, %v5191
  %5193 = vdwg.mxu0
  %v5194 = vxor.u32 %v4977, 2147483648
  %v5195 = vxor.u32 %v4979, 2147483648
  %v5196 = vmul.f32 %v5194, 1.442695
  %v5197 = vpow.pop %v5196
  %v5198 = vmul.f32 %v5195, 1.442695
  %v5199 = vpow.pop %v5198
  %v5200 = vadd.f32 %v5197, 1.0
  %v5201 = vadd.f32 %v5199, 1.0
  %v5202 = vrcp.pop %v5200
  %v5203 = vmul.f32 1.0, %v5202
  %v5204 = vrcp.pop %v5201
  %v5205 = vmul.f32 1.0, %v5204
  %v5206 = vxor.u32 %v5048, 2147483648
  %v5207 = vxor.u32 %v5050, 2147483648
  %v5208 = vmul.f32 %v5206, 1.442695
  %v5209 = vpow.pop %v5208
  %v5210 = vmul.f32 %v5207, 1.442695
  %v5211 = vpow.pop %v5210
  %v5212 = vadd.f32 %v5209, 1.0
  %v5213 = vadd.f32 %v5211, 1.0
  %v5214 = vrcp.pop %v5212
  %v5215 = vmul.f32 1.0, %v5214
  %v5216 = vrcp.pop %v5213
  %v5217 = vmul.f32 1.0, %v5216
  %v5218 = vtanh.pop %v5119
  %v5219 = vtanh.pop %v5121
  %v5220 = vxor.u32 %v5190, 2147483648
  %v5221 = vxor.u32 %v5192, 2147483648
  %v5222 = vmul.f32 %v5220, 1.442695
  %v5223 = vpow.pop %v5222
  %v5224 = vmul.f32 %v5221, 1.442695
  %v5225 = vpow.pop %v5224
  %v5226 = vadd.f32 %v5223, 1.0
  %v5227 = vadd.f32 %v5225, 1.0
  %v5228 = vrcp.pop %v5226
  %v5229 = vmul.f32 1.0, %v5228
  %v5230 = vrcp.pop %v5227
  %v5231 = vmul.f32 1.0, %v5230
  %v5232 = vmul.f32 %v5215, %v4904
  %v5233 = vmul.f32 %v5217, %v4905
  %v5234 = vmul.f32 %v5203, %v5218
  %v5235 = vmul.f32 %v5205, %v5219
  %v5236 = vadd.f32 %v5232, %v5234
  %v5237 = vadd.f32 %v5233, %v5235
  %v5238 = vtanh.pop %v5236
  %v5239 = vtanh.pop %v5237
  %v5240 = vmul.f32 %v5229, %v5238
  %v5241 = vmul.f32 %v5231, %v5239
  %5242 = vmatprep.subr.mxu0 %v3675
  %5243 = vmatpush1.msra.mxu0 %v3674
  %5244 = vmatprep.subr.mxu0 %v3683
  %5245 = vmatpush1.msra.mxu0 %v3682
  %5246 = vmatprep.subr.mxu0 %v3691
  %5247 = vmatpush1.msra.mxu0 %v3690
  %5248 = vmatprep.subr.mxu0 %v3699
  %5249 = vmatpush1.msra.mxu0 %v3698
  %5250 = vmatprep.subr.mxu0 %v3707
  %5251 = vmatpush1.msra.mxu0 %v3706
  %5252 = vmatprep.subr.mxu0 %v3715
  %5253 = vmatpush1.msra.mxu0 %v3714
  %5254 = vmatprep.subr.mxu0 %v3723
  %5255 = vmatpush1.msra.mxu0 %v3722
  %5256 = vmatprep.subr.mxu0 %v3731
  %5257 = vmatpush1.msra.mxu0 %v3730
  %5258 = vmatprep.subr.mxu0 %v3739
  %5259 = vmatpush1.msra.mxu0 %v3738
  %5260 = vmatprep.subr.mxu0 %v3747
  %5261 = vmatpush1.msra.mxu0 %v3746
  %5262 = vmatprep.subr.mxu0 %v3755
  %5263 = vmatpush1.msra.mxu0 %v3754
  %5264 = vmatprep.subr.mxu0 %v3763
  %5265 = vmatpush1.msra.mxu0 %v3762
  %5266 = vmatprep.subr.mxu0 %v3771
  %5267 = vmatpush1.msra.mxu0 %v3770
  %5268 = vmatprep.subr.mxu0 %v3779
  %5269 = vmatpush1.msra.mxu0 %v3778
  %5270 = vmatprep.subr.mxu0 %v3787
  %5271 = vmatpush1.msra.mxu0 %v3786
  %5272 = vmatprep.subr.mxu0 %v3795
  %5273 = vmatpush1.msra.mxu0 %v3794
  %5274 = vmatprep.subr.mxu0 %v3803
  %5275 = vmatpush1.msra.mxu0 %v3802
  %5276 = vmatprep.subr.mxu0 %v3811
  %5277 = vmatpush1.msra.mxu0 %v3810
  %5278 = vmatprep.subr.mxu0 %v3819
  %5279 = vmatpush1.msra.mxu0 %v3818
  %5280 = vmatprep.subr.mxu0 %v3827
  %5281 = vmatpush1.msra.mxu0 %v3826
  %5282 = vmatprep.subr.mxu0 %v3835
  %5283 = vmatpush1.msra.mxu0 %v3834
  %5284 = vmatprep.subr.mxu0 %v3843
  %5285 = vmatpush1.msra.mxu0 %v3842
  %5286 = vmatprep.subr.mxu0 %v3851
  %5287 = vmatpush1.msra.mxu0 %v3850
  %5288 = vmatprep.subr.mxu0 %v3859
  %5289 = vmatpush1.msra.mxu0 %v3858
  %5290 = vmatprep.subr.mxu0 %v3867
  %5291 = vmatpush1.msra.mxu0 %v3866
  %5292 = vmatprep.subr.mxu0 %v3875
  %5293 = vmatpush1.msra.mxu0 %v3874
  %5294 = vmatprep.subr.mxu0 %v3883
  %5295 = vmatpush1.msra.mxu0 %v3882
  %5296 = vmatprep.subr.mxu0 %v3891
  %5297 = vmatpush1.msra.mxu0 %v3890
  %5298 = vmatprep.subr.mxu0 %v3899
  %5299 = vmatpush1.msra.mxu0 %v3898
  %5300 = vmatprep.subr.mxu0 %v3907
  %5301 = vmatpush1.msra.mxu0 %v3906
  %5302 = vmatprep.subr.mxu0 %v3915
  %5303 = vmatpush1.msra.mxu0 %v3914
  %5304 = vmatprep.subr.mxu0 %v3923
  %5305 = vmatpush1.msra.mxu0 %v3922
  %5306 = vmatprep.mubr.f32.mxu0 %v5241
  %5307 = vmatmul.mubr.f32.gmra.mrb[0].mxu0 %v5240
  %v5308 = vpop.f32.mrb[0].mxu0
  %v5309 = vadd.f32 %v4086, %v5308
  %v5310 = vpop.f32.mrb[0].mxu0
  %v5311 = vadd.f32 %v4090, %v5310
  %5312 = vdwg.mxu0
  %5313 = vmatprep.subr.mxu0 %v3677
  %5314 = vmatpush1.msra.mxu0 %v3676
  %5315 = vmatprep.subr.mxu0 %v3685
  %5316 = vmatpush1.msra.mxu0 %v3684
  %5317 = vmatprep.subr.mxu0 %v3693
  %5318 = vmatpush1.msra.mxu0 %v3692
  %5319 = vmatprep.subr.mxu0 %v3701
  %5320 = vmatpush1.msra.mxu0 %v3700
  %5321 = vmatprep.subr.mxu0 %v3709
  %5322 = vmatpush1.msra.mxu0 %v3708
  %5323 = vmatprep.subr.mxu0 %v3717
  %5324 = vmatpush1.msra.mxu0 %v3716
  %5325 = vmatprep.subr.mxu0 %v3725
  %5326 = vmatpush1.msra.mxu0 %v3724
  %5327 = vmatprep.subr.mxu0 %v3733
  %5328 = vmatpush1.msra.mxu0 %v3732
  %5329 = vmatprep.subr.mxu0 %v3741
  %5330 = vmatpush1.msra.mxu0 %v3740
  %5331 = vmatprep.subr.mxu0 %v3749
  %5332 = vmatpush1.msra.mxu0 %v3748
  %5333 = vmatprep.subr.mxu0 %v3757
  %5334 = vmatpush1.msra.mxu0 %v3756
  %5335 = vmatprep.subr.mxu0 %v3765
  %5336 = vmatpush1.msra.mxu0 %v3764
  %5337 = vmatprep.subr.mxu0 %v3773
  %5338 = vmatpush1.msra.mxu0 %v3772
  %5339 = vmatprep.subr.mxu0 %v3781
  %5340 = vmatpush1.msra.mxu0 %v3780
  %5341 = vmatprep.subr.mxu0 %v3789
  %5342 = vmatpush1.msra.mxu0 %v3788
  %5343 = vmatprep.subr.mxu0 %v3797
  %5344 = vmatpush1.msra.mxu0 %v3796
  %5345 = vmatprep.subr.mxu0 %v3805
  %5346 = vmatpush1.msra.mxu0 %v3804
  %5347 = vmatprep.subr.mxu0 %v3813
  %5348 = vmatpush1.msra.mxu0 %v3812
  %5349 = vmatprep.subr.mxu0 %v3821
  %5350 = vmatpush1.msra.mxu0 %v3820
  %5351 = vmatprep.subr.mxu0 %v3829
  %5352 = vmatpush1.msra.mxu0 %v3828
  %5353 = vmatprep.subr.mxu0 %v3837
  %5354 = vmatpush1.msra.mxu0 %v3836
  %5355 = vmatprep.subr.mxu0 %v3845
  %5356 = vmatpush1.msra.mxu0 %v3844
  %5357 = vmatprep.subr.mxu0 %v3853
  %5358 = vmatpush1.msra.mxu0 %v3852
  %5359 = vmatprep.subr.mxu0 %v3861
  %5360 = vmatpush1.msra.mxu0 %v3860
  %5361 = vmatprep.subr.mxu0 %v3869
  %5362 = vmatpush1.msra.mxu0 %v3868
  %5363 = vmatprep.subr.mxu0 %v3877
  %5364 = vmatpush1.msra.mxu0 %v3876
  %5365 = vmatprep.subr.mxu0 %v3885
  %5366 = vmatpush1.msra.mxu0 %v3884
  %5367 = vmatprep.subr.mxu0 %v3893
  %5368 = vmatpush1.msra.mxu0 %v3892
  %5369 = vmatprep.subr.mxu0 %v3901
  %5370 = vmatpush1.msra.mxu0 %v3900
  %5371 = vmatprep.subr.mxu0 %v3909
  %5372 = vmatpush1.msra.mxu0 %v3908
  %5373 = vmatprep.subr.mxu0 %v3917
  %5374 = vmatpush1.msra.mxu0 %v3916
  %5375 = vmatprep.subr.mxu0 %v3925
  %5376 = vmatpush1.msra.mxu0 %v3924
  %5377 = vmatprep.mubr.f32.mxu0 %v5241
  %5378 = vmatmul.mubr.f32.gmra.mrb[0].mxu0 %v5240
  %v5379 = vpop.f32.mrb[0].mxu0
  %v5380 = vadd.f32 %v4094, %v5379
  %v5381 = vpop.f32.mrb[0].mxu0
  %v5382 = vadd.f32 %v4098, %v5381
  %5383 = vdwg.mxu0
  %5384 = vmatprep.subr.mxu0 %v3679
  %5385 = vmatpush1.msra.mxu0 %v3678
  %5386 = vmatprep.subr.mxu0 %v3687
  %5387 = vmatpush1.msra.mxu0 %v3686
  %5388 = vmatprep.subr.mxu0 %v3695
  %5389 = vmatpush1.msra.mxu0 %v3694
  %5390 = vmatprep.subr.mxu0 %v3703
  %5391 = vmatpush1.msra.mxu0 %v3702
  %5392 = vmatprep.subr.mxu0 %v3711
  %5393 = vmatpush1.msra.mxu0 %v3710
  %5394 = vmatprep.subr.mxu0 %v3719
  %5395 = vmatpush1.msra.mxu0 %v3718
  %5396 = vmatprep.subr.mxu0 %v3727
  %5397 = vmatpush1.msra.mxu0 %v3726
  %5398 = vmatprep.subr.mxu0 %v3735
  %5399 = vmatpush1.msra.mxu0 %v3734
  %5400 = vmatprep.subr.mxu0 %v3743
  %5401 = vmatpush1.msra.mxu0 %v3742
  %5402 = vmatprep.subr.mxu0 %v3751
  %5403 = vmatpush1.msra.mxu0 %v3750
  %5404 = vmatprep.subr.mxu0 %v3759
  %5405 = vmatpush1.msra.mxu0 %v3758
  %5406 = vmatprep.subr.mxu0 %v3767
  %5407 = vmatpush1.msra.mxu0 %v3766
  %5408 = vmatprep.subr.mxu0 %v3775
  %5409 = vmatpush1.msra.mxu0 %v3774
  %5410 = vmatprep.subr.mxu0 %v3783
  %5411 = vmatpush1.msra.mxu0 %v3782
  %5412 = vmatprep.subr.mxu0 %v3791
  %5413 = vmatpush1.msra.mxu0 %v3790
  %5414 = vmatprep.subr.mxu0 %v3799
  %5415 = vmatpush1.msra.mxu0 %v3798
  %5416 = vmatprep.subr.mxu0 %v3807
  %5417 = vmatpush1.msra.mxu0 %v3806
  %5418 = vmatprep.subr.mxu0 %v3815
  %5419 = vmatpush1.msra.mxu0 %v3814
  %5420 = vmatprep.subr.mxu0 %v3823
  %5421 = vmatpush1.msra.mxu0 %v3822
  %5422 = vmatprep.subr.mxu0 %v3831
  %5423 = vmatpush1.msra.mxu0 %v3830
  %5424 = vmatprep.subr.mxu0 %v3839
  %5425 = vmatpush1.msra.mxu0 %v3838
  %5426 = vmatprep.subr.mxu0 %v3847
  %5427 = vmatpush1.msra.mxu0 %v3846
  %5428 = vmatprep.subr.mxu0 %v3855
  %5429 = vmatpush1.msra.mxu0 %v3854
  %5430 = vmatprep.subr.mxu0 %v3863
  %5431 = vmatpush1.msra.mxu0 %v3862
  %5432 = vmatprep.subr.mxu0 %v3871
  %5433 = vmatpush1.msra.mxu0 %v3870
  %5434 = vmatprep.subr.mxu0 %v3879
  %5435 = vmatpush1.msra.mxu0 %v3878
  %5436 = vmatprep.subr.mxu0 %v3887
  %5437 = vmatpush1.msra.mxu0 %v3886
  %5438 = vmatprep.subr.mxu0 %v3895
  %5439 = vmatpush1.msra.mxu0 %v3894
  %5440 = vmatprep.subr.mxu0 %v3903
  %5441 = vmatpush1.msra.mxu0 %v3902
  %5442 = vmatprep.subr.mxu0 %v3911
  %5443 = vmatpush1.msra.mxu0 %v3910
  %5444 = vmatprep.subr.mxu0 %v3919
  %5445 = vmatpush1.msra.mxu0 %v3918
  %5446 = vmatprep.subr.mxu0 %v3927
  %5447 = vmatpush1.msra.mxu0 %v3926
  %5448 = vmatprep.mubr.f32.mxu0 %v5241
  %5449 = vmatmul.mubr.f32.gmra.mrb[0].mxu0 %v5240
  %v5450 = vpop.f32.mrb[0].mxu0
  %v5451 = vadd.f32 %v4102, %v5450
  %v5452 = vpop.f32.mrb[0].mxu0
  %v5453 = vadd.f32 %v4106, %v5452
  %5454 = vdwg.mxu0
  %5455 = vmatprep.subr.mxu0 %v3681
  %5456 = vmatpush1.msra.mxu0 %v3680
  %5457 = vmatprep.subr.mxu0 %v3689
  %5458 = vmatpush1.msra.mxu0 %v3688
  %5459 = vmatprep.subr.mxu0 %v3697
  %5460 = vmatpush1.msra.mxu0 %v3696
  %5461 = vmatprep.subr.mxu0 %v3705
  %5462 = vmatpush1.msra.mxu0 %v3704
  %5463 = vmatprep.subr.mxu0 %v3713
  %5464 = vmatpush1.msra.mxu0 %v3712
  %5465 = vmatprep.subr.mxu0 %v3721
  %5466 = vmatpush1.msra.mxu0 %v3720
  %5467 = vmatprep.subr.mxu0 %v3729
  %5468 = vmatpush1.msra.mxu0 %v3728
  %5469 = vmatprep.subr.mxu0 %v3737
  %5470 = vmatpush1.msra.mxu0 %v3736
  %5471 = vmatprep.subr.mxu0 %v3745
  %5472 = vmatpush1.msra.mxu0 %v3744
  %5473 = vmatprep.subr.mxu0 %v3753
  %5474 = vmatpush1.msra.mxu0 %v3752
  %5475 = vmatprep.subr.mxu0 %v3761
  %5476 = vmatpush1.msra.mxu0 %v3760
  %5477 = vmatprep.subr.mxu0 %v3769
  %5478 = vmatpush1.msra.mxu0 %v3768
  %5479 = vmatprep.subr.mxu0 %v3777
  %5480 = vmatpush1.msra.mxu0 %v3776
  %5481 = vmatprep.subr.mxu0 %v3785
  %5482 = vmatpush1.msra.mxu0 %v3784
  %5483 = vmatprep.subr.mxu0 %v3793
  %5484 = vmatpush1.msra.mxu0 %v3792
  %5485 = vmatprep.subr.mxu0 %v3801
  %5486 = vmatpush1.msra.mxu0 %v3800
  %5487 = vmatprep.subr.mxu0 %v3809
  %5488 = vmatpush1.msra.mxu0 %v3808
  %5489 = vmatprep.subr.mxu0 %v3817
  %5490 = vmatpush1.msra.mxu0 %v3816
  %5491 = vmatprep.subr.mxu0 %v3825
  %5492 = vmatpush1.msra.mxu0 %v3824
  %5493 = vmatprep.subr.mxu0 %v3833
  %5494 = vmatpush1.msra.mxu0 %v3832
  %5495 = vmatprep.subr.mxu0 %v3841
  %5496 = vmatpush1.msra.mxu0 %v3840
  %5497 = vmatprep.subr.mxu0 %v3849
  %5498 = vmatpush1.msra.mxu0 %v3848
  %5499 = vmatprep.subr.mxu0 %v3857
  %5500 = vmatpush1.msra.mxu0 %v3856
  %5501 = vmatprep.subr.mxu0 %v3865
  %5502 = vmatpush1.msra.mxu0 %v3864
  %5503 = vmatprep.subr.mxu0 %v3873
  %5504 = vmatpush1.msra.mxu0 %v3872
  %5505 = vmatprep.subr.mxu0 %v3881
  %5506 = vmatpush1.msra.mxu0 %v3880
  %5507 = vmatprep.subr.mxu0 %v3889
  %5508 = vmatpush1.msra.mxu0 %v3888
  %5509 = vmatprep.subr.mxu0 %v3897
  %5510 = vmatpush1.msra.mxu0 %v3896
  %5511 = vmatprep.subr.mxu0 %v3905
  %5512 = vmatpush1.msra.mxu0 %v3904
  %5513 = vmatprep.subr.mxu0 %v3913
  %5514 = vmatpush1.msra.mxu0 %v3912
  %5515 = vmatprep.subr.mxu0 %v3921
  %5516 = vmatpush1.msra.mxu0 %v3920
  %5517 = vmatprep.subr.mxu0 %v3929
  %5518 = vmatpush1.msra.mxu0 %v3928
  %5519 = vmatprep.mubr.f32.mxu0 %v5241
  %5520 = vmatmul.mubr.f32.gmra.mrb[0].mxu0 %v5240
  %v5521 = vpop.f32.mrb[0].mxu0
  %v5522 = vadd.f32 %v4110, %v5521
  %v5523 = vpop.f32.mrb[0].mxu0
  %v5524 = vadd.f32 %v4114, %v5523
  %5525 = vdwg.mxu0
  %v5526 = vxor.u32 %v5309, 2147483648
  %v5527 = vxor.u32 %v5311, 2147483648
  %v5528 = vmul.f32 %v5526, 1.442695
  %v5529 = vpow.pop %v5528
  %v5530 = vmul.f32 %v5527, 1.442695
  %v5531 = vpow.pop %v5530
  %v5532 = vadd.f32 %v5529, 1.0
  %v5533 = vadd.f32 %v5531, 1.0
  %v5534 = vrcp.pop %v5532
  %v5535 = vmul.f32 1.0, %v5534
  %v5536 = vrcp.pop %v5533
  %v5537 = vmul.f32 1.0, %v5536
  %v5538 = vxor.u32 %v5380, 2147483648
  %v5539 = vxor.u32 %v5382, 2147483648
  %v5540 = vmul.f32 %v5538, 1.442695
  %v5541 = vpow.pop %v5540
  %v5542 = vmul.f32 %v5539, 1.442695
  %v5543 = vpow.pop %v5542
  %v5544 = vadd.f32 %v5541, 1.0
  %v5545 = vadd.f32 %v5543, 1.0
  %v5546 = vrcp.pop %v5544
  %v5547 = vmul.f32 1.0, %v5546
  %v5548 = vrcp.pop %v5545
  %v5549 = vmul.f32 1.0, %v5548
  %v5550 = vtanh.pop %v5451
  %v5551 = vtanh.pop %v5453
  %v5552 = vxor.u32 %v5522, 2147483648
  %v5553 = vxor.u32 %v5524, 2147483648
  %v5554 = vmul.f32 %v5552, 1.442695
  %v5555 = vpow.pop %v5554
  %v5556 = vmul.f32 %v5553, 1.442695
  %v5557 = vpow.pop %v5556
  %v5558 = vadd.f32 %v5555, 1.0
  %v5559 = vadd.f32 %v5557, 1.0
  %v5560 = vrcp.pop %v5558
  %v5561 = vmul.f32 1.0, %v5560
  %v5562 = vrcp.pop %v5559
  %v5563 = vmul.f32 1.0, %v5562
  %v5564 = vmul.f32 %v5547, %v5236
  %v5565 = vmul.f32 %v5549, %v5237
  %v5566 = vmul.f32 %v5535, %v5550
  %v5567 = vmul.f32 %v5537, %v5551
  %v5568 = vadd.f32 %v5564, %v5566
  %v5569 = vadd.f32 %v5565, %v5567
  %v5570 = vtanh.pop %v5568
  %v5571 = vtanh.pop %v5569
  %v5572 = vmul.f32 %v5561, %v5570
  %v5573 = vmul.f32 %v5563, %v5571
  %5574 = vmatprep.subr.mxu0 %v3675
  %5575 = vmatpush1.msra.mxu0 %v3674
  %5576 = vmatprep.subr.mxu0 %v3683
  %5577 = vmatpush1.msra.mxu0 %v3682
  %5578 = vmatprep.subr.mxu0 %v3691
  %5579 = vmatpush1.msra.mxu0 %v3690
  %5580 = vmatprep.subr.mxu0 %v3699
  %5581 = vmatpush1.msra.mxu0 %v3698
  %5582 = vmatprep.subr.mxu0 %v3707
  %5583 = vmatpush1.msra.mxu0 %v3706
  %5584 = vmatprep.subr.mxu0 %v3715
  %5585 = vmatpush1.msra.mxu0 %v3714
  %5586 = vmatprep.subr.mxu0 %v3723
  %5587 = vmatpush1.msra.mxu0 %v3722
  %5588 = vmatprep.subr.mxu0 %v3731
  %5589 = vmatpush1.msra.mxu0 %v3730
  %5590 = vmatprep.subr.mxu0 %v3739
  %5591 = vmatpush1.msra.mxu0 %v3738
  %5592 = vmatprep.subr.mxu0 %v3747
  %5593 = vmatpush1.msra.mxu0 %v3746
  %5594 = vmatprep.subr.mxu0 %v3755
  %5595 = vmatpush1.msra.mxu0 %v3754
  %5596 = vmatprep.subr.mxu0 %v3763
  %5597 = vmatpush1.msra.mxu0 %v3762
  %5598 = vmatprep.subr.mxu0 %v3771
  %5599 = vmatpush1.msra.mxu0 %v3770
  %5600 = vmatprep.subr.mxu0 %v3779
  %5601 = vmatpush1.msra.mxu0 %v3778
  %5602 = vmatprep.subr.mxu0 %v3787
  %5603 = vmatpush1.msra.mxu0 %v3786
  %5604 = vmatprep.subr.mxu0 %v3795
  %5605 = vmatpush1.msra.mxu0 %v3794
  %5606 = vmatprep.subr.mxu0 %v3803
  %5607 = vmatpush1.msra.mxu0 %v3802
  %5608 = vmatprep.subr.mxu0 %v3811
  %5609 = vmatpush1.msra.mxu0 %v3810
  %5610 = vmatprep.subr.mxu0 %v3819
  %5611 = vmatpush1.msra.mxu0 %v3818
  %5612 = vmatprep.subr.mxu0 %v3827
  %5613 = vmatpush1.msra.mxu0 %v3826
  %5614 = vmatprep.subr.mxu0 %v3835
  %5615 = vmatpush1.msra.mxu0 %v3834
  %5616 = vmatprep.subr.mxu0 %v3843
  %5617 = vmatpush1.msra.mxu0 %v3842
  %5618 = vmatprep.subr.mxu0 %v3851
  %5619 = vmatpush1.msra.mxu0 %v3850
  %5620 = vmatprep.subr.mxu0 %v3859
  %5621 = vmatpush1.msra.mxu0 %v3858
  %5622 = vmatprep.subr.mxu0 %v3867
  %5623 = vmatpush1.msra.mxu0 %v3866
  %5624 = vmatprep.subr.mxu0 %v3875
  %5625 = vmatpush1.msra.mxu0 %v3874
  %5626 = vmatprep.subr.mxu0 %v3883
  %5627 = vmatpush1.msra.mxu0 %v3882
  %5628 = vmatprep.subr.mxu0 %v3891
  %5629 = vmatpush1.msra.mxu0 %v3890
  %5630 = vmatprep.subr.mxu0 %v3899
  %5631 = vmatpush1.msra.mxu0 %v3898
  %5632 = vmatprep.subr.mxu0 %v3907
  %5633 = vmatpush1.msra.mxu0 %v3906
  %5634 = vmatprep.subr.mxu0 %v3915
  %5635 = vmatpush1.msra.mxu0 %v3914
  %5636 = vmatprep.subr.mxu0 %v3923
  %5637 = vmatpush1.msra.mxu0 %v3922
  %5638 = vmatprep.mubr.f32.mxu0 %v5573
  %5639 = vmatmul.mubr.f32.gmra.mrb[0].mxu0 %v5572
  %v5640 = vpop.f32.mrb[0].mxu0
  %v5641 = vadd.f32 %v4086, %v5640
  %v5642 = vpop.f32.mrb[0].mxu0
  %v5643 = vadd.f32 %v4090, %v5642
  %5644 = vdwg.mxu0
  %5645 = vmatprep.subr.mxu0 %v3677
  %5646 = vmatpush1.msra.mxu0 %v3676
  %5647 = vmatprep.subr.mxu0 %v3685
  %5648 = vmatpush1.msra.mxu0 %v3684
  %5649 = vmatprep.subr.mxu0 %v3693
  %5650 = vmatpush1.msra.mxu0 %v3692
  %5651 = vmatprep.subr.mxu0 %v3701
  %5652 = vmatpush1.msra.mxu0 %v3700
  %5653 = vmatprep.subr.mxu0 %v3709
  %5654 = vmatpush1.msra.mxu0 %v3708
  %5655 = vmatprep.subr.mxu0 %v3717
  %5656 = vmatpush1.msra.mxu0 %v3716
  %5657 = vmatprep.subr.mxu0 %v3725
  %5658 = vmatpush1.msra.mxu0 %v3724
  %5659 = vmatprep.subr.mxu0 %v3733
  %5660 = vmatpush1.msra.mxu0 %v3732
  %5661 = vmatprep.subr.mxu0 %v3741
  %5662 = vmatpush1.msra.mxu0 %v3740
  %5663 = vmatprep.subr.mxu0 %v3749
  %5664 = vmatpush1.msra.mxu0 %v3748
  %5665 = vmatprep.subr.mxu0 %v3757
  %5666 = vmatpush1.msra.mxu0 %v3756
  %5667 = vmatprep.subr.mxu0 %v3765
  %5668 = vmatpush1.msra.mxu0 %v3764
  %5669 = vmatprep.subr.mxu0 %v3773
  %5670 = vmatpush1.msra.mxu0 %v3772
  %5671 = vmatprep.subr.mxu0 %v3781
  %5672 = vmatpush1.msra.mxu0 %v3780
  %5673 = vmatprep.subr.mxu0 %v3789
  %5674 = vmatpush1.msra.mxu0 %v3788
  %5675 = vmatprep.subr.mxu0 %v3797
  %5676 = vmatpush1.msra.mxu0 %v3796
  %5677 = vmatprep.subr.mxu0 %v3805
  %5678 = vmatpush1.msra.mxu0 %v3804
  %5679 = vmatprep.subr.mxu0 %v3813
  %5680 = vmatpush1.msra.mxu0 %v3812
  %5681 = vmatprep.subr.mxu0 %v3821
  %5682 = vmatpush1.msra.mxu0 %v3820
  %5683 = vmatprep.subr.mxu0 %v3829
  %5684 = vmatpush1.msra.mxu0 %v3828
  %5685 = vmatprep.subr.mxu0 %v3837
  %5686 = vmatpush1.msra.mxu0 %v3836
  %5687 = vmatprep.subr.mxu0 %v3845
  %5688 = vmatpush1.msra.mxu0 %v3844
  %5689 = vmatprep.subr.mxu0 %v3853
  %5690 = vmatpush1.msra.mxu0 %v3852
  %5691 = vmatprep.subr.mxu0 %v3861
  %5692 = vmatpush1.msra.mxu0 %v3860
  %5693 = vmatprep.subr.mxu0 %v3869
  %5694 = vmatpush1.msra.mxu0 %v3868
  %5695 = vmatprep.subr.mxu0 %v3877
  %5696 = vmatpush1.msra.mxu0 %v3876
  %5697 = vmatprep.subr.mxu0 %v3885
  %5698 = vmatpush1.msra.mxu0 %v3884
  %5699 = vmatprep.subr.mxu0 %v3893
  %5700 = vmatpush1.msra.mxu0 %v3892
  %5701 = vmatprep.subr.mxu0 %v3901
  %5702 = vmatpush1.msra.mxu0 %v3900
  %5703 = vmatprep.subr.mxu0 %v3909
  %5704 = vmatpush1.msra.mxu0 %v3908
  %5705 = vmatprep.subr.mxu0 %v3917
  %5706 = vmatpush1.msra.mxu0 %v3916
  %5707 = vmatprep.subr.mxu0 %v3925
  %5708 = vmatpush1.msra.mxu0 %v3924
  %5709 = vmatprep.mubr.f32.mxu0 %v5573
  %5710 = vmatmul.mubr.f32.gmra.mrb[0].mxu0 %v5572
  %v5711 = vpop.f32.mrb[0].mxu0
  %v5712 = vadd.f32 %v4094, %v5711
  %v5713 = vpop.f32.mrb[0].mxu0
  %v5714 = vadd.f32 %v4098, %v5713
  %5715 = vdwg.mxu0
  %5716 = vmatprep.subr.mxu0 %v3679
  %5717 = vmatpush1.msra.mxu0 %v3678
  %5718 = vmatprep.subr.mxu0 %v3687
  %5719 = vmatpush1.msra.mxu0 %v3686
  %5720 = vmatprep.subr.mxu0 %v3695
  %5721 = vmatpush1.msra.mxu0 %v3694
  %5722 = vmatprep.subr.mxu0 %v3703
  %5723 = vmatpush1.msra.mxu0 %v3702
  %5724 = vmatprep.subr.mxu0 %v3711
  %5725 = vmatpush1.msra.mxu0 %v3710
  %5726 = vmatprep.subr.mxu0 %v3719
  %5727 = vmatpush1.msra.mxu0 %v3718
  %5728 = vmatprep.subr.mxu0 %v3727
  %5729 = vmatpush1.msra.mxu0 %v3726
  %5730 = vmatprep.subr.mxu0 %v3735
  %5731 = vmatpush1.msra.mxu0 %v3734
  %5732 = vmatprep.subr.mxu0 %v3743
  %5733 = vmatpush1.msra.mxu0 %v3742
  %5734 = vmatprep.subr.mxu0 %v3751
  %5735 = vmatpush1.msra.mxu0 %v3750
  %5736 = vmatprep.subr.mxu0 %v3759
  %5737 = vmatpush1.msra.mxu0 %v3758
  %5738 = vmatprep.subr.mxu0 %v3767
  %5739 = vmatpush1.msra.mxu0 %v3766
  %5740 = vmatprep.subr.mxu0 %v3775
  %5741 = vmatpush1.msra.mxu0 %v3774
  %5742 = vmatprep.subr.mxu0 %v3783
  %5743 = vmatpush1.msra.mxu0 %v3782
  %5744 = vmatprep.subr.mxu0 %v3791
  %5745 = vmatpush1.msra.mxu0 %v3790
  %5746 = vmatprep.subr.mxu0 %v3799
  %5747 = vmatpush1.msra.mxu0 %v3798
  %5748 = vmatprep.subr.mxu0 %v3807
  %5749 = vmatpush1.msra.mxu0 %v3806
  %5750 = vmatprep.subr.mxu0 %v3815
  %5751 = vmatpush1.msra.mxu0 %v3814
  %5752 = vmatprep.subr.mxu0 %v3823
  %5753 = vmatpush1.msra.mxu0 %v3822
  %5754 = vmatprep.subr.mxu0 %v3831
  %5755 = vmatpush1.msra.mxu0 %v3830
  %5756 = vmatprep.subr.mxu0 %v3839
  %5757 = vmatpush1.msra.mxu0 %v3838
  %5758 = vmatprep.subr.mxu0 %v3847
  %5759 = vmatpush1.msra.mxu0 %v3846
  %5760 = vmatprep.subr.mxu0 %v3855
  %5761 = vmatpush1.msra.mxu0 %v3854
  %5762 = vmatprep.subr.mxu0 %v3863
  %5763 = vmatpush1.msra.mxu0 %v3862
  %5764 = vmatprep.subr.mxu0 %v3871
  %5765 = vmatpush1.msra.mxu0 %v3870
  %5766 = vmatprep.subr.mxu0 %v3879
  %5767 = vmatpush1.msra.mxu0 %v3878
  %5768 = vmatprep.subr.mxu0 %v3887
  %5769 = vmatpush1.msra.mxu0 %v3886
  %5770 = vmatprep.subr.mxu0 %v3895
  %5771 = vmatpush1.msra.mxu0 %v3894
  %5772 = vmatprep.subr.mxu0 %v3903
  %5773 = vmatpush1.msra.mxu0 %v3902
  %5774 = vmatprep.subr.mxu0 %v3911
  %5775 = vmatpush1.msra.mxu0 %v3910
  %5776 = vmatprep.subr.mxu0 %v3919
  %5777 = vmatpush1.msra.mxu0 %v3918
  %5778 = vmatprep.subr.mxu0 %v3927
  %5779 = vmatpush1.msra.mxu0 %v3926
  %5780 = vmatprep.mubr.f32.mxu0 %v5573
  %5781 = vmatmul.mubr.f32.gmra.mrb[0].mxu0 %v5572
  %v5782 = vpop.f32.mrb[0].mxu0
  %v5783 = vadd.f32 %v4102, %v5782
  %v5784 = vpop.f32.mrb[0].mxu0
  %v5785 = vadd.f32 %v4106, %v5784
  %5786 = vdwg.mxu0
  %5787 = vmatprep.subr.mxu0 %v3681
  %5788 = vmatpush1.msra.mxu0 %v3680
  %5789 = vmatprep.subr.mxu0 %v3689
  %5790 = vmatpush1.msra.mxu0 %v3688
  %5791 = vmatprep.subr.mxu0 %v3697
  %5792 = vmatpush1.msra.mxu0 %v3696
  %5793 = vmatprep.subr.mxu0 %v3705
  %5794 = vmatpush1.msra.mxu0 %v3704
  %5795 = vmatprep.subr.mxu0 %v3713
  %5796 = vmatpush1.msra.mxu0 %v3712
  %5797 = vmatprep.subr.mxu0 %v3721
  %5798 = vmatpush1.msra.mxu0 %v3720
  %5799 = vmatprep.subr.mxu0 %v3729
  %5800 = vmatpush1.msra.mxu0 %v3728
  %5801 = vmatprep.subr.mxu0 %v3737
  %5802 = vmatpush1.msra.mxu0 %v3736
  %5803 = vmatprep.subr.mxu0 %v3745
  %5804 = vmatpush1.msra.mxu0 %v3744
  %5805 = vmatprep.subr.mxu0 %v3753
  %5806 = vmatpush1.msra.mxu0 %v3752
  %5807 = vmatprep.subr.mxu0 %v3761
  %5808 = vmatpush1.msra.mxu0 %v3760
  %5809 = vmatprep.subr.mxu0 %v3769
  %5810 = vmatpush1.msra.mxu0 %v3768
  %5811 = vmatprep.subr.mxu0 %v3777
  %5812 = vmatpush1.msra.mxu0 %v3776
  %5813 = vmatprep.subr.mxu0 %v3785
  %5814 = vmatpush1.msra.mxu0 %v3784
  %5815 = vmatprep.subr.mxu0 %v3793
  %5816 = vmatpush1.msra.mxu0 %v3792
  %5817 = vmatprep.subr.mxu0 %v3801
  %5818 = vmatpush1.msra.mxu0 %v3800
  %5819 = vmatprep.subr.mxu0 %v3809
  %5820 = vmatpush1.msra.mxu0 %v3808
  %5821 = vmatprep.subr.mxu0 %v3817
  %5822 = vmatpush1.msra.mxu0 %v3816
  %5823 = vmatprep.subr.mxu0 %v3825
  %5824 = vmatpush1.msra.mxu0 %v3824
  %5825 = vmatprep.subr.mxu0 %v3833
  %5826 = vmatpush1.msra.mxu0 %v3832
  %5827 = vmatprep.subr.mxu0 %v3841
  %5828 = vmatpush1.msra.mxu0 %v3840
  %5829 = vmatprep.subr.mxu0 %v3849
  %5830 = vmatpush1.msra.mxu0 %v3848
  %5831 = vmatprep.subr.mxu0 %v3857
  %5832 = vmatpush1.msra.mxu0 %v3856
  %5833 = vmatprep.subr.mxu0 %v3865
  %5834 = vmatpush1.msra.mxu0 %v3864
  %5835 = vmatprep.subr.mxu0 %v3873
  %5836 = vmatpush1.msra.mxu0 %v3872
  %5837 = vmatprep.subr.mxu0 %v3881
  %5838 = vmatpush1.msra.mxu0 %v3880
  %5839 = vmatprep.subr.mxu0 %v3889
  %5840 = vmatpush1.msra.mxu0 %v3888
  %5841 = vmatprep.subr.mxu0 %v3897
  %5842 = vmatpush1.msra.mxu0 %v3896
  %5843 = vmatprep.subr.mxu0 %v3905
  %5844 = vmatpush1.msra.mxu0 %v3904
  %5845 = vmatprep.subr.mxu0 %v3913
  %5846 = vmatpush1.msra.mxu0 %v3912
  %5847 = vmatprep.subr.mxu0 %v3921
  %5848 = vmatpush1.msra.mxu0 %v3920
  %5849 = vmatprep.subr.mxu0 %v3929
  %5850 = vmatpush1.msra.mxu0 %v3928
  %5851 = vmatprep.mubr.f32.mxu0 %v5573
  %5852 = vmatmul.mubr.f32.gmra.mrb[0].mxu0 %v5572
  %v5853 = vpop.f32.mrb[0].mxu0
  %v5854 = vadd.f32 %v4110, %v5853
  %v5855 = vpop.f32.mrb[0].mxu0
  %v5856 = vadd.f32 %v4114, %v5855
  %5857 = vdwg.mxu0
  %v5858 = vxor.u32 %v5641, 2147483648
  %v5859 = vxor.u32 %v5643, 2147483648
  %v5860 = vmul.f32 %v5858, 1.442695
  %v5861 = vpow.pop %v5860
  %v5862 = vmul.f32 %v5859, 1.442695
  %v5863 = vpow.pop %v5862
  %v5864 = vadd.f32 %v5861, 1.0
  %v5865 = vadd.f32 %v5863, 1.0
  %v5866 = vrcp.pop %v5864
  %v5867 = vmul.f32 1.0, %v5866
  %v5868 = vrcp.pop %v5865
  %v5869 = vmul.f32 1.0, %v5868
  %v5870 = vxor.u32 %v5712, 2147483648
  %v5871 = vxor.u32 %v5714, 2147483648
  %v5872 = vmul.f32 %v5870, 1.442695
  %v5873 = vpow.pop %v5872
  %v5874 = vmul.f32 %v5871, 1.442695
  %v5875 = vpow.pop %v5874
  %v5876 = vadd.f32 %v5873, 1.0
  %v5877 = vadd.f32 %v5875, 1.0
  %v5878 = vrcp.pop %v5876
  %v5879 = vmul.f32 1.0, %v5878
  %v5880 = vrcp.pop %v5877
  %v5881 = vmul.f32 1.0, %v5880
  %v5882 = vtanh.pop %v5783
  %v5883 = vtanh.pop %v5785
  %v5884 = vxor.u32 %v5854, 2147483648
  %v5885 = vxor.u32 %v5856, 2147483648
  %v5886 = vmul.f32 %v5884, 1.442695
  %v5887 = vpow.pop %v5886
  %v5888 = vmul.f32 %v5885, 1.442695
  %v5889 = vpow.pop %v5888
  %v5890 = vadd.f32 %v5887, 1.0
  %v5891 = vadd.f32 %v5889, 1.0
  %v5892 = vrcp.pop %v5890
  %v5893 = vmul.f32 1.0, %v5892
  %v5894 = vrcp.pop %v5891
  %v5895 = vmul.f32 1.0, %v5894
  %v5896 = vmul.f32 %v5879, %v5568
  %v5897 = vmul.f32 %v5881, %v5569
  %v5898 = vmul.f32 %v5867, %v5882
  %v5899 = vmul.f32 %v5869, %v5883
  %v5900 = vadd.f32 %v5896, %v5898
  %v5901 = vadd.f32 %v5897, %v5899
  %v5902 = vtanh.pop %v5900
  %v5903 = vtanh.pop %v5901
  %v5904 = vmul.f32 %v5893, %v5902
  %v5905 = vmul.f32 %v5895, %v5903
  %5906 = vmatprep.subr.mxu0 %v3675
  %5907 = vmatpush1.msra.mxu0 %v3674
  %5908 = vmatprep.subr.mxu0 %v3683
  %5909 = vmatpush1.msra.mxu0 %v3682
  %5910 = vmatprep.subr.mxu0 %v3691
  %5911 = vmatpush1.msra.mxu0 %v3690
  %5912 = vmatprep.subr.mxu0 %v3699
  %5913 = vmatpush1.msra.mxu0 %v3698
  %5914 = vmatprep.subr.mxu0 %v3707
  %5915 = vmatpush1.msra.mxu0 %v3706
  %5916 = vmatprep.subr.mxu0 %v3715
  %5917 = vmatpush1.msra.mxu0 %v3714
  %5918 = vmatprep.subr.mxu0 %v3723
  %5919 = vmatpush1.msra.mxu0 %v3722
  %5920 = vmatprep.subr.mxu0 %v3731
  %5921 = vmatpush1.msra.mxu0 %v3730
  %5922 = vmatprep.subr.mxu0 %v3739
  %5923 = vmatpush1.msra.mxu0 %v3738
  %5924 = vmatprep.subr.mxu0 %v3747
  %5925 = vmatpush1.msra.mxu0 %v3746
  %5926 = vmatprep.subr.mxu0 %v3755
  %5927 = vmatpush1.msra.mxu0 %v3754
  %5928 = vmatprep.subr.mxu0 %v3763
  %5929 = vmatpush1.msra.mxu0 %v3762
  %5930 = vmatprep.subr.mxu0 %v3771
  %5931 = vmatpush1.msra.mxu0 %v3770
  %5932 = vmatprep.subr.mxu0 %v3779
  %5933 = vmatpush1.msra.mxu0 %v3778
  %5934 = vmatprep.subr.mxu0 %v3787
  %5935 = vmatpush1.msra.mxu0 %v3786
  %5936 = vmatprep.subr.mxu0 %v3795
  %5937 = vmatpush1.msra.mxu0 %v3794
  %5938 = vmatprep.subr.mxu0 %v3803
  %5939 = vmatpush1.msra.mxu0 %v3802
  %5940 = vmatprep.subr.mxu0 %v3811
  %5941 = vmatpush1.msra.mxu0 %v3810
  %5942 = vmatprep.subr.mxu0 %v3819
  %5943 = vmatpush1.msra.mxu0 %v3818
  %5944 = vmatprep.subr.mxu0 %v3827
  %5945 = vmatpush1.msra.mxu0 %v3826
  %5946 = vmatprep.subr.mxu0 %v3835
  %5947 = vmatpush1.msra.mxu0 %v3834
  %5948 = vmatprep.subr.mxu0 %v3843
  %5949 = vmatpush1.msra.mxu0 %v3842
  %5950 = vmatprep.subr.mxu0 %v3851
  %5951 = vmatpush1.msra.mxu0 %v3850
  %5952 = vmatprep.subr.mxu0 %v3859
  %5953 = vmatpush1.msra.mxu0 %v3858
  %5954 = vmatprep.subr.mxu0 %v3867
  %5955 = vmatpush1.msra.mxu0 %v3866
  %5956 = vmatprep.subr.mxu0 %v3875
  %5957 = vmatpush1.msra.mxu0 %v3874
  %5958 = vmatprep.subr.mxu0 %v3883
  %5959 = vmatpush1.msra.mxu0 %v3882
  %5960 = vmatprep.subr.mxu0 %v3891
  %5961 = vmatpush1.msra.mxu0 %v3890
  %5962 = vmatprep.subr.mxu0 %v3899
  %5963 = vmatpush1.msra.mxu0 %v3898
  %5964 = vmatprep.subr.mxu0 %v3907
  %5965 = vmatpush1.msra.mxu0 %v3906
  %5966 = vmatprep.subr.mxu0 %v3915
  %5967 = vmatpush1.msra.mxu0 %v3914
  %5968 = vmatprep.subr.mxu0 %v3923
  %5969 = vmatpush1.msra.mxu0 %v3922
  %5970 = vmatprep.mubr.f32.mxu0 %v5905
  %5971 = vmatmul.mubr.f32.gmra.mrb[0].mxu0 %v5904
  %v5972 = vpop.f32.mrb[0].mxu0
  %v5973 = vadd.f32 %v4086, %v5972
  %v5974 = vpop.f32.mrb[0].mxu0
  %v5975 = vadd.f32 %v4090, %v5974
  %5976 = vdwg.mxu0
  %5977 = vmatprep.subr.mxu0 %v3677
  %5978 = vmatpush1.msra.mxu0 %v3676
  %5979 = vmatprep.subr.mxu0 %v3685
  %5980 = vmatpush1.msra.mxu0 %v3684
  %5981 = vmatprep.subr.mxu0 %v3693
  %5982 = vmatpush1.msra.mxu0 %v3692
  %5983 = vmatprep.subr.mxu0 %v3701
  %5984 = vmatpush1.msra.mxu0 %v3700
  %5985 = vmatprep.subr.mxu0 %v3709
  %5986 = vmatpush1.msra.mxu0 %v3708
  %5987 = vmatprep.subr.mxu0 %v3717
  %5988 = vmatpush1.msra.mxu0 %v3716
  %5989 = vmatprep.subr.mxu0 %v3725
  %5990 = vmatpush1.msra.mxu0 %v3724
  %5991 = vmatprep.subr.mxu0 %v3733
  %5992 = vmatpush1.msra.mxu0 %v3732
  %5993 = vmatprep.subr.mxu0 %v3741
  %5994 = vmatpush1.msra.mxu0 %v3740
  %5995 = vmatprep.subr.mxu0 %v3749
  %5996 = vmatpush1.msra.mxu0 %v3748
  %5997 = vmatprep.subr.mxu0 %v3757
  %5998 = vmatpush1.msra.mxu0 %v3756
  %5999 = vmatprep.subr.mxu0 %v3765
  %6000 = vmatpush1.msra.mxu0 %v3764
  %6001 = vmatprep.subr.mxu0 %v3773
  %6002 = vmatpush1.msra.mxu0 %v3772
  %6003 = vmatprep.subr.mxu0 %v3781
  %6004 = vmatpush1.msra.mxu0 %v3780
  %6005 = vmatprep.subr.mxu0 %v3789
  %6006 = vmatpush1.msra.mxu0 %v3788
  %6007 = vmatprep.subr.mxu0 %v3797
  %6008 = vmatpush1.msra.mxu0 %v3796
  %6009 = vmatprep.subr.mxu0 %v3805
  %6010 = vmatpush1.msra.mxu0 %v3804
  %6011 = vmatprep.subr.mxu0 %v3813
  %6012 = vmatpush1.msra.mxu0 %v3812
  %6013 = vmatprep.subr.mxu0 %v3821
  %6014 = vmatpush1.msra.mxu0 %v3820
  %6015 = vmatprep.subr.mxu0 %v3829
  %6016 = vmatpush1.msra.mxu0 %v3828
  %6017 = vmatprep.subr.mxu0 %v3837
  %6018 = vmatpush1.msra.mxu0 %v3836
  %6019 = vmatprep.subr.mxu0 %v3845
  %6020 = vmatpush1.msra.mxu0 %v3844
  %6021 = vmatprep.subr.mxu0 %v3853
  %6022 = vmatpush1.msra.mxu0 %v3852
  %6023 = vmatprep.subr.mxu0 %v3861
  %6024 = vmatpush1.msra.mxu0 %v3860
  %6025 = vmatprep.subr.mxu0 %v3869
  %6026 = vmatpush1.msra.mxu0 %v3868
  %6027 = vmatprep.subr.mxu0 %v3877
  %6028 = vmatpush1.msra.mxu0 %v3876
  %6029 = vmatprep.subr.mxu0 %v3885
  %6030 = vmatpush1.msra.mxu0 %v3884
  %6031 = vmatprep.subr.mxu0 %v3893
  %6032 = vmatpush1.msra.mxu0 %v3892
  %6033 = vmatprep.subr.mxu0 %v3901
  %6034 = vmatpush1.msra.mxu0 %v3900
  %6035 = vmatprep.subr.mxu0 %v3909
  %6036 = vmatpush1.msra.mxu0 %v3908
  %6037 = vmatprep.subr.mxu0 %v3917
  %6038 = vmatpush1.msra.mxu0 %v3916
  %6039 = vmatprep.subr.mxu0 %v3925
  %6040 = vmatpush1.msra.mxu0 %v3924
  %6041 = vmatprep.mubr.f32.mxu0 %v5905
  %6042 = vmatmul.mubr.f32.gmra.mrb[0].mxu0 %v5904
  %v6043 = vpop.f32.mrb[0].mxu0
  %v6044 = vadd.f32 %v4094, %v6043
  %v6045 = vpop.f32.mrb[0].mxu0
  %v6046 = vadd.f32 %v4098, %v6045
  %6047 = vdwg.mxu0
  %6048 = vmatprep.subr.mxu0 %v3679
  %6049 = vmatpush1.msra.mxu0 %v3678
  %6050 = vmatprep.subr.mxu0 %v3687
  %6051 = vmatpush1.msra.mxu0 %v3686
  %6052 = vmatprep.subr.mxu0 %v3695
  %6053 = vmatpush1.msra.mxu0 %v3694
  %6054 = vmatprep.subr.mxu0 %v3703
  %6055 = vmatpush1.msra.mxu0 %v3702
  %6056 = vmatprep.subr.mxu0 %v3711
  %6057 = vmatpush1.msra.mxu0 %v3710
  %6058 = vmatprep.subr.mxu0 %v3719
  %6059 = vmatpush1.msra.mxu0 %v3718
  %6060 = vmatprep.subr.mxu0 %v3727
  %6061 = vmatpush1.msra.mxu0 %v3726
  %6062 = vmatprep.subr.mxu0 %v3735
  %6063 = vmatpush1.msra.mxu0 %v3734
  %6064 = vmatprep.subr.mxu0 %v3743
  %6065 = vmatpush1.msra.mxu0 %v3742
  %6066 = vmatprep.subr.mxu0 %v3751
  %6067 = vmatpush1.msra.mxu0 %v3750
  %6068 = vmatprep.subr.mxu0 %v3759
  %6069 = vmatpush1.msra.mxu0 %v3758
  %6070 = vmatprep.subr.mxu0 %v3767
  %6071 = vmatpush1.msra.mxu0 %v3766
  %6072 = vmatprep.subr.mxu0 %v3775
  %6073 = vmatpush1.msra.mxu0 %v3774
  %6074 = vmatprep.subr.mxu0 %v3783
  %6075 = vmatpush1.msra.mxu0 %v3782
  %6076 = vmatprep.subr.mxu0 %v3791
  %6077 = vmatpush1.msra.mxu0 %v3790
  %6078 = vmatprep.subr.mxu0 %v3799
  %6079 = vmatpush1.msra.mxu0 %v3798
  %6080 = vmatprep.subr.mxu0 %v3807
  %6081 = vmatpush1.msra.mxu0 %v3806
  %6082 = vmatprep.subr.mxu0 %v3815
  %6083 = vmatpush1.msra.mxu0 %v3814
  %6084 = vmatprep.subr.mxu0 %v3823
  %6085 = vmatpush1.msra.mxu0 %v3822
  %6086 = vmatprep.subr.mxu0 %v3831
  %6087 = vmatpush1.msra.mxu0 %v3830
  %6088 = vmatprep.subr.mxu0 %v3839
  %6089 = vmatpush1.msra.mxu0 %v3838
  %6090 = vmatprep.subr.mxu0 %v3847
  %6091 = vmatpush1.msra.mxu0 %v3846
  %6092 = vmatprep.subr.mxu0 %v3855
  %6093 = vmatpush1.msra.mxu0 %v3854
  %6094 = vmatprep.subr.mxu0 %v3863
  %6095 = vmatpush1.msra.mxu0 %v3862
  %6096 = vmatprep.subr.mxu0 %v3871
  %6097 = vmatpush1.msra.mxu0 %v3870
  %6098 = vmatprep.subr.mxu0 %v3879
  %6099 = vmatpush1.msra.mxu0 %v3878
  %6100 = vmatprep.subr.mxu0 %v3887
  %6101 = vmatpush1.msra.mxu0 %v3886
  %6102 = vmatprep.subr.mxu0 %v3895
  %6103 = vmatpush1.msra.mxu0 %v3894
  %6104 = vmatprep.subr.mxu0 %v3903
  %6105 = vmatpush1.msra.mxu0 %v3902
  %6106 = vmatprep.subr.mxu0 %v3911
  %6107 = vmatpush1.msra.mxu0 %v3910
  %6108 = vmatprep.subr.mxu0 %v3919
  %6109 = vmatpush1.msra.mxu0 %v3918
  %6110 = vmatprep.subr.mxu0 %v3927
  %6111 = vmatpush1.msra.mxu0 %v3926
  %6112 = vmatprep.mubr.f32.mxu0 %v5905
  %6113 = vmatmul.mubr.f32.gmra.mrb[0].mxu0 %v5904
  %v6114 = vpop.f32.mrb[0].mxu0
  %v6115 = vadd.f32 %v4102, %v6114
  %v6116 = vpop.f32.mrb[0].mxu0
  %v6117 = vadd.f32 %v4106, %v6116
  %6118 = vdwg.mxu0
  %6119 = vmatprep.subr.mxu0 %v3681
  %6120 = vmatpush1.msra.mxu0 %v3680
  %6121 = vmatprep.subr.mxu0 %v3689
  %6122 = vmatpush1.msra.mxu0 %v3688
  %6123 = vmatprep.subr.mxu0 %v3697
  %6124 = vmatpush1.msra.mxu0 %v3696
  %6125 = vmatprep.subr.mxu0 %v3705
  %6126 = vmatpush1.msra.mxu0 %v3704
  %6127 = vmatprep.subr.mxu0 %v3713
  %6128 = vmatpush1.msra.mxu0 %v3712
  %6129 = vmatprep.subr.mxu0 %v3721
  %6130 = vmatpush1.msra.mxu0 %v3720
  %6131 = vmatprep.subr.mxu0 %v3729
  %6132 = vmatpush1.msra.mxu0 %v3728
  %6133 = vmatprep.subr.mxu0 %v3737
  %6134 = vmatpush1.msra.mxu0 %v3736
  %6135 = vmatprep.subr.mxu0 %v3745
  %6136 = vmatpush1.msra.mxu0 %v3744
  %6137 = vmatprep.subr.mxu0 %v3753
  %6138 = vmatpush1.msra.mxu0 %v3752
  %6139 = vmatprep.subr.mxu0 %v3761
  %6140 = vmatpush1.msra.mxu0 %v3760
  %6141 = vmatprep.subr.mxu0 %v3769
  %6142 = vmatpush1.msra.mxu0 %v3768
  %6143 = vmatprep.subr.mxu0 %v3777
  %6144 = vmatpush1.msra.mxu0 %v3776
  %6145 = vmatprep.subr.mxu0 %v3785
  %6146 = vmatpush1.msra.mxu0 %v3784
  %6147 = vmatprep.subr.mxu0 %v3793
  %6148 = vmatpush1.msra.mxu0 %v3792
  %6149 = vmatprep.subr.mxu0 %v3801
  %6150 = vmatpush1.msra.mxu0 %v3800
  %6151 = vmatprep.subr.mxu0 %v3809
  %6152 = vmatpush1.msra.mxu0 %v3808
  %6153 = vmatprep.subr.mxu0 %v3817
  %6154 = vmatpush1.msra.mxu0 %v3816
  %6155 = vmatprep.subr.mxu0 %v3825
  %6156 = vmatpush1.msra.mxu0 %v3824
  %6157 = vmatprep.subr.mxu0 %v3833
  %6158 = vmatpush1.msra.mxu0 %v3832
  %6159 = vmatprep.subr.mxu0 %v3841
  %6160 = vmatpush1.msra.mxu0 %v3840
  %6161 = vmatprep.subr.mxu0 %v3849
  %6162 = vmatpush1.msra.mxu0 %v3848
  %6163 = vmatprep.subr.mxu0 %v3857
  %6164 = vmatpush1.msra.mxu0 %v3856
  %6165 = vmatprep.subr.mxu0 %v3865
  %6166 = vmatpush1.msra.mxu0 %v3864
  %6167 = vmatprep.subr.mxu0 %v3873
  %6168 = vmatpush1.msra.mxu0 %v3872
  %6169 = vmatprep.subr.mxu0 %v3881
  %6170 = vmatpush1.msra.mxu0 %v3880
  %6171 = vmatprep.subr.mxu0 %v3889
  %6172 = vmatpush1.msra.mxu0 %v3888
  %6173 = vmatprep.subr.mxu0 %v3897
  %6174 = vmatpush1.msra.mxu0 %v3896
  %6175 = vmatprep.subr.mxu0 %v3905
  %6176 = vmatpush1.msra.mxu0 %v3904
  %6177 = vmatprep.subr.mxu0 %v3913
  %6178 = vmatpush1.msra.mxu0 %v3912
  %6179 = vmatprep.subr.mxu0 %v3921
  %6180 = vmatpush1.msra.mxu0 %v3920
  %6181 = vmatprep.subr.mxu0 %v3929
  %6182 = vmatpush1.msra.mxu0 %v3928
  %6183 = vmatprep.mubr.f32.mxu0 %v5905
  %6184 = vmatmul.mubr.f32.gmra.mrb[0].mxu0 %v5904
  %v6185 = vpop.f32.mrb[0].mxu0
  %v6186 = vadd.f32 %v4110, %v6185
  %v6187 = vpop.f32.mrb[0].mxu0
  %v6188 = vadd.f32 %v4114, %v6187
  %6189 = vdwg.mxu0
  %v6190 = vxor.u32 %v5973, 2147483648
  %v6191 = vxor.u32 %v5975, 2147483648
  %v6192 = vmul.f32 %v6190, 1.442695
  %v6193 = vpow.pop %v6192
  %v6194 = vmul.f32 %v6191, 1.442695
  %v6195 = vpow.pop %v6194
  %v6196 = vadd.f32 %v6193, 1.0
  %v6197 = vadd.f32 %v6195, 1.0
  %v6198 = vrcp.pop %v6196
  %v6199 = vmul.f32 1.0, %v6198
  %v6200 = vrcp.pop %v6197
  %v6201 = vmul.f32 1.0, %v6200
  %v6202 = vxor.u32 %v6044, 2147483648
  %v6203 = vxor.u32 %v6046, 2147483648
  %v6204 = vmul.f32 %v6202, 1.442695
  %v6205 = vpow.pop %v6204
  %v6206 = vmul.f32 %v6203, 1.442695
  %v6207 = vpow.pop %v6206
  %v6208 = vadd.f32 %v6205, 1.0
  %v6209 = vadd.f32 %v6207, 1.0
  %v6210 = vrcp.pop %v6208
  %v6211 = vmul.f32 1.0, %v6210
  %v6212 = vrcp.pop %v6209
  %v6213 = vmul.f32 1.0, %v6212
  %v6214 = vtanh.pop %v6115
  %v6215 = vtanh.pop %v6117
  %v6216 = vxor.u32 %v6186, 2147483648
  %v6217 = vxor.u32 %v6188, 2147483648
  %v6218 = vmul.f32 %v6216, 1.442695
  %v6219 = vpow.pop %v6218
  %v6220 = vmul.f32 %v6217, 1.442695
  %v6221 = vpow.pop %v6220
  %v6222 = vadd.f32 %v6219, 1.0
  %v6223 = vadd.f32 %v6221, 1.0
  %v6224 = vrcp.pop %v6222
  %v6225 = vmul.f32 1.0, %v6224
  %v6226 = vrcp.pop %v6223
  %v6227 = vmul.f32 1.0, %v6226
  %v6228 = vmul.f32 %v6211, %v5900
  %v6229 = vmul.f32 %v6213, %v5901
  %v6230 = vmul.f32 %v6199, %v6214
  %v6231 = vmul.f32 %v6201, %v6215
  %v6232 = vadd.f32 %v6228, %v6230
  %v6233 = vadd.f32 %v6229, %v6231
  %v6234 = vtanh.pop %v6232
  %v6235 = vtanh.pop %v6233
  %v6236 = vmul.f32 %v6225, %v6234
  %v6237 = vmul.f32 %v6227, %v6235
  %6238 = vmatprep.subr.mxu0 %v3675
  %6239 = vmatpush1.msra.mxu0 %v3674
  %6240 = vmatprep.subr.mxu0 %v3683
  %6241 = vmatpush1.msra.mxu0 %v3682
  %6242 = vmatprep.subr.mxu0 %v3691
  %6243 = vmatpush1.msra.mxu0 %v3690
  %6244 = vmatprep.subr.mxu0 %v3699
  %6245 = vmatpush1.msra.mxu0 %v3698
  %6246 = vmatprep.subr.mxu0 %v3707
  %6247 = vmatpush1.msra.mxu0 %v3706
  %6248 = vmatprep.subr.mxu0 %v3715
  %6249 = vmatpush1.msra.mxu0 %v3714
  %6250 = vmatprep.subr.mxu0 %v3723
  %6251 = vmatpush1.msra.mxu0 %v3722
  %6252 = vmatprep.subr.mxu0 %v3731
  %6253 = vmatpush1.msra.mxu0 %v3730
  %6254 = vmatprep.subr.mxu0 %v3739
  %6255 = vmatpush1.msra.mxu0 %v3738
  %6256 = vmatprep.subr.mxu0 %v3747
  %6257 = vmatpush1.msra.mxu0 %v3746
  %6258 = vmatprep.subr.mxu0 %v3755
  %6259 = vmatpush1.msra.mxu0 %v3754
  %6260 = vmatprep.subr.mxu0 %v3763
  %6261 = vmatpush1.msra.mxu0 %v3762
  %6262 = vmatprep.subr.mxu0 %v3771
  %6263 = vmatpush1.msra.mxu0 %v3770
  %6264 = vmatprep.subr.mxu0 %v3779
  %6265 = vmatpush1.msra.mxu0 %v3778
  %6266 = vmatprep.subr.mxu0 %v3787
  %6267 = vmatpush1.msra.mxu0 %v3786
  %6268 = vmatprep.subr.mxu0 %v3795
  %6269 = vmatpush1.msra.mxu0 %v3794
  %6270 = vmatprep.subr.mxu0 %v3803
  %6271 = vmatpush1.msra.mxu0 %v3802
  %6272 = vmatprep.subr.mxu0 %v3811
  %6273 = vmatpush1.msra.mxu0 %v3810
  %6274 = vmatprep.subr.mxu0 %v3819
  %6275 = vmatpush1.msra.mxu0 %v3818
  %6276 = vmatprep.subr.mxu0 %v3827
  %6277 = vmatpush1.msra.mxu0 %v3826
  %6278 = vmatprep.subr.mxu0 %v3835
  %6279 = vmatpush1.msra.mxu0 %v3834
  %6280 = vmatprep.subr.mxu0 %v3843
  %6281 = vmatpush1.msra.mxu0 %v3842
  %6282 = vmatprep.subr.mxu0 %v3851
  %6283 = vmatpush1.msra.mxu0 %v3850
  %6284 = vmatprep.subr.mxu0 %v3859
  %6285 = vmatpush1.msra.mxu0 %v3858
  %6286 = vmatprep.subr.mxu0 %v3867
  %6287 = vmatpush1.msra.mxu0 %v3866
  %6288 = vmatprep.subr.mxu0 %v3875
  %6289 = vmatpush1.msra.mxu0 %v3874
  %6290 = vmatprep.subr.mxu0 %v3883
  %6291 = vmatpush1.msra.mxu0 %v3882
  %6292 = vmatprep.subr.mxu0 %v3891
  %6293 = vmatpush1.msra.mxu0 %v3890
  %6294 = vmatprep.subr.mxu0 %v3899
  %6295 = vmatpush1.msra.mxu0 %v3898
  %6296 = vmatprep.subr.mxu0 %v3907
  %6297 = vmatpush1.msra.mxu0 %v3906
  %6298 = vmatprep.subr.mxu0 %v3915
  %6299 = vmatpush1.msra.mxu0 %v3914
  %6300 = vmatprep.subr.mxu0 %v3923
  %6301 = vmatpush1.msra.mxu0 %v3922
  %6302 = vmatprep.mubr.f32.mxu0 %v6237
  %6303 = vmatmul.mubr.f32.gmra.mrb[0].mxu0 %v6236
  %v6304 = vpop.f32.mrb[0].mxu0
  %v6305 = vadd.f32 %v4086, %v6304
  %v6306 = vpop.f32.mrb[0].mxu0
  %v6307 = vadd.f32 %v4090, %v6306
  %6308 = vdwg.mxu0
  %6309 = vmatprep.subr.mxu0 %v3677
  %6310 = vmatpush1.msra.mxu0 %v3676
  %6311 = vmatprep.subr.mxu0 %v3685
  %6312 = vmatpush1.msra.mxu0 %v3684
  %6313 = vmatprep.subr.mxu0 %v3693
  %6314 = vmatpush1.msra.mxu0 %v3692
  %6315 = vmatprep.subr.mxu0 %v3701
  %6316 = vmatpush1.msra.mxu0 %v3700
  %6317 = vmatprep.subr.mxu0 %v3709
  %6318 = vmatpush1.msra.mxu0 %v3708
  %6319 = vmatprep.subr.mxu0 %v3717
  %6320 = vmatpush1.msra.mxu0 %v3716
  %6321 = vmatprep.subr.mxu0 %v3725
  %6322 = vmatpush1.msra.mxu0 %v3724
  %6323 = vmatprep.subr.mxu0 %v3733
  %6324 = vmatpush1.msra.mxu0 %v3732
  %6325 = vmatprep.subr.mxu0 %v3741
  %6326 = vmatpush1.msra.mxu0 %v3740
  %6327 = vmatprep.subr.mxu0 %v3749
  %6328 = vmatpush1.msra.mxu0 %v3748
  %6329 = vmatprep.subr.mxu0 %v3757
  %6330 = vmatpush1.msra.mxu0 %v3756
  %6331 = vmatprep.subr.mxu0 %v3765
  %6332 = vmatpush1.msra.mxu0 %v3764
  %6333 = vmatprep.subr.mxu0 %v3773
  %6334 = vmatpush1.msra.mxu0 %v3772
  %6335 = vmatprep.subr.mxu0 %v3781
  %6336 = vmatpush1.msra.mxu0 %v3780
  %6337 = vmatprep.subr.mxu0 %v3789
  %6338 = vmatpush1.msra.mxu0 %v3788
  %6339 = vmatprep.subr.mxu0 %v3797
  %6340 = vmatpush1.msra.mxu0 %v3796
  %6341 = vmatprep.subr.mxu0 %v3805
  %6342 = vmatpush1.msra.mxu0 %v3804
  %6343 = vmatprep.subr.mxu0 %v3813
  %6344 = vmatpush1.msra.mxu0 %v3812
  %6345 = vmatprep.subr.mxu0 %v3821
  %6346 = vmatpush1.msra.mxu0 %v3820
  %6347 = vmatprep.subr.mxu0 %v3829
  %6348 = vmatpush1.msra.mxu0 %v3828
  %6349 = vmatprep.subr.mxu0 %v3837
  %6350 = vmatpush1.msra.mxu0 %v3836
  %6351 = vmatprep.subr.mxu0 %v3845
  %6352 = vmatpush1.msra.mxu0 %v3844
  %6353 = vmatprep.subr.mxu0 %v3853
  %6354 = vmatpush1.msra.mxu0 %v3852
  %6355 = vmatprep.subr.mxu0 %v3861
  %6356 = vmatpush1.msra.mxu0 %v3860
  %6357 = vmatprep.subr.mxu0 %v3869
  %6358 = vmatpush1.msra.mxu0 %v3868
  %6359 = vmatprep.subr.mxu0 %v3877
  %6360 = vmatpush1.msra.mxu0 %v3876
  %6361 = vmatprep.subr.mxu0 %v3885
  %6362 = vmatpush1.msra.mxu0 %v3884
  %6363 = vmatprep.subr.mxu0 %v3893
  %6364 = vmatpush1.msra.mxu0 %v3892
  %6365 = vmatprep.subr.mxu0 %v3901
  %6366 = vmatpush1.msra.mxu0 %v3900
  %6367 = vmatprep.subr.mxu0 %v3909
  %6368 = vmatpush1.msra.mxu0 %v3908
  %6369 = vmatprep.subr.mxu0 %v3917
  %6370 = vmatpush1.msra.mxu0 %v3916
  %6371 = vmatprep.subr.mxu0 %v3925
  %6372 = vmatpush1.msra.mxu0 %v3924
  %6373 = vmatprep.mubr.f32.mxu0 %v6237
  %6374 = vmatmul.mubr.f32.gmra.mrb[0].mxu0 %v6236
  %v6375 = vpop.f32.mrb[0].mxu0
  %v6376 = vadd.f32 %v4094, %v6375
  %v6377 = vpop.f32.mrb[0].mxu0
  %v6378 = vadd.f32 %v4098, %v6377
  %6379 = vdwg.mxu0
  %6380 = vmatprep.subr.mxu0 %v3679
  %6381 = vmatpush1.msra.mxu0 %v3678
  %6382 = vmatprep.subr.mxu0 %v3687
  %6383 = vmatpush1.msra.mxu0 %v3686
  %6384 = vmatprep.subr.mxu0 %v3695
  %6385 = vmatpush1.msra.mxu0 %v3694
  %6386 = vmatprep.subr.mxu0 %v3703
  %6387 = vmatpush1.msra.mxu0 %v3702
  %6388 = vmatprep.subr.mxu0 %v3711
  %6389 = vmatpush1.msra.mxu0 %v3710
  %6390 = vmatprep.subr.mxu0 %v3719
  %6391 = vmatpush1.msra.mxu0 %v3718
  %6392 = vmatprep.subr.mxu0 %v3727
  %6393 = vmatpush1.msra.mxu0 %v3726
  %6394 = vmatprep.subr.mxu0 %v3735
  %6395 = vmatpush1.msra.mxu0 %v3734
  %6396 = vmatprep.subr.mxu0 %v3743
  %6397 = vmatpush1.msra.mxu0 %v3742
  %6398 = vmatprep.subr.mxu0 %v3751
  %6399 = vmatpush1.msra.mxu0 %v3750
  %6400 = vmatprep.subr.mxu0 %v3759
  %6401 = vmatpush1.msra.mxu0 %v3758
  %6402 = vmatprep.subr.mxu0 %v3767
  %6403 = vmatpush1.msra.mxu0 %v3766
  %6404 = vmatprep.subr.mxu0 %v3775
  %6405 = vmatpush1.msra.mxu0 %v3774
  %6406 = vmatprep.subr.mxu0 %v3783
  %6407 = vmatpush1.msra.mxu0 %v3782
  %6408 = vmatprep.subr.mxu0 %v3791
  %6409 = vmatpush1.msra.mxu0 %v3790
  %6410 = vmatprep.subr.mxu0 %v3799
  %6411 = vmatpush1.msra.mxu0 %v3798
  %6412 = vmatprep.subr.mxu0 %v3807
  %6413 = vmatpush1.msra.mxu0 %v3806
  %6414 = vmatprep.subr.mxu0 %v3815
  %6415 = vmatpush1.msra.mxu0 %v3814
  %6416 = vmatprep.subr.mxu0 %v3823
  %6417 = vmatpush1.msra.mxu0 %v3822
  %6418 = vmatprep.subr.mxu0 %v3831
  %6419 = vmatpush1.msra.mxu0 %v3830
  %6420 = vmatprep.subr.mxu0 %v3839
  %6421 = vmatpush1.msra.mxu0 %v3838
  %6422 = vmatprep.subr.mxu0 %v3847
  %6423 = vmatpush1.msra.mxu0 %v3846
  %6424 = vmatprep.subr.mxu0 %v3855
  %6425 = vmatpush1.msra.mxu0 %v3854
  %6426 = vmatprep.subr.mxu0 %v3863
  %6427 = vmatpush1.msra.mxu0 %v3862
  %6428 = vmatprep.subr.mxu0 %v3871
  %6429 = vmatpush1.msra.mxu0 %v3870
  %6430 = vmatprep.subr.mxu0 %v3879
  %6431 = vmatpush1.msra.mxu0 %v3878
  %6432 = vmatprep.subr.mxu0 %v3887
  %6433 = vmatpush1.msra.mxu0 %v3886
  %6434 = vmatprep.subr.mxu0 %v3895
  %6435 = vmatpush1.msra.mxu0 %v3894
  %6436 = vmatprep.subr.mxu0 %v3903
  %6437 = vmatpush1.msra.mxu0 %v3902
  %6438 = vmatprep.subr.mxu0 %v3911
  %6439 = vmatpush1.msra.mxu0 %v3910
  %6440 = vmatprep.subr.mxu0 %v3919
  %6441 = vmatpush1.msra.mxu0 %v3918
  %6442 = vmatprep.subr.mxu0 %v3927
  %6443 = vmatpush1.msra.mxu0 %v3926
  %6444 = vmatprep.mubr.f32.mxu0 %v6237
  %6445 = vmatmul.mubr.f32.gmra.mrb[0].mxu0 %v6236
  %v6446 = vpop.f32.mrb[0].mxu0
  %v6447 = vadd.f32 %v4102, %v6446
  %v6448 = vpop.f32.mrb[0].mxu0
  %v6449 = vadd.f32 %v4106, %v6448
  %6450 = vdwg.mxu0
  %6451 = vmatprep.subr.mxu0 %v3681
  %6452 = vmatpush1.msra.mxu0 %v3680
  %6453 = vmatprep.subr.mxu0 %v3689
  %6454 = vmatpush1.msra.mxu0 %v3688
  %6455 = vmatprep.subr.mxu0 %v3697
  %6456 = vmatpush1.msra.mxu0 %v3696
  %6457 = vmatprep.subr.mxu0 %v3705
  %6458 = vmatpush1.msra.mxu0 %v3704
  %6459 = vmatprep.subr.mxu0 %v3713
  %6460 = vmatpush1.msra.mxu0 %v3712
  %6461 = vmatprep.subr.mxu0 %v3721
  %6462 = vmatpush1.msra.mxu0 %v3720
  %6463 = vmatprep.subr.mxu0 %v3729
  %6464 = vmatpush1.msra.mxu0 %v3728
  %6465 = vmatprep.subr.mxu0 %v3737
  %6466 = vmatpush1.msra.mxu0 %v3736
  %6467 = vmatprep.subr.mxu0 %v3745
  %6468 = vmatpush1.msra.mxu0 %v3744
  %6469 = vmatprep.subr.mxu0 %v3753
  %6470 = vmatpush1.msra.mxu0 %v3752
  %6471 = vmatprep.subr.mxu0 %v3761
  %6472 = vmatpush1.msra.mxu0 %v3760
  %6473 = vmatprep.subr.mxu0 %v3769
  %6474 = vmatpush1.msra.mxu0 %v3768
  %6475 = vmatprep.subr.mxu0 %v3777
  %6476 = vmatpush1.msra.mxu0 %v3776
  %6477 = vmatprep.subr.mxu0 %v3785
  %6478 = vmatpush1.msra.mxu0 %v3784
  %6479 = vmatprep.subr.mxu0 %v3793
  %6480 = vmatpush1.msra.mxu0 %v3792
  %6481 = vmatprep.subr.mxu0 %v3801
  %6482 = vmatpush1.msra.mxu0 %v3800
  %6483 = vmatprep.subr.mxu0 %v3809
  %6484 = vmatpush1.msra.mxu0 %v3808
  %6485 = vmatprep.subr.mxu0 %v3817
  %6486 = vmatpush1.msra.mxu0 %v3816
  %6487 = vmatprep.subr.mxu0 %v3825
  %6488 = vmatpush1.msra.mxu0 %v3824
  %6489 = vmatprep.subr.mxu0 %v3833
  %6490 = vmatpush1.msra.mxu0 %v3832
  %6491 = vmatprep.subr.mxu0 %v3841
  %6492 = vmatpush1.msra.mxu0 %v3840
  %6493 = vmatprep.subr.mxu0 %v3849
  %6494 = vmatpush1.msra.mxu0 %v3848
  %6495 = vmatprep.subr.mxu0 %v3857
  %6496 = vmatpush1.msra.mxu0 %v3856
  %6497 = vmatprep.subr.mxu0 %v3865
  %6498 = vmatpush1.msra.mxu0 %v3864
  %6499 = vmatprep.subr.mxu0 %v3873
  %6500 = vmatpush1.msra.mxu0 %v3872
  %6501 = vmatprep.subr.mxu0 %v3881
  %6502 = vmatpush1.msra.mxu0 %v3880
  %6503 = vmatprep.subr.mxu0 %v3889
  %6504 = vmatpush1.msra.mxu0 %v3888
  %6505 = vmatprep.subr.mxu0 %v3897
  %6506 = vmatpush1.msra.mxu0 %v3896
  %6507 = vmatprep.subr.mxu0 %v3905
  %6508 = vmatpush1.msra.mxu0 %v3904
  %6509 = vmatprep.subr.mxu0 %v3913
  %6510 = vmatpush1.msra.mxu0 %v3912
  %6511 = vmatprep.subr.mxu0 %v3921
  %6512 = vmatpush1.msra.mxu0 %v3920
  %6513 = vmatprep.subr.mxu0 %v3929
  %6514 = vmatpush1.msra.mxu0 %v3928
  %6515 = vmatprep.mubr.f32.mxu0 %v6237
  %6516 = vmatmul.mubr.f32.gmra.mrb[0].mxu0 %v6236
  %v6517 = vpop.f32.mrb[0].mxu0
  %v6518 = vadd.f32 %v4110, %v6517
  %v6519 = vpop.f32.mrb[0].mxu0
  %v6520 = vadd.f32 %v4114, %v6519
  %6521 = vdwg.mxu0
  %v6522 = vxor.u32 %v6305, 2147483648
  %v6523 = vxor.u32 %v6307, 2147483648
  %v6524 = vmul.f32 %v6522, 1.442695
  %v6525 = vpow.pop %v6524
  %v6526 = vmul.f32 %v6523, 1.442695
  %v6527 = vpow.pop %v6526
  %v6528 = vadd.f32 %v6525, 1.0
  %v6529 = vadd.f32 %v6527, 1.0
  %v6530 = vrcp.pop %v6528
  %v6531 = vmul.f32 1.0, %v6530
  %v6532 = vrcp.pop %v6529
  %v6533 = vmul.f32 1.0, %v6532
  %v6534 = vxor.u32 %v6376, 2147483648
  %v6535 = vxor.u32 %v6378, 2147483648
  %v6536 = vmul.f32 %v6534, 1.442695
  %v6537 = vpow.pop %v6536
  %v6538 = vmul.f32 %v6535, 1.442695
  %v6539 = vpow.pop %v6538
  %v6540 = vadd.f32 %v6537, 1.0
  %v6541 = vadd.f32 %v6539, 1.0
  %v6542 = vrcp.pop %v6540
  %v6543 = vmul.f32 1.0, %v6542
  %v6544 = vrcp.pop %v6541
  %v6545 = vmul.f32 1.0, %v6544
  %v6546 = vtanh.pop %v6447
  %v6547 = vtanh.pop %v6449
  %v6548 = vxor.u32 %v6518, 2147483648
  %v6549 = vxor.u32 %v6520, 2147483648
  %v6550 = vmul.f32 %v6548, 1.442695
  %v6551 = vpow.pop %v6550
  %v6552 = vmul.f32 %v6549, 1.442695
  %v6553 = vpow.pop %v6552
  %v6554 = vadd.f32 %v6551, 1.0
  %v6555 = vadd.f32 %v6553, 1.0
  %v6556 = vrcp.pop %v6554
  %v6557 = vmul.f32 1.0, %v6556
  %v6558 = vrcp.pop %v6555
  %v6559 = vmul.f32 1.0, %v6558
  %v6560 = vmul.f32 %v6543, %v6232
  %v6561 = vmul.f32 %v6545, %v6233
  %v6562 = vmul.f32 %v6531, %v6546
  %v6563 = vmul.f32 %v6533, %v6547
  %v6564 = vadd.f32 %v6560, %v6562
  %v6565 = vadd.f32 %v6561, %v6563
  %v6566 = vtanh.pop %v6564
  %v6567 = vtanh.pop %v6565
  %v6568 = vmul.f32 %v6557, %v6566
  %v6569 = vmul.f32 %v6559, %v6567
  %6570 = vmatprep.subr.mxu0 %v3675
  %6571 = vmatpush1.msra.mxu0 %v3674
  %6572 = vmatprep.subr.mxu0 %v3683
  %6573 = vmatpush1.msra.mxu0 %v3682
  %6574 = vmatprep.subr.mxu0 %v3691
  %6575 = vmatpush1.msra.mxu0 %v3690
  %6576 = vmatprep.subr.mxu0 %v3699
  %6577 = vmatpush1.msra.mxu0 %v3698
  %6578 = vmatprep.subr.mxu0 %v3707
  %6579 = vmatpush1.msra.mxu0 %v3706
  %6580 = vmatprep.subr.mxu0 %v3715
  %6581 = vmatpush1.msra.mxu0 %v3714
  %6582 = vmatprep.subr.mxu0 %v3723
  %6583 = vmatpush1.msra.mxu0 %v3722
  %6584 = vmatprep.subr.mxu0 %v3731
  %6585 = vmatpush1.msra.mxu0 %v3730
  %6586 = vmatprep.subr.mxu0 %v3739
  %6587 = vmatpush1.msra.mxu0 %v3738
  %6588 = vmatprep.subr.mxu0 %v3747
  %6589 = vmatpush1.msra.mxu0 %v3746
  %6590 = vmatprep.subr.mxu0 %v3755
  %6591 = vmatpush1.msra.mxu0 %v3754
  %6592 = vmatprep.subr.mxu0 %v3763
  %6593 = vmatpush1.msra.mxu0 %v3762
  %6594 = vmatprep.subr.mxu0 %v3771
  %6595 = vmatpush1.msra.mxu0 %v3770
  %6596 = vmatprep.subr.mxu0 %v3779
  %6597 = vmatpush1.msra.mxu0 %v3778
  %6598 = vmatprep.subr.mxu0 %v3787
  %6599 = vmatpush1.msra.mxu0 %v3786
  %6600 = vmatprep.subr.mxu0 %v3795
  %6601 = vmatpush1.msra.mxu0 %v3794
  %6602 = vmatprep.subr.mxu0 %v3803
  %6603 = vmatpush1.msra.mxu0 %v3802
  %6604 = vmatprep.subr.mxu0 %v3811
  %6605 = vmatpush1.msra.mxu0 %v3810
  %6606 = vmatprep.subr.mxu0 %v3819
  %6607 = vmatpush1.msra.mxu0 %v3818
  %6608 = vmatprep.subr.mxu0 %v3827
  %6609 = vmatpush1.msra.mxu0 %v3826
  %6610 = vmatprep.subr.mxu0 %v3835
  %6611 = vmatpush1.msra.mxu0 %v3834
  %6612 = vmatprep.subr.mxu0 %v3843
  %6613 = vmatpush1.msra.mxu0 %v3842
  %6614 = vmatprep.subr.mxu0 %v3851
  %6615 = vmatpush1.msra.mxu0 %v3850
  %6616 = vmatprep.subr.mxu0 %v3859
  %6617 = vmatpush1.msra.mxu0 %v3858
  %6618 = vmatprep.subr.mxu0 %v3867
  %6619 = vmatpush1.msra.mxu0 %v3866
  %6620 = vmatprep.subr.mxu0 %v3875
  %6621 = vmatpush1.msra.mxu0 %v3874
  %6622 = vmatprep.subr.mxu0 %v3883
  %6623 = vmatpush1.msra.mxu0 %v3882
  %6624 = vmatprep.subr.mxu0 %v3891
  %6625 = vmatpush1.msra.mxu0 %v3890
  %6626 = vmatprep.subr.mxu0 %v3899
  %6627 = vmatpush1.msra.mxu0 %v3898
  %6628 = vmatprep.subr.mxu0 %v3907
  %6629 = vmatpush1.msra.mxu0 %v3906
  %6630 = vmatprep.subr.mxu0 %v3915
  %6631 = vmatpush1.msra.mxu0 %v3914
  %6632 = vmatprep.subr.mxu0 %v3923
  %6633 = vmatpush1.msra.mxu0 %v3922
  %6634 = vmatprep.mubr.f32.mxu0 %v6569
  %6635 = vmatmul.mubr.f32.gmra.mrb[0].mxu0 %v6568
  %v6636 = vpop.f32.mrb[0].mxu0
  %v6637 = vadd.f32 %v4086, %v6636
  %v6638 = vpop.f32.mrb[0].mxu0
  %v6639 = vadd.f32 %v4090, %v6638
  %6640 = vdwg.mxu0
  %6641 = vmatprep.subr.mxu0 %v3677
  %6642 = vmatpush1.msra.mxu0 %v3676
  %6643 = vmatprep.subr.mxu0 %v3685
  %6644 = vmatpush1.msra.mxu0 %v3684
  %6645 = vmatprep.subr.mxu0 %v3693
  %6646 = vmatpush1.msra.mxu0 %v3692
  %6647 = vmatprep.subr.mxu0 %v3701
  %6648 = vmatpush1.msra.mxu0 %v3700
  %6649 = vmatprep.subr.mxu0 %v3709
  %6650 = vmatpush1.msra.mxu0 %v3708
  %6651 = vmatprep.subr.mxu0 %v3717
  %6652 = vmatpush1.msra.mxu0 %v3716
  %6653 = vmatprep.subr.mxu0 %v3725
  %6654 = vmatpush1.msra.mxu0 %v3724
  %6655 = vmatprep.subr.mxu0 %v3733
  %6656 = vmatpush1.msra.mxu0 %v3732
  %6657 = vmatprep.subr.mxu0 %v3741
  %6658 = vmatpush1.msra.mxu0 %v3740
  %6659 = vmatprep.subr.mxu0 %v3749
  %6660 = vmatpush1.msra.mxu0 %v3748
  %6661 = vmatprep.subr.mxu0 %v3757
  %6662 = vmatpush1.msra.mxu0 %v3756
  %6663 = vmatprep.subr.mxu0 %v3765
  %6664 = vmatpush1.msra.mxu0 %v3764
  %6665 = vmatprep.subr.mxu0 %v3773
  %6666 = vmatpush1.msra.mxu0 %v3772
  %6667 = vmatprep.subr.mxu0 %v3781
  %6668 = vmatpush1.msra.mxu0 %v3780
  %6669 = vmatprep.subr.mxu0 %v3789
  %6670 = vmatpush1.msra.mxu0 %v3788
  %6671 = vmatprep.subr.mxu0 %v3797
  %6672 = vmatpush1.msra.mxu0 %v3796
  %6673 = vmatprep.subr.mxu0 %v3805
  %6674 = vmatpush1.msra.mxu0 %v3804
  %6675 = vmatprep.subr.mxu0 %v3813
  %6676 = vmatpush1.msra.mxu0 %v3812
  %6677 = vmatprep.subr.mxu0 %v3821
  %6678 = vmatpush1.msra.mxu0 %v3820
  %6679 = vmatprep.subr.mxu0 %v3829
  %6680 = vmatpush1.msra.mxu0 %v3828
  %6681 = vmatprep.subr.mxu0 %v3837
  %6682 = vmatpush1.msra.mxu0 %v3836
  %6683 = vmatprep.subr.mxu0 %v3845
  %6684 = vmatpush1.msra.mxu0 %v3844
  %6685 = vmatprep.subr.mxu0 %v3853
  %6686 = vmatpush1.msra.mxu0 %v3852
  %6687 = vmatprep.subr.mxu0 %v3861
  %6688 = vmatpush1.msra.mxu0 %v3860
  %6689 = vmatprep.subr.mxu0 %v3869
  %6690 = vmatpush1.msra.mxu0 %v3868
  %6691 = vmatprep.subr.mxu0 %v3877
  %6692 = vmatpush1.msra.mxu0 %v3876
  %6693 = vmatprep.subr.mxu0 %v3885
  %6694 = vmatpush1.msra.mxu0 %v3884
  %6695 = vmatprep.subr.mxu0 %v3893
  %6696 = vmatpush1.msra.mxu0 %v3892
  %6697 = vmatprep.subr.mxu0 %v3901
  %6698 = vmatpush1.msra.mxu0 %v3900
  %6699 = vmatprep.subr.mxu0 %v3909
  %6700 = vmatpush1.msra.mxu0 %v3908
  %6701 = vmatprep.subr.mxu0 %v3917
  %6702 = vmatpush1.msra.mxu0 %v3916
  %6703 = vmatprep.subr.mxu0 %v3925
  %6704 = vmatpush1.msra.mxu0 %v3924
  %6705 = vmatprep.mubr.f32.mxu0 %v6569
  %6706 = vmatmul.mubr.f32.gmra.mrb[0].mxu0 %v6568
  %v6707 = vpop.f32.mrb[0].mxu0
  %v6708 = vadd.f32 %v4094, %v6707
  %v6709 = vpop.f32.mrb[0].mxu0
  %v6710 = vadd.f32 %v4098, %v6709
  %6711 = vdwg.mxu0
  %6712 = vmatprep.subr.mxu0 %v3679
  %6713 = vmatpush1.msra.mxu0 %v3678
  %6714 = vmatprep.subr.mxu0 %v3687
  %6715 = vmatpush1.msra.mxu0 %v3686
  %6716 = vmatprep.subr.mxu0 %v3695
  %6717 = vmatpush1.msra.mxu0 %v3694
  %6718 = vmatprep.subr.mxu0 %v3703
  %6719 = vmatpush1.msra.mxu0 %v3702
  %6720 = vmatprep.subr.mxu0 %v3711
  %6721 = vmatpush1.msra.mxu0 %v3710
  %6722 = vmatprep.subr.mxu0 %v3719
  %6723 = vmatpush1.msra.mxu0 %v3718
  %6724 = vmatprep.subr.mxu0 %v3727
  %6725 = vmatpush1.msra.mxu0 %v3726
  %6726 = vmatprep.subr.mxu0 %v3735
  %6727 = vmatpush1.msra.mxu0 %v3734
  %6728 = vmatprep.subr.mxu0 %v3743
  %6729 = vmatpush1.msra.mxu0 %v3742
  %6730 = vmatprep.subr.mxu0 %v3751
  %6731 = vmatpush1.msra.mxu0 %v3750
  %6732 = vmatprep.subr.mxu0 %v3759
  %6733 = vmatpush1.msra.mxu0 %v3758
  %6734 = vmatprep.subr.mxu0 %v3767
  %6735 = vmatpush1.msra.mxu0 %v3766
  %6736 = vmatprep.subr.mxu0 %v3775
  %6737 = vmatpush1.msra.mxu0 %v3774
  %6738 = vmatprep.subr.mxu0 %v3783
  %6739 = vmatpush1.msra.mxu0 %v3782
  %6740 = vmatprep.subr.mxu0 %v3791
  %6741 = vmatpush1.msra.mxu0 %v3790
  %6742 = vmatprep.subr.mxu0 %v3799
  %6743 = vmatpush1.msra.mxu0 %v3798
  %6744 = vmatprep.subr.mxu0 %v3807
  %6745 = vmatpush1.msra.mxu0 %v3806
  %6746 = vmatprep.subr.mxu0 %v3815
  %6747 = vmatpush1.msra.mxu0 %v3814
  %6748 = vmatprep.subr.mxu0 %v3823
  %6749 = vmatpush1.msra.mxu0 %v3822
  %6750 = vmatprep.subr.mxu0 %v3831
  %6751 = vmatpush1.msra.mxu0 %v3830
  %6752 = vmatprep.subr.mxu0 %v3839
  %6753 = vmatpush1.msra.mxu0 %v3838
  %6754 = vmatprep.subr.mxu0 %v3847
  %6755 = vmatpush1.msra.mxu0 %v3846
  %6756 = vmatprep.subr.mxu0 %v3855
  %6757 = vmatpush1.msra.mxu0 %v3854
  %6758 = vmatprep.subr.mxu0 %v3863
  %6759 = vmatpush1.msra.mxu0 %v3862
  %6760 = vmatprep.subr.mxu0 %v3871
  %6761 = vmatpush1.msra.mxu0 %v3870
  %6762 = vmatprep.subr.mxu0 %v3879
  %6763 = vmatpush1.msra.mxu0 %v3878
  %6764 = vmatprep.subr.mxu0 %v3887
  %6765 = vmatpush1.msra.mxu0 %v3886
  %6766 = vmatprep.subr.mxu0 %v3895
  %6767 = vmatpush1.msra.mxu0 %v3894
  %6768 = vmatprep.subr.mxu0 %v3903
  %6769 = vmatpush1.msra.mxu0 %v3902
  %6770 = vmatprep.subr.mxu0 %v3911
  %6771 = vmatpush1.msra.mxu0 %v3910
  %6772 = vmatprep.subr.mxu0 %v3919
  %6773 = vmatpush1.msra.mxu0 %v3918
  %6774 = vmatprep.subr.mxu0 %v3927
  %6775 = vmatpush1.msra.mxu0 %v3926
  %6776 = vmatprep.mubr.f32.mxu0 %v6569
  %6777 = vmatmul.mubr.f32.gmra.mrb[0].mxu0 %v6568
  %v6778 = vpop.f32.mrb[0].mxu0
  %v6779 = vadd.f32 %v4102, %v6778
  %v6780 = vpop.f32.mrb[0].mxu0
  %v6781 = vadd.f32 %v4106, %v6780
  %6782 = vdwg.mxu0
  %6783 = vmatprep.subr.mxu0 %v3681
  %6784 = vmatpush1.msra.mxu0 %v3680
  %6785 = vmatprep.subr.mxu0 %v3689
  %6786 = vmatpush1.msra.mxu0 %v3688
  %6787 = vmatprep.subr.mxu0 %v3697
  %6788 = vmatpush1.msra.mxu0 %v3696
  %6789 = vmatprep.subr.mxu0 %v3705
  %6790 = vmatpush1.msra.mxu0 %v3704
  %6791 = vmatprep.subr.mxu0 %v3713
  %6792 = vmatpush1.msra.mxu0 %v3712
  %6793 = vmatprep.subr.mxu0 %v3721
  %6794 = vmatpush1.msra.mxu0 %v3720
  %6795 = vmatprep.subr.mxu0 %v3729
  %6796 = vmatpush1.msra.mxu0 %v3728
  %6797 = vmatprep.subr.mxu0 %v3737
  %6798 = vmatpush1.msra.mxu0 %v3736
  %6799 = vmatprep.subr.mxu0 %v3745
  %6800 = vmatpush1.msra.mxu0 %v3744
  %6801 = vmatprep.subr.mxu0 %v3753
  %6802 = vmatpush1.msra.mxu0 %v3752
  %6803 = vmatprep.subr.mxu0 %v3761
  %6804 = vmatpush1.msra.mxu0 %v3760
  %6805 = vmatprep.subr.mxu0 %v3769
  %6806 = vmatpush1.msra.mxu0 %v3768
  %6807 = vmatprep.subr.mxu0 %v3777
  %6808 = vmatpush1.msra.mxu0 %v3776
  %6809 = vmatprep.subr.mxu0 %v3785
  %6810 = vmatpush1.msra.mxu0 %v3784
  %6811 = vmatprep.subr.mxu0 %v3793
  %6812 = vmatpush1.msra.mxu0 %v3792
  %6813 = vmatprep.subr.mxu0 %v3801
  %6814 = vmatpush1.msra.mxu0 %v3800
  %6815 = vmatprep.subr.mxu0 %v3809
  %6816 = vmatpush1.msra.mxu0 %v3808
  %6817 = vmatprep.subr.mxu0 %v3817
  %6818 = vmatpush1.msra.mxu0 %v3816
  %6819 = vmatprep.subr.mxu0 %v3825
  %6820 = vmatpush1.msra.mxu0 %v3824
  %6821 = vmatprep.subr.mxu0 %v3833
  %6822 = vmatpush1.msra.mxu0 %v3832
  %6823 = vmatprep.subr.mxu0 %v3841
  %6824 = vmatpush1.msra.mxu0 %v3840
  %6825 = vmatprep.subr.mxu0 %v3849
  %6826 = vmatpush1.msra.mxu0 %v3848
  %6827 = vmatprep.subr.mxu0 %v3857
  %6828 = vmatpush1.msra.mxu0 %v3856
  %6829 = vmatprep.subr.mxu0 %v3865
  %6830 = vmatpush1.msra.mxu0 %v3864
  %6831 = vmatprep.subr.mxu0 %v3873
  %6832 = vmatpush1.msra.mxu0 %v3872
  %6833 = vmatprep.subr.mxu0 %v3881
  %6834 = vmatpush1.msra.mxu0 %v3880
  %6835 = vmatprep.subr.mxu0 %v3889
  %6836 = vmatpush1.msra.mxu0 %v3888
  %6837 = vmatprep.subr.mxu0 %v3897
  %6838 = vmatpush1.msra.mxu0 %v3896
  %6839 = vmatprep.subr.mxu0 %v3905
  %6840 = vmatpush1.msra.mxu0 %v3904
  %6841 = vmatprep.subr.mxu0 %v3913
  %6842 = vmatpush1.msra.mxu0 %v3912
  %6843 = vmatprep.subr.mxu0 %v3921
  %6844 = vmatpush1.msra.mxu0 %v3920
  %6845 = vmatprep.subr.mxu0 %v3929
  %6846 = vmatpush1.msra.mxu0 %v3928
  %6847 = vmatprep.mubr.f32.mxu0 %v6569
  %6848 = vmatmul.mubr.f32.gmra.mrb[0].mxu0 %v6568
  %v6849 = vpop.f32.mrb[0].mxu0
  %v6850 = vadd.f32 %v4110, %v6849
  %v6851 = vpop.f32.mrb[0].mxu0
  %v6852 = vadd.f32 %v4114, %v6851
  %6853 = vdwg.mxu0
  %v6854 = vxor.u32 %v6637, 2147483648
  %v6855 = vxor.u32 %v6639, 2147483648
  %v6856 = vmul.f32 %v6854, 1.442695
  %v6857 = vpow.pop %v6856
  %v6858 = vmul.f32 %v6855, 1.442695
  %v6859 = vpow.pop %v6858
  %v6860 = vadd.f32 %v6857, 1.0
  %v6861 = vadd.f32 %v6859, 1.0
  %v6862 = vrcp.pop %v6860
  %v6863 = vmul.f32 1.0, %v6862
  %v6864 = vrcp.pop %v6861
  %v6865 = vmul.f32 1.0, %v6864
  %v6866 = vxor.u32 %v6708, 2147483648
  %v6867 = vxor.u32 %v6710, 2147483648
  %v6868 = vmul.f32 %v6866, 1.442695
  %v6869 = vpow.pop %v6868
  %v6870 = vmul.f32 %v6867, 1.442695
  %v6871 = vpow.pop %v6870
  %v6872 = vadd.f32 %v6869, 1.0
  %v6873 = vadd.f32 %v6871, 1.0
  %v6874 = vrcp.pop %v6872
  %v6875 = vmul.f32 1.0, %v6874
  %v6876 = vrcp.pop %v6873
  %v6877 = vmul.f32 1.0, %v6876
  %v6878 = vtanh.pop %v6779
  %v6879 = vtanh.pop %v6781
  %v6880 = vxor.u32 %v6850, 2147483648
  %v6881 = vxor.u32 %v6852, 2147483648
  %v6882 = vmul.f32 %v6880, 1.442695
  %v6883 = vpow.pop %v6882
  %v6884 = vmul.f32 %v6881, 1.442695
  %v6885 = vpow.pop %v6884
  %v6886 = vadd.f32 %v6883, 1.0
  %v6887 = vadd.f32 %v6885, 1.0
  %v6888 = vrcp.pop %v6886
  %v6889 = vmul.f32 1.0, %v6888
  %v6890 = vrcp.pop %v6887
  %v6891 = vmul.f32 1.0, %v6890
  %v6892 = vmul.f32 %v6875, %v6564
  %v6893 = vmul.f32 %v6877, %v6565
  %v6894 = vmul.f32 %v6863, %v6878
  %v6895 = vmul.f32 %v6865, %v6879
  %v6896 = vadd.f32 %v6892, %v6894
  %v6897 = vadd.f32 %v6893, %v6895
  %v6898 = vtanh.pop %v6896
  %v6899 = vtanh.pop %v6897
  %v6900 = vmul.f32 %v6889, %v6898
  %v6901 = vmul.f32 %v6891, %v6899
  %v6904 = vcombine.low %v6900, %v6901
  %v6906 = vunpack.c.l.s4 1983009808
  %v6907 = vunpack.c.0.s8 %v6906
  %v6908 = vlaneseq
  %v6909 = vshrl.u32 %v6908, 7
  %v6910 = vsub.s32 %v6907, %v6909
  %v6911 = vrot.slane %v6904, %v6910
  %6913 = vst [vmem:[%s6 + $0x6] sm:$0xf] %v6911
  %v6916 = vcombine.low %v6896, %v6897
  %v6918 = vunpack.c.l.s4 1983009808
  %v6919 = vunpack.c.0.s8 %v6918
  %v6920 = vlaneseq
  %v6921 = vshrl.u32 %v6920, 7
  %v6922 = vsub.s32 %v6919, %v6921
  %v6923 = vrot.slane %v6916, %v6922
  %6925 = vst [vmem:[%s6 + $0xa] sm:$0xf] %v6923
  %v6928 = vrot.slane %v4908, 6
  %v6929 = vrot.slane %v4909, 6
  %v6934 = vrot.slane %v5240, 4
  %v6935 = vrot.slane %v5241, 4
  %v6940 = vrot.slane %v5572, 2
  %v6941 = vrot.slane %v5573, 2
  %v6946 = vrot.slane %v6236, 6
  %v6947 = vrot.slane %v6237, 6
  %v6952 = vrot.slane %v6568, 4
  %v6953 = vrot.slane %v6569, 4
  %v6956 = vrot.slane %v6900, 2
  %v6957 = vrot.slane %v6901, 2
  %v6960 = vsel %vm2721, %v4576, %v6928
  %v6961 = vsel %vm2721, %v4577, %v6929
  %v6962 = vsel %vm2437, %v6960, %v6934
  %v6963 = vsel %vm2437, %v6961, %v6935
  %vm6964 = vcmask 1045504
  %v6965 = vsel %vm6964, %v6962, %v6940
  %v6966 = vsel %vm6964, %v6963, %v6941
  %v6967 = vsel %vm2721, %v5904, %v6946
  %v6968 = vsel %vm2721, %v5905, %v6947
  %v6969 = vsel %vm2437, %v6967, %v6952
  %v6970 = vsel %vm2437, %v6968, %v6953
  %v6971 = vsel %vm6964, %v6969, %v6956
  %v6972 = vsel %vm6964, %v6970, %v6957
  %6973 = vmatprep.subr.mxu0 %v3931
  %6974 = vmatpush1.msra.mxu0 %v3930
  %6975 = vmatprep.subr.mxu0 %v3933
  %6976 = vmatpush1.msra.mxu0 %v3932
  %6977 = vmatprep.subr.mxu0 %v3935
  %6978 = vmatpush1.msra.mxu0 %v3934
  %6979 = vmatprep.subr.mxu0 %v3937
  %6980 = vmatpush1.msra.mxu0 %v3936
  %6981 = vmatprep.subr.mxu0 %v3939
  %6982 = vmatpush1.msra.mxu0 %v3938
  %6983 = vmatprep.subr.mxu0 %v3941
  %6984 = vmatpush1.msra.mxu0 %v3940
  %6985 = vmatprep.subr.mxu0 %v3943
  %6986 = vmatpush1.msra.mxu0 %v3942
  %6987 = vmatprep.subr.mxu0 %v3945
  %6988 = vmatpush1.msra.mxu0 %v3944
  %6989 = vmatprep.subr.mxu0 %v3947
  %6990 = vmatpush1.msra.mxu0 %v3946
  %6991 = vmatprep.subr.mxu0 %v3949
  %6992 = vmatpush1.msra.mxu0 %v3948
  %6993 = vmatprep.subr.mxu0 %v3951
  %6994 = vmatpush1.msra.mxu0 %v3950
  %6995 = vmatprep.subr.mxu0 %v3953
  %6996 = vmatpush1.msra.mxu0 %v3952
  %6997 = vmatprep.subr.mxu0 %v3955
  %6998 = vmatpush1.msra.mxu0 %v3954
  %6999 = vmatprep.subr.mxu0 %v3957
  %7000 = vmatpush1.msra.mxu0 %v3956
  %7001 = vmatprep.subr.mxu0 %v3959
  %7002 = vmatpush1.msra.mxu0 %v3958
  %7003 = vmatprep.subr.mxu0 %v3961
  %7004 = vmatpush1.msra.mxu0 %v3960
  %7005 = vmatprep.subr.mxu0 %v3963
  %7006 = vmatpush1.msra.mxu0 %v3962
  %7007 = vmatprep.subr.mxu0 %v3965
  %7008 = vmatpush1.msra.mxu0 %v3964
  %7009 = vmatprep.subr.mxu0 %v3967
  %7010 = vmatpush1.msra.mxu0 %v3966
  %7011 = vmatprep.subr.mxu0 %v3969
  %7012 = vmatpush1.msra.mxu0 %v3968
  %7013 = vmatprep.subr.mxu0 %v3971
  %7014 = vmatpush1.msra.mxu0 %v3970
  %7015 = vmatprep.subr.mxu0 %v3973
  %7016 = vmatpush1.msra.mxu0 %v3972
  %7017 = vmatprep.subr.mxu0 %v3975
  %7018 = vmatpush1.msra.mxu0 %v3974
  %7019 = vmatprep.subr.mxu0 %v3977
  %7020 = vmatpush1.msra.mxu0 %v3976
  %7021 = vmatprep.subr.mxu0 %v3979
  %7022 = vmatpush1.msra.mxu0 %v3978
  %7023 = vmatprep.subr.mxu0 %v3981
  %7024 = vmatpush1.msra.mxu0 %v3980
  %7025 = vmatprep.subr.mxu0 %v3983
  %7026 = vmatpush1.msra.mxu0 %v3982
  %7027 = vmatprep.subr.mxu0 %v3985
  %7028 = vmatpush1.msra.mxu0 %v3984
  %7029 = vmatprep.subr.mxu0 %v3987
  %7030 = vmatpush1.msra.mxu0 %v3986
  %7031 = vmatprep.subr.mxu0 %v3989
  %7032 = vmatpush1.msra.mxu0 %v3988
  %7033 = vmatprep.subr.mxu0 %v3991
  %7034 = vmatpush1.msra.mxu0 %v3990
  %7035 = vmatprep.subr.mxu0 %v3993
  %7036 = vmatpush1.msra.mxu0 %v3992
  %7037 = vmatprep.mubr.f32.mxu0 %v6966
  %7038 = vmatmul.mubr.f32.gmra.mrb[0].mxu0 %v6965
  %v7039 = vpop.f32.mrb[0].mxu0
  %v7040 = vadd.f32 %v4000, %v7039
  %v7041 = vpop.f32.mrb[0].mxu0
  %v7042 = vadd.f32 %v4004, %v7041
  %7043 = vmatprep.mubr.f32.mxu0 %v6972
  %7044 = vmatmul.mubr.f32.gmra.mrb[0].mxu0 %v6971
  %v7045 = vpop.f32.mrb[0].mxu0
  %v7046 = vadd.f32 %v4000, %v7045
  %v7047 = vpop.f32.mrb[0].mxu0
  %v7048 = vadd.f32 %v4004, %v7047
  %7049 = vdwg.mxu0
  %7050 = vst [vmem:[%s8] sm:$0xff] %v7040
  %7051 = vst [vmem:[%s8 + $0x8] sm:$0xff] %v7042
  %7052 = vst [vmem:[%s8 + $0x10] sm:$0xff] %v7046
  %7053 = vst [vmem:[%s8 + $0x18] sm:$0xff] %v7048
  // Predicated region
  $region26: #{seq2seq_forward.1} parent=0 // pred_check
    _
  $region27: #{seq2seq_forward.1} parent=0 // pred_check_branch
    %7055 = sbr.rel (0) target = $region29
  $region28: #{seq2seq_forward.1} parent=0 // pred_region
    _
  $region29: #{seq2seq_forward.1} parent=0 // pred_fallthru
    _
  // Predicated region
  $region30: #{seq2seq_forward.1} parent=0 // pred_check
    _
  $region31: #{seq2seq_forward.1} parent=0 // pred_check_branch
    %7057 = sbr.rel (0) target = $region33
  $region32: #{seq2seq_forward.1} parent=0 // pred_region
    _
  $region33: #{seq2seq_forward.1} parent=0 // pred_fallthru
    _
  // Predicated region
  $region34: #{seq2seq_forward.1} parent=0 // pred_check
    _
  $region35: #{seq2seq_forward.1} parent=0 // pred_check_branch
    %7059 = sbr.rel (0) target = $region37
  $region36: #{seq2seq_forward.1} parent=0 // pred_region
    _
  $region37: #{seq2seq_forward.1} parent=0 // pred_fallthru
    _
  // Predicated region
  $region38: #{seq2seq_forward.1} parent=0 // pred_check
    _
  $region39: #{seq2seq_forward.1} parent=0 // pred_check_branch
    %7061 = sbr.rel (0) target = $region41
  $region40: #{seq2seq_forward.1} parent=0 // pred_region
    _
  $region41: #{seq2seq_forward.1} parent=0 // pred_fallthru
    _
  // Predicated region
  $region42: #{seq2seq_forward.1} parent=0 // pred_check
    _
  $region43: #{seq2seq_forward.1} parent=0 // pred_check_branch
    %7063 = sbr.rel (0) target = $region45
  $region44: #{seq2seq_forward.1} parent=0 // pred_region
    _
  $region45: #{seq2seq_forward.1} parent=0 // pred_fallthru
    _
  // Predicated region
  $region46: #{seq2seq_forward.1} parent=0 // pred_check
    _
  $region47: #{seq2seq_forward.1} parent=0 // pred_check_branch
    %7065 = sbr.rel (0) target = $region49
  $region48: #{seq2seq_forward.1} parent=0 // pred_region
    _
  $region49: #{seq2seq_forward.1} parent=0 // pred_fallthru
    _

</llo_original>
